<compile_context>
chip_gen: v6e
topology: v6e:2x2x1
jax: 0.10.0
libtpu: 0.0.40
codegen_flags: <defaults>
</compile_context>

<pallas_src>
import functools

import jax
import jax.numpy as jnp
from jax import lax
from jax.experimental import pallas as pl
from jax.experimental.pallas import tpu as pltpu


def _round_up(x, m):
    return (x + m - 1) // m * m


def _fold_bn(gamma, beta, mean, var, eps=1e-5):
    scale = (gamma / jnp.sqrt(var + eps)).astype(jnp.float32)
    bias = (beta - mean * scale).astype(jnp.float32)
    return scale, bias


# ----------------------- hardware / feature discovery -----------------------

def _vmem_capacity_bytes():
    try:
        info = pltpu.get_tpu_info()
        for attr in ("vmem_capacity_bytes", "vmem_bytes", "vmem_size_bytes"):
            v = getattr(info, attr, None)
            if v:
                return int(v)
    except Exception:
        pass
    return 64 << 20       # conservative default: v7x per-TensorCore VMEM


_WEIGHT_PIPELINE_MODE = "unset"


def _weight_pipeline_mode():
    """pl.Buffered(1) for constant-index weights (halves their VMEM footprint).

    Runs a tiny feature-test kernel once; falls back to default double
    buffering if pipeline_mode / Buffered(1) is unsupported on this jax.
    """
    global _WEIGHT_PIPELINE_MODE
    if _WEIGHT_PIPELINE_MODE != "unset":
        return _WEIGHT_PIPELINE_MODE
    try:
        mode = pl.Buffered(1)

        def _k(w_ref, x_ref, o_ref):
            o_ref[...] = x_ref[...] + w_ref[...]

        w = jnp.ones((8, 128), jnp.float32)
        x = jnp.arange(2 * 8 * 128, dtype=jnp.float32).reshape(2, 8, 128)
        out = pl.pallas_call(
            _k,
            out_shape=jax.ShapeDtypeStruct((2, 8, 128), jnp.float32),
            grid_spec=pltpu.PrefetchScalarGridSpec(
                num_scalar_prefetch=0,
                grid=(2, 1),
                in_specs=[
                    pl.BlockSpec((8, 128), lambda n, t: (0, 0),
                                 pipeline_mode=mode),
                    pl.BlockSpec((1, 8, 128), lambda n, t: (n, 0, 0)),
                ],
                out_specs=pl.BlockSpec((1, 8, 128), lambda n, t: (n, 0, 0)),
            ),
            compiler_params=pltpu.CompilerParams(
                dimension_semantics=("parallel", "parallel")),
        )(w, x)
        jax.block_until_ready(out)
        ok = bool(jnp.allclose(out, x + 1.0))
        _WEIGHT_PIPELINE_MODE = mode if ok else None
    except Exception:
        _WEIGHT_PIPELINE_MODE = None
    return _WEIGHT_PIPELINE_MODE


# ----------------------------- VMEM budgeting --------------------------------

def _weights_bytes(Cp, WIDTHP):
    return ((Cp * WIDTHP + 9 * WIDTHP * WIDTHP + WIDTHP * Cp) * 2
            + (2 * WIDTHP + Cp) * 4)


def _vmem_estimate(tile_h, H, W, Cp, WIDTHP, WP2, wbytes, weight_bufs):
    TH = tile_h
    M1 = (TH + 2) * WP2
    M2 = TH * WP2
    x_resident = 2 * (H + 2) * WP2 * Cp * 2      # resident bf16 image (2 bufs over n)
    out_tile = 2 * TH * W * Cp * 4               # f32 output tile (double-buffered)
    canvas = M1 * 3 * WIDTHP * 2                 # bf16 dx-grouped conv1 canvas
    temps = (2 * M1 * WIDTHP + 2 * M2 * WIDTHP + 2 * M2 * Cp) * 4   # rough f32 temps
    return x_resident + out_tile + canvas + temps + weight_bufs * wbytes


def _pick_tile_h(N, H, W, Cp, WIDTHP, WP2, wbytes, weight_bufs, budget):
    divisors = [d for d in range(1, H + 1) if H % d == 0]
    fits = [d for d in divisors
            if _vmem_estimate(d, H, W, Cp, WIDTHP, WP2, wbytes, weight_bufs) <= budget]
    tile_h = max(fits) if fits else 1
    # keep >= 2 row tiles when N == 1 so both v7x TensorCores get work
    # (no effect on v5e/v6e: one TensorCore).
    if N == 1 and tile_h == H and H > 1:
        tile_h = max(d for d in divisors if d < H)
    return tile_h


# ------------------------------ fused kernel ---------------------------------

def _bottleneck_kernel(x_ref, w1_ref, b1_ref, w2_ref, b2_ref, w3_ref, b3_ref,
                       o_ref, h1p_ref, *, tile_h, W, WP2):
    # x_ref : (1, H+2, WP2, Cp)      bf16 padded image, resident across row tiles
    # w1_ref: (Cp, WIDTHP)           bf16, bn1 scale folded
    # w2_ref: (3, 3*WIDTHP, WIDTHP)  bf16, bn2 scale folded; block dy, row dx*WIDTHP+c
    # w3_ref: (WIDTHP, Cp)           bf16, bn3 scale folded
    # b*_ref: (1, C) f32 biases
    # o_ref : (1, tile_h, W, Cp) f32
    # h1p_ref: ((tile_h+2)*WP2, 3*WIDTHP) bf16 scratch — FLAT conv1 canvas;
    #          lane block dx holds the canvas shifted by dx columns, so every
    #          conv2 tap is an aligned contiguous slice.
    TH = tile_h
    t = pl.program_id(1)
    n_t = pl.num_programs(1)

    row0 = t * TH
    if TH % 8 == 0:
        row0 = pl.multiple_of(row0, 8)

    M1 = (TH + 2) * WP2          # halo'd rows, full canvas width (conv1 domain)
    M2 = TH * WP2                # output rows, full canvas width (conv2/3 domain)

    # ---- conv1 (1x1) + bn1 + relu over the halo'd row window ----------------
    xt = x_ref[0, pl.ds(row0, TH + 2), :, :]              # (TH+2, WP2, Cp) bf16
    a1 = xt.reshape(M1, xt.shape[-1])                     # layout no-op (WP2 % 16 == 0)
    g = jnp.dot(a1, w1_ref[...], preferred_element_type=jnp.float32)
    g = jnp.maximum(g + b1_ref[...], 0.0)                 # bn1 bias + relu (f32)
    widthp = g.shape[-1]

    # conv2's zero padding: canvas positions outside the image must be zero
    # (relu(bias) at x==0 padding would otherwise leak in); interior tile
    # halos keep neighbour-row data.
    g3 = g.reshape(TH + 2, WP2, widthp)                   # f32, layout no-op
    rows = lax.broadcasted_iota(jnp.int32, (TH + 2, WP2, 1), 0)
    cols = lax.broadcasted_iota(jnp.int32, (TH + 2, WP2, 1), 1)
    row_ok = jnp.logical_and(jnp.logical_or(rows >= 1, t > 0),
                             jnp.logical_or(rows <= TH, t < n_t - 1))
    col_ok = jnp.logical_and(cols >= 1, cols <= W)
    g3 = jnp.where(jnp.logical_and(row_ok, col_ok), g3, 0.0)
    g_flat = g3.reshape(M1, widthp)                       # f32, layout no-op

    # dx-grouped bf16 canvas: lane block dx = canvas shifted up by dx flat rows
    # (shift done once here in f32; the shifted-in tail rows only ever feed
    # discarded junk columns, keep them zero).
    for dx in range(3):
        shifted = g_flat if dx == 0 else jnp.concatenate(
            [g_flat[dx:, :], jnp.zeros((dx, widthp), jnp.float32)], axis=0)
        h1p_ref[:, dx * widthp:(dx + 1) * widthp] = shifted.astype(jnp.bfloat16)

    # ---- conv2 (3x3): 3 aligned flat taps (one per dy), accumulated in f32 --
    # Output flat row r = i*WP2 + j (columns j >= W are junk, discarded once at
    # the end); tap dy row r, lane block dx = canvas[(i+dy)*WP2 + j + dx].
    h2 = None
    for dy in range(3):
        tap = h1p_ref[pl.ds(dy * WP2, M2), :]             # (M2, 3*widthp) bf16, aligned
        part = jnp.dot(tap, w2_ref[dy], preferred_element_type=jnp.float32)
        h2 = part if h2 is None else h2 + part
    h2 = jnp.maximum(h2 + b2_ref[...], 0.0)               # bn2 bias + relu (f32)

    # ---- conv3 (1x1) + bn3 + residual + relu (epilogue math in f32) ---------
    h3 = jnp.dot(h2.astype(jnp.bfloat16), w3_ref[...],
                 preferred_element_type=jnp.float32) + b3_ref[...]   # (M2, Cp)
    cp = h3.shape[-1]
    h3 = h3.reshape(TH, WP2, cp)[:, :W, :]                # drop junk columns once
    xi = x_ref[0, pl.ds(row0 + 1, TH), :, :]              # identity rows (aligned VMEM re-read)
    ident = xi.astype(jnp.float32)[:, 1:W + 1, :]         # f32 column shift (cheap)
    o_ref[0] = jnp.maximum(h3 + ident, 0.0)


# -------------------------------- JAX wrapper --------------------------------

def bottleneck_forward(x_nchw, params, meta, *, tile_h=None, eps=1e-5):
    """Forward of Bottleneck((x, meta)) for the default (non-sparse) config."""
    N, Cin, H, W = x_nchw.shape
    w1 = params['conv1_w']                      # (width, Cin, 1, 1) OIHW
    w2 = params['conv2_w']                      # (width, width, 3, 3) OIHW
    w3 = params['conv3_w']                      # (Cout, width, 1, 1) OIHW
    width = w1.shape[0]
    Cout = w3.shape[0]
    assert Cout == Cin, "downsample=None identity shortcut requires Cout == Cin"

    Cp = _round_up(Cin, 128)                    # lane-dense channels
    WIDTHP = _round_up(width, 128)
    WP2 = _round_up(W + 2, 16)                  # canvas width: bf16 no-op reshapes

    wmode = _weight_pipeline_mode()             # pl.Buffered(1) or None
    wbufs = 1 if wmode is not None else 2
    wbytes = _weights_bytes(Cp, WIDTHP)
    cap = _vmem_capacity_bytes()
    budget = int(0.70 * cap)

    if tile_h is None:
        tile_h = _pick_tile_h(N, H, W, Cp, WIDTHP, WP2, wbytes, wbufs, budget)
    assert H % tile_h == 0
    n_ht = H // tile_h

    est = _vmem_estimate(tile_h, H, W, Cp, WIDTHP, WP2, wbytes, wbufs)
    vmem_limit = int(min(0.9 * cap, max(2 * est, 32 << 20)))

    # --- layout: NHWC, +1 spatial halo, channels padded to 128, bf16 ---------
    x_nhwc = jnp.transpose(x_nchw, (0, 2, 3, 1)).astype(jnp.float32)
    x_pad = jnp.pad(x_nhwc, ((0, 0), (1, 1), (1, WP2 - W - 1), (0, Cp - Cin)))
    x_pad = x_pad.astype(jnp.bfloat16)

    # --- fold BN (eval-mode running stats): scale into weights, keep bias ----
    s1, b1 = _fold_bn(params['bn1_gamma'], params['bn1_beta'],
                      params['bn1_mean'], params['bn1_var'], eps)
    s2, b2 = _fold_bn(params['bn2_gamma'], params['bn2_beta'],
                      params['bn2_mean'], params['bn2_var'], eps)
    s3, b3 = _fold_bn(params['bn3_gamma'], params['bn3_beta'],
                      params['bn3_mean'], params['bn3_var'], eps)

    w1_mat = jnp.transpose(w1[:, :, 0, 0]) * s1[None, :]            # (Cin, width)
    w1_p = (jnp.zeros((Cp, WIDTHP), jnp.float32)
            .at[:Cin, :width].set(w1_mat).astype(jnp.bfloat16))
    b1_p = jnp.zeros((1, WIDTHP), jnp.float32).at[0, :width].set(b1)

    # (ky, kx, I, O), dx-grouped to match the canvas lane blocks: block dy,
    # row dx*WIDTHP + c.
    w2_t = jnp.transpose(w2, (2, 3, 1, 0)) * s2[None, None, None, :]
    w2_p = (jnp.zeros((3, 3, WIDTHP, WIDTHP), jnp.float32)
            .at[:, :, :width, :width].set(w2_t)
            .reshape(3, 3 * WIDTHP, WIDTHP).astype(jnp.bfloat16))
    b2_p = jnp.zeros((1, WIDTHP), jnp.float32).at[0, :width].set(b2)

    w3_mat = jnp.transpose(w3[:, :, 0, 0]) * s3[None, :]            # (width, Cout)
    w3_p = (jnp.zeros((WIDTHP, Cp), jnp.float32)
            .at[:width, :Cout].set(w3_mat).astype(jnp.bfloat16))
    b3_p = jnp.zeros((1, Cp), jnp.float32).at[0, :Cout].set(b3)

    def _const_spec(shape):
        idx = lambda n, t, _s=shape: (0,) * len(_s)
        if wmode is not None:
            return pl.BlockSpec(shape, idx, pipeline_mode=wmode)
        return pl.BlockSpec(shape, idx)

    kernel = functools.partial(_bottleneck_kernel,
                               tile_h=tile_h, W=W, WP2=WP2)

    out_padded = pl.pallas_call(
        kernel,
        out_shape=jax.ShapeDtypeStruct((N, H, W, Cp), jnp.float32),
        grid_spec=pltpu.PrefetchScalarGridSpec(
            num_scalar_prefetch=0,
            grid=(N, n_ht),
            in_specs=[
                # padded image: resident across the row-tile axis (halo free)
                pl.BlockSpec((1, H + 2, WP2, Cp), lambda n, t: (n, 0, 0, 0)),
                _const_spec((Cp, WIDTHP)),
                _const_spec((1, WIDTHP)),
                _const_spec((3, 3 * WIDTHP, WIDTHP)),
                _const_spec((1, WIDTHP)),
                _const_spec((WIDTHP, Cp)),
                _const_spec((1, Cp)),
            ],
            out_specs=pl.BlockSpec((1, tile_h, W, Cp),
                                   lambda n, t: (n, t, 0, 0)),
            scratch_shapes=[pltpu.VMEM(((tile_h + 2) * WP2, 3 * WIDTHP),
                                       jnp.bfloat16)],
        ),
        compiler_params=pltpu.CompilerParams(
            dimension_semantics=("parallel", "parallel"),
            vmem_limit_bytes=vmem_limit),
    )(x_pad, w1_p, b1_p, w2_p, b2_p, w3_p, b3_p)

    out = out_padded[:, :, :, :Cout]
    out_nchw = jnp.transpose(out, (0, 3, 1, 2))
    new_meta = dict(meta)
    new_meta['block_id'] = new_meta.get('block_id', 0) + 1
    return out_nchw, new_meta


# --------------------------- deterministic parameters ------------------------

def init_params(key, inplanes, planes, base_width=64, groups=1, expansion=4):
    width = int(planes * (base_width / 64.0)) * groups
    outplanes = planes * expansion
    keys = jax.random.split(key, 6)

    def bn_params(k, c):
        k1, k2, k3, k4 = jax.random.split(k, 4)
        gamma = jax.random.uniform(k1, (c,), jnp.float32, 0.5, 1.5)
        beta = 0.1 * jax.random.normal(k2, (c,), jnp.float32)
        mean = 0.1 * jax.random.normal(k3, (c,), jnp.float32)
        var = jax.random.uniform(k4, (c,), jnp.float32, 0.5, 1.5)
        return gamma, beta, mean, var

    p = {}
    p['conv1_w'] = 0.1 * jax.random.normal(keys[0], (width, inplanes, 1, 1), jnp.float32)
    p['conv2_w'] = 0.1 * jax.random.normal(keys[1], (width, width, 3, 3), jnp.float32)
    p['conv3_w'] = 0.1 * jax.random.normal(keys[2], (outplanes, width, 1, 1), jnp.float32)
    (p['bn1_gamma'], p['bn1_beta'], p['bn1_mean'], p['bn1_var']) = bn_params(keys[3], width)
    (p['bn2_gamma'], p['bn2_beta'], p['bn2_mean'], p['bn2_var']) = bn_params(keys[4], width)
    (p['bn3_gamma'], p['bn3_beta'], p['bn3_mean'], p['bn3_var']) = bn_params(keys[5], outplanes)
    return p


# ----------------------------- pure-JAX references ---------------------------

def reference_forward(x, p, eps=1e-5):
    """Exact f32 reference of the PyTorch module (conv/bn/relu, unfused)."""
    dn = ('NCHW', 'OIHW', 'NCHW')
    hi = lax.Precision.HIGHEST

    def bn(y, g, b, m, v):
        g, b, m, v = (a.reshape(1, -1, 1, 1) for a in (g, b, m, v))
        return g * (y - m) / jnp.sqrt(v + eps) + b

    out = lax.conv_general_dilated(x, p['conv1_w'], (1, 1), 'VALID',
                                   dimension_numbers=dn, precision=hi)
    out = jax.nn.relu(bn(out, p['bn1_gamma'], p['bn1_beta'], p['bn1_mean'], p['bn1_var']))
    out = lax.conv_general_dilated(out, p['conv2_w'], (1, 1), ((1, 1), (1, 1)),
                                   dimension_numbers=dn, precision=hi)
    out = jax.nn.relu(bn(out, p['bn2_gamma'], p['bn2_beta'], p['bn2_mean'], p['bn2_var']))
    out = lax.conv_general_dilated(out, p['conv3_w'], (1, 1), 'VALID',
                                   dimension_numbers=dn, precision=hi)
    out = bn(out, p['bn3_gamma'], p['bn3_beta'], p['bn3_mean'], p['bn3_var'])
    return jax.nn.relu(out + x)


def reference_forward_mixed(x, p, eps=1e-5):
    """Mirror of the kernel's precision pipeline: BN folded into weights,
    matmul operands rounded to bf16, f32 accumulation / bias / residual."""
    dn = ('NCHW', 'OIHW', 'NCHW')
    hi = lax.Precision.HIGHEST
    rb = lambda a: a.astype(jnp.bfloat16).astype(jnp.float32)

    s1, b1 = _fold_bn(p['bn1_gamma'], p['bn1_beta'], p['bn1_mean'], p['bn1_var'], eps)
    s2, b2 = _fold_bn(p['bn2_gamma'], p['bn2_beta'], p['bn2_mean'], p['bn2_var'], eps)
    s3, b3 = _fold_bn(p['bn3_gamma'], p['bn3_beta'], p['bn3_mean'], p['bn3_var'], eps)

    xb = rb(x)
    w1 = rb(p['conv1_w'] * s1[:, None, None, None])
    h = lax.conv_general_dilated(xb, w1, (1, 1), 'VALID',
                                 dimension_numbers=dn, precision=hi)
    h = rb(jax.nn.relu(h + b1.reshape(1, -1, 1, 1)))
    w2 = rb(p['conv2_w'] * s2[:, None, None, None])
    h = lax.conv_general_dilated(h, w2, (1, 1), ((1, 1), (1, 1)),
                                 dimension_numbers=dn, precision=hi)
    h = rb(jax.nn.relu(h + b2.reshape(1, -1, 1, 1)))
    w3 = rb(p['conv3_w'] * s3[:, None, None, None])
    h = lax.conv_general_dilated(h, w3, (1, 1), 'VALID',
                                 dimension_numbers=dn, precision=hi)
    h = h + b3.reshape(1, -1, 1, 1)
    return jax.nn.relu(h + xb)


if __name__ == "__main__":
    key = jax.random.PRNGKey(0)
    kx, kp = jax.random.split(key)

    # Bottleneck(inplanes=16, planes=4): width=4, output channels = 4*4 = 16,
    # so the identity shortcut (downsample=None) is shape-compatible.
    N, inplanes, H, W = 2, 16, 16, 16
    planes = 4

    x = jax.random.normal(kx, (N, inplanes, H, W), jnp.float32)
    params = init_params(kp, inplanes, planes)
    meta = {'block_id': 0, 'stage_id': 0, 'masks': []}

    ref32 = reference_forward(x, params)
    refmx = reference_forward_mixed(x, params)

    # tile_h=None -> auto (single row tile here); tile_h=8 exercises the halo
    # logic / border masking across interior row-tile boundaries.
    for th in (None, 8):
        out, new_meta = bottleneck_forward(x, params, meta, tile_h=th)
        out = jax.block_until_ready(out)
        assert out.shape == ref32.shape == (N, inplanes, H, W)
        assert new_meta['block_id'] == 1
        err_mx = float(jnp.max(jnp.abs(out - refmx)))   # implementation check
        err_32 = float(jnp.max(jnp.abs(out - ref32)))   # semantics (bf16 inputs)
        if err_mx > 1e-3:
            raise AssertionError(f"tile_h={th}: mismatch vs mixed-precision "
                                 f"reference: max|err|={err_mx}")
        if err_32 > 5e-2:
            raise AssertionError(f"tile_h={th}: mismatch vs f32 reference: "
                                 f"max|err|={err_32}")

    print("KERNEL_OK")
</pallas_src>

<mosaic_0001>
module attributes {stable_mosaic.version = 11 : i64} {
  func.func @_k(%arg0: i32, %arg1: i32, %arg2: memref<8x128xf32, #tpu.memory_space<vmem>>, %arg3: memref<1x8x128xf32, #tpu.memory_space<vmem>>, %arg4: memref<1x8x128xf32, #tpu.memory_space<vmem>>) attributes {dimension_semantics = [#tpu.dimension_semantics<parallel>, #tpu.dimension_semantics<parallel>], iteration_bounds = array<i64: 2, 1>, scalar_prefetch = 0 : i64, scratch_operands = 0 : i64, tpu.core_type = #tpu.core_type<tc>, window_params = [{pipeline_mode = #tpu.pipeline_mode<synchronous>, transform_indices = @transform_0, window_bounds = array<i64: 8, 128>}, {transform_indices = @transform_1, window_bounds = array<i64: 1, 8, 128>}, {transform_indices = @transform_2, window_bounds = array<i64: 1, 8, 128>}]} {
    %c0 = arith.constant 0 : index
    %c0_0 = arith.constant 0 : index
    %c0_1 = arith.constant 0 : index
    %0 = vector.load %arg3[%c0, %c0_0, %c0_1] : memref<1x8x128xf32, #tpu.memory_space<vmem>>, vector<1x8x128xf32>
    %c0_2 = arith.constant 0 : index
    %c0_3 = arith.constant 0 : index
    %1 = vector.load %arg2[%c0_2, %c0_3] : memref<8x128xf32, #tpu.memory_space<vmem>>, vector<8x128xf32>
    %2 = vector.shape_cast %1 : vector<8x128xf32> to vector<1x8x128xf32>
    %3 = arith.addf %0, %2 : vector<1x8x128xf32>
    %c0_4 = arith.constant 0 : index
    %c0_5 = arith.constant 0 : index
    %c0_6 = arith.constant 0 : index
    %4 = vector.load %arg4[%c0_4, %c0_5, %c0_6] : memref<1x8x128xf32, #tpu.memory_space<vmem>>, vector<1x8x128xf32>
    tpu.vector_store %arg4[%c0_4, %c0_5, %c0_6], %3 {strides = array<i32>} : memref<1x8x128xf32, #tpu.memory_space<vmem>>, vector<1x8x128xf32>,
    return
  }
  func.func @transform_0(%arg0: i32, %arg1: i32) -> (i32, i32) {
    %c0_i32 = arith.constant 0 : i32
    %c0_i32_0 = arith.constant 0 : i32
    %c0_i32_1 = arith.constant 0 : i32
    return %c0_i32, %c0_i32_0 : i32, i32
  }
  func.func @transform_1(%arg0: i32, %arg1: i32) -> (i32, i32, i32) {
    %c0_i32 = arith.constant 0 : i32
    %c0_i32_0 = arith.constant 0 : i32
    %c0_i32_1 = arith.constant 0 : i32
    return %arg0, %c0_i32, %c0_i32_0 : i32, i32, i32
  }
  func.func @transform_2(%arg0: i32, %arg1: i32) -> (i32, i32, i32) {
    %c0_i32 = arith.constant 0 : i32
    %c0_i32_0 = arith.constant 0 : i32
    %c0_i32_1 = arith.constant 0 : i32
    return %arg0, %c0_i32, %c0_i32_0 : i32, i32, i32
  }
}

module attributes {stable_mosaic.version = 11 : i64} {
  func.func @_bottleneck_kernel(%arg0: i32, %arg1: i32, %arg2: memref<1x18x32x128xbf16, #tpu.memory_space<vmem>>, %arg3: memref<128x128xbf16, #tpu.memory_space<vmem>>, %arg4: memref<1x128xf32, #tpu.memory_space<vmem>>, %arg5: memref<3x384x128xbf16, #tpu.memory_space<vmem>>, %arg6: memref<1x128xf32, #tpu.memory_space<vmem>>, %arg7: memref<128x128xbf16, #tpu.memory_space<vmem>>, %arg8: memref<1x128xf32, #tpu.memory_space<vmem>>, %arg9: memref<1x16x16x128xf32, #tpu.memory_space<vmem>>, %arg10: memref<576x384xbf16, #tpu.memory_space<vmem>>) attributes {dimension_semantics = [#tpu.dimension_semantics<parallel>, #tpu.dimension_semantics<parallel>], iteration_bounds = array<i64: 2, 1>, scalar_prefetch = 0 : i64, scratch_operands = 1 : i64, tpu.core_type = #tpu.core_type<tc>, window_params = [{transform_indices = @transform_0, window_bounds = array<i64: 1, 18, 32, 128>}, {pipeline_mode = #tpu.pipeline_mode<synchronous>, transform_indices = @transform_1, window_bounds = array<i64: 128, 128>}, {pipeline_mode = #tpu.pipeline_mode<synchronous>, transform_indices = @transform_2, window_bounds = array<i64: 1, 128>}, {pipeline_mode = #tpu.pipeline_mode<synchronous>, transform_indices = @transform_3, window_bounds = array<i64: 3, 384, 128>}, {pipeline_mode = #tpu.pipeline_mode<synchronous>, transform_indices = @transform_4, window_bounds = array<i64: 1, 128>}, {pipeline_mode = #tpu.pipeline_mode<synchronous>, transform_indices = @transform_5, window_bounds = array<i64: 128, 128>}, {pipeline_mode = #tpu.pipeline_mode<synchronous>, transform_indices = @transform_6, window_bounds = array<i64: 1, 128>}, {transform_indices = @transform_7, window_bounds = array<i64: 1, 16, 16, 128>}]} {
    %c16_i32 = arith.constant 16 : i32
    %0 = arith.muli %arg1, %c16_i32 : i32
    %1 = tpu.assume_multiple %0, 8 : i32
    %c0 = arith.constant 0 : index
    %2 = arith.index_cast %1 : i32 to index
    %c0_0 = arith.constant 0 : index
    %c0_1 = arith.constant 0 : index
    %3 = vector.load %arg2[%c0, %2, %c0_0, %c0_1] : memref<1x18x32x128xbf16, #tpu.memory_space<vmem>>, vector<1x18x32x128xbf16>
    %4 = vector.shape_cast %3 : vector<1x18x32x128xbf16> to vector<18x32x128xbf16>
    %5 = vector.shape_cast %4 : vector<18x32x128xbf16> to vector<576x128xbf16>
    %c0_2 = arith.constant 0 : index
    %c0_3 = arith.constant 0 : index
    %6 = vector.load %arg3[%c0_2, %c0_3] : memref<128x128xbf16, #tpu.memory_space<vmem>>, vector<128x128xbf16>
    %cst = arith.constant dense<0.000000e+00> : vector<576x128xf32>
    %7 = tpu.matmul %5, %6, %cst {dimension_numbers = #tpu.dot_dimension_numbers<[1], [0], [0], [1], [0, 0, 1, 1], [], []>} : vector<576x128xbf16>, vector<128x128xbf16>, vector<576x128xf32> -> vector<576x128xf32>
    %c0_4 = arith.constant 0 : index
    %c0_5 = arith.constant 0 : index
    %8 = vector.load %arg4[%c0_4, %c0_5] : memref<1x128xf32, #tpu.memory_space<vmem>>, vector<1x128xf32>
    %9 = vector.broadcast %8 : vector<1x128xf32> to vector<576x128xf32>
    %10 = arith.addf %7, %9 : vector<576x128xf32>
    %cst_6 = arith.constant 0.000000e+00 : f32
    %11 = vector.broadcast %cst_6 : f32 to vector<576x128xf32>
    %12 = arith.maximumf %10, %11 : vector<576x128xf32>
    %13 = vector.shape_cast %12 : vector<576x128xf32> to vector<18x32x128xf32>
    %14 = tpu.iota {dimensions = array<i32: 0>} : vector<18x32x1xi32>
    %15 = tpu.iota {dimensions = array<i32: 1>} : vector<18x32x1xi32>
    %c1_i32 = arith.constant 1 : i32
    %16 = vector.broadcast %c1_i32 : i32 to vector<18x32x1xi32>
    %17 = arith.cmpi sge, %14, %16 : vector<18x32x1xi32>
    %c0_i32 = arith.constant 0 : i32
    %18 = arith.cmpi sgt, %arg1, %c0_i32 : i32
    %19 = vector.broadcast %18 : i1 to vector<18x32x1xi1>
    %20 = arith.ori %17, %19 : vector<18x32x1xi1>
    %c16_i32_7 = arith.constant 16 : i32
    %21 = vector.broadcast %c16_i32_7 : i32 to vector<18x32x1xi32>
    %22 = arith.cmpi sle, %14, %21 : vector<18x32x1xi32>
    %c0_i32_8 = arith.constant 0 : i32
    %23 = arith.cmpi slt, %arg1, %c0_i32_8 : i32
    %24 = vector.broadcast %23 : i1 to vector<18x32x1xi1>
    %25 = arith.ori %22, %24 : vector<18x32x1xi1>
    %26 = arith.andi %20, %25 : vector<18x32x1xi1>
    %c1_i32_9 = arith.constant 1 : i32
    %27 = vector.broadcast %c1_i32_9 : i32 to vector<18x32x1xi32>
    %28 = arith.cmpi sge, %15, %27 : vector<18x32x1xi32>
    %c16_i32_10 = arith.constant 16 : i32
    %29 = vector.broadcast %c16_i32_10 : i32 to vector<18x32x1xi32>
    %30 = arith.cmpi sle, %15, %29 : vector<18x32x1xi32>
    %31 = arith.andi %28, %30 : vector<18x32x1xi1>
    %32 = arith.andi %26, %31 : vector<18x32x1xi1>
    %cst_11 = arith.constant 0.000000e+00 : f32
    %33 = vector.shape_cast %32 : vector<18x32x1xi1> to vector<18x32x1xi1>
    %34 = vector.broadcast %33 : vector<18x32x1xi1> to vector<18x32x128xi1>
    %35 = vector.broadcast %cst_11 : f32 to vector<18x32x128xf32>
    %36 = arith.select %34, %13, %35 : vector<18x32x128xi1>, vector<18x32x128xf32>
    %37 = vector.shape_cast %36 : vector<18x32x128xf32> to vector<576x128xf32>
    %38 = arith.truncf %37 : vector<576x128xf32> to vector<576x128xbf16>
    %c0_12 = arith.constant 0 : index
    %c0_13 = arith.constant 0 : index
    %39 = vector.load %arg10[%c0_12, %c0_13] : memref<576x384xbf16, #tpu.memory_space<vmem>>, vector<576x128xbf16>
    tpu.vector_store %arg10[%c0_12, %c0_13], %38 {strides = array<i32>} : memref<576x384xbf16, #tpu.memory_space<vmem>>, vector<576x128xbf16>,
    %40 = vector.extract_strided_slice %37 {offsets = [1, 0], sizes = [575, 128], strides = [1, 1]} : vector<576x128xf32> to vector<575x128xf32>
    %cst_14 = arith.constant 0.000000e+00 : f32
    %41 = vector.broadcast %cst_14 : f32 to vector<1x128xf32>
    %42 = tpu.concatenate %40, %41 in 0 : vector<575x128xf32>, vector<1x128xf32> -> vector<576x128xf32>
    %43 = arith.truncf %42 : vector<576x128xf32> to vector<576x128xbf16>
    %c0_15 = arith.constant 0 : index
    %c128 = arith.constant 128 : index
    %44 = vector.load %arg10[%c0_15, %c128] : memref<576x384xbf16, #tpu.memory_space<vmem>>, vector<576x128xbf16>
    tpu.vector_store %arg10[%c0_15, %c128], %43 {strides = array<i32>} : memref<576x384xbf16, #tpu.memory_space<vmem>>, vector<576x128xbf16>,
    %45 = vector.extract_strided_slice %37 {offsets = [2, 0], sizes = [574, 128], strides = [1, 1]} : vector<576x128xf32> to vector<574x128xf32>
    %cst_16 = arith.constant 0.000000e+00 : f32
    %46 = vector.broadcast %cst_16 : f32 to vector<2x128xf32>
    %47 = tpu.concatenate %45, %46 in 0 : vector<574x128xf32>, vector<2x128xf32> -> vector<576x128xf32>
    %48 = arith.truncf %47 : vector<576x128xf32> to vector<576x128xbf16>
    %c0_17 = arith.constant 0 : index
    %c256 = arith.constant 256 : index
    %49 = vector.load %arg10[%c0_17, %c256] : memref<576x384xbf16, #tpu.memory_space<vmem>>, vector<576x128xbf16>
    tpu.vector_store %arg10[%c0_17, %c256], %48 {strides = array<i32>} : memref<576x384xbf16, #tpu.memory_space<vmem>>, vector<576x128xbf16>,
    %c0_18 = arith.constant 0 : index
    %c0_19 = arith.constant 0 : index
    %50 = vector.load %arg10[%c0_18, %c0_19] : memref<576x384xbf16, #tpu.memory_space<vmem>>, vector<512x384xbf16>
    %c0_20 = arith.constant 0 : index
    %c0_21 = arith.constant 0 : index
    %c0_22 = arith.constant 0 : index
    %51 = vector.load %arg5[%c0_20, %c0_21, %c0_22] : memref<3x384x128xbf16, #tpu.memory_space<vmem>>, vector<1x384x128xbf16>
    %52 = vector.shape_cast %51 : vector<1x384x128xbf16> to vector<384x128xbf16>
    %cst_23 = arith.constant dense<0.000000e+00> : vector<512x128xf32>
    %53 = tpu.matmul %50, %52, %cst_23 {dimension_numbers = #tpu.dot_dimension_numbers<[1], [0], [0], [1], [0, 0, 1, 1], [], []>} : vector<512x384xbf16>, vector<384x128xbf16>, vector<512x128xf32> -> vector<512x128xf32>
    %c32 = arith.constant 32 : index
    %c0_24 = arith.constant 0 : index
    %54 = vector.load %arg10[%c32, %c0_24] : memref<576x384xbf16, #tpu.memory_space<vmem>>, vector<512x384xbf16>
    %c1 = arith.constant 1 : index
    %c0_25 = arith.constant 0 : index
    %c0_26 = arith.constant 0 : index
    %55 = vector.load %arg5[%c1, %c0_25, %c0_26] : memref<3x384x128xbf16, #tpu.memory_space<vmem>>, vector<1x384x128xbf16>
    %56 = vector.shape_cast %55 : vector<1x384x128xbf16> to vector<384x128xbf16>
    %cst_27 = arith.constant dense<0.000000e+00> : vector<512x128xf32>
    %57 = tpu.matmul %54, %56, %cst_27 {dimension_numbers = #tpu.dot_dimension_numbers<[1], [0], [0], [1], [0, 0, 1, 1], [], []>} : vector<512x384xbf16>, vector<384x128xbf16>, vector<512x128xf32> -> vector<512x128xf32>
    %58 = arith.addf %53, %57 : vector<512x128xf32>
    %c64 = arith.constant 64 : index
    %c0_28 = arith.constant 0 : index
    %59 = vector.load %arg10[%c64, %c0_28] : memref<576x384xbf16, #tpu.memory_space<vmem>>, vector<512x384xbf16>
    %c2 = arith.constant 2 : index
    %c0_29 = arith.constant 0 : index
    %c0_30 = arith.constant 0 : index
    %60 = vector.load %arg5[%c2, %c0_29, %c0_30] : memref<3x384x128xbf16, #tpu.memory_space<vmem>>, vector<1x384x128xbf16>
    %61 = vector.shape_cast %60 : vector<1x384x128xbf16> to vector<384x128xbf16>
    %cst_31 = arith.constant dense<0.000000e+00> : vector<512x128xf32>
    %62 = tpu.matmul %59, %61, %cst_31 {dimension_numbers = #tpu.dot_dimension_numbers<[1], [0], [0], [1], [0, 0, 1, 1], [], []>} : vector<512x384xbf16>, vector<384x128xbf16>, vector<512x128xf32> -> vector<512x128xf32>
    %63 = arith.addf %58, %62 : vector<512x128xf32>
    %c0_32 = arith.constant 0 : index
    %c0_33 = arith.constant 0 : index
    %64 = vector.load %arg6[%c0_32, %c0_33] : memref<1x128xf32, #tpu.memory_space<vmem>>, vector<1x128xf32>
    %65 = vector.broadcast %64 : vector<1x128xf32> to vector<512x128xf32>
    %66 = arith.addf %63, %65 : vector<512x128xf32>
    %cst_34 = arith.constant 0.000000e+00 : f32
    %67 = vector.broadcast %cst_34 : f32 to vector<512x128xf32>
    %68 = arith.maximumf %66, %67 : vector<512x128xf32>
    %69 = arith.truncf %68 : vector<512x128xf32> to vector<512x128xbf16>
    %c0_35 = arith.constant 0 : index
    %c0_36 = arith.constant 0 : index
    %70 = vector.load %arg7[%c0_35, %c0_36] : memref<128x128xbf16, #tpu.memory_space<vmem>>, vector<128x128xbf16>
    %cst_37 = arith.constant dense<0.000000e+00> : vector<512x128xf32>
    %71 = tpu.matmul %69, %70, %cst_37 {dimension_numbers = #tpu.dot_dimension_numbers<[1], [0], [0], [1], [0, 0, 1, 1], [], []>} : vector<512x128xbf16>, vector<128x128xbf16>, vector<512x128xf32> -> vector<512x128xf32>
    %c0_38 = arith.constant 0 : index
    %c0_39 = arith.constant 0 : index
    %72 = vector.load %arg8[%c0_38, %c0_39] : memref<1x128xf32, #tpu.memory_space<vmem>>, vector<1x128xf32>
    %73 = vector.broadcast %72 : vector<1x128xf32> to vector<512x128xf32>
    %74 = arith.addf %71, %73 : vector<512x128xf32>
    %75 = vector.shape_cast %74 : vector<512x128xf32> to vector<16x32x128xf32>
    %76 = vector.extract_strided_slice %75 {offsets = [0, 0, 0], sizes = [16, 16, 128], strides = [1, 1, 1]} : vector<16x32x128xf32> to vector<16x16x128xf32>
    %c1_i32_40 = arith.constant 1 : i32
    %77 = arith.addi %1, %c1_i32_40 : i32
    %c0_41 = arith.constant 0 : index
    %78 = arith.index_cast %77 : i32 to index
    %c0_42 = arith.constant 0 : index
    %c0_43 = arith.constant 0 : index
    %79 = vector.load %arg2[%c0_41, %78, %c0_42, %c0_43] : memref<1x18x32x128xbf16, #tpu.memory_space<vmem>>, vector<1x16x32x128xbf16>
    %80 = vector.shape_cast %79 : vector<1x16x32x128xbf16> to vector<16x32x128xbf16>
    %81 = arith.extf %80 : vector<16x32x128xbf16> to vector<16x32x128xf32>
    %82 = vector.extract_strided_slice %81 {offsets = [0, 1, 0], sizes = [16, 16, 128], strides = [1, 1, 1]} : vector<16x32x128xf32> to vector<16x16x128xf32>
    %83 = arith.addf %76, %82 : vector<16x16x128xf32>
    %cst_44 = arith.constant 0.000000e+00 : f32
    %84 = vector.broadcast %cst_44 : f32 to vector<16x16x128xf32>
    %85 = arith.maximumf %83, %84 : vector<16x16x128xf32>
    %c0_45 = arith.constant 0 : index
    %c0_46 = arith.constant 0 : index
    %c0_47 = arith.constant 0 : index
    %c0_48 = arith.constant 0 : index
    %86 = vector.load %arg9[%c0_45, %c0_46, %c0_47, %c0_48] : memref<1x16x16x128xf32, #tpu.memory_space<vmem>>, vector<1x16x16x128xf32>
    %87 = vector.shape_cast %86 : vector<1x16x16x128xf32> to vector<16x16x128xf32>
    %88 = vector.shape_cast %85 : vector<16x16x128xf32> to vector<1x16x16x128xf32>
    tpu.vector_store %arg9[%c0_45, %c0_46, %c0_47, %c0_48], %88 {strides = array<i32>} : memref<1x16x16x128xf32, #tpu.memory_space<vmem>>, vector<1x16x16x128xf32>,
    return
  }
  func.func @transform_0(%arg0: i32, %arg1: i32) -> (i32, i32, i32, i32) {
    %c0_i32 = arith.constant 0 : i32
    %c0_i32_0 = arith.constant 0 : i32
    %c0_i32_1 = arith.constant 0 : i32
    %c0_i32_2 = arith.constant 0 : i32
    return %arg0, %c0_i32, %c0_i32_0, %c0_i32_1 : i32, i32, i32, i32
  }
  func.func @transform_1(%arg0: i32, %arg1: i32) -> (i32, i32) {
    %c0_i32 = arith.constant 0 : i32
    %c0_i32_0 = arith.constant 0 : i32
    %c0_i32_1 = arith.constant 0 : i32
    return %c0_i32, %c0_i32_0 : i32, i32
  }
  func.func @transform_2(%arg0: i32, %arg1: i32) -> (i32, i32) {
    %c0_i32 = arith.constant 0 : i32
    %c0_i32_0 = arith.constant 0 : i32
    %c0_i32_1 = arith.constant 0 : i32
    return %c0_i32, %c0_i32_0 : i32, i32
  }
  func.func @transform_3(%arg0: i32, %arg1: i32) -> (i32, i32, i32) {
    %c0_i32 = arith.constant 0 : i32
    %c0_i32_0 = arith.constant 0 : i32
    %c0_i32_1 = arith.constant 0 : i32
    %c0_i32_2 = arith.constant 0 : i32
    return %c0_i32, %c0_i32_0, %c0_i32_1 : i32, i32, i32
  }
  func.func @transform_4(%arg0: i32, %arg1: i32) -> (i32, i32) {
    %c0_i32 = arith.constant 0 : i32
    %c0_i32_0 = arith.constant 0 : i32
    %c0_i32_1 = arith.constant 0 : i32
    return %c0_i32, %c0_i32_0 : i32, i32
  }
  func.func @transform_5(%arg0: i32, %arg1: i32) -> (i32, i32) {
    %c0_i32 = arith.constant 0 : i32
    %c0_i32_0 = arith.constant 0 : i32
    %c0_i32_1 = arith.constant 0 : i32
    return %c0_i32, %c0_i32_0 : i32, i32
  }
  func.func @transform_6(%arg0: i32, %arg1: i32) -> (i32, i32) {
    %c0_i32 = arith.constant 0 : i32
    %c0_i32_0 = arith.constant 0 : i32
    %c0_i32_1 = arith.constant 0 : i32
    return %c0_i32, %c0_i32_0 : i32, i32
  }
  func.func @transform_7(%arg0: i32, %arg1: i32) -> (i32, i32, i32, i32) {
    %c0_i32 = arith.constant 0 : i32
    %c0_i32_0 = arith.constant 0 : i32
    %c0_i32_1 = arith.constant 0 : i32
    return %arg0, %arg1, %c0_i32, %c0_i32_0 : i32, i32, i32, i32
  }
}

</mosaic_0001>

<llo_original>
// kernel: tpu_custom_call.1
$region0: #{tpu_custom_call.1}
  #allocation0 [shape = 'u32[]', space=smem, size = 0x4, offset = 0x4, fixed_abs, tag = 'smem constant byte address 0x4 - core index']
  #allocation1 [shape = 'u32[144,128]{1,0:T(1,128)}', space=vmem, size = 0x12000, scoped, tag = 'internal scratch']
  %s0 = inlined_call_operand.hbm [shape: f32[8,128], index: 0, kind: input, shape index: {}]
  %s1 = inlined_call_operand.hbm [shape: f32[2,8,128], index: 1, kind: input, shape index: {}]
  %s2 = inlined_call_operand.hbm [shape: f32[2,8,128], index: 2, kind: output, shape index: {}]
  %s3 = sld [smem:[#allocation0]]
  $region49: #{tpu_custom_call.1} parent=0
    _
  %s5 = ssub.s32 1, %s3
  %s6 = scalar_select 0, %s5, %s3
  $region1: #{tpu_custom_call.1} parent=0
    #allocation2 [shape = 'u8[4096]{0}', space=vmem, size = 0x1000, scoped, tag = 'input window, operand 0, single buffered']
    #allocation3 [shape = 's32[2]{0}', space=sflag, size = 0x8, scoped, tag = 'scoped memory for tpu_custom_call.1']
    #allocation4 [shape = 's32[2]{0}', space=sflag, size = 0x8, scoped, tag = 'scoped memory for tpu_custom_call.1']
    #allocation5 [shape = 'u8[8192]{0}', space=vmem, size = 0x2000, scoped, tag = 'input window, operand 1']
    #allocation6 [shape = 's32[2]{0}', space=sflag, size = 0x8, scoped, tag = 'scoped memory for tpu_custom_call.1']
    #allocation7 [shape = 'u8[8192]{0}', space=vmem, size = 0x2000, scoped, tag = 'output window, operand 0']
    %7 = vsyncpa [#allocation3], 0
    %8 = vsyncpa [#allocation6], 0
    %s9 = scalar_lea.sflag [#allocation6], 1
    %10 = vsyncpa %s9, 0
    %11 = vsyncpa [#allocation4], 0
    %s12 = scalar_lea.sflag [#allocation4], 1
    %13 = vsyncpa %s12, 0
    loop: start=0, step=1, limit=4
    $region2: #{tpu_custom_call.1} parent=1 // loop_pre_header
      _
    $region3: #{tpu_custom_call.1} parent=1 // loop_header
      %s15 = sphi 0, %s19
      %p16 = scmp.ge.s32.totalorder %s15, 4
      %s22 = sphi 0, %s34
      %s23 = sphi 0, %s30
      %s24 = sphi 0, %s22
      %s25 = sphi 0, %s23
      %s26 = sphi 0, %s24
      %s27 = sphi 0, %s25
      %s35 = sphi 0, %s35
      %s37 = sphi 0, %s35
      %s38 = sphi 0, %s37
      %s52 = sphi 0, %s38
      %s58 = sphi 0, %s60
      %s61 = sphi 0, %s58
      %s62 = sphi 0, %s61
      %s78 = sphi 0, %s62
      %s84 = sphi 0, %s86
      %s87 = sphi 0, %s84
      %s88 = sphi 0, %s87
      %s104 = sphi 0, %s88
    $region4: #{tpu_custom_call.1} parent=1 // loop_header_branch
      %18 = sbr.rel (%p16) target = $region8
    $region5: #{tpu_custom_call.1} parent=1 // loop_body
      %s20 = ssub.s32 %s15, 1
      %s21 = ssub.s32 %s15, 2
      %s28 = sadd.s32 1, %s23
      %p29 = scmp.ge.s32.totalorder %s28, 1
      %s30 = scalar_select %p29, 0, %s28
      %s31 = sadd.s32 1, %s22
      %s32 = scalar_select %p29, %s31, %s22
      %p33 = scmp.ge.s32.totalorder %s32, 2
      %s34 = scalar_select %p33, 0, %s32
      %s36 = sadd.s32 %s35, 1
      %p39 = scmp.eq.s32.totalorder %s15, 1
      %p40 = scmp.ne.s32.totalorder %s35, %s37
      %p41 = scmp.eq.s32.totalorder %s15, 0
      %p42 = por %p40, %p41
      %p43 = scmp.ne.s32.totalorder %s35, %s37
      %p44 = scmp.eq.s32.totalorder %s20, 1
      %p45 = por %p43, %p44
      %p46 = scmp.ne.s32.totalorder %s37, %s38
      %p47 = scmp.eq.s32.totalorder %s20, 0
      %p48 = por %p46, %p47
      %p49 = scmp.ne.s32.totalorder %s37, %s38
      %p50 = scmp.eq.s32.totalorder %s21, 1
      %p51 = por %p49, %p50
      %p53 = scmp.ne.s32.totalorder %s38, %s52
      %p54 = scmp.eq.s32.totalorder %s21, 0
      %p55 = por %p53, %p54
      %s56 = ssub.s32 %s22, %s34
      %p57 = scmp.eq.s32.totalorder %s56, 0
      %s59 = sadd.s32 %s58, 1
      %s60 = scalar_select %p57, %s58, %s59
      %p63 = pneg %p57
      %p64 = scmp.eq.s32.totalorder %s15, 1
      %p65 = por %p63, %p64
      %p66 = scmp.ne.s32.totalorder %s58, %s61
      %p67 = scmp.eq.s32.totalorder %s15, 0
      %p68 = por %p66, %p67
      %p69 = scmp.ne.s32.totalorder %s58, %s61
      %p70 = scmp.eq.s32.totalorder %s20, 1
      %p71 = por %p69, %p70
      %p72 = scmp.ne.s32.totalorder %s61, %s62
      %p73 = scmp.eq.s32.totalorder %s20, 0
      %p74 = por %p72, %p73
      %p75 = scmp.ne.s32.totalorder %s61, %s62
      %p76 = scmp.eq.s32.totalorder %s21, 1
      %p77 = por %p75, %p76
      %p79 = scmp.ne.s32.totalorder %s62, %s78
      %p80 = scmp.eq.s32.totalorder %s21, 0
      %p81 = por %p79, %p80
      %s82 = ssub.s32 %s22, %s34
      %p83 = scmp.eq.s32.totalorder %s82, 0
      %s85 = sadd.s32 %s84, 1
      %s86 = scalar_select %p83, %s84, %s85
      %p89 = pneg %p83
      %p90 = scmp.eq.s32.totalorder %s15, 1
      %p91 = por %p89, %p90
      %p92 = scmp.ne.s32.totalorder %s84, %s87
      %p93 = scmp.eq.s32.totalorder %s15, 0
      %p94 = por %p92, %p93
      %p95 = scmp.ne.s32.totalorder %s84, %s87
      %p96 = scmp.eq.s32.totalorder %s20, 1
      %p97 = por %p95, %p96
      %p98 = scmp.ne.s32.totalorder %s87, %s88
      %p99 = scmp.eq.s32.totalorder %s20, 0
      %p100 = por %p98, %p99
      %p101 = scmp.ne.s32.totalorder %s87, %s88
      %p102 = scmp.eq.s32.totalorder %s21, 1
      %p103 = por %p101, %p102
      %p105 = scmp.ne.s32.totalorder %s88, %s104
      %p106 = scmp.eq.s32.totalorder %s21, 0
      %p107 = por %p105, %p106
      %p108 = scmp.le.s32.totalorder 1, %s15
      %p109 = scmp.lt.s32.totalorder %s15, 3
      %p110 = pnand %p108, %p109
      %p111 = pneg %p110
      // Predicated region
      $region9: #{tpu_custom_call.1} parent=5 // pred_check
        _
      $region10: #{tpu_custom_call.1} parent=5 // pred_check_branch
        %113 = sbr.rel (%p110) target = $region12
      $region11: #{tpu_custom_call.1} parent=5 // pred_region
        %s114 = ssub.s32 %s15, 1
        // Predicated region
        $region13: #{tpu_custom_call.1} parent=11 // pred_check
          %p115 = pneg %p48
        $region14: #{tpu_custom_call.1} parent=11 // pred_check_branch
          %117 = sbr.rel (%p115) target = $region16
        $region15: #{tpu_custom_call.1} parent=11 // pred_region
          %s119 = ssub.s32 128, 128
          %120 = vsyncadd [#allocation3], %s119
          %s122 = sshll.u32 [#allocation2], 4
          %s123 = int_to_ptr.vmem [resolvable:$true] %s122
          %125 = dma.hbm_to_vmem [thread:$0]  %s0, 128, %s123, [#allocation3]
        $region16: #{tpu_custom_call.1} parent=11 // pred_fallthru
          _
      $region12: #{tpu_custom_call.1} parent=5 // pred_fallthru
        _
      %p126 = scmp.lt.s32.totalorder %s15, 2
      // Predicated region
      $region17: #{tpu_custom_call.1} parent=5 // pred_check
        %p127 = pneg %p126
      $region18: #{tpu_custom_call.1} parent=5 // pred_check_branch
        %129 = sbr.rel (%p127) target = $region20
      $region19: #{tpu_custom_call.1} parent=5 // pred_region
        // Predicated region
        $region21: #{tpu_custom_call.1} parent=19 // pred_check
          %p130 = pneg %p68
        $region22: #{tpu_custom_call.1} parent=19 // pred_check_branch
          %132 = sbr.rel (%p130) target = $region24
        $region23: #{tpu_custom_call.1} parent=19 // pred_region
          %s133 = sand.u32 %s58, 1
          %s134 = scalar_lea.sflag [#allocation6], %s133
          %s135 = sand.u32 %s58, 1
          %s136 = smul.addr %s135, 8
          %s137 = scalar_lea.vmem [#allocation5], %s136
          %s139 = ssub.s32 128, 128
          %140 = vsyncadd %s134, %s139
          %s141 = smul.addr %s22, 128
          %s142 = scalar_lea.hbm %s1, %s141
          %s144 = sshll.u32 %s137, 4
          %s145 = int_to_ptr.vmem [resolvable:$true] %s144
          %147 = dma.hbm_to_vmem [thread:$0]  %s142, 128, %s145, %s134
        $region24: #{tpu_custom_call.1} parent=19 // pred_fallthru
          _
      $region20: #{tpu_custom_call.1} parent=5 // pred_fallthru
        _
      %p148 = scmp.le.s32.totalorder 1, %s15
      %p149 = scmp.lt.s32.totalorder %s15, 3
      %p150 = pnand %p148, %p149
      %p151 = pneg %p150
      // Predicated region
      $region25: #{tpu_custom_call.1} parent=5 // pred_check
        _
      $region26: #{tpu_custom_call.1} parent=5 // pred_check_branch
        %153 = sbr.rel (%p150) target = $region28
      $region27: #{tpu_custom_call.1} parent=5 // pred_region
        %s154 = ssub.s32 %s15, 1
        // Predicated region
        $region29: #{tpu_custom_call.1} parent=27 // pred_check
          %p155 = pneg %p48
        $region30: #{tpu_custom_call.1} parent=27 // pred_check_branch
          %157 = sbr.rel (%p155) target = $region32
        $region31: #{tpu_custom_call.1} parent=27 // pred_region
          %158 = dma.done [#allocation3], 128
        $region32: #{tpu_custom_call.1} parent=27 // pred_fallthru
          _
        %s159 = sand.u32 %s61, 1
        %s160 = scalar_lea.sflag [#allocation6], %s159
        %s161 = sand.u32 %s61, 1
        %s162 = smul.addr %s161, 8
        %s163 = scalar_lea.vmem [#allocation5], %s162
        // Predicated region
        $region33: #{tpu_custom_call.1} parent=27 // pred_check
          %p164 = pneg %p74
        $region34: #{tpu_custom_call.1} parent=27 // pred_check_branch
          %166 = sbr.rel (%p164) target = $region36
        $region35: #{tpu_custom_call.1} parent=27 // pred_region
          %167 = dma.done %s160, 128
        $region36: #{tpu_custom_call.1} parent=27 // pred_fallthru
          _
        %p168 = pneg %p48
        %p169 = pneg %p45
        %s170 = sand.u32 %s61, 1
        %s171 = scalar_lea.sflag [#allocation6], %s170
        %s172 = sand.u32 %s61, 1
        %s173 = smul.addr %s172, 8
        %s174 = scalar_lea.vmem [#allocation5], %s173
        %p175 = pneg %p74
        %p176 = pneg %p71
        %p177 = pneg %p100
        %p178 = pneg %p97
        %s179 = sand.u32 %s87, 1
        %s180 = scalar_lea.sflag [#allocation4], %s179
        %s181 = sand.u32 %s87, 1
        %s182 = smul.addr %s181, 8
        %s183 = scalar_lea.vmem [#allocation7], %s182
        %v184 = vld [vmem:[%s163] sm:$0xff]
        %v185 = vld [vmem:[#allocation2] sm:$0xff]
        %v186 = vadd.f32 %v184, %v185
        %187 = vst [vmem:[%s183] sm:$0xff] %v186
        %s188 = sand.u32 %s87, 1
        %s189 = scalar_lea.sflag [#allocation4], %s188
        %s190 = sand.u32 %s87, 1
        %s191 = smul.addr %s190, 8
        %s192 = scalar_lea.vmem [#allocation7], %s191
        // Predicated region
        $region37: #{tpu_custom_call.1} parent=27 // pred_check
          %p193 = pneg %p97
        $region38: #{tpu_custom_call.1} parent=27 // pred_check_branch
          %195 = sbr.rel (%p193) target = $region40
        $region39: #{tpu_custom_call.1} parent=27 // pred_region
          %s197 = ssub.s32 128, 128
          %198 = vsyncadd %s189, %s197
          %s199 = smul.addr %s24, 128
          %s200 = scalar_lea.hbm %s2, %s199
          %s202 = sshll.u32 %s192, 4
          %s203 = int_to_ptr.vmem [resolvable:$true] %s202
          %205 = dma.vmem_to_hbm [thread:$0]  %s203, 128, %s200, %s189
        $region40: #{tpu_custom_call.1} parent=27 // pred_fallthru
          _
      $region28: #{tpu_custom_call.1} parent=5 // pred_fallthru
        _
      %p206 = scmp.le.s32.totalorder 2, %s15
      // Predicated region
      $region41: #{tpu_custom_call.1} parent=5 // pred_check
        %p207 = pneg %p206
      $region42: #{tpu_custom_call.1} parent=5 // pred_check_branch
        %209 = sbr.rel (%p207) target = $region44
      $region43: #{tpu_custom_call.1} parent=5 // pred_region
        %s210 = ssub.s32 %s15, 2
        // Predicated region
        $region45: #{tpu_custom_call.1} parent=43 // pred_check
          %p211 = pneg %p103
        $region46: #{tpu_custom_call.1} parent=43 // pred_check_branch
          %213 = sbr.rel (%p211) target = $region48
        $region47: #{tpu_custom_call.1} parent=43 // pred_region
          %s214 = sand.u32 %s88, 1
          %s215 = scalar_lea.sflag [#allocation4], %s214
          %s216 = sand.u32 %s88, 1
          %s217 = smul.addr %s216, 8
          %s218 = scalar_lea.vmem [#allocation7], %s217
          %219 = dma.done %s215, 128
        $region48: #{tpu_custom_call.1} parent=43 // pred_fallthru
          _
      $region44: #{tpu_custom_call.1} parent=5 // pred_fallthru
        _
    $region6: #{tpu_custom_call.1} parent=1 // loop_footer
      %s19 = sadd.s32 1, %s15
    $region7: #{tpu_custom_call.1} parent=1 // loop_footer_branch
      %14 = sbr.rel target = $region3
    $region8: #{tpu_custom_call.1} parent=1 // loop_exit
      _
    %220 = vsyncpa [#allocation3], 1
    %s221 = scalar_lea.sflag [#allocation3], 1
    %222 = vsyncpa %s221, 1
    %223 = vsyncpa [#allocation6], 1
    %s224 = scalar_lea.sflag [#allocation6], 1
    %225 = vsyncpa %s224, 1
    %226 = vsyncpa [#allocation4], 1
    %s227 = scalar_lea.sflag [#allocation4], 1
    %228 = vsyncpa %s227, 1

// kernel: tpu_custom_call.1
$region0: #{tpu_custom_call.1}
  #allocation0 [shape = 'u32[]', space=smem, size = 0x4, offset = 0x4, fixed_abs, tag = 'smem constant byte address 0x4 - core index']
  #allocation1 [shape = 'u32[144,128]{1,0:T(1,128)}', space=vmem, size = 0x12000, scoped, tag = 'internal scratch']
  #allocation2 [shape = 'bf16[576,384]{1,0:T(8,128)(2,1)}', space=vmem, size = 0x6c000, scoped, tag = 'scratch operand']
  %s0 = inlined_call_operand.hbm [shape: bf16[2,18,32,128], index: 0, kind: input, shape index: {}]
  %s1 = inlined_call_operand.hbm [shape: bf16[128,128], index: 1, kind: input, shape index: {}]
  %s2 = inlined_call_operand.vmem [shape: f32[1,128], index: 2, kind: input, shape index: {}]
  %s3 = inlined_call_operand.hbm [shape: bf16[3,384,128], index: 3, kind: input, shape index: {}]
  %s4 = inlined_call_operand.vmem [shape: f32[1,128], index: 4, kind: input, shape index: {}]
  %s5 = inlined_call_operand.hbm [shape: bf16[128,128], index: 5, kind: input, shape index: {}]
  %s6 = inlined_call_operand.vmem [shape: f32[1,128], index: 6, kind: input, shape index: {}]
  %s7 = inlined_call_operand.hbm [shape: f32[2,16,16,128], index: 7, kind: output, shape index: {}]
  %s8 = sld [smem:[#allocation0]]
  $region77: #{tpu_custom_call.1} parent=0
    _
  %s10 = ssub.s32 1, %s8
  %s11 = scalar_select 0, %s10, %s8
  $region1: #{tpu_custom_call.1} parent=0
    #allocation3 [shape = 'u8[294912]{0}', space=vmem, size = 0x48000, scoped, tag = 'input window, operand 0']
    #allocation4 [shape = 's32[2]{0}', space=sflag, size = 0x8, scoped, tag = 'scoped memory for tpu_custom_call.1']
    #allocation5 [shape = 's32[2]{0}', space=sflag, size = 0x8, scoped, tag = 'scoped memory for tpu_custom_call.1']
    #allocation6 [shape = 'u8[32768]{0}', space=vmem, size = 0x8000, scoped, tag = 'input window, operand 1, single buffered']
    #allocation7 [shape = 's32[1]{0}', space=sflag, size = 0x4, scoped, tag = 'scoped memory for tpu_custom_call.1']
    #allocation8 [shape = 'u8[294912]{0}', space=vmem, size = 0x48000, scoped, tag = 'input window, operand 3, single buffered']
    #allocation9 [shape = 'u8[32768]{0}', space=vmem, size = 0x8000, scoped, tag = 'input window, operand 5, single buffered']
    #allocation10 [shape = 's32[1]{0}', space=sflag, size = 0x4, scoped, tag = 'scoped memory for tpu_custom_call.1']
    #allocation11 [shape = 'u8[262144]{0}', space=vmem, size = 0x40000, scoped, tag = 'output window, operand 0']
    %12 = vsyncpa [#allocation4], 0
    %s13 = scalar_lea.sflag [#allocation4], 1
    %14 = vsyncpa %s13, 0
    %15 = vsyncpa [#allocation7], 0
    %16 = vsyncpa [#allocation10], 0
    %17 = vsyncpa [#allocation5], 0
    %s18 = scalar_lea.sflag [#allocation5], 1
    %19 = vsyncpa %s18, 0
    loop: start=0, step=1, limit=4
    $region2: #{tpu_custom_call.1} parent=1 // loop_pre_header
      _
    $region3: #{tpu_custom_call.1} parent=1 // loop_header
      %s21 = sphi 0, %s25
      %p22 = scmp.ge.s32.totalorder %s21, 4
      %s28 = sphi 0, %s40
      %s29 = sphi 0, %s36
      %s30 = sphi 0, %s28
      %s31 = sphi 0, %s29
      %s32 = sphi 0, %s30
      %s33 = sphi 0, %s31
      %s43 = sphi 0, %s45
      %s46 = sphi 0, %s43
      %s47 = sphi 0, %s46
      %s63 = sphi 0, %s47
      %s67 = sphi 0, %s67
      %s69 = sphi 0, %s67
      %s70 = sphi 0, %s69
      %s84 = sphi 0, %s70
      %s88 = sphi 0, %s88
      %s90 = sphi 0, %s88
      %s91 = sphi 0, %s90
      %s105 = sphi 0, %s91
      %s109 = sphi 0, %s109
      %s111 = sphi 0, %s109
      %s112 = sphi 0, %s111
      %s126 = sphi 0, %s112
      %s130 = sphi 0, %s130
      %s132 = sphi 0, %s130
      %s133 = sphi 0, %s132
      %s147 = sphi 0, %s133
      %s151 = sphi 0, %s151
      %s153 = sphi 0, %s151
      %s154 = sphi 0, %s153
      %s168 = sphi 0, %s154
      %s172 = sphi 0, %s172
      %s174 = sphi 0, %s172
      %s175 = sphi 0, %s174
      %s189 = sphi 0, %s175
      %s197 = sphi 0, %s199
      %s200 = sphi 0, %s197
      %s201 = sphi 0, %s200
      %s217 = sphi 0, %s201
    $region4: #{tpu_custom_call.1} parent=1 // loop_header_branch
      %24 = sbr.rel (%p22) target = $region8
    $region5: #{tpu_custom_call.1} parent=1 // loop_body
      %s26 = ssub.s32 %s21, 1
      %s27 = ssub.s32 %s21, 2
      %s34 = sadd.s32 1, %s29
      %p35 = scmp.ge.s32.totalorder %s34, 1
      %s36 = scalar_select %p35, 0, %s34
      %s37 = sadd.s32 1, %s28
      %s38 = scalar_select %p35, %s37, %s28
      %p39 = scmp.ge.s32.totalorder %s38, 2
      %s40 = scalar_select %p39, 0, %s38
      %s41 = ssub.s32 %s28, %s40
      %p42 = scmp.eq.s32.totalorder %s41, 0
      %s44 = sadd.s32 %s43, 1
      %s45 = scalar_select %p42, %s43, %s44
      %p48 = pneg %p42
      %p49 = scmp.eq.s32.totalorder %s21, 1
      %p50 = por %p48, %p49
      %p51 = scmp.ne.s32.totalorder %s43, %s46
      %p52 = scmp.eq.s32.totalorder %s21, 0
      %p53 = por %p51, %p52
      %p54 = scmp.ne.s32.totalorder %s43, %s46
      %p55 = scmp.eq.s32.totalorder %s26, 1
      %p56 = por %p54, %p55
      %p57 = scmp.ne.s32.totalorder %s46, %s47
      %p58 = scmp.eq.s32.totalorder %s26, 0
      %p59 = por %p57, %p58
      %p60 = scmp.ne.s32.totalorder %s46, %s47
      %p61 = scmp.eq.s32.totalorder %s27, 1
      %p62 = por %p60, %p61
      %p64 = scmp.ne.s32.totalorder %s47, %s63
      %p65 = scmp.eq.s32.totalorder %s27, 0
      %p66 = por %p64, %p65
      %s68 = sadd.s32 %s67, 1
      %p71 = scmp.eq.s32.totalorder %s21, 1
      %p72 = scmp.ne.s32.totalorder %s67, %s69
      %p73 = scmp.eq.s32.totalorder %s21, 0
      %p74 = por %p72, %p73
      %p75 = scmp.ne.s32.totalorder %s67, %s69
      %p76 = scmp.eq.s32.totalorder %s26, 1
      %p77 = por %p75, %p76
      %p78 = scmp.ne.s32.totalorder %s69, %s70
      %p79 = scmp.eq.s32.totalorder %s26, 0
      %p80 = por %p78, %p79
      %p81 = scmp.ne.s32.totalorder %s69, %s70
      %p82 = scmp.eq.s32.totalorder %s27, 1
      %p83 = por %p81, %p82
      %p85 = scmp.ne.s32.totalorder %s70, %s84
      %p86 = scmp.eq.s32.totalorder %s27, 0
      %p87 = por %p85, %p86
      %s89 = sadd.s32 %s88, 1
      %p92 = scmp.eq.s32.totalorder %s21, 1
      %p93 = scmp.ne.s32.totalorder %s88, %s90
      %p94 = scmp.eq.s32.totalorder %s21, 0
      %p95 = por %p93, %p94
      %p96 = scmp.ne.s32.totalorder %s88, %s90
      %p97 = scmp.eq.s32.totalorder %s26, 1
      %p98 = por %p96, %p97
      %p99 = scmp.ne.s32.totalorder %s90, %s91
      %p100 = scmp.eq.s32.totalorder %s26, 0
      %p101 = por %p99, %p100
      %p102 = scmp.ne.s32.totalorder %s90, %s91
      %p103 = scmp.eq.s32.totalorder %s27, 1
      %p104 = por %p102, %p103
      %p106 = scmp.ne.s32.totalorder %s91, %s105
      %p107 = scmp.eq.s32.totalorder %s27, 0
      %p108 = por %p106, %p107
      %s110 = sadd.s32 %s109, 1
      %p113 = scmp.eq.s32.totalorder %s21, 1
      %p114 = scmp.ne.s32.totalorder %s109, %s111
      %p115 = scmp.eq.s32.totalorder %s21, 0
      %p116 = por %p114, %p115
      %p117 = scmp.ne.s32.totalorder %s109, %s111
      %p118 = scmp.eq.s32.totalorder %s26, 1
      %p119 = por %p117, %p118
      %p120 = scmp.ne.s32.totalorder %s111, %s112
      %p121 = scmp.eq.s32.totalorder %s26, 0
      %p122 = por %p120, %p121
      %p123 = scmp.ne.s32.totalorder %s111, %s112
      %p124 = scmp.eq.s32.totalorder %s27, 1
      %p125 = por %p123, %p124
      %p127 = scmp.ne.s32.totalorder %s112, %s126
      %p128 = scmp.eq.s32.totalorder %s27, 0
      %p129 = por %p127, %p128
      %s131 = sadd.s32 %s130, 1
      %p134 = scmp.eq.s32.totalorder %s21, 1
      %p135 = scmp.ne.s32.totalorder %s130, %s132
      %p136 = scmp.eq.s32.totalorder %s21, 0
      %p137 = por %p135, %p136
      %p138 = scmp.ne.s32.totalorder %s130, %s132
      %p139 = scmp.eq.s32.totalorder %s26, 1
      %p140 = por %p138, %p139
      %p141 = scmp.ne.s32.totalorder %s132, %s133
      %p142 = scmp.eq.s32.totalorder %s26, 0
      %p143 = por %p141, %p142
      %p144 = scmp.ne.s32.totalorder %s132, %s133
      %p145 = scmp.eq.s32.totalorder %s27, 1
      %p146 = por %p144, %p145
      %p148 = scmp.ne.s32.totalorder %s133, %s147
      %p149 = scmp.eq.s32.totalorder %s27, 0
      %p150 = por %p148, %p149
      %s152 = sadd.s32 %s151, 1
      %p155 = scmp.eq.s32.totalorder %s21, 1
      %p156 = scmp.ne.s32.totalorder %s151, %s153
      %p157 = scmp.eq.s32.totalorder %s21, 0
      %p158 = por %p156, %p157
      %p159 = scmp.ne.s32.totalorder %s151, %s153
      %p160 = scmp.eq.s32.totalorder %s26, 1
      %p161 = por %p159, %p160
      %p162 = scmp.ne.s32.totalorder %s153, %s154
      %p163 = scmp.eq.s32.totalorder %s26, 0
      %p164 = por %p162, %p163
      %p165 = scmp.ne.s32.totalorder %s153, %s154
      %p166 = scmp.eq.s32.totalorder %s27, 1
      %p167 = por %p165, %p166
      %p169 = scmp.ne.s32.totalorder %s154, %s168
      %p170 = scmp.eq.s32.totalorder %s27, 0
      %p171 = por %p169, %p170
      %s173 = sadd.s32 %s172, 1
      %p176 = scmp.eq.s32.totalorder %s21, 1
      %p177 = scmp.ne.s32.totalorder %s172, %s174
      %p178 = scmp.eq.s32.totalorder %s21, 0
      %p179 = por %p177, %p178
      %p180 = scmp.ne.s32.totalorder %s172, %s174
      %p181 = scmp.eq.s32.totalorder %s26, 1
      %p182 = por %p180, %p181
      %p183 = scmp.ne.s32.totalorder %s174, %s175
      %p184 = scmp.eq.s32.totalorder %s26, 0
      %p185 = por %p183, %p184
      %p186 = scmp.ne.s32.totalorder %s174, %s175
      %p187 = scmp.eq.s32.totalorder %s27, 1
      %p188 = por %p186, %p187
      %p190 = scmp.ne.s32.totalorder %s175, %s189
      %p191 = scmp.eq.s32.totalorder %s27, 0
      %p192 = por %p190, %p191
      %s193 = ssub.s32 %s28, %s40
      %s194 = ssub.s32 %s29, %s36
      %s195 = sor.u32 %s193, %s194
      %p196 = scmp.eq.s32.totalorder %s195, 0
      %s198 = sadd.s32 %s197, 1
      %s199 = scalar_select %p196, %s197, %s198
      %p202 = pneg %p196
      %p203 = scmp.eq.s32.totalorder %s21, 1
      %p204 = por %p202, %p203
      %p205 = scmp.ne.s32.totalorder %s197, %s200
      %p206 = scmp.eq.s32.totalorder %s21, 0
      %p207 = por %p205, %p206
      %p208 = scmp.ne.s32.totalorder %s197, %s200
      %p209 = scmp.eq.s32.totalorder %s26, 1
      %p210 = por %p208, %p209
      %p211 = scmp.ne.s32.totalorder %s200, %s201
      %p212 = scmp.eq.s32.totalorder %s26, 0
      %p213 = por %p211, %p212
      %p214 = scmp.ne.s32.totalorder %s200, %s201
      %p215 = scmp.eq.s32.totalorder %s27, 1
      %p216 = por %p214, %p215
      %p218 = scmp.ne.s32.totalorder %s201, %s217
      %p219 = scmp.eq.s32.totalorder %s27, 0
      %p220 = por %p218, %p219
      %p221 = scmp.le.s32.totalorder 1, %s21
      %p222 = scmp.lt.s32.totalorder %s21, 3
      %p223 = pnand %p221, %p222
      %p224 = pneg %p223
      // Predicated region
      $region9: #{tpu_custom_call.1} parent=5 // pred_check
        _
      $region10: #{tpu_custom_call.1} parent=5 // pred_check_branch
        %226 = sbr.rel (%p223) target = $region12
      $region11: #{tpu_custom_call.1} parent=5 // pred_region
        %s227 = ssub.s32 %s21, 1
        // Predicated region
        $region13: #{tpu_custom_call.1} parent=11 // pred_check
          %p228 = pneg %p80
        $region14: #{tpu_custom_call.1} parent=11 // pred_check_branch
          %230 = sbr.rel (%p228) target = $region16
        $region15: #{tpu_custom_call.1} parent=11 // pred_region
          %s232 = ssub.s32 1024, 1024
          %233 = vsyncadd [#allocation7], %s232
          %s234 = sshll.u32 [#allocation6], 4
          %s235 = int_to_ptr.vmem [resolvable:$true] %s234
          %240 = dma.hbm_to_vmem [thread:$0]  %s1, 1024, %s235, [#allocation7], 64, 64, 4
        $region16: #{tpu_custom_call.1} parent=11 // pred_fallthru
          _
        // Predicated region
        $region17: #{tpu_custom_call.1} parent=11 // pred_check
          %p241 = pneg %p101
        $region18: #{tpu_custom_call.1} parent=11 // pred_check_branch
          %243 = sbr.rel (%p241) target = $region20
        $region19: #{tpu_custom_call.1} parent=11 // pred_region
          _
        $region20: #{tpu_custom_call.1} parent=11 // pred_fallthru
          _
        // Predicated region
        $region21: #{tpu_custom_call.1} parent=11 // pred_check
          %p244 = pneg %p122
        $region22: #{tpu_custom_call.1} parent=11 // pred_check_branch
          %246 = sbr.rel (%p244) target = $region24
        $region23: #{tpu_custom_call.1} parent=11 // pred_region
          %s248 = ssub.s32 9216, 9216
          %249 = vsyncadd [#allocation7], %s248
          %s250 = sshll.u32 [#allocation8], 4
          %s251 = int_to_ptr.vmem [resolvable:$true] %s250
          %256 = dma.hbm_to_vmem [thread:$0]  %s3, 9216, %s251, [#allocation7], 64, 64, 4
        $region24: #{tpu_custom_call.1} parent=11 // pred_fallthru
          _
        // Predicated region
        $region25: #{tpu_custom_call.1} parent=11 // pred_check
          %p257 = pneg %p143
        $region26: #{tpu_custom_call.1} parent=11 // pred_check_branch
          %259 = sbr.rel (%p257) target = $region28
        $region27: #{tpu_custom_call.1} parent=11 // pred_region
          _
        $region28: #{tpu_custom_call.1} parent=11 // pred_fallthru
          _
        // Predicated region
        $region29: #{tpu_custom_call.1} parent=11 // pred_check
          %p260 = pneg %p164
        $region30: #{tpu_custom_call.1} parent=11 // pred_check_branch
          %262 = sbr.rel (%p260) target = $region32
        $region31: #{tpu_custom_call.1} parent=11 // pred_region
          %s264 = ssub.s32 1024, 1024
          %265 = vsyncadd [#allocation10], %s264
          %s266 = sshll.u32 [#allocation9], 4
          %s267 = int_to_ptr.vmem [resolvable:$true] %s266
          %272 = dma.hbm_to_vmem [thread:$0]  %s5, 1024, %s267, [#allocation10], 64, 64, 4
        $region32: #{tpu_custom_call.1} parent=11 // pred_fallthru
          _
        // Predicated region
        $region33: #{tpu_custom_call.1} parent=11 // pred_check
          %p273 = pneg %p185
        $region34: #{tpu_custom_call.1} parent=11 // pred_check_branch
          %275 = sbr.rel (%p273) target = $region36
        $region35: #{tpu_custom_call.1} parent=11 // pred_region
          _
        $region36: #{tpu_custom_call.1} parent=11 // pred_fallthru
          _
      $region12: #{tpu_custom_call.1} parent=5 // pred_fallthru
        _
      %p276 = scmp.lt.s32.totalorder %s21, 2
      // Predicated region
      $region37: #{tpu_custom_call.1} parent=5 // pred_check
        %p277 = pneg %p276
      $region38: #{tpu_custom_call.1} parent=5 // pred_check_branch
        %279 = sbr.rel (%p277) target = $region40
      $region39: #{tpu_custom_call.1} parent=5 // pred_region
        // Predicated region
        $region41: #{tpu_custom_call.1} parent=39 // pred_check
          %p280 = pneg %p53
        $region42: #{tpu_custom_call.1} parent=39 // pred_check_branch
          %282 = sbr.rel (%p280) target = $region44
        $region43: #{tpu_custom_call.1} parent=39 // pred_region
          %s283 = sand.u32 %s43, 1
          %s284 = scalar_lea.sflag [#allocation4], %s283
          %s285 = sand.u32 %s43, 1
          %s286 = smul.addr %s285, 288
          %s287 = scalar_lea.vmem [#allocation3], %s286
          %s289 = ssub.s32 4608, 4608
          %290 = vsyncadd %s284, %s289
          %s291 = smul.addr %s28, 72
          %s292 = smul.addr %s291, 64
          %s293 = scalar_lea.hbm %s0, %s292
          %s294 = sshll.u32 %s287, 4
          %s295 = int_to_ptr.vmem [resolvable:$true] %s294
          %300 = dma.hbm_to_vmem [thread:$0]  %s293, 4608, %s295, %s284, 64, 64, 4
        $region44: #{tpu_custom_call.1} parent=39 // pred_fallthru
          _
      $region40: #{tpu_custom_call.1} parent=5 // pred_fallthru
        _
      %p301 = scmp.le.s32.totalorder 1, %s21
      %p302 = scmp.lt.s32.totalorder %s21, 3
      %p303 = pnand %p301, %p302
      %p304 = pneg %p303
      // Predicated region
      $region45: #{tpu_custom_call.1} parent=5 // pred_check
        _
      $region46: #{tpu_custom_call.1} parent=5 // pred_check_branch
        %306 = sbr.rel (%p303) target = $region48
      $region47: #{tpu_custom_call.1} parent=5 // pred_region
        %s307 = ssub.s32 %s21, 1
        %s308 = sand.u32 %s46, 1
        %s309 = scalar_lea.sflag [#allocation4], %s308
        %s310 = sand.u32 %s46, 1
        %s311 = smul.addr %s310, 288
        %s312 = scalar_lea.vmem [#allocation3], %s311
        // Predicated region
        $region49: #{tpu_custom_call.1} parent=47 // pred_check
          %p313 = pneg %p59
        $region50: #{tpu_custom_call.1} parent=47 // pred_check_branch
          %315 = sbr.rel (%p313) target = $region52
        $region51: #{tpu_custom_call.1} parent=47 // pred_region
          %316 = dma.done %s309, 4608
        $region52: #{tpu_custom_call.1} parent=47 // pred_fallthru
          _
        // Predicated region
        $region53: #{tpu_custom_call.1} parent=47 // pred_check
          %p317 = pneg %p80
        $region54: #{tpu_custom_call.1} parent=47 // pred_check_branch
          %319 = sbr.rel (%p317) target = $region56
        $region55: #{tpu_custom_call.1} parent=47 // pred_region
          %320 = dma.done [#allocation7], 1024
        $region56: #{tpu_custom_call.1} parent=47 // pred_fallthru
          _
        // Predicated region
        $region57: #{tpu_custom_call.1} parent=47 // pred_check
          %p321 = pneg %p122
        $region58: #{tpu_custom_call.1} parent=47 // pred_check_branch
          %323 = sbr.rel (%p321) target = $region60
        $region59: #{tpu_custom_call.1} parent=47 // pred_region
          %324 = dma.done [#allocation7], 9216
        $region60: #{tpu_custom_call.1} parent=47 // pred_fallthru
          _
        // Predicated region
        $region61: #{tpu_custom_call.1} parent=47 // pred_check
          %p325 = pneg %p164
        $region62: #{tpu_custom_call.1} parent=47 // pred_check_branch
          %327 = sbr.rel (%p325) target = $region64
        $region63: #{tpu_custom_call.1} parent=47 // pred_region
          %328 = dma.done [#allocation10], 1024
        $region64: #{tpu_custom_call.1} parent=47 // pred_fallthru
          _
        %s329 = sand.u32 %s46, 1
        %s330 = scalar_lea.sflag [#allocation4], %s329
        %s331 = sand.u32 %s46, 1
        %s332 = smul.addr %s331, 288
        %s333 = scalar_lea.vmem [#allocation3], %s332
        %p334 = pneg %p59
        %p335 = pneg %p56
        %p336 = pneg %p80
        %p337 = pneg %p77
        %p338 = pneg %p101
        %p339 = pneg %p98
        %p340 = pneg %p122
        %p341 = pneg %p119
        %p342 = pneg %p143
        %p343 = pneg %p140
        %p344 = pneg %p164
        %p345 = pneg %p161
        %p346 = pneg %p185
        %p347 = pneg %p182
        %p348 = pneg %p213
        %p349 = pneg %p210
        %s350 = sand.u32 %s200, 1
        %s351 = scalar_lea.sflag [#allocation5], %s350
        %s352 = sand.u32 %s200, 1
        %s353 = smul.addr %s352, 256
        %s354 = scalar_lea.vmem [#allocation11], %s353
        %s355 = smul.u32 16, %s31
        %s357 = smul.u32 %s31, 16
        %s358 = smul.u32 %s357, 4
        %s359 = smul.addr %s358, 4
        %s360 = scalar_lea.vmem %s312, %s359 [#allocation3]
        %v361 = vld [vmem:[%s360] sm:$0xf]
        %v362 = vld [vmem:[%s360 + $0x4] sm:$0xf]
        %v363 = vld [vmem:[%s360 + $0x8] sm:$0xf]
        %v364 = vld [vmem:[%s360 + $0xc] sm:$0xf]
        %v365 = vld [vmem:[%s360 + $0x10] sm:$0xf]
        %v366 = vld [vmem:[%s360 + $0x14] sm:$0xf]
        %v367 = vld [vmem:[%s360 + $0x18] sm:$0xf]
        %v368 = vld [vmem:[%s360 + $0x1c] sm:$0xf]
        %v369 = vld [vmem:[%s360 + $0x20] sm:$0xf]
        %v370 = vld [vmem:[%s360 + $0x24] sm:$0xf]
        %v371 = vld [vmem:[%s360 + $0x28] sm:$0xf]
        %v372 = vld [vmem:[%s360 + $0x2c] sm:$0xf]
        %v373 = vld [vmem:[%s360 + $0x30] sm:$0xf]
        %v374 = vld [vmem:[%s360 + $0x34] sm:$0xf]
        %v375 = vld [vmem:[%s360 + $0x38] sm:$0xf]
        %v376 = vld [vmem:[%s360 + $0x3c] sm:$0xf]
        %v377 = vld [vmem:[%s360 + $0x40] sm:$0xf]
        %v378 = vld [vmem:[%s360 + $0x44] sm:$0xf]
        %v379 = vld [vmem:[%s360 + $0x48] sm:$0xf]
        %v380 = vld [vmem:[%s360 + $0x4c] sm:$0xf]
        %v381 = vld [vmem:[%s360 + $0x50] sm:$0xf]
        %v382 = vld [vmem:[%s360 + $0x54] sm:$0xf]
        %v383 = vld [vmem:[%s360 + $0x58] sm:$0xf]
        %v384 = vld [vmem:[%s360 + $0x5c] sm:$0xf]
        %v385 = vld [vmem:[%s360 + $0x60] sm:$0xf]
        %v386 = vld [vmem:[%s360 + $0x64] sm:$0xf]
        %v387 = vld [vmem:[%s360 + $0x68] sm:$0xf]
        %v388 = vld [vmem:[%s360 + $0x6c] sm:$0xf]
        %v389 = vld [vmem:[%s360 + $0x70] sm:$0xf]
        %v390 = vld [vmem:[%s360 + $0x74] sm:$0xf]
        %v391 = vld [vmem:[%s360 + $0x78] sm:$0xf]
        %v392 = vld [vmem:[%s360 + $0x7c] sm:$0xf]
        %v393 = vld [vmem:[%s360 + $0x80] sm:$0xf]
        %v394 = vld [vmem:[%s360 + $0x84] sm:$0xf]
        %v395 = vld [vmem:[%s360 + $0x88] sm:$0xf]
        %v396 = vld [vmem:[%s360 + $0x8c] sm:$0xf]
        %v397 = vld [vmem:[%s360 + $0x90] sm:$0xf]
        %v398 = vld [vmem:[%s360 + $0x94] sm:$0xf]
        %v399 = vld [vmem:[%s360 + $0x98] sm:$0xf]
        %v400 = vld [vmem:[%s360 + $0x9c] sm:$0xf]
        %v401 = vld [vmem:[%s360 + $0xa0] sm:$0xf]
        %v402 = vld [vmem:[%s360 + $0xa4] sm:$0xf]
        %v403 = vld [vmem:[%s360 + $0xa8] sm:$0xf]
        %v404 = vld [vmem:[%s360 + $0xac] sm:$0xf]
        %v405 = vld [vmem:[%s360 + $0xb0] sm:$0xf]
        %v406 = vld [vmem:[%s360 + $0xb4] sm:$0xf]
        %v407 = vld [vmem:[%s360 + $0xb8] sm:$0xf]
        %v408 = vld [vmem:[%s360 + $0xbc] sm:$0xf]
        %v409 = vld [vmem:[%s360 + $0xc0] sm:$0xf]
        %v410 = vld [vmem:[%s360 + $0xc4] sm:$0xf]
        %v411 = vld [vmem:[%s360 + $0xc8] sm:$0xf]
        %v412 = vld [vmem:[%s360 + $0xcc] sm:$0xf]
        %v413 = vld [vmem:[%s360 + $0xd0] sm:$0xf]
        %v414 = vld [vmem:[%s360 + $0xd4] sm:$0xf]
        %v415 = vld [vmem:[%s360 + $0xd8] sm:$0xf]
        %v416 = vld [vmem:[%s360 + $0xdc] sm:$0xf]
        %v417 = vld [vmem:[%s360 + $0xe0] sm:$0xf]
        %v418 = vld [vmem:[%s360 + $0xe4] sm:$0xf]
        %v419 = vld [vmem:[%s360 + $0xe8] sm:$0xf]
        %v420 = vld [vmem:[%s360 + $0xec] sm:$0xf]
        %v421 = vld [vmem:[%s360 + $0xf0] sm:$0xf]
        %v422 = vld [vmem:[%s360 + $0xf4] sm:$0xf]
        %v423 = vld [vmem:[%s360 + $0xf8] sm:$0xf]
        %v424 = vld [vmem:[%s360 + $0xfc] sm:$0xf]
        %v425 = vld [vmem:[%s360 + $0x100] sm:$0xf]
        %v426 = vld [vmem:[%s360 + $0x104] sm:$0xf]
        %v427 = vld [vmem:[%s360 + $0x108] sm:$0xf]
        %v428 = vld [vmem:[%s360 + $0x10c] sm:$0xf]
        %v429 = vld [vmem:[%s360 + $0x110] sm:$0xf]
        %v430 = vld [vmem:[%s360 + $0x114] sm:$0xf]
        %v431 = vld [vmem:[%s360 + $0x118] sm:$0xf]
        %v432 = vld [vmem:[%s360 + $0x11c] sm:$0xf]
        %v433 = vld [vmem:[#allocation6] sm:$0xf]
        %v434 = vld [vmem:[#allocation6 + $0x4] sm:$0xf]
        %v435 = vld [vmem:[#allocation6 + $0x8] sm:$0xf]
        %v436 = vld [vmem:[#allocation6 + $0xc] sm:$0xf]
        %v437 = vld [vmem:[#allocation6 + $0x10] sm:$0xf]
        %v438 = vld [vmem:[#allocation6 + $0x14] sm:$0xf]
        %v439 = vld [vmem:[#allocation6 + $0x18] sm:$0xf]
        %v440 = vld [vmem:[#allocation6 + $0x1c] sm:$0xf]
        %v441 = vld [vmem:[#allocation6 + $0x20] sm:$0xf]
        %v442 = vld [vmem:[#allocation6 + $0x24] sm:$0xf]
        %v443 = vld [vmem:[#allocation6 + $0x28] sm:$0xf]
        %v444 = vld [vmem:[#allocation6 + $0x2c] sm:$0xf]
        %v445 = vld [vmem:[#allocation6 + $0x30] sm:$0xf]
        %v446 = vld [vmem:[#allocation6 + $0x34] sm:$0xf]
        %v447 = vld [vmem:[#allocation6 + $0x38] sm:$0xf]
        %v448 = vld [vmem:[#allocation6 + $0x3c] sm:$0xf]
        %v449 = vld [vmem:[%s2] sm:$0x1]
        %v451 = vlaneseq
        %v452 = vshrl.u32 %v451, 7
        %v453 = vsub.s32 0, %v452
        %v454 = vrot.slane %v449, %v453
        %v528 = vunpack.c.l.b16 %v361
        %v529 = vunpack.c.l.b16 %v362
        %v530 = vunpack.c.l.b16 %v363
        %v531 = vunpack.c.l.b16 %v364
        %v532 = vunpack.c.l.b16 %v365
        %v533 = vunpack.c.l.b16 %v366
        %v534 = vunpack.c.l.b16 %v367
        %v535 = vunpack.c.l.b16 %v368
        %v536 = vunpack.c.l.b16 %v369
        %v537 = vunpack.c.l.b16 %v370
        %v538 = vunpack.c.l.b16 %v371
        %v539 = vunpack.c.l.b16 %v372
        %v540 = vunpack.c.l.b16 %v373
        %v541 = vunpack.c.l.b16 %v374
        %v542 = vunpack.c.l.b16 %v375
        %v543 = vunpack.c.l.b16 %v376
        %v544 = vunpack.c.l.b16 %v377
        %v545 = vunpack.c.l.b16 %v378
        %v546 = vunpack.c.l.b16 %v379
        %v547 = vunpack.c.l.b16 %v380
        %v548 = vunpack.c.l.b16 %v381
        %v549 = vunpack.c.l.b16 %v382
        %v550 = vunpack.c.l.b16 %v383
        %v551 = vunpack.c.l.b16 %v384
        %v552 = vunpack.c.l.b16 %v385
        %v553 = vunpack.c.l.b16 %v386
        %v554 = vunpack.c.l.b16 %v387
        %v555 = vunpack.c.l.b16 %v388
        %v556 = vunpack.c.l.b16 %v389
        %v557 = vunpack.c.l.b16 %v390
        %v558 = vunpack.c.l.b16 %v391
        %v559 = vunpack.c.l.b16 %v392
        %v560 = vunpack.c.l.b16 %v393
        %v561 = vunpack.c.l.b16 %v394
        %v562 = vunpack.c.l.b16 %v395
        %v563 = vunpack.c.l.b16 %v396
        %v564 = vunpack.c.l.b16 %v397
        %v565 = vunpack.c.l.b16 %v398
        %v566 = vunpack.c.l.b16 %v399
        %v567 = vunpack.c.l.b16 %v400
        %v568 = vunpack.c.l.b16 %v401
        %v569 = vunpack.c.l.b16 %v402
        %v570 = vunpack.c.l.b16 %v403
        %v571 = vunpack.c.l.b16 %v404
        %v572 = vunpack.c.l.b16 %v405
        %v573 = vunpack.c.l.b16 %v406
        %v574 = vunpack.c.l.b16 %v407
        %v575 = vunpack.c.l.b16 %v408
        %v576 = vunpack.c.l.b16 %v409
        %v577 = vunpack.c.l.b16 %v410
        %v578 = vunpack.c.l.b16 %v411
        %v579 = vunpack.c.l.b16 %v412
        %v580 = vunpack.c.l.b16 %v413
        %v581 = vunpack.c.l.b16 %v414
        %v582 = vunpack.c.l.b16 %v415
        %v583 = vunpack.c.l.b16 %v416
        %v584 = vunpack.c.l.b16 %v417
        %v585 = vunpack.c.l.b16 %v418
        %v586 = vunpack.c.l.b16 %v419
        %v587 = vunpack.c.l.b16 %v420
        %v588 = vunpack.c.l.b16 %v421
        %v589 = vunpack.c.l.b16 %v422
        %v590 = vunpack.c.l.b16 %v423
        %v591 = vunpack.c.l.b16 %v424
        %v592 = vunpack.c.l.b16 %v425
        %v593 = vunpack.c.l.b16 %v426
        %v594 = vunpack.c.l.b16 %v427
        %v595 = vunpack.c.l.b16 %v428
        %v596 = vunpack.c.l.b16 %v429
        %v597 = vunpack.c.l.b16 %v430
        %v598 = vunpack.c.l.b16 %v431
        %v599 = vunpack.c.l.b16 %v432
        %v600 = vpack.c.b16 %v529, %v528
        %v601 = vpack.c.b16 %v531, %v530
        %v602 = vpack.c.b16 %v533, %v532
        %v603 = vpack.c.b16 %v535, %v534
        %v604 = vpack.c.b16 %v537, %v536
        %v605 = vpack.c.b16 %v539, %v538
        %v606 = vpack.c.b16 %v541, %v540
        %v607 = vpack.c.b16 %v543, %v542
        %v608 = vpack.c.b16 %v545, %v544
        %v609 = vpack.c.b16 %v547, %v546
        %v610 = vpack.c.b16 %v549, %v548
        %v611 = vpack.c.b16 %v551, %v550
        %v612 = vpack.c.b16 %v553, %v552
        %v613 = vpack.c.b16 %v555, %v554
        %v614 = vpack.c.b16 %v557, %v556
        %v615 = vpack.c.b16 %v559, %v558
        %v616 = vpack.c.b16 %v561, %v560
        %v617 = vpack.c.b16 %v563, %v562
        %v618 = vpack.c.b16 %v565, %v564
        %v619 = vpack.c.b16 %v567, %v566
        %v620 = vpack.c.b16 %v569, %v568
        %v621 = vpack.c.b16 %v571, %v570
        %v622 = vpack.c.b16 %v573, %v572
        %v623 = vpack.c.b16 %v575, %v574
        %v624 = vpack.c.b16 %v577, %v576
        %v625 = vpack.c.b16 %v579, %v578
        %v626 = vpack.c.b16 %v581, %v580
        %v627 = vpack.c.b16 %v583, %v582
        %v628 = vpack.c.b16 %v585, %v584
        %v629 = vpack.c.b16 %v587, %v586
        %v630 = vpack.c.b16 %v589, %v588
        %v631 = vpack.c.b16 %v591, %v590
        %v632 = vpack.c.b16 %v593, %v592
        %v633 = vpack.c.b16 %v595, %v594
        %v634 = vpack.c.b16 %v597, %v596
        %v635 = vpack.c.b16 %v599, %v598
        %v688 = vunpack.c.l.b16 %v433
        %v689 = vunpack.c.l.b16 %v434
        %v690 = vunpack.c.l.b16 %v435
        %v691 = vunpack.c.l.b16 %v436
        %v692 = vunpack.c.l.b16 %v437
        %v693 = vunpack.c.l.b16 %v438
        %v694 = vunpack.c.l.b16 %v439
        %v695 = vunpack.c.l.b16 %v440
        %v696 = vunpack.c.l.b16 %v441
        %v697 = vunpack.c.l.b16 %v442
        %v698 = vunpack.c.l.b16 %v443
        %v699 = vunpack.c.l.b16 %v444
        %v700 = vunpack.c.l.b16 %v445
        %v701 = vunpack.c.l.b16 %v446
        %v702 = vunpack.c.l.b16 %v447
        %v703 = vunpack.c.l.b16 %v448
        %v704 = vpack.c.b16 %v689, %v688
        %v705 = vpack.c.b16 %v691, %v690
        %v706 = vpack.c.b16 %v693, %v692
        %v707 = vpack.c.b16 %v695, %v694
        %v708 = vpack.c.b16 %v697, %v696
        %v709 = vpack.c.b16 %v699, %v698
        %v710 = vpack.c.b16 %v701, %v700
        %v711 = vpack.c.b16 %v703, %v702
        %720 = vmatprep.subr.bf16.mxu0 0
        %721 = vmatpush1.bf16.msra.mxu0 %v711
        %722 = vmatprep.subr.bf16.mxu0 0
        %723 = vmatpush1.bf16.msra.mxu0 %v710
        %724 = vmatprep.subr.bf16.mxu0 0
        %725 = vmatpush1.bf16.msra.mxu0 %v709
        %726 = vmatprep.subr.bf16.mxu0 0
        %727 = vmatpush1.bf16.msra.mxu0 %v708
        %728 = vmatprep.subr.bf16.mxu0 0
        %729 = vmatpush1.bf16.msra.mxu0 %v707
        %730 = vmatprep.subr.bf16.mxu0 0
        %731 = vmatpush1.bf16.msra.mxu0 %v706
        %732 = vmatprep.subr.bf16.mxu0 0
        %733 = vmatpush1.bf16.msra.mxu0 %v705
        %734 = vmatprep.subr.bf16.mxu0 0
        %735 = vmatpush1.bf16.msra.mxu0 %v704
        %736 = vmatprep.subr.bf16.mxu0 0
        %737 = vmatpush2.bf16.msra.mxu0 0
        %738 = vmatprep.subr.bf16.mxu0 0
        %739 = vmatpush2.bf16.msra.mxu0 0
        %740 = vmatprep.subr.bf16.mxu0 0
        %741 = vmatpush2.bf16.msra.mxu0 0
        %742 = vmatprep.subr.bf16.mxu0 0
        %743 = vmatpush2.bf16.msra.mxu0 0
        %744 = vmatprep.subr.bf16.mxu0 0
        %745 = vmatpush2.bf16.msra.mxu0 0
        %746 = vmatprep.subr.bf16.mxu0 0
        %747 = vmatpush2.bf16.msra.mxu0 0
        %748 = vmatprep.subr.bf16.mxu0 0
        %749 = vmatpush2.bf16.msra.mxu0 0
        %750 = vmatprep.subr.bf16.mxu0 0
        %751 = vmatpush2.bf16.msra.mxu0 0
        %752 = vmatprep.mubr.bf16.mxu0 0
        %753 = vmatmul.mubr.bf16.gmra.mxu0 %v600
        %v754 = vpop.f32.mrf.mxu0
        %v755 = vadd.f32 %v454, %v754
        %v756 = vpop.f32.mrf.mxu0
        %v757 = vpop.f32.mrf.mxu0
        %v758 = vadd.f32 %v454, %v757
        %v759 = vpop.f32.mrf.mxu0
        %760 = vmatprep.mubr.bf16.mxu0 0
        %761 = vmatmul.mubr.bf16.gmra.mxu0 %v601
        %v762 = vpop.f32.mrf.mxu0
        %v763 = vadd.f32 %v454, %v762
        %v764 = vpop.f32.mrf.mxu0
        %v765 = vpop.f32.mrf.mxu0
        %v766 = vadd.f32 %v454, %v765
        %v767 = vpop.f32.mrf.mxu0
        %768 = vmatprep.mubr.bf16.mxu0 0
        %769 = vmatmul.mubr.bf16.gmra.mxu0 %v602
        %v770 = vpop.f32.mrf.mxu0
        %v771 = vadd.f32 %v454, %v770
        %v772 = vpop.f32.mrf.mxu0
        %v773 = vpop.f32.mrf.mxu0
        %v774 = vadd.f32 %v454, %v773
        %v775 = vpop.f32.mrf.mxu0
        %776 = vmatprep.mubr.bf16.mxu0 0
        %777 = vmatmul.mubr.bf16.gmra.mxu0 %v603
        %v778 = vpop.f32.mrf.mxu0
        %v779 = vadd.f32 %v454, %v778
        %v780 = vpop.f32.mrf.mxu0
        %v781 = vpop.f32.mrf.mxu0
        %v782 = vadd.f32 %v454, %v781
        %v783 = vpop.f32.mrf.mxu0
        %784 = vmatprep.mubr.bf16.mxu0 0
        %785 = vmatmul.mubr.bf16.gmra.mxu0 %v604
        %v786 = vpop.f32.mrf.mxu0
        %v787 = vadd.f32 %v454, %v786
        %v788 = vpop.f32.mrf.mxu0
        %v789 = vpop.f32.mrf.mxu0
        %v790 = vadd.f32 %v454, %v789
        %v791 = vpop.f32.mrf.mxu0
        %792 = vmatprep.mubr.bf16.mxu0 0
        %793 = vmatmul.mubr.bf16.gmra.mxu0 %v605
        %v794 = vpop.f32.mrf.mxu0
        %v795 = vadd.f32 %v454, %v794
        %v796 = vpop.f32.mrf.mxu0
        %v797 = vpop.f32.mrf.mxu0
        %v798 = vadd.f32 %v454, %v797
        %v799 = vpop.f32.mrf.mxu0
        %800 = vmatprep.mubr.bf16.mxu0 0
        %801 = vmatmul.mubr.bf16.gmra.mxu0 %v606
        %v802 = vpop.f32.mrf.mxu0
        %v803 = vadd.f32 %v454, %v802
        %v804 = vpop.f32.mrf.mxu0
        %v805 = vpop.f32.mrf.mxu0
        %v806 = vadd.f32 %v454, %v805
        %v807 = vpop.f32.mrf.mxu0
        %808 = vmatprep.mubr.bf16.mxu0 0
        %809 = vmatmul.mubr.bf16.gmra.mxu0 %v607
        %v810 = vpop.f32.mrf.mxu0
        %v811 = vadd.f32 %v454, %v810
        %v812 = vpop.f32.mrf.mxu0
        %v813 = vpop.f32.mrf.mxu0
        %v814 = vadd.f32 %v454, %v813
        %v815 = vpop.f32.mrf.mxu0
        %816 = vmatprep.mubr.bf16.mxu0 0
        %817 = vmatmul.mubr.bf16.gmra.mxu0 %v608
        %v818 = vpop.f32.mrf.mxu0
        %v819 = vadd.f32 %v454, %v818
        %v820 = vpop.f32.mrf.mxu0
        %v821 = vpop.f32.mrf.mxu0
        %v822 = vadd.f32 %v454, %v821
        %v823 = vpop.f32.mrf.mxu0
        %824 = vmatprep.mubr.bf16.mxu0 0
        %825 = vmatmul.mubr.bf16.gmra.mxu0 %v609
        %v826 = vpop.f32.mrf.mxu0
        %v827 = vadd.f32 %v454, %v826
        %v828 = vpop.f32.mrf.mxu0
        %v829 = vpop.f32.mrf.mxu0
        %v830 = vadd.f32 %v454, %v829
        %v831 = vpop.f32.mrf.mxu0
        %832 = vmatprep.mubr.bf16.mxu0 0
        %833 = vmatmul.mubr.bf16.gmra.mxu0 %v610
        %v834 = vpop.f32.mrf.mxu0
        %v835 = vadd.f32 %v454, %v834
        %v836 = vpop.f32.mrf.mxu0
        %v837 = vpop.f32.mrf.mxu0
        %v838 = vadd.f32 %v454, %v837
        %v839 = vpop.f32.mrf.mxu0
        %840 = vmatprep.mubr.bf16.mxu0 0
        %841 = vmatmul.mubr.bf16.gmra.mxu0 %v611
        %v842 = vpop.f32.mrf.mxu0
        %v843 = vadd.f32 %v454, %v842
        %v844 = vpop.f32.mrf.mxu0
        %v845 = vpop.f32.mrf.mxu0
        %v846 = vadd.f32 %v454, %v845
        %v847 = vpop.f32.mrf.mxu0
        %848 = vmatprep.mubr.bf16.mxu0 0
        %849 = vmatmul.mubr.bf16.gmra.mxu0 %v612
        %v850 = vpop.f32.mrf.mxu0
        %v851 = vadd.f32 %v454, %v850
        %v852 = vpop.f32.mrf.mxu0
        %v853 = vpop.f32.mrf.mxu0
        %v854 = vadd.f32 %v454, %v853
        %v855 = vpop.f32.mrf.mxu0
        %856 = vmatprep.mubr.bf16.mxu0 0
        %857 = vmatmul.mubr.bf16.gmra.mxu0 %v613
        %v858 = vpop.f32.mrf.mxu0
        %v859 = vadd.f32 %v454, %v858
        %v860 = vpop.f32.mrf.mxu0
        %v861 = vpop.f32.mrf.mxu0
        %v862 = vadd.f32 %v454, %v861
        %v863 = vpop.f32.mrf.mxu0
        %864 = vmatprep.mubr.bf16.mxu0 0
        %865 = vmatmul.mubr.bf16.gmra.mxu0 %v614
        %v866 = vpop.f32.mrf.mxu0
        %v867 = vadd.f32 %v454, %v866
        %v868 = vpop.f32.mrf.mxu0
        %v869 = vpop.f32.mrf.mxu0
        %v870 = vadd.f32 %v454, %v869
        %v871 = vpop.f32.mrf.mxu0
        %872 = vmatprep.mubr.bf16.mxu0 0
        %873 = vmatmul.mubr.bf16.gmra.mxu0 %v615
        %v874 = vpop.f32.mrf.mxu0
        %v875 = vadd.f32 %v454, %v874
        %v876 = vpop.f32.mrf.mxu0
        %v877 = vpop.f32.mrf.mxu0
        %v878 = vadd.f32 %v454, %v877
        %v879 = vpop.f32.mrf.mxu0
        %880 = vmatprep.mubr.bf16.mxu0 0
        %881 = vmatmul.mubr.bf16.gmra.mxu0 %v616
        %v882 = vpop.f32.mrf.mxu0
        %v883 = vadd.f32 %v454, %v882
        %v884 = vpop.f32.mrf.mxu0
        %v885 = vpop.f32.mrf.mxu0
        %v886 = vadd.f32 %v454, %v885
        %v887 = vpop.f32.mrf.mxu0
        %888 = vmatprep.mubr.bf16.mxu0 0
        %889 = vmatmul.mubr.bf16.gmra.mxu0 %v617
        %v890 = vpop.f32.mrf.mxu0
        %v891 = vadd.f32 %v454, %v890
        %v892 = vpop.f32.mrf.mxu0
        %v893 = vpop.f32.mrf.mxu0
        %v894 = vadd.f32 %v454, %v893
        %v895 = vpop.f32.mrf.mxu0
        %896 = vmatprep.mubr.bf16.mxu0 0
        %897 = vmatmul.mubr.bf16.gmra.mxu0 %v618
        %v898 = vpop.f32.mrf.mxu0
        %v899 = vadd.f32 %v454, %v898
        %v900 = vpop.f32.mrf.mxu0
        %v901 = vpop.f32.mrf.mxu0
        %v902 = vadd.f32 %v454, %v901
        %v903 = vpop.f32.mrf.mxu0
        %904 = vmatprep.mubr.bf16.mxu0 0
        %905 = vmatmul.mubr.bf16.gmra.mxu0 %v619
        %v906 = vpop.f32.mrf.mxu0
        %v907 = vadd.f32 %v454, %v906
        %v908 = vpop.f32.mrf.mxu0
        %v909 = vpop.f32.mrf.mxu0
        %v910 = vadd.f32 %v454, %v909
        %v911 = vpop.f32.mrf.mxu0
        %912 = vmatprep.mubr.bf16.mxu0 0
        %913 = vmatmul.mubr.bf16.gmra.mxu0 %v620
        %v914 = vpop.f32.mrf.mxu0
        %v915 = vadd.f32 %v454, %v914
        %v916 = vpop.f32.mrf.mxu0
        %v917 = vpop.f32.mrf.mxu0
        %v918 = vadd.f32 %v454, %v917
        %v919 = vpop.f32.mrf.mxu0
        %920 = vmatprep.mubr.bf16.mxu0 0
        %921 = vmatmul.mubr.bf16.gmra.mxu0 %v621
        %v922 = vpop.f32.mrf.mxu0
        %v923 = vadd.f32 %v454, %v922
        %v924 = vpop.f32.mrf.mxu0
        %v925 = vpop.f32.mrf.mxu0
        %v926 = vadd.f32 %v454, %v925
        %v927 = vpop.f32.mrf.mxu0
        %928 = vmatprep.mubr.bf16.mxu0 0
        %929 = vmatmul.mubr.bf16.gmra.mxu0 %v622
        %v930 = vpop.f32.mrf.mxu0
        %v931 = vadd.f32 %v454, %v930
        %v932 = vpop.f32.mrf.mxu0
        %v933 = vpop.f32.mrf.mxu0
        %v934 = vadd.f32 %v454, %v933
        %v935 = vpop.f32.mrf.mxu0
        %936 = vmatprep.mubr.bf16.mxu0 0
        %937 = vmatmul.mubr.bf16.gmra.mxu0 %v623
        %v938 = vpop.f32.mrf.mxu0
        %v939 = vadd.f32 %v454, %v938
        %v940 = vpop.f32.mrf.mxu0
        %v941 = vpop.f32.mrf.mxu0
        %v942 = vadd.f32 %v454, %v941
        %v943 = vpop.f32.mrf.mxu0
        %944 = vmatprep.mubr.bf16.mxu0 0
        %945 = vmatmul.mubr.bf16.gmra.mxu0 %v624
        %v946 = vpop.f32.mrf.mxu0
        %v947 = vadd.f32 %v454, %v946
        %v948 = vpop.f32.mrf.mxu0
        %v949 = vpop.f32.mrf.mxu0
        %v950 = vadd.f32 %v454, %v949
        %v951 = vpop.f32.mrf.mxu0
        %952 = vmatprep.mubr.bf16.mxu0 0
        %953 = vmatmul.mubr.bf16.gmra.mxu0 %v625
        %v954 = vpop.f32.mrf.mxu0
        %v955 = vadd.f32 %v454, %v954
        %v956 = vpop.f32.mrf.mxu0
        %v957 = vpop.f32.mrf.mxu0
        %v958 = vadd.f32 %v454, %v957
        %v959 = vpop.f32.mrf.mxu0
        %960 = vmatprep.mubr.bf16.mxu0 0
        %961 = vmatmul.mubr.bf16.gmra.mxu0 %v626
        %v962 = vpop.f32.mrf.mxu0
        %v963 = vadd.f32 %v454, %v962
        %v964 = vpop.f32.mrf.mxu0
        %v965 = vpop.f32.mrf.mxu0
        %v966 = vadd.f32 %v454, %v965
        %v967 = vpop.f32.mrf.mxu0
        %968 = vmatprep.mubr.bf16.mxu0 0
        %969 = vmatmul.mubr.bf16.gmra.mxu0 %v627
        %v970 = vpop.f32.mrf.mxu0
        %v971 = vadd.f32 %v454, %v970
        %v972 = vpop.f32.mrf.mxu0
        %v973 = vpop.f32.mrf.mxu0
        %v974 = vadd.f32 %v454, %v973
        %v975 = vpop.f32.mrf.mxu0
        %976 = vmatprep.mubr.bf16.mxu0 0
        %977 = vmatmul.mubr.bf16.gmra.mxu0 %v628
        %v978 = vpop.f32.mrf.mxu0
        %v979 = vadd.f32 %v454, %v978
        %v980 = vpop.f32.mrf.mxu0
        %v981 = vpop.f32.mrf.mxu0
        %v982 = vadd.f32 %v454, %v981
        %v983 = vpop.f32.mrf.mxu0
        %984 = vmatprep.mubr.bf16.mxu0 0
        %985 = vmatmul.mubr.bf16.gmra.mxu0 %v629
        %v986 = vpop.f32.mrf.mxu0
        %v987 = vadd.f32 %v454, %v986
        %v988 = vpop.f32.mrf.mxu0
        %v989 = vpop.f32.mrf.mxu0
        %v990 = vadd.f32 %v454, %v989
        %v991 = vpop.f32.mrf.mxu0
        %992 = vmatprep.mubr.bf16.mxu0 0
        %993 = vmatmul.mubr.bf16.gmra.mxu0 %v630
        %v994 = vpop.f32.mrf.mxu0
        %v995 = vadd.f32 %v454, %v994
        %v996 = vpop.f32.mrf.mxu0
        %v997 = vpop.f32.mrf.mxu0
        %v998 = vadd.f32 %v454, %v997
        %v999 = vpop.f32.mrf.mxu0
        %1000 = vmatprep.mubr.bf16.mxu0 0
        %1001 = vmatmul.mubr.bf16.gmra.mxu0 %v631
        %v1002 = vpop.f32.mrf.mxu0
        %v1003 = vadd.f32 %v454, %v1002
        %v1004 = vpop.f32.mrf.mxu0
        %v1005 = vpop.f32.mrf.mxu0
        %v1006 = vadd.f32 %v454, %v1005
        %v1007 = vpop.f32.mrf.mxu0
        %1008 = vmatprep.mubr.bf16.mxu0 0
        %1009 = vmatmul.mubr.bf16.gmra.mxu0 %v632
        %v1010 = vpop.f32.mrf.mxu0
        %v1011 = vadd.f32 %v454, %v1010
        %v1012 = vpop.f32.mrf.mxu0
        %v1013 = vpop.f32.mrf.mxu0
        %v1014 = vadd.f32 %v454, %v1013
        %v1015 = vpop.f32.mrf.mxu0
        %1016 = vmatprep.mubr.bf16.mxu0 0
        %1017 = vmatmul.mubr.bf16.gmra.mxu0 %v633
        %v1018 = vpop.f32.mrf.mxu0
        %v1019 = vadd.f32 %v454, %v1018
        %v1020 = vpop.f32.mrf.mxu0
        %v1021 = vpop.f32.mrf.mxu0
        %v1022 = vadd.f32 %v454, %v1021
        %v1023 = vpop.f32.mrf.mxu0
        %1024 = vmatprep.mubr.bf16.mxu0 0
        %1025 = vmatmul.mubr.bf16.gmra.mxu0 %v634
        %v1026 = vpop.f32.mrf.mxu0
        %v1027 = vadd.f32 %v454, %v1026
        %v1028 = vpop.f32.mrf.mxu0
        %v1029 = vpop.f32.mrf.mxu0
        %v1030 = vadd.f32 %v454, %v1029
        %v1031 = vpop.f32.mrf.mxu0
        %1032 = vmatprep.mubr.bf16.mxu0 0
        %1033 = vmatmul.mubr.bf16.gmra.mxu0 %v635
        %v1034 = vpop.f32.mrf.mxu0
        %v1035 = vadd.f32 %v454, %v1034
        %v1036 = vpop.f32.mrf.mxu0
        %v1037 = vpop.f32.mrf.mxu0
        %v1038 = vadd.f32 %v454, %v1037
        %v1039 = vpop.f32.mrf.mxu0
        %1040 = vdwg.mxu0
        %v1041 = vmax.f32 %v755, 0.0
        %v1042 = vmax.f32 %v758, 0.0
        %v1043 = vmax.f32 %v763, 0.0
        %v1044 = vmax.f32 %v766, 0.0
        %v1045 = vmax.f32 %v771, 0.0
        %v1046 = vmax.f32 %v774, 0.0
        %v1047 = vmax.f32 %v779, 0.0
        %v1048 = vmax.f32 %v782, 0.0
        %v1049 = vmax.f32 %v787, 0.0
        %v1050 = vmax.f32 %v790, 0.0
        %v1051 = vmax.f32 %v795, 0.0
        %v1052 = vmax.f32 %v798, 0.0
        %v1053 = vmax.f32 %v803, 0.0
        %v1054 = vmax.f32 %v806, 0.0
        %v1055 = vmax.f32 %v811, 0.0
        %v1056 = vmax.f32 %v814, 0.0
        %v1057 = vmax.f32 %v819, 0.0
        %v1058 = vmax.f32 %v822, 0.0
        %v1059 = vmax.f32 %v827, 0.0
        %v1060 = vmax.f32 %v830, 0.0
        %v1061 = vmax.f32 %v835, 0.0
        %v1062 = vmax.f32 %v838, 0.0
        %v1063 = vmax.f32 %v843, 0.0
        %v1064 = vmax.f32 %v846, 0.0
        %v1065 = vmax.f32 %v851, 0.0
        %v1066 = vmax.f32 %v854, 0.0
        %v1067 = vmax.f32 %v859, 0.0
        %v1068 = vmax.f32 %v862, 0.0
        %v1069 = vmax.f32 %v867, 0.0
        %v1070 = vmax.f32 %v870, 0.0
        %v1071 = vmax.f32 %v875, 0.0
        %v1072 = vmax.f32 %v878, 0.0
        %v1073 = vmax.f32 %v883, 0.0
        %v1074 = vmax.f32 %v886, 0.0
        %v1075 = vmax.f32 %v891, 0.0
        %v1076 = vmax.f32 %v894, 0.0
        %v1077 = vmax.f32 %v899, 0.0
        %v1078 = vmax.f32 %v902, 0.0
        %v1079 = vmax.f32 %v907, 0.0
        %v1080 = vmax.f32 %v910, 0.0
        %v1081 = vmax.f32 %v915, 0.0
        %v1082 = vmax.f32 %v918, 0.0
        %v1083 = vmax.f32 %v923, 0.0
        %v1084 = vmax.f32 %v926, 0.0
        %v1085 = vmax.f32 %v931, 0.0
        %v1086 = vmax.f32 %v934, 0.0
        %v1087 = vmax.f32 %v939, 0.0
        %v1088 = vmax.f32 %v942, 0.0
        %v1089 = vmax.f32 %v947, 0.0
        %v1090 = vmax.f32 %v950, 0.0
        %v1091 = vmax.f32 %v955, 0.0
        %v1092 = vmax.f32 %v958, 0.0
        %v1093 = vmax.f32 %v963, 0.0
        %v1094 = vmax.f32 %v966, 0.0
        %v1095 = vmax.f32 %v971, 0.0
        %v1096 = vmax.f32 %v974, 0.0
        %v1097 = vmax.f32 %v979, 0.0
        %v1098 = vmax.f32 %v982, 0.0
        %v1099 = vmax.f32 %v987, 0.0
        %v1100 = vmax.f32 %v990, 0.0
        %v1101 = vmax.f32 %v995, 0.0
        %v1102 = vmax.f32 %v998, 0.0
        %v1103 = vmax.f32 %v1003, 0.0
        %v1104 = vmax.f32 %v1006, 0.0
        %v1105 = vmax.f32 %v1011, 0.0
        %v1106 = vmax.f32 %v1014, 0.0
        %v1107 = vmax.f32 %v1019, 0.0
        %v1108 = vmax.f32 %v1022, 0.0
        %v1109 = vmax.f32 %v1027, 0.0
        %v1110 = vmax.f32 %v1030, 0.0
        %v1111 = vmax.f32 %v1035, 0.0
        %v1112 = vmax.f32 %v1038, 0.0
        %v1113 = vlaneseq
        %v1114 = vshrl.u32 %v1113, 7
        %v1115 = vadd.s32 %v1114, 8
        %v1116 = vadd.s32 %v1114, 16
        %v1117 = vadd.s32 %v1114, 24
        %p1118 = scmp.gt.s32.totalorder %s31, 0
        %s1119 = scalar_select %p1118, 1, 0
        %v1120 = vstv %s1119
        %vm1121 = vcmp.eq.s32.totalorder %v1120, 1
        %p1122 = scmp.lt.s32.totalorder %s31, 0
        %s1123 = scalar_select %p1122, 1, 0
        %v1124 = vstv %s1123
        %vm1125 = vcmp.eq.s32.totalorder %v1124, 1
        %vm1126 = vcmp.ge.s32.totalorder %v1114, 1
        %vm1127 = vcmp.ge.s32.totalorder %v1115, 1
        %vm1128 = vcmp.ge.s32.totalorder %v1116, 1
        %vm1129 = vcmp.ge.s32.totalorder %v1117, 1
        %vm1130 = vcmp.le.s32.totalorder %v1114, 16
        %vm1131 = vcmp.le.s32.totalorder %v1115, 16
        %vm1132 = vcmp.le.s32.totalorder %v1116, 16
        %vm1133 = vcmp.le.s32.totalorder %v1117, 16
        %vm1134 = vmand %vm1126, %vm1130
        %vm1135 = vmand %vm1127, %vm1131
        %vm1136 = vmand %vm1128, %vm1132
        %vm1137 = vmand %vm1129, %vm1133
        %vm1138 = vmand %vm1121, %vm1134
        %vm1139 = vmand %vm1121, %vm1135
        %vm1140 = vmand %vm1121, %vm1136
        %vm1141 = vmand %vm1121, %vm1137
        %vm1142 = vmand 1, %vm1134
        %vm1143 = vmand 1, %vm1135
        %vm1144 = vmand 1, %vm1136
        %vm1145 = vmand 1, %vm1137
        %vm1146 = vmand %vm1125, %vm1134
        %vm1147 = vmand %vm1125, %vm1135
        %vm1148 = vmand %vm1125, %vm1136
        %vm1149 = vmand %vm1125, %vm1137
        %v1150 = vsel %vm1138, 1, 0
        %v1151 = vsel %vm1139, 1, 0
        %v1152 = vsel %vm1140, 1, 0
        %v1153 = vsel %vm1141, 1, 0
        %v1154 = vsel %vm1142, 1, 0
        %v1155 = vsel %vm1143, 1, 0
        %v1156 = vsel %vm1144, 1, 0
        %v1157 = vsel %vm1145, 1, 0
        %v1158 = vsel %vm1146, 1, 0
        %v1159 = vsel %vm1147, 1, 0
        %v1160 = vsel %vm1148, 1, 0
        %v1161 = vsel %vm1149, 1, 0
        %vm1162 = vcmp.eq.s32.totalorder %v1150, 1
        %vm1163 = vcmp.eq.s32.totalorder %v1151, 1
        %vm1164 = vcmp.eq.s32.totalorder %v1152, 1
        %vm1165 = vcmp.eq.s32.totalorder %v1153, 1
        %vm1166 = vcmp.eq.s32.totalorder %v1154, 1
        %vm1167 = vcmp.eq.s32.totalorder %v1155, 1
        %vm1168 = vcmp.eq.s32.totalorder %v1156, 1
        %vm1169 = vcmp.eq.s32.totalorder %v1157, 1
        %vm1170 = vcmp.eq.s32.totalorder %v1158, 1
        %vm1171 = vcmp.eq.s32.totalorder %v1159, 1
        %vm1172 = vcmp.eq.s32.totalorder %v1160, 1
        %vm1173 = vcmp.eq.s32.totalorder %v1161, 1
        %v1174 = vsel %vm1162, %v1041, 0.0
        %v1175 = vsel %vm1163, %v1042, 0.0
        %v1176 = vsel %vm1164, %v1043, 0.0
        %v1177 = vsel %vm1165, %v1044, 0.0
        %v1178 = vsel %vm1166, %v1045, 0.0
        %v1179 = vsel %vm1167, %v1046, 0.0
        %v1180 = vsel %vm1168, %v1047, 0.0
        %v1181 = vsel %vm1169, %v1048, 0.0
        %v1182 = vsel %vm1166, %v1049, 0.0
        %v1183 = vsel %vm1167, %v1050, 0.0
        %v1184 = vsel %vm1168, %v1051, 0.0
        %v1185 = vsel %vm1169, %v1052, 0.0
        %v1186 = vsel %vm1166, %v1053, 0.0
        %v1187 = vsel %vm1167, %v1054, 0.0
        %v1188 = vsel %vm1168, %v1055, 0.0
        %v1189 = vsel %vm1169, %v1056, 0.0
        %v1190 = vsel %vm1166, %v1057, 0.0
        %v1191 = vsel %vm1167, %v1058, 0.0
        %v1192 = vsel %vm1168, %v1059, 0.0
        %v1193 = vsel %vm1169, %v1060, 0.0
        %v1194 = vsel %vm1166, %v1061, 0.0
        %v1195 = vsel %vm1167, %v1062, 0.0
        %v1196 = vsel %vm1168, %v1063, 0.0
        %v1197 = vsel %vm1169, %v1064, 0.0
        %v1198 = vsel %vm1166, %v1065, 0.0
        %v1199 = vsel %vm1167, %v1066, 0.0
        %v1200 = vsel %vm1168, %v1067, 0.0
        %v1201 = vsel %vm1169, %v1068, 0.0
        %v1202 = vsel %vm1166, %v1069, 0.0
        %v1203 = vsel %vm1167, %v1070, 0.0
        %v1204 = vsel %vm1168, %v1071, 0.0
        %v1205 = vsel %vm1169, %v1072, 0.0
        %v1206 = vsel %vm1166, %v1073, 0.0
        %v1207 = vsel %vm1167, %v1074, 0.0
        %v1208 = vsel %vm1168, %v1075, 0.0
        %v1209 = vsel %vm1169, %v1076, 0.0
        %v1210 = vsel %vm1166, %v1077, 0.0
        %v1211 = vsel %vm1167, %v1078, 0.0
        %v1212 = vsel %vm1168, %v1079, 0.0
        %v1213 = vsel %vm1169, %v1080, 0.0
        %v1214 = vsel %vm1166, %v1081, 0.0
        %v1215 = vsel %vm1167, %v1082, 0.0
        %v1216 = vsel %vm1168, %v1083, 0.0
        %v1217 = vsel %vm1169, %v1084, 0.0
        %v1218 = vsel %vm1166, %v1085, 0.0
        %v1219 = vsel %vm1167, %v1086, 0.0
        %v1220 = vsel %vm1168, %v1087, 0.0
        %v1221 = vsel %vm1169, %v1088, 0.0
        %v1222 = vsel %vm1166, %v1089, 0.0
        %v1223 = vsel %vm1167, %v1090, 0.0
        %v1224 = vsel %vm1168, %v1091, 0.0
        %v1225 = vsel %vm1169, %v1092, 0.0
        %v1226 = vsel %vm1166, %v1093, 0.0
        %v1227 = vsel %vm1167, %v1094, 0.0
        %v1228 = vsel %vm1168, %v1095, 0.0
        %v1229 = vsel %vm1169, %v1096, 0.0
        %v1230 = vsel %vm1166, %v1097, 0.0
        %v1231 = vsel %vm1167, %v1098, 0.0
        %v1232 = vsel %vm1168, %v1099, 0.0
        %v1233 = vsel %vm1169, %v1100, 0.0
        %v1234 = vsel %vm1166, %v1101, 0.0
        %v1235 = vsel %vm1167, %v1102, 0.0
        %v1236 = vsel %vm1168, %v1103, 0.0
        %v1237 = vsel %vm1169, %v1104, 0.0
        %v1238 = vsel %vm1166, %v1105, 0.0
        %v1239 = vsel %vm1167, %v1106, 0.0
        %v1240 = vsel %vm1168, %v1107, 0.0
        %v1241 = vsel %vm1169, %v1108, 0.0
        %v1242 = vsel %vm1170, %v1109, 0.0
        %v1243 = vsel %vm1171, %v1110, 0.0
        %v1244 = vsel %vm1172, %v1111, 0.0
        %v1245 = vsel %vm1173, %v1112, 0.0
        %v1246 = vpack.c.bf16 %v1175, %v1174
        %v1247 = vpack.c.bf16 %v1177, %v1176
        %v1248 = vpack.c.bf16 %v1179, %v1178
        %v1249 = vpack.c.bf16 %v1181, %v1180
        %v1250 = vpack.c.bf16 %v1183, %v1182
        %v1251 = vpack.c.bf16 %v1185, %v1184
        %v1252 = vpack.c.bf16 %v1187, %v1186
        %v1253 = vpack.c.bf16 %v1189, %v1188
        %v1254 = vpack.c.bf16 %v1191, %v1190
        %v1255 = vpack.c.bf16 %v1193, %v1192
        %v1256 = vpack.c.bf16 %v1195, %v1194
        %v1257 = vpack.c.bf16 %v1197, %v1196
        %v1258 = vpack.c.bf16 %v1199, %v1198
        %v1259 = vpack.c.bf16 %v1201, %v1200
        %v1260 = vpack.c.bf16 %v1203, %v1202
        %v1261 = vpack.c.bf16 %v1205, %v1204
        %v1262 = vpack.c.bf16 %v1207, %v1206
        %v1263 = vpack.c.bf16 %v1209, %v1208
        %v1264 = vpack.c.bf16 %v1211, %v1210
        %v1265 = vpack.c.bf16 %v1213, %v1212
        %v1266 = vpack.c.bf16 %v1215, %v1214
        %v1267 = vpack.c.bf16 %v1217, %v1216
        %v1268 = vpack.c.bf16 %v1219, %v1218
        %v1269 = vpack.c.bf16 %v1221, %v1220
        %v1270 = vpack.c.bf16 %v1223, %v1222
        %v1271 = vpack.c.bf16 %v1225, %v1224
        %v1272 = vpack.c.bf16 %v1227, %v1226
        %v1273 = vpack.c.bf16 %v1229, %v1228
        %v1274 = vpack.c.bf16 %v1231, %v1230
        %v1275 = vpack.c.bf16 %v1233, %v1232
        %v1276 = vpack.c.bf16 %v1235, %v1234
        %v1277 = vpack.c.bf16 %v1237, %v1236
        %v1278 = vpack.c.bf16 %v1239, %v1238
        %v1279 = vpack.c.bf16 %v1241, %v1240
        %v1280 = vpack.c.bf16 %v1243, %v1242
        %v1281 = vpack.c.bf16 %v1245, %v1244
        %v1318 = vunpack.c.l.b16 %v1246
        %v1319 = vunpack.c.h.b16 %v1246
        %v1320 = vunpack.c.l.b16 %v1247
        %v1321 = vunpack.c.h.b16 %v1247
        %v1322 = vunpack.c.l.b16 %v1248
        %v1323 = vunpack.c.h.b16 %v1248
        %v1324 = vunpack.c.l.b16 %v1249
        %v1325 = vunpack.c.h.b16 %v1249
        %v1326 = vunpack.c.l.b16 %v1250
        %v1327 = vunpack.c.h.b16 %v1250
        %v1328 = vunpack.c.l.b16 %v1251
        %v1329 = vunpack.c.h.b16 %v1251
        %v1330 = vunpack.c.l.b16 %v1252
        %v1331 = vunpack.c.h.b16 %v1252
        %v1332 = vunpack.c.l.b16 %v1253
        %v1333 = vunpack.c.h.b16 %v1253
        %v1334 = vunpack.c.l.b16 %v1254
        %v1335 = vunpack.c.h.b16 %v1254
        %v1336 = vunpack.c.l.b16 %v1255
        %v1337 = vunpack.c.h.b16 %v1255
        %v1338 = vunpack.c.l.b16 %v1256
        %v1339 = vunpack.c.h.b16 %v1256
        %v1340 = vunpack.c.l.b16 %v1257
        %v1341 = vunpack.c.h.b16 %v1257
        %v1342 = vunpack.c.l.b16 %v1258
        %v1343 = vunpack.c.h.b16 %v1258
        %v1344 = vunpack.c.l.b16 %v1259
        %v1345 = vunpack.c.h.b16 %v1259
        %v1346 = vunpack.c.l.b16 %v1260
        %v1347 = vunpack.c.h.b16 %v1260
        %v1348 = vunpack.c.l.b16 %v1261
        %v1349 = vunpack.c.h.b16 %v1261
        %v1350 = vunpack.c.l.b16 %v1262
        %v1351 = vunpack.c.h.b16 %v1262
        %v1352 = vunpack.c.l.b16 %v1263
        %v1353 = vunpack.c.h.b16 %v1263
        %v1354 = vunpack.c.l.b16 %v1264
        %v1355 = vunpack.c.h.b16 %v1264
        %v1356 = vunpack.c.l.b16 %v1265
        %v1357 = vunpack.c.h.b16 %v1265
        %v1358 = vunpack.c.l.b16 %v1266
        %v1359 = vunpack.c.h.b16 %v1266
        %v1360 = vunpack.c.l.b16 %v1267
        %v1361 = vunpack.c.h.b16 %v1267
        %v1362 = vunpack.c.l.b16 %v1268
        %v1363 = vunpack.c.h.b16 %v1268
        %v1364 = vunpack.c.l.b16 %v1269
        %v1365 = vunpack.c.h.b16 %v1269
        %v1366 = vunpack.c.l.b16 %v1270
        %v1367 = vunpack.c.h.b16 %v1270
        %v1368 = vunpack.c.l.b16 %v1271
        %v1369 = vunpack.c.h.b16 %v1271
        %v1370 = vunpack.c.l.b16 %v1272
        %v1371 = vunpack.c.h.b16 %v1272
        %v1372 = vunpack.c.l.b16 %v1273
        %v1373 = vunpack.c.h.b16 %v1273
        %v1374 = vunpack.c.l.b16 %v1274
        %v1375 = vunpack.c.h.b16 %v1274
        %v1376 = vunpack.c.l.b16 %v1275
        %v1377 = vunpack.c.h.b16 %v1275
        %v1378 = vunpack.c.l.b16 %v1276
        %v1379 = vunpack.c.h.b16 %v1276
        %v1380 = vunpack.c.l.b16 %v1277
        %v1381 = vunpack.c.h.b16 %v1277
        %v1382 = vunpack.c.l.b16 %v1278
        %v1383 = vunpack.c.h.b16 %v1278
        %v1384 = vunpack.c.l.b16 %v1279
        %v1385 = vunpack.c.h.b16 %v1279
        %v1386 = vunpack.c.l.b16 %v1280
        %v1387 = vunpack.c.h.b16 %v1280
        %v1388 = vunpack.c.l.b16 %v1281
        %v1389 = vunpack.c.h.b16 %v1281
        %v1390 = vpack.c.b16 %v1318, %v1318
        %v1391 = vpack.c.b16 %v1319, %v1319
        %v1392 = vpack.c.b16 %v1320, %v1320
        %v1393 = vpack.c.b16 %v1321, %v1321
        %v1394 = vpack.c.b16 %v1322, %v1322
        %v1395 = vpack.c.b16 %v1323, %v1323
        %v1396 = vpack.c.b16 %v1324, %v1324
        %v1397 = vpack.c.b16 %v1325, %v1325
        %v1398 = vpack.c.b16 %v1326, %v1326
        %v1399 = vpack.c.b16 %v1327, %v1327
        %v1400 = vpack.c.b16 %v1328, %v1328
        %v1401 = vpack.c.b16 %v1329, %v1329
        %v1402 = vpack.c.b16 %v1330, %v1330
        %v1403 = vpack.c.b16 %v1331, %v1331
        %v1404 = vpack.c.b16 %v1332, %v1332
        %v1405 = vpack.c.b16 %v1333, %v1333
        %v1406 = vpack.c.b16 %v1334, %v1334
        %v1407 = vpack.c.b16 %v1335, %v1335
        %v1408 = vpack.c.b16 %v1336, %v1336
        %v1409 = vpack.c.b16 %v1337, %v1337
        %v1410 = vpack.c.b16 %v1338, %v1338
        %v1411 = vpack.c.b16 %v1339, %v1339
        %v1412 = vpack.c.b16 %v1340, %v1340
        %v1413 = vpack.c.b16 %v1341, %v1341
        %v1414 = vpack.c.b16 %v1342, %v1342
        %v1415 = vpack.c.b16 %v1343, %v1343
        %v1416 = vpack.c.b16 %v1344, %v1344
        %v1417 = vpack.c.b16 %v1345, %v1345
        %v1418 = vpack.c.b16 %v1346, %v1346
        %v1419 = vpack.c.b16 %v1347, %v1347
        %v1420 = vpack.c.b16 %v1348, %v1348
        %v1421 = vpack.c.b16 %v1349, %v1349
        %v1422 = vpack.c.b16 %v1350, %v1350
        %v1423 = vpack.c.b16 %v1351, %v1351
        %v1424 = vpack.c.b16 %v1352, %v1352
        %v1425 = vpack.c.b16 %v1353, %v1353
        %v1426 = vpack.c.b16 %v1354, %v1354
        %v1427 = vpack.c.b16 %v1355, %v1355
        %v1428 = vpack.c.b16 %v1356, %v1356
        %v1429 = vpack.c.b16 %v1357, %v1357
        %v1430 = vpack.c.b16 %v1358, %v1358
        %v1431 = vpack.c.b16 %v1359, %v1359
        %v1432 = vpack.c.b16 %v1360, %v1360
        %v1433 = vpack.c.b16 %v1361, %v1361
        %v1434 = vpack.c.b16 %v1362, %v1362
        %v1435 = vpack.c.b16 %v1363, %v1363
        %v1436 = vpack.c.b16 %v1364, %v1364
        %v1437 = vpack.c.b16 %v1365, %v1365
        %v1438 = vpack.c.b16 %v1366, %v1366
        %v1439 = vpack.c.b16 %v1367, %v1367
        %v1440 = vpack.c.b16 %v1368, %v1368
        %v1441 = vpack.c.b16 %v1369, %v1369
        %v1442 = vpack.c.b16 %v1370, %v1370
        %v1443 = vpack.c.b16 %v1371, %v1371
        %v1444 = vpack.c.b16 %v1372, %v1372
        %v1445 = vpack.c.b16 %v1373, %v1373
        %v1446 = vpack.c.b16 %v1374, %v1374
        %v1447 = vpack.c.b16 %v1375, %v1375
        %v1448 = vpack.c.b16 %v1376, %v1376
        %v1449 = vpack.c.b16 %v1377, %v1377
        %v1450 = vpack.c.b16 %v1378, %v1378
        %v1451 = vpack.c.b16 %v1379, %v1379
        %v1452 = vpack.c.b16 %v1380, %v1380
        %v1453 = vpack.c.b16 %v1381, %v1381
        %v1454 = vpack.c.b16 %v1382, %v1382
        %v1455 = vpack.c.b16 %v1383, %v1383
        %v1456 = vpack.c.b16 %v1384, %v1384
        %v1457 = vpack.c.b16 %v1385, %v1385
        %v1458 = vpack.c.b16 %v1386, %v1386
        %v1459 = vpack.c.b16 %v1387, %v1387
        %v1460 = vpack.c.b16 %v1388, %v1388
        %v1461 = vpack.c.b16 %v1389, %v1389
        %1534 = vst [vmem:[#allocation2] sm:$0xf] %v1390
        %1535 = vst [vmem:[#allocation2 + $0xc] sm:$0xf] %v1391
        %1536 = vst [vmem:[#allocation2 + $0x18] sm:$0xf] %v1392
        %1537 = vst [vmem:[#allocation2 + $0x24] sm:$0xf] %v1393
        %1538 = vst [vmem:[#allocation2 + $0x30] sm:$0xf] %v1394
        %1539 = vst [vmem:[#allocation2 + $0x3c] sm:$0xf] %v1395
        %1540 = vst [vmem:[#allocation2 + $0x48] sm:$0xf] %v1396
        %1541 = vst [vmem:[#allocation2 + $0x54] sm:$0xf] %v1397
        %1542 = vst [vmem:[#allocation2 + $0x60] sm:$0xf] %v1398
        %1543 = vst [vmem:[#allocation2 + $0x6c] sm:$0xf] %v1399
        %1544 = vst [vmem:[#allocation2 + $0x78] sm:$0xf] %v1400
        %1545 = vst [vmem:[#allocation2 + $0x84] sm:$0xf] %v1401
        %1546 = vst [vmem:[#allocation2 + $0x90] sm:$0xf] %v1402
        %1547 = vst [vmem:[#allocation2 + $0x9c] sm:$0xf] %v1403
        %1548 = vst [vmem:[#allocation2 + $0xa8] sm:$0xf] %v1404
        %1549 = vst [vmem:[#allocation2 + $0xb4] sm:$0xf] %v1405
        %1550 = vst [vmem:[#allocation2 + $0xc0] sm:$0xf] %v1406
        %1551 = vst [vmem:[#allocation2 + $0xcc] sm:$0xf] %v1407
        %1552 = vst [vmem:[#allocation2 + $0xd8] sm:$0xf] %v1408
        %1553 = vst [vmem:[#allocation2 + $0xe4] sm:$0xf] %v1409
        %1554 = vst [vmem:[#allocation2 + $0xf0] sm:$0xf] %v1410
        %1555 = vst [vmem:[#allocation2 + $0xfc] sm:$0xf] %v1411
        %1556 = vst [vmem:[#allocation2 + $0x108] sm:$0xf] %v1412
        %1557 = vst [vmem:[#allocation2 + $0x114] sm:$0xf] %v1413
        %1558 = vst [vmem:[#allocation2 + $0x120] sm:$0xf] %v1414
        %1559 = vst [vmem:[#allocation2 + $0x12c] sm:$0xf] %v1415
        %1560 = vst [vmem:[#allocation2 + $0x138] sm:$0xf] %v1416
        %1561 = vst [vmem:[#allocation2 + $0x144] sm:$0xf] %v1417
        %1562 = vst [vmem:[#allocation2 + $0x150] sm:$0xf] %v1418
        %1563 = vst [vmem:[#allocation2 + $0x15c] sm:$0xf] %v1419
        %1564 = vst [vmem:[#allocation2 + $0x168] sm:$0xf] %v1420
        %1565 = vst [vmem:[#allocation2 + $0x174] sm:$0xf] %v1421
        %1566 = vst [vmem:[#allocation2 + $0x180] sm:$0xf] %v1422
        %1567 = vst [vmem:[#allocation2 + $0x18c] sm:$0xf] %v1423
        %1568 = vst [vmem:[#allocation2 + $0x198] sm:$0xf] %v1424
        %1569 = vst [vmem:[#allocation2 + $0x1a4] sm:$0xf] %v1425
        %1570 = vst [vmem:[#allocation2 + $0x1b0] sm:$0xf] %v1426
        %1571 = vst [vmem:[#allocation2 + $0x1bc] sm:$0xf] %v1427
        %1572 = vst [vmem:[#allocation2 + $0x1c8] sm:$0xf] %v1428
        %1573 = vst [vmem:[#allocation2 + $0x1d4] sm:$0xf] %v1429
        %1574 = vst [vmem:[#allocation2 + $0x1e0] sm:$0xf] %v1430
        %1575 = vst [vmem:[#allocation2 + $0x1ec] sm:$0xf] %v1431
        %1576 = vst [vmem:[#allocation2 + $0x1f8] sm:$0xf] %v1432
        %1577 = vst [vmem:[#allocation2 + $0x204] sm:$0xf] %v1433
        %1578 = vst [vmem:[#allocation2 + $0x210] sm:$0xf] %v1434
        %1579 = vst [vmem:[#allocation2 + $0x21c] sm:$0xf] %v1435
        %1580 = vst [vmem:[#allocation2 + $0x228] sm:$0xf] %v1436
        %1581 = vst [vmem:[#allocation2 + $0x234] sm:$0xf] %v1437
        %1582 = vst [vmem:[#allocation2 + $0x240] sm:$0xf] %v1438
        %1583 = vst [vmem:[#allocation2 + $0x24c] sm:$0xf] %v1439
        %1584 = vst [vmem:[#allocation2 + $0x258] sm:$0xf] %v1440
        %1585 = vst [vmem:[#allocation2 + $0x264] sm:$0xf] %v1441
        %1586 = vst [vmem:[#allocation2 + $0x270] sm:$0xf] %v1442
        %1587 = vst [vmem:[#allocation2 + $0x27c] sm:$0xf] %v1443
        %1588 = vst [vmem:[#allocation2 + $0x288] sm:$0xf] %v1444
        %1589 = vst [vmem:[#allocation2 + $0x294] sm:$0xf] %v1445
        %1590 = vst [vmem:[#allocation2 + $0x2a0] sm:$0xf] %v1446
        %1591 = vst [vmem:[#allocation2 + $0x2ac] sm:$0xf] %v1447
        %1592 = vst [vmem:[#allocation2 + $0x2b8] sm:$0xf] %v1448
        %1593 = vst [vmem:[#allocation2 + $0x2c4] sm:$0xf] %v1449
        %1594 = vst [vmem:[#allocation2 + $0x2d0] sm:$0xf] %v1450
        %1595 = vst [vmem:[#allocation2 + $0x2dc] sm:$0xf] %v1451
        %1596 = vst [vmem:[#allocation2 + $0x2e8] sm:$0xf] %v1452
        %1597 = vst [vmem:[#allocation2 + $0x2f4] sm:$0xf] %v1453
        %1598 = vst [vmem:[#allocation2 + $0x300] sm:$0xf] %v1454
        %1599 = vst [vmem:[#allocation2 + $0x30c] sm:$0xf] %v1455
        %1600 = vst [vmem:[#allocation2 + $0x318] sm:$0xf] %v1456
        %1601 = vst [vmem:[#allocation2 + $0x324] sm:$0xf] %v1457
        %1602 = vst [vmem:[#allocation2 + $0x330] sm:$0xf] %v1458
        %1603 = vst [vmem:[#allocation2 + $0x33c] sm:$0xf] %v1459
        %1604 = vst [vmem:[#allocation2 + $0x348] sm:$0xf] %v1460
        %1605 = vst [vmem:[#allocation2 + $0x354] sm:$0xf] %v1461
        %vm1678 = vcmask 1046528
        %v1679 = vrot.slane %v1174, 1
        %v1680 = vrot.slane %v1175, 1
        %v1681 = vsel %vm1678, %v1679, %v1680
        %v1682 = vrot.slane %v1176, 1
        %v1683 = vsel %vm1678, %v1680, %v1682
        %v1684 = vrot.slane %v1177, 1
        %v1685 = vsel %vm1678, %v1682, %v1684
        %v1686 = vrot.slane %v1178, 1
        %v1687 = vsel %vm1678, %v1684, %v1686
        %v1688 = vrot.slane %v1179, 1
        %v1689 = vsel %vm1678, %v1686, %v1688
        %v1690 = vrot.slane %v1180, 1
        %v1691 = vsel %vm1678, %v1688, %v1690
        %v1692 = vrot.slane %v1181, 1
        %v1693 = vsel %vm1678, %v1690, %v1692
        %v1694 = vrot.slane %v1182, 1
        %v1695 = vsel %vm1678, %v1692, %v1694
        %v1696 = vrot.slane %v1183, 1
        %v1697 = vsel %vm1678, %v1694, %v1696
        %v1698 = vrot.slane %v1184, 1
        %v1699 = vsel %vm1678, %v1696, %v1698
        %v1700 = vrot.slane %v1185, 1
        %v1701 = vsel %vm1678, %v1698, %v1700
        %v1702 = vrot.slane %v1186, 1
        %v1703 = vsel %vm1678, %v1700, %v1702
        %v1704 = vrot.slane %v1187, 1
        %v1705 = vsel %vm1678, %v1702, %v1704
        %v1706 = vrot.slane %v1188, 1
        %v1707 = vsel %vm1678, %v1704, %v1706
        %v1708 = vrot.slane %v1189, 1
        %v1709 = vsel %vm1678, %v1706, %v1708
        %v1710 = vrot.slane %v1190, 1
        %v1711 = vsel %vm1678, %v1708, %v1710
        %v1712 = vrot.slane %v1191, 1
        %v1713 = vsel %vm1678, %v1710, %v1712
        %v1714 = vrot.slane %v1192, 1
        %v1715 = vsel %vm1678, %v1712, %v1714
        %v1716 = vrot.slane %v1193, 1
        %v1717 = vsel %vm1678, %v1714, %v1716
        %v1718 = vrot.slane %v1194, 1
        %v1719 = vsel %vm1678, %v1716, %v1718
        %v1720 = vrot.slane %v1195, 1
        %v1721 = vsel %vm1678, %v1718, %v1720
        %v1722 = vrot.slane %v1196, 1
        %v1723 = vsel %vm1678, %v1720, %v1722
        %v1724 = vrot.slane %v1197, 1
        %v1725 = vsel %vm1678, %v1722, %v1724
        %v1726 = vrot.slane %v1198, 1
        %v1727 = vsel %vm1678, %v1724, %v1726
        %v1728 = vrot.slane %v1199, 1
        %v1729 = vsel %vm1678, %v1726, %v1728
        %v1730 = vrot.slane %v1200, 1
        %v1731 = vsel %vm1678, %v1728, %v1730
        %v1732 = vrot.slane %v1201, 1
        %v1733 = vsel %vm1678, %v1730, %v1732
        %v1734 = vrot.slane %v1202, 1
        %v1735 = vsel %vm1678, %v1732, %v1734
        %v1736 = vrot.slane %v1203, 1
        %v1737 = vsel %vm1678, %v1734, %v1736
        %v1738 = vrot.slane %v1204, 1
        %v1739 = vsel %vm1678, %v1736, %v1738
        %v1740 = vrot.slane %v1205, 1
        %v1741 = vsel %vm1678, %v1738, %v1740
        %v1742 = vrot.slane %v1206, 1
        %v1743 = vsel %vm1678, %v1740, %v1742
        %v1744 = vrot.slane %v1207, 1
        %v1745 = vsel %vm1678, %v1742, %v1744
        %v1746 = vrot.slane %v1208, 1
        %v1747 = vsel %vm1678, %v1744, %v1746
        %v1748 = vrot.slane %v1209, 1
        %v1749 = vsel %vm1678, %v1746, %v1748
        %v1750 = vrot.slane %v1210, 1
        %v1751 = vsel %vm1678, %v1748, %v1750
        %v1752 = vrot.slane %v1211, 1
        %v1753 = vsel %vm1678, %v1750, %v1752
        %v1754 = vrot.slane %v1212, 1
        %v1755 = vsel %vm1678, %v1752, %v1754
        %v1756 = vrot.slane %v1213, 1
        %v1757 = vsel %vm1678, %v1754, %v1756
        %v1758 = vrot.slane %v1214, 1
        %v1759 = vsel %vm1678, %v1756, %v1758
        %v1760 = vrot.slane %v1215, 1
        %v1761 = vsel %vm1678, %v1758, %v1760
        %v1762 = vrot.slane %v1216, 1
        %v1763 = vsel %vm1678, %v1760, %v1762
        %v1764 = vrot.slane %v1217, 1
        %v1765 = vsel %vm1678, %v1762, %v1764
        %v1766 = vrot.slane %v1218, 1
        %v1767 = vsel %vm1678, %v1764, %v1766
        %v1768 = vrot.slane %v1219, 1
        %v1769 = vsel %vm1678, %v1766, %v1768
        %v1770 = vrot.slane %v1220, 1
        %v1771 = vsel %vm1678, %v1768, %v1770
        %v1772 = vrot.slane %v1221, 1
        %v1773 = vsel %vm1678, %v1770, %v1772
        %v1774 = vrot.slane %v1222, 1
        %v1775 = vsel %vm1678, %v1772, %v1774
        %v1776 = vrot.slane %v1223, 1
        %v1777 = vsel %vm1678, %v1774, %v1776
        %v1778 = vrot.slane %v1224, 1
        %v1779 = vsel %vm1678, %v1776, %v1778
        %v1780 = vrot.slane %v1225, 1
        %v1781 = vsel %vm1678, %v1778, %v1780
        %v1782 = vrot.slane %v1226, 1
        %v1783 = vsel %vm1678, %v1780, %v1782
        %v1784 = vrot.slane %v1227, 1
        %v1785 = vsel %vm1678, %v1782, %v1784
        %v1786 = vrot.slane %v1228, 1
        %v1787 = vsel %vm1678, %v1784, %v1786
        %v1788 = vrot.slane %v1229, 1
        %v1789 = vsel %vm1678, %v1786, %v1788
        %v1790 = vrot.slane %v1230, 1
        %v1791 = vsel %vm1678, %v1788, %v1790
        %v1792 = vrot.slane %v1231, 1
        %v1793 = vsel %vm1678, %v1790, %v1792
        %v1794 = vrot.slane %v1232, 1
        %v1795 = vsel %vm1678, %v1792, %v1794
        %v1796 = vrot.slane %v1233, 1
        %v1797 = vsel %vm1678, %v1794, %v1796
        %v1798 = vrot.slane %v1234, 1
        %v1799 = vsel %vm1678, %v1796, %v1798
        %v1800 = vrot.slane %v1235, 1
        %v1801 = vsel %vm1678, %v1798, %v1800
        %v1802 = vrot.slane %v1236, 1
        %v1803 = vsel %vm1678, %v1800, %v1802
        %v1804 = vrot.slane %v1237, 1
        %v1805 = vsel %vm1678, %v1802, %v1804
        %v1806 = vrot.slane %v1238, 1
        %v1807 = vsel %vm1678, %v1804, %v1806
        %v1808 = vrot.slane %v1239, 1
        %v1809 = vsel %vm1678, %v1806, %v1808
        %v1810 = vrot.slane %v1240, 1
        %v1811 = vsel %vm1678, %v1808, %v1810
        %v1812 = vrot.slane %v1241, 1
        %v1813 = vsel %vm1678, %v1810, %v1812
        %v1814 = vrot.slane %v1242, 1
        %v1815 = vsel %vm1678, %v1812, %v1814
        %v1816 = vrot.slane %v1243, 1
        %v1817 = vsel %vm1678, %v1814, %v1816
        %v1818 = vrot.slane %v1244, 1
        %v1819 = vsel %vm1678, %v1816, %v1818
        %v1820 = vrot.slane %v1245, 1
        %v1821 = vsel %vm1678, %v1818, %v1820
        %v1894 = vsel %vm1678, %v1820, 0.0
        %v1895 = vpack.c.bf16 %v1683, %v1681
        %v1896 = vpack.c.bf16 %v1687, %v1685
        %v1897 = vpack.c.bf16 %v1691, %v1689
        %v1898 = vpack.c.bf16 %v1695, %v1693
        %v1899 = vpack.c.bf16 %v1699, %v1697
        %v1900 = vpack.c.bf16 %v1703, %v1701
        %v1901 = vpack.c.bf16 %v1707, %v1705
        %v1902 = vpack.c.bf16 %v1711, %v1709
        %v1903 = vpack.c.bf16 %v1715, %v1713
        %v1904 = vpack.c.bf16 %v1719, %v1717
        %v1905 = vpack.c.bf16 %v1723, %v1721
        %v1906 = vpack.c.bf16 %v1727, %v1725
        %v1907 = vpack.c.bf16 %v1731, %v1729
        %v1908 = vpack.c.bf16 %v1735, %v1733
        %v1909 = vpack.c.bf16 %v1739, %v1737
        %v1910 = vpack.c.bf16 %v1743, %v1741
        %v1911 = vpack.c.bf16 %v1747, %v1745
        %v1912 = vpack.c.bf16 %v1751, %v1749
        %v1913 = vpack.c.bf16 %v1755, %v1753
        %v1914 = vpack.c.bf16 %v1759, %v1757
        %v1915 = vpack.c.bf16 %v1763, %v1761
        %v1916 = vpack.c.bf16 %v1767, %v1765
        %v1917 = vpack.c.bf16 %v1771, %v1769
        %v1918 = vpack.c.bf16 %v1775, %v1773
        %v1919 = vpack.c.bf16 %v1779, %v1777
        %v1920 = vpack.c.bf16 %v1783, %v1781
        %v1921 = vpack.c.bf16 %v1787, %v1785
        %v1922 = vpack.c.bf16 %v1791, %v1789
        %v1923 = vpack.c.bf16 %v1795, %v1793
        %v1924 = vpack.c.bf16 %v1799, %v1797
        %v1925 = vpack.c.bf16 %v1803, %v1801
        %v1926 = vpack.c.bf16 %v1807, %v1805
        %v1927 = vpack.c.bf16 %v1811, %v1809
        %v1928 = vpack.c.bf16 %v1815, %v1813
        %v1929 = vpack.c.bf16 %v1819, %v1817
        %v1930 = vpack.c.bf16 %v1894, %v1821
        %v1967 = vunpack.c.l.b16 %v1895
        %v1968 = vunpack.c.h.b16 %v1895
        %v1969 = vunpack.c.l.b16 %v1896
        %v1970 = vunpack.c.h.b16 %v1896
        %v1971 = vunpack.c.l.b16 %v1897
        %v1972 = vunpack.c.h.b16 %v1897
        %v1973 = vunpack.c.l.b16 %v1898
        %v1974 = vunpack.c.h.b16 %v1898
        %v1975 = vunpack.c.l.b16 %v1899
        %v1976 = vunpack.c.h.b16 %v1899
        %v1977 = vunpack.c.l.b16 %v1900
        %v1978 = vunpack.c.h.b16 %v1900
        %v1979 = vunpack.c.l.b16 %v1901
        %v1980 = vunpack.c.h.b16 %v1901
        %v1981 = vunpack.c.l.b16 %v1902
        %v1982 = vunpack.c.h.b16 %v1902
        %v1983 = vunpack.c.l.b16 %v1903
        %v1984 = vunpack.c.h.b16 %v1903
        %v1985 = vunpack.c.l.b16 %v1904
        %v1986 = vunpack.c.h.b16 %v1904
        %v1987 = vunpack.c.l.b16 %v1905
        %v1988 = vunpack.c.h.b16 %v1905
        %v1989 = vunpack.c.l.b16 %v1906
        %v1990 = vunpack.c.h.b16 %v1906
        %v1991 = vunpack.c.l.b16 %v1907
        %v1992 = vunpack.c.h.b16 %v1907
        %v1993 = vunpack.c.l.b16 %v1908
        %v1994 = vunpack.c.h.b16 %v1908
        %v1995 = vunpack.c.l.b16 %v1909
        %v1996 = vunpack.c.h.b16 %v1909
        %v1997 = vunpack.c.l.b16 %v1910
        %v1998 = vunpack.c.h.b16 %v1910
        %v1999 = vunpack.c.l.b16 %v1911
        %v2000 = vunpack.c.h.b16 %v1911
        %v2001 = vunpack.c.l.b16 %v1912
        %v2002 = vunpack.c.h.b16 %v1912
        %v2003 = vunpack.c.l.b16 %v1913
        %v2004 = vunpack.c.h.b16 %v1913
        %v2005 = vunpack.c.l.b16 %v1914
        %v2006 = vunpack.c.h.b16 %v1914
        %v2007 = vunpack.c.l.b16 %v1915
        %v2008 = vunpack.c.h.b16 %v1915
        %v2009 = vunpack.c.l.b16 %v1916
        %v2010 = vunpack.c.h.b16 %v1916
        %v2011 = vunpack.c.l.b16 %v1917
        %v2012 = vunpack.c.h.b16 %v1917
        %v2013 = vunpack.c.l.b16 %v1918
        %v2014 = vunpack.c.h.b16 %v1918
        %v2015 = vunpack.c.l.b16 %v1919
        %v2016 = vunpack.c.h.b16 %v1919
        %v2017 = vunpack.c.l.b16 %v1920
        %v2018 = vunpack.c.h.b16 %v1920
        %v2019 = vunpack.c.l.b16 %v1921
        %v2020 = vunpack.c.h.b16 %v1921
        %v2021 = vunpack.c.l.b16 %v1922
        %v2022 = vunpack.c.h.b16 %v1922
        %v2023 = vunpack.c.l.b16 %v1923
        %v2024 = vunpack.c.h.b16 %v1923
        %v2025 = vunpack.c.l.b16 %v1924
        %v2026 = vunpack.c.h.b16 %v1924
        %v2027 = vunpack.c.l.b16 %v1925
        %v2028 = vunpack.c.h.b16 %v1925
        %v2029 = vunpack.c.l.b16 %v1926
        %v2030 = vunpack.c.h.b16 %v1926
        %v2031 = vunpack.c.l.b16 %v1927
        %v2032 = vunpack.c.h.b16 %v1927
        %v2033 = vunpack.c.l.b16 %v1928
        %v2034 = vunpack.c.h.b16 %v1928
        %v2035 = vunpack.c.l.b16 %v1929
        %v2036 = vunpack.c.h.b16 %v1929
        %v2037 = vunpack.c.l.b16 %v1930
        %v2038 = vunpack.c.h.b16 %v1930
        %v2039 = vpack.c.b16 %v1967, %v1967
        %v2040 = vpack.c.b16 %v1968, %v1968
        %v2041 = vpack.c.b16 %v1969, %v1969
        %v2042 = vpack.c.b16 %v1970, %v1970
        %v2043 = vpack.c.b16 %v1971, %v1971
        %v2044 = vpack.c.b16 %v1972, %v1972
        %v2045 = vpack.c.b16 %v1973, %v1973
        %v2046 = vpack.c.b16 %v1974, %v1974
        %v2047 = vpack.c.b16 %v1975, %v1975
        %v2048 = vpack.c.b16 %v1976, %v1976
        %v2049 = vpack.c.b16 %v1977, %v1977
        %v2050 = vpack.c.b16 %v1978, %v1978
        %v2051 = vpack.c.b16 %v1979, %v1979
        %v2052 = vpack.c.b16 %v1980, %v1980
        %v2053 = vpack.c.b16 %v1981, %v1981
        %v2054 = vpack.c.b16 %v1982, %v1982
        %v2055 = vpack.c.b16 %v1983, %v1983
        %v2056 = vpack.c.b16 %v1984, %v1984
        %v2057 = vpack.c.b16 %v1985, %v1985
        %v2058 = vpack.c.b16 %v1986, %v1986
        %v2059 = vpack.c.b16 %v1987, %v1987
        %v2060 = vpack.c.b16 %v1988, %v1988
        %v2061 = vpack.c.b16 %v1989, %v1989
        %v2062 = vpack.c.b16 %v1990, %v1990
        %v2063 = vpack.c.b16 %v1991, %v1991
        %v2064 = vpack.c.b16 %v1992, %v1992
        %v2065 = vpack.c.b16 %v1993, %v1993
        %v2066 = vpack.c.b16 %v1994, %v1994
        %v2067 = vpack.c.b16 %v1995, %v1995
        %v2068 = vpack.c.b16 %v1996, %v1996
        %v2069 = vpack.c.b16 %v1997, %v1997
        %v2070 = vpack.c.b16 %v1998, %v1998
        %v2071 = vpack.c.b16 %v1999, %v1999
        %v2072 = vpack.c.b16 %v2000, %v2000
        %v2073 = vpack.c.b16 %v2001, %v2001
        %v2074 = vpack.c.b16 %v2002, %v2002
        %v2075 = vpack.c.b16 %v2003, %v2003
        %v2076 = vpack.c.b16 %v2004, %v2004
        %v2077 = vpack.c.b16 %v2005, %v2005
        %v2078 = vpack.c.b16 %v2006, %v2006
        %v2079 = vpack.c.b16 %v2007, %v2007
        %v2080 = vpack.c.b16 %v2008, %v2008
        %v2081 = vpack.c.b16 %v2009, %v2009
        %v2082 = vpack.c.b16 %v2010, %v2010
        %v2083 = vpack.c.b16 %v2011, %v2011
        %v2084 = vpack.c.b16 %v2012, %v2012
        %v2085 = vpack.c.b16 %v2013, %v2013
        %v2086 = vpack.c.b16 %v2014, %v2014
        %v2087 = vpack.c.b16 %v2015, %v2015
        %v2088 = vpack.c.b16 %v2016, %v2016
        %v2089 = vpack.c.b16 %v2017, %v2017
        %v2090 = vpack.c.b16 %v2018, %v2018
        %v2091 = vpack.c.b16 %v2019, %v2019
        %v2092 = vpack.c.b16 %v2020, %v2020
        %v2093 = vpack.c.b16 %v2021, %v2021
        %v2094 = vpack.c.b16 %v2022, %v2022
        %v2095 = vpack.c.b16 %v2023, %v2023
        %v2096 = vpack.c.b16 %v2024, %v2024
        %v2097 = vpack.c.b16 %v2025, %v2025
        %v2098 = vpack.c.b16 %v2026, %v2026
        %v2099 = vpack.c.b16 %v2027, %v2027
        %v2100 = vpack.c.b16 %v2028, %v2028
        %v2101 = vpack.c.b16 %v2029, %v2029
        %v2102 = vpack.c.b16 %v2030, %v2030
        %v2103 = vpack.c.b16 %v2031, %v2031
        %v2104 = vpack.c.b16 %v2032, %v2032
        %v2105 = vpack.c.b16 %v2033, %v2033
        %v2106 = vpack.c.b16 %v2034, %v2034
        %v2107 = vpack.c.b16 %v2035, %v2035
        %v2108 = vpack.c.b16 %v2036, %v2036
        %v2109 = vpack.c.b16 %v2037, %v2037
        %v2110 = vpack.c.b16 %v2038, %v2038
        %2183 = vst [vmem:[#allocation2 + $0x4] sm:$0xf] %v2039
        %2184 = vst [vmem:[#allocation2 + $0x10] sm:$0xf] %v2040
        %2185 = vst [vmem:[#allocation2 + $0x1c] sm:$0xf] %v2041
        %2186 = vst [vmem:[#allocation2 + $0x28] sm:$0xf] %v2042
        %2187 = vst [vmem:[#allocation2 + $0x34] sm:$0xf] %v2043
        %2188 = vst [vmem:[#allocation2 + $0x40] sm:$0xf] %v2044
        %2189 = vst [vmem:[#allocation2 + $0x4c] sm:$0xf] %v2045
        %2190 = vst [vmem:[#allocation2 + $0x58] sm:$0xf] %v2046
        %2191 = vst [vmem:[#allocation2 + $0x64] sm:$0xf] %v2047
        %2192 = vst [vmem:[#allocation2 + $0x70] sm:$0xf] %v2048
        %2193 = vst [vmem:[#allocation2 + $0x7c] sm:$0xf] %v2049
        %2194 = vst [vmem:[#allocation2 + $0x88] sm:$0xf] %v2050
        %2195 = vst [vmem:[#allocation2 + $0x94] sm:$0xf] %v2051
        %2196 = vst [vmem:[#allocation2 + $0xa0] sm:$0xf] %v2052
        %2197 = vst [vmem:[#allocation2 + $0xac] sm:$0xf] %v2053
        %2198 = vst [vmem:[#allocation2 + $0xb8] sm:$0xf] %v2054
        %2199 = vst [vmem:[#allocation2 + $0xc4] sm:$0xf] %v2055
        %2200 = vst [vmem:[#allocation2 + $0xd0] sm:$0xf] %v2056
        %2201 = vst [vmem:[#allocation2 + $0xdc] sm:$0xf] %v2057
        %2202 = vst [vmem:[#allocation2 + $0xe8] sm:$0xf] %v2058
        %2203 = vst [vmem:[#allocation2 + $0xf4] sm:$0xf] %v2059
        %2204 = vst [vmem:[#allocation2 + $0x100] sm:$0xf] %v2060
        %2205 = vst [vmem:[#allocation2 + $0x10c] sm:$0xf] %v2061
        %2206 = vst [vmem:[#allocation2 + $0x118] sm:$0xf] %v2062
        %2207 = vst [vmem:[#allocation2 + $0x124] sm:$0xf] %v2063
        %2208 = vst [vmem:[#allocation2 + $0x130] sm:$0xf] %v2064
        %2209 = vst [vmem:[#allocation2 + $0x13c] sm:$0xf] %v2065
        %2210 = vst [vmem:[#allocation2 + $0x148] sm:$0xf] %v2066
        %2211 = vst [vmem:[#allocation2 + $0x154] sm:$0xf] %v2067
        %2212 = vst [vmem:[#allocation2 + $0x160] sm:$0xf] %v2068
        %2213 = vst [vmem:[#allocation2 + $0x16c] sm:$0xf] %v2069
        %2214 = vst [vmem:[#allocation2 + $0x178] sm:$0xf] %v2070
        %2215 = vst [vmem:[#allocation2 + $0x184] sm:$0xf] %v2071
        %2216 = vst [vmem:[#allocation2 + $0x190] sm:$0xf] %v2072
        %2217 = vst [vmem:[#allocation2 + $0x19c] sm:$0xf] %v2073
        %2218 = vst [vmem:[#allocation2 + $0x1a8] sm:$0xf] %v2074
        %2219 = vst [vmem:[#allocation2 + $0x1b4] sm:$0xf] %v2075
        %2220 = vst [vmem:[#allocation2 + $0x1c0] sm:$0xf] %v2076
        %2221 = vst [vmem:[#allocation2 + $0x1cc] sm:$0xf] %v2077
        %2222 = vst [vmem:[#allocation2 + $0x1d8] sm:$0xf] %v2078
        %2223 = vst [vmem:[#allocation2 + $0x1e4] sm:$0xf] %v2079
        %2224 = vst [vmem:[#allocation2 + $0x1f0] sm:$0xf] %v2080
        %2225 = vst [vmem:[#allocation2 + $0x1fc] sm:$0xf] %v2081
        %2226 = vst [vmem:[#allocation2 + $0x208] sm:$0xf] %v2082
        %2227 = vst [vmem:[#allocation2 + $0x214] sm:$0xf] %v2083
        %2228 = vst [vmem:[#allocation2 + $0x220] sm:$0xf] %v2084
        %2229 = vst [vmem:[#allocation2 + $0x22c] sm:$0xf] %v2085
        %2230 = vst [vmem:[#allocation2 + $0x238] sm:$0xf] %v2086
        %2231 = vst [vmem:[#allocation2 + $0x244] sm:$0xf] %v2087
        %2232 = vst [vmem:[#allocation2 + $0x250] sm:$0xf] %v2088
        %2233 = vst [vmem:[#allocation2 + $0x25c] sm:$0xf] %v2089
        %2234 = vst [vmem:[#allocation2 + $0x268] sm:$0xf] %v2090
        %2235 = vst [vmem:[#allocation2 + $0x274] sm:$0xf] %v2091
        %2236 = vst [vmem:[#allocation2 + $0x280] sm:$0xf] %v2092
        %2237 = vst [vmem:[#allocation2 + $0x28c] sm:$0xf] %v2093
        %2238 = vst [vmem:[#allocation2 + $0x298] sm:$0xf] %v2094
        %2239 = vst [vmem:[#allocation2 + $0x2a4] sm:$0xf] %v2095
        %2240 = vst [vmem:[#allocation2 + $0x2b0] sm:$0xf] %v2096
        %2241 = vst [vmem:[#allocation2 + $0x2bc] sm:$0xf] %v2097
        %2242 = vst [vmem:[#allocation2 + $0x2c8] sm:$0xf] %v2098
        %2243 = vst [vmem:[#allocation2 + $0x2d4] sm:$0xf] %v2099
        %2244 = vst [vmem:[#allocation2 + $0x2e0] sm:$0xf] %v2100
        %2245 = vst [vmem:[#allocation2 + $0x2ec] sm:$0xf] %v2101
        %2246 = vst [vmem:[#allocation2 + $0x2f8] sm:$0xf] %v2102
        %2247 = vst [vmem:[#allocation2 + $0x304] sm:$0xf] %v2103
        %2248 = vst [vmem:[#allocation2 + $0x310] sm:$0xf] %v2104
        %2249 = vst [vmem:[#allocation2 + $0x31c] sm:$0xf] %v2105
        %2250 = vst [vmem:[#allocation2 + $0x328] sm:$0xf] %v2106
        %2251 = vst [vmem:[#allocation2 + $0x334] sm:$0xf] %v2107
        %2252 = vst [vmem:[#allocation2 + $0x340] sm:$0xf] %v2108
        %2253 = vst [vmem:[#allocation2 + $0x34c] sm:$0xf] %v2109
        %2254 = vst [vmem:[#allocation2 + $0x358] sm:$0xf] %v2110
        %vm2255 = vcmask 1045504
        %v2256 = vrot.slane %v1174, 2
        %v2257 = vrot.slane %v1175, 2
        %v2258 = vsel %vm2255, %v2256, %v2257
        %v2259 = vrot.slane %v1176, 2
        %v2260 = vsel %vm2255, %v2257, %v2259
        %v2261 = vrot.slane %v1177, 2
        %v2262 = vsel %vm2255, %v2259, %v2261
        %v2263 = vrot.slane %v1178, 2
        %v2264 = vsel %vm2255, %v2261, %v2263
        %v2265 = vrot.slane %v1179, 2
        %v2266 = vsel %vm2255, %v2263, %v2265
        %v2267 = vrot.slane %v1180, 2
        %v2268 = vsel %vm2255, %v2265, %v2267
        %v2269 = vrot.slane %v1181, 2
        %v2270 = vsel %vm2255, %v2267, %v2269
        %v2271 = vrot.slane %v1182, 2
        %v2272 = vsel %vm2255, %v2269, %v2271
        %v2273 = vrot.slane %v1183, 2
        %v2274 = vsel %vm2255, %v2271, %v2273
        %v2275 = vrot.slane %v1184, 2
        %v2276 = vsel %vm2255, %v2273, %v2275
        %v2277 = vrot.slane %v1185, 2
        %v2278 = vsel %vm2255, %v2275, %v2277
        %v2279 = vrot.slane %v1186, 2
        %v2280 = vsel %vm2255, %v2277, %v2279
        %v2281 = vrot.slane %v1187, 2
        %v2282 = vsel %vm2255, %v2279, %v2281
        %v2283 = vrot.slane %v1188, 2
        %v2284 = vsel %vm2255, %v2281, %v2283
        %v2285 = vrot.slane %v1189, 2
        %v2286 = vsel %vm2255, %v2283, %v2285
        %v2287 = vrot.slane %v1190, 2
        %v2288 = vsel %vm2255, %v2285, %v2287
        %v2289 = vrot.slane %v1191, 2
        %v2290 = vsel %vm2255, %v2287, %v2289
        %v2291 = vrot.slane %v1192, 2
        %v2292 = vsel %vm2255, %v2289, %v2291
        %v2293 = vrot.slane %v1193, 2
        %v2294 = vsel %vm2255, %v2291, %v2293
        %v2295 = vrot.slane %v1194, 2
        %v2296 = vsel %vm2255, %v2293, %v2295
        %v2297 = vrot.slane %v1195, 2
        %v2298 = vsel %vm2255, %v2295, %v2297
        %v2299 = vrot.slane %v1196, 2
        %v2300 = vsel %vm2255, %v2297, %v2299
        %v2301 = vrot.slane %v1197, 2
        %v2302 = vsel %vm2255, %v2299, %v2301
        %v2303 = vrot.slane %v1198, 2
        %v2304 = vsel %vm2255, %v2301, %v2303
        %v2305 = vrot.slane %v1199, 2
        %v2306 = vsel %vm2255, %v2303, %v2305
        %v2307 = vrot.slane %v1200, 2
        %v2308 = vsel %vm2255, %v2305, %v2307
        %v2309 = vrot.slane %v1201, 2
        %v2310 = vsel %vm2255, %v2307, %v2309
        %v2311 = vrot.slane %v1202, 2
        %v2312 = vsel %vm2255, %v2309, %v2311
        %v2313 = vrot.slane %v1203, 2
        %v2314 = vsel %vm2255, %v2311, %v2313
        %v2315 = vrot.slane %v1204, 2
        %v2316 = vsel %vm2255, %v2313, %v2315
        %v2317 = vrot.slane %v1205, 2
        %v2318 = vsel %vm2255, %v2315, %v2317
        %v2319 = vrot.slane %v1206, 2
        %v2320 = vsel %vm2255, %v2317, %v2319
        %v2321 = vrot.slane %v1207, 2
        %v2322 = vsel %vm2255, %v2319, %v2321
        %v2323 = vrot.slane %v1208, 2
        %v2324 = vsel %vm2255, %v2321, %v2323
        %v2325 = vrot.slane %v1209, 2
        %v2326 = vsel %vm2255, %v2323, %v2325
        %v2327 = vrot.slane %v1210, 2
        %v2328 = vsel %vm2255, %v2325, %v2327
        %v2329 = vrot.slane %v1211, 2
        %v2330 = vsel %vm2255, %v2327, %v2329
        %v2331 = vrot.slane %v1212, 2
        %v2332 = vsel %vm2255, %v2329, %v2331
        %v2333 = vrot.slane %v1213, 2
        %v2334 = vsel %vm2255, %v2331, %v2333
        %v2335 = vrot.slane %v1214, 2
        %v2336 = vsel %vm2255, %v2333, %v2335
        %v2337 = vrot.slane %v1215, 2
        %v2338 = vsel %vm2255, %v2335, %v2337
        %v2339 = vrot.slane %v1216, 2
        %v2340 = vsel %vm2255, %v2337, %v2339
        %v2341 = vrot.slane %v1217, 2
        %v2342 = vsel %vm2255, %v2339, %v2341
        %v2343 = vrot.slane %v1218, 2
        %v2344 = vsel %vm2255, %v2341, %v2343
        %v2345 = vrot.slane %v1219, 2
        %v2346 = vsel %vm2255, %v2343, %v2345
        %v2347 = vrot.slane %v1220, 2
        %v2348 = vsel %vm2255, %v2345, %v2347
        %v2349 = vrot.slane %v1221, 2
        %v2350 = vsel %vm2255, %v2347, %v2349
        %v2351 = vrot.slane %v1222, 2
        %v2352 = vsel %vm2255, %v2349, %v2351
        %v2353 = vrot.slane %v1223, 2
        %v2354 = vsel %vm2255, %v2351, %v2353
        %v2355 = vrot.slane %v1224, 2
        %v2356 = vsel %vm2255, %v2353, %v2355
        %v2357 = vrot.slane %v1225, 2
        %v2358 = vsel %vm2255, %v2355, %v2357
        %v2359 = vrot.slane %v1226, 2
        %v2360 = vsel %vm2255, %v2357, %v2359
        %v2361 = vrot.slane %v1227, 2
        %v2362 = vsel %vm2255, %v2359, %v2361
        %v2363 = vrot.slane %v1228, 2
        %v2364 = vsel %vm2255, %v2361, %v2363
        %v2365 = vrot.slane %v1229, 2
        %v2366 = vsel %vm2255, %v2363, %v2365
        %v2367 = vrot.slane %v1230, 2
        %v2368 = vsel %vm2255, %v2365, %v2367
        %v2369 = vrot.slane %v1231, 2
        %v2370 = vsel %vm2255, %v2367, %v2369
        %v2371 = vrot.slane %v1232, 2
        %v2372 = vsel %vm2255, %v2369, %v2371
        %v2373 = vrot.slane %v1233, 2
        %v2374 = vsel %vm2255, %v2371, %v2373
        %v2375 = vrot.slane %v1234, 2
        %v2376 = vsel %vm2255, %v2373, %v2375
        %v2377 = vrot.slane %v1235, 2
        %v2378 = vsel %vm2255, %v2375, %v2377
        %v2379 = vrot.slane %v1236, 2
        %v2380 = vsel %vm2255, %v2377, %v2379
        %v2381 = vrot.slane %v1237, 2
        %v2382 = vsel %vm2255, %v2379, %v2381
        %v2383 = vrot.slane %v1238, 2
        %v2384 = vsel %vm2255, %v2381, %v2383
        %v2385 = vrot.slane %v1239, 2
        %v2386 = vsel %vm2255, %v2383, %v2385
        %v2387 = vrot.slane %v1240, 2
        %v2388 = vsel %vm2255, %v2385, %v2387
        %v2389 = vrot.slane %v1241, 2
        %v2390 = vsel %vm2255, %v2387, %v2389
        %v2391 = vrot.slane %v1242, 2
        %v2392 = vsel %vm2255, %v2389, %v2391
        %v2393 = vrot.slane %v1243, 2
        %v2394 = vsel %vm2255, %v2391, %v2393
        %v2395 = vrot.slane %v1244, 2
        %v2396 = vsel %vm2255, %v2393, %v2395
        %v2397 = vrot.slane %v1245, 2
        %v2398 = vsel %vm2255, %v2395, %v2397
        %v2471 = vsel %vm2255, %v2397, 0.0
        %v2472 = vpack.c.bf16 %v2260, %v2258
        %v2473 = vpack.c.bf16 %v2264, %v2262
        %v2474 = vpack.c.bf16 %v2268, %v2266
        %v2475 = vpack.c.bf16 %v2272, %v2270
        %v2476 = vpack.c.bf16 %v2276, %v2274
        %v2477 = vpack.c.bf16 %v2280, %v2278
        %v2478 = vpack.c.bf16 %v2284, %v2282
        %v2479 = vpack.c.bf16 %v2288, %v2286
        %v2480 = vpack.c.bf16 %v2292, %v2290
        %v2481 = vpack.c.bf16 %v2296, %v2294
        %v2482 = vpack.c.bf16 %v2300, %v2298
        %v2483 = vpack.c.bf16 %v2304, %v2302
        %v2484 = vpack.c.bf16 %v2308, %v2306
        %v2485 = vpack.c.bf16 %v2312, %v2310
        %v2486 = vpack.c.bf16 %v2316, %v2314
        %v2487 = vpack.c.bf16 %v2320, %v2318
        %v2488 = vpack.c.bf16 %v2324, %v2322
        %v2489 = vpack.c.bf16 %v2328, %v2326
        %v2490 = vpack.c.bf16 %v2332, %v2330
        %v2491 = vpack.c.bf16 %v2336, %v2334
        %v2492 = vpack.c.bf16 %v2340, %v2338
        %v2493 = vpack.c.bf16 %v2344, %v2342
        %v2494 = vpack.c.bf16 %v2348, %v2346
        %v2495 = vpack.c.bf16 %v2352, %v2350
        %v2496 = vpack.c.bf16 %v2356, %v2354
        %v2497 = vpack.c.bf16 %v2360, %v2358
        %v2498 = vpack.c.bf16 %v2364, %v2362
        %v2499 = vpack.c.bf16 %v2368, %v2366
        %v2500 = vpack.c.bf16 %v2372, %v2370
        %v2501 = vpack.c.bf16 %v2376, %v2374
        %v2502 = vpack.c.bf16 %v2380, %v2378
        %v2503 = vpack.c.bf16 %v2384, %v2382
        %v2504 = vpack.c.bf16 %v2388, %v2386
        %v2505 = vpack.c.bf16 %v2392, %v2390
        %v2506 = vpack.c.bf16 %v2396, %v2394
        %v2507 = vpack.c.bf16 %v2471, %v2398
        %v2544 = vunpack.c.l.b16 %v2472
        %v2545 = vunpack.c.h.b16 %v2472
        %v2546 = vunpack.c.l.b16 %v2473
        %v2547 = vunpack.c.h.b16 %v2473
        %v2548 = vunpack.c.l.b16 %v2474
        %v2549 = vunpack.c.h.b16 %v2474
        %v2550 = vunpack.c.l.b16 %v2475
        %v2551 = vunpack.c.h.b16 %v2475
        %v2552 = vunpack.c.l.b16 %v2476
        %v2553 = vunpack.c.h.b16 %v2476
        %v2554 = vunpack.c.l.b16 %v2477
        %v2555 = vunpack.c.h.b16 %v2477
        %v2556 = vunpack.c.l.b16 %v2478
        %v2557 = vunpack.c.h.b16 %v2478
        %v2558 = vunpack.c.l.b16 %v2479
        %v2559 = vunpack.c.h.b16 %v2479
        %v2560 = vunpack.c.l.b16 %v2480
        %v2561 = vunpack.c.h.b16 %v2480
        %v2562 = vunpack.c.l.b16 %v2481
        %v2563 = vunpack.c.h.b16 %v2481
        %v2564 = vunpack.c.l.b16 %v2482
        %v2565 = vunpack.c.h.b16 %v2482
        %v2566 = vunpack.c.l.b16 %v2483
        %v2567 = vunpack.c.h.b16 %v2483
        %v2568 = vunpack.c.l.b16 %v2484
        %v2569 = vunpack.c.h.b16 %v2484
        %v2570 = vunpack.c.l.b16 %v2485
        %v2571 = vunpack.c.h.b16 %v2485
        %v2572 = vunpack.c.l.b16 %v2486
        %v2573 = vunpack.c.h.b16 %v2486
        %v2574 = vunpack.c.l.b16 %v2487
        %v2575 = vunpack.c.h.b16 %v2487
        %v2576 = vunpack.c.l.b16 %v2488
        %v2577 = vunpack.c.h.b16 %v2488
        %v2578 = vunpack.c.l.b16 %v2489
        %v2579 = vunpack.c.h.b16 %v2489
        %v2580 = vunpack.c.l.b16 %v2490
        %v2581 = vunpack.c.h.b16 %v2490
        %v2582 = vunpack.c.l.b16 %v2491
        %v2583 = vunpack.c.h.b16 %v2491
        %v2584 = vunpack.c.l.b16 %v2492
        %v2585 = vunpack.c.h.b16 %v2492
        %v2586 = vunpack.c.l.b16 %v2493
        %v2587 = vunpack.c.h.b16 %v2493
        %v2588 = vunpack.c.l.b16 %v2494
        %v2589 = vunpack.c.h.b16 %v2494
        %v2590 = vunpack.c.l.b16 %v2495
        %v2591 = vunpack.c.h.b16 %v2495
        %v2592 = vunpack.c.l.b16 %v2496
        %v2593 = vunpack.c.h.b16 %v2496
        %v2594 = vunpack.c.l.b16 %v2497
        %v2595 = vunpack.c.h.b16 %v2497
        %v2596 = vunpack.c.l.b16 %v2498
        %v2597 = vunpack.c.h.b16 %v2498
        %v2598 = vunpack.c.l.b16 %v2499
        %v2599 = vunpack.c.h.b16 %v2499
        %v2600 = vunpack.c.l.b16 %v2500
        %v2601 = vunpack.c.h.b16 %v2500
        %v2602 = vunpack.c.l.b16 %v2501
        %v2603 = vunpack.c.h.b16 %v2501
        %v2604 = vunpack.c.l.b16 %v2502
        %v2605 = vunpack.c.h.b16 %v2502
        %v2606 = vunpack.c.l.b16 %v2503
        %v2607 = vunpack.c.h.b16 %v2503
        %v2608 = vunpack.c.l.b16 %v2504
        %v2609 = vunpack.c.h.b16 %v2504
        %v2610 = vunpack.c.l.b16 %v2505
        %v2611 = vunpack.c.h.b16 %v2505
        %v2612 = vunpack.c.l.b16 %v2506
        %v2613 = vunpack.c.h.b16 %v2506
        %v2614 = vunpack.c.l.b16 %v2507
        %v2615 = vunpack.c.h.b16 %v2507
        %v2616 = vpack.c.b16 %v2544, %v2544
        %v2617 = vpack.c.b16 %v2545, %v2545
        %v2618 = vpack.c.b16 %v2546, %v2546
        %v2619 = vpack.c.b16 %v2547, %v2547
        %v2620 = vpack.c.b16 %v2548, %v2548
        %v2621 = vpack.c.b16 %v2549, %v2549
        %v2622 = vpack.c.b16 %v2550, %v2550
        %v2623 = vpack.c.b16 %v2551, %v2551
        %v2624 = vpack.c.b16 %v2552, %v2552
        %v2625 = vpack.c.b16 %v2553, %v2553
        %v2626 = vpack.c.b16 %v2554, %v2554
        %v2627 = vpack.c.b16 %v2555, %v2555
        %v2628 = vpack.c.b16 %v2556, %v2556
        %v2629 = vpack.c.b16 %v2557, %v2557
        %v2630 = vpack.c.b16 %v2558, %v2558
        %v2631 = vpack.c.b16 %v2559, %v2559
        %v2632 = vpack.c.b16 %v2560, %v2560
        %v2633 = vpack.c.b16 %v2561, %v2561
        %v2634 = vpack.c.b16 %v2562, %v2562
        %v2635 = vpack.c.b16 %v2563, %v2563
        %v2636 = vpack.c.b16 %v2564, %v2564
        %v2637 = vpack.c.b16 %v2565, %v2565
        %v2638 = vpack.c.b16 %v2566, %v2566
        %v2639 = vpack.c.b16 %v2567, %v2567
        %v2640 = vpack.c.b16 %v2568, %v2568
        %v2641 = vpack.c.b16 %v2569, %v2569
        %v2642 = vpack.c.b16 %v2570, %v2570
        %v2643 = vpack.c.b16 %v2571, %v2571
        %v2644 = vpack.c.b16 %v2572, %v2572
        %v2645 = vpack.c.b16 %v2573, %v2573
        %v2646 = vpack.c.b16 %v2574, %v2574
        %v2647 = vpack.c.b16 %v2575, %v2575
        %v2648 = vpack.c.b16 %v2576, %v2576
        %v2649 = vpack.c.b16 %v2577, %v2577
        %v2650 = vpack.c.b16 %v2578, %v2578
        %v2651 = vpack.c.b16 %v2579, %v2579
        %v2652 = vpack.c.b16 %v2580, %v2580
        %v2653 = vpack.c.b16 %v2581, %v2581
        %v2654 = vpack.c.b16 %v2582, %v2582
        %v2655 = vpack.c.b16 %v2583, %v2583
        %v2656 = vpack.c.b16 %v2584, %v2584
        %v2657 = vpack.c.b16 %v2585, %v2585
        %v2658 = vpack.c.b16 %v2586, %v2586
        %v2659 = vpack.c.b16 %v2587, %v2587
        %v2660 = vpack.c.b16 %v2588, %v2588
        %v2661 = vpack.c.b16 %v2589, %v2589
        %v2662 = vpack.c.b16 %v2590, %v2590
        %v2663 = vpack.c.b16 %v2591, %v2591
        %v2664 = vpack.c.b16 %v2592, %v2592
        %v2665 = vpack.c.b16 %v2593, %v2593
        %v2666 = vpack.c.b16 %v2594, %v2594
        %v2667 = vpack.c.b16 %v2595, %v2595
        %v2668 = vpack.c.b16 %v2596, %v2596
        %v2669 = vpack.c.b16 %v2597, %v2597
        %v2670 = vpack.c.b16 %v2598, %v2598
        %v2671 = vpack.c.b16 %v2599, %v2599
        %v2672 = vpack.c.b16 %v2600, %v2600
        %v2673 = vpack.c.b16 %v2601, %v2601
        %v2674 = vpack.c.b16 %v2602, %v2602
        %v2675 = vpack.c.b16 %v2603, %v2603
        %v2676 = vpack.c.b16 %v2604, %v2604
        %v2677 = vpack.c.b16 %v2605, %v2605
        %v2678 = vpack.c.b16 %v2606, %v2606
        %v2679 = vpack.c.b16 %v2607, %v2607
        %v2680 = vpack.c.b16 %v2608, %v2608
        %v2681 = vpack.c.b16 %v2609, %v2609
        %v2682 = vpack.c.b16 %v2610, %v2610
        %v2683 = vpack.c.b16 %v2611, %v2611
        %v2684 = vpack.c.b16 %v2612, %v2612
        %v2685 = vpack.c.b16 %v2613, %v2613
        %v2686 = vpack.c.b16 %v2614, %v2614
        %v2687 = vpack.c.b16 %v2615, %v2615
        %2760 = vst [vmem:[#allocation2 + $0x8] sm:$0xf] %v2616
        %2761 = vst [vmem:[#allocation2 + $0x14] sm:$0xf] %v2617
        %2762 = vst [vmem:[#allocation2 + $0x20] sm:$0xf] %v2618
        %2763 = vst [vmem:[#allocation2 + $0x2c] sm:$0xf] %v2619
        %2764 = vst [vmem:[#allocation2 + $0x38] sm:$0xf] %v2620
        %2765 = vst [vmem:[#allocation2 + $0x44] sm:$0xf] %v2621
        %2766 = vst [vmem:[#allocation2 + $0x50] sm:$0xf] %v2622
        %2767 = vst [vmem:[#allocation2 + $0x5c] sm:$0xf] %v2623
        %2768 = vst [vmem:[#allocation2 + $0x68] sm:$0xf] %v2624
        %2769 = vst [vmem:[#allocation2 + $0x74] sm:$0xf] %v2625
        %2770 = vst [vmem:[#allocation2 + $0x80] sm:$0xf] %v2626
        %2771 = vst [vmem:[#allocation2 + $0x8c] sm:$0xf] %v2627
        %2772 = vst [vmem:[#allocation2 + $0x98] sm:$0xf] %v2628
        %2773 = vst [vmem:[#allocation2 + $0xa4] sm:$0xf] %v2629
        %2774 = vst [vmem:[#allocation2 + $0xb0] sm:$0xf] %v2630
        %2775 = vst [vmem:[#allocation2 + $0xbc] sm:$0xf] %v2631
        %2776 = vst [vmem:[#allocation2 + $0xc8] sm:$0xf] %v2632
        %2777 = vst [vmem:[#allocation2 + $0xd4] sm:$0xf] %v2633
        %2778 = vst [vmem:[#allocation2 + $0xe0] sm:$0xf] %v2634
        %2779 = vst [vmem:[#allocation2 + $0xec] sm:$0xf] %v2635
        %2780 = vst [vmem:[#allocation2 + $0xf8] sm:$0xf] %v2636
        %2781 = vst [vmem:[#allocation2 + $0x104] sm:$0xf] %v2637
        %2782 = vst [vmem:[#allocation2 + $0x110] sm:$0xf] %v2638
        %2783 = vst [vmem:[#allocation2 + $0x11c] sm:$0xf] %v2639
        %2784 = vst [vmem:[#allocation2 + $0x128] sm:$0xf] %v2640
        %2785 = vst [vmem:[#allocation2 + $0x134] sm:$0xf] %v2641
        %2786 = vst [vmem:[#allocation2 + $0x140] sm:$0xf] %v2642
        %2787 = vst [vmem:[#allocation2 + $0x14c] sm:$0xf] %v2643
        %2788 = vst [vmem:[#allocation2 + $0x158] sm:$0xf] %v2644
        %2789 = vst [vmem:[#allocation2 + $0x164] sm:$0xf] %v2645
        %2790 = vst [vmem:[#allocation2 + $0x170] sm:$0xf] %v2646
        %2791 = vst [vmem:[#allocation2 + $0x17c] sm:$0xf] %v2647
        %2792 = vst [vmem:[#allocation2 + $0x188] sm:$0xf] %v2648
        %2793 = vst [vmem:[#allocation2 + $0x194] sm:$0xf] %v2649
        %2794 = vst [vmem:[#allocation2 + $0x1a0] sm:$0xf] %v2650
        %2795 = vst [vmem:[#allocation2 + $0x1ac] sm:$0xf] %v2651
        %2796 = vst [vmem:[#allocation2 + $0x1b8] sm:$0xf] %v2652
        %2797 = vst [vmem:[#allocation2 + $0x1c4] sm:$0xf] %v2653
        %2798 = vst [vmem:[#allocation2 + $0x1d0] sm:$0xf] %v2654
        %2799 = vst [vmem:[#allocation2 + $0x1dc] sm:$0xf] %v2655
        %2800 = vst [vmem:[#allocation2 + $0x1e8] sm:$0xf] %v2656
        %2801 = vst [vmem:[#allocation2 + $0x1f4] sm:$0xf] %v2657
        %2802 = vst [vmem:[#allocation2 + $0x200] sm:$0xf] %v2658
        %2803 = vst [vmem:[#allocation2 + $0x20c] sm:$0xf] %v2659
        %2804 = vst [vmem:[#allocation2 + $0x218] sm:$0xf] %v2660
        %2805 = vst [vmem:[#allocation2 + $0x224] sm:$0xf] %v2661
        %2806 = vst [vmem:[#allocation2 + $0x230] sm:$0xf] %v2662
        %2807 = vst [vmem:[#allocation2 + $0x23c] sm:$0xf] %v2663
        %2808 = vst [vmem:[#allocation2 + $0x248] sm:$0xf] %v2664
        %2809 = vst [vmem:[#allocation2 + $0x254] sm:$0xf] %v2665
        %2810 = vst [vmem:[#allocation2 + $0x260] sm:$0xf] %v2666
        %2811 = vst [vmem:[#allocation2 + $0x26c] sm:$0xf] %v2667
        %2812 = vst [vmem:[#allocation2 + $0x278] sm:$0xf] %v2668
        %2813 = vst [vmem:[#allocation2 + $0x284] sm:$0xf] %v2669
        %2814 = vst [vmem:[#allocation2 + $0x290] sm:$0xf] %v2670
        %2815 = vst [vmem:[#allocation2 + $0x29c] sm:$0xf] %v2671
        %2816 = vst [vmem:[#allocation2 + $0x2a8] sm:$0xf] %v2672
        %2817 = vst [vmem:[#allocation2 + $0x2b4] sm:$0xf] %v2673
        %2818 = vst [vmem:[#allocation2 + $0x2c0] sm:$0xf] %v2674
        %2819 = vst [vmem:[#allocation2 + $0x2cc] sm:$0xf] %v2675
        %2820 = vst [vmem:[#allocation2 + $0x2d8] sm:$0xf] %v2676
        %2821 = vst [vmem:[#allocation2 + $0x2e4] sm:$0xf] %v2677
        %2822 = vst [vmem:[#allocation2 + $0x2f0] sm:$0xf] %v2678
        %2823 = vst [vmem:[#allocation2 + $0x2fc] sm:$0xf] %v2679
        %2824 = vst [vmem:[#allocation2 + $0x308] sm:$0xf] %v2680
        %2825 = vst [vmem:[#allocation2 + $0x314] sm:$0xf] %v2681
        %2826 = vst [vmem:[#allocation2 + $0x320] sm:$0xf] %v2682
        %2827 = vst [vmem:[#allocation2 + $0x32c] sm:$0xf] %v2683
        %2828 = vst [vmem:[#allocation2 + $0x338] sm:$0xf] %v2684
        %2829 = vst [vmem:[#allocation2 + $0x344] sm:$0xf] %v2685
        %2830 = vst [vmem:[#allocation2 + $0x350] sm:$0xf] %v2686
        %2831 = vst [vmem:[#allocation2 + $0x35c] sm:$0xf] %v2687
        %v2832 = vld [vmem:[#allocation2] sm:$0xff]
        %v2833 = vld [vmem:[#allocation2 + $0x8] sm:$0xf]
        %v2834 = vld [vmem:[#allocation2 + $0xc] sm:$0xff]
        %v2835 = vld [vmem:[#allocation2 + $0x14] sm:$0xf]
        %v2836 = vld [vmem:[#allocation2 + $0x18] sm:$0xff]
        %v2837 = vld [vmem:[#allocation2 + $0x20] sm:$0xf]
        %v2838 = vld [vmem:[#allocation2 + $0x24] sm:$0xff]
        %v2839 = vld [vmem:[#allocation2 + $0x2c] sm:$0xf]
        %v2840 = vld [vmem:[#allocation2 + $0x30] sm:$0xff]
        %v2841 = vld [vmem:[#allocation2 + $0x38] sm:$0xf]
        %v2842 = vld [vmem:[#allocation2 + $0x3c] sm:$0xff]
        %v2843 = vld [vmem:[#allocation2 + $0x44] sm:$0xf]
        %v2844 = vld [vmem:[#allocation2 + $0x48] sm:$0xff]
        %v2845 = vld [vmem:[#allocation2 + $0x50] sm:$0xf]
        %v2846 = vld [vmem:[#allocation2 + $0x54] sm:$0xff]
        %v2847 = vld [vmem:[#allocation2 + $0x5c] sm:$0xf]
        %v2848 = vld [vmem:[#allocation2 + $0x60] sm:$0xff]
        %v2849 = vld [vmem:[#allocation2 + $0x68] sm:$0xf]
        %v2850 = vld [vmem:[#allocation2 + $0x6c] sm:$0xff]
        %v2851 = vld [vmem:[#allocation2 + $0x74] sm:$0xf]
        %v2852 = vld [vmem:[#allocation2 + $0x78] sm:$0xff]
        %v2853 = vld [vmem:[#allocation2 + $0x80] sm:$0xf]
        %v2854 = vld [vmem:[#allocation2 + $0x84] sm:$0xff]
        %v2855 = vld [vmem:[#allocation2 + $0x8c] sm:$0xf]
        %v2856 = vld [vmem:[#allocation2 + $0x90] sm:$0xff]
        %v2857 = vld [vmem:[#allocation2 + $0x98] sm:$0xf]
        %v2858 = vld [vmem:[#allocation2 + $0x9c] sm:$0xff]
        %v2859 = vld [vmem:[#allocation2 + $0xa4] sm:$0xf]
        %v2860 = vld [vmem:[#allocation2 + $0xa8] sm:$0xff]
        %v2861 = vld [vmem:[#allocation2 + $0xb0] sm:$0xf]
        %v2862 = vld [vmem:[#allocation2 + $0xb4] sm:$0xff]
        %v2863 = vld [vmem:[#allocation2 + $0xbc] sm:$0xf]
        %v2864 = vld [vmem:[#allocation2 + $0xc0] sm:$0xff]
        %v2865 = vld [vmem:[#allocation2 + $0xc8] sm:$0xf]
        %v2866 = vld [vmem:[#allocation2 + $0xcc] sm:$0xff]
        %v2867 = vld [vmem:[#allocation2 + $0xd4] sm:$0xf]
        %v2868 = vld [vmem:[#allocation2 + $0xd8] sm:$0xff]
        %v2869 = vld [vmem:[#allocation2 + $0xe0] sm:$0xf]
        %v2870 = vld [vmem:[#allocation2 + $0xe4] sm:$0xff]
        %v2871 = vld [vmem:[#allocation2 + $0xec] sm:$0xf]
        %v2872 = vld [vmem:[#allocation2 + $0xf0] sm:$0xff]
        %v2873 = vld [vmem:[#allocation2 + $0xf8] sm:$0xf]
        %v2874 = vld [vmem:[#allocation2 + $0xfc] sm:$0xff]
        %v2875 = vld [vmem:[#allocation2 + $0x104] sm:$0xf]
        %v2876 = vld [vmem:[#allocation2 + $0x108] sm:$0xff]
        %v2877 = vld [vmem:[#allocation2 + $0x110] sm:$0xf]
        %v2878 = vld [vmem:[#allocation2 + $0x114] sm:$0xff]
        %v2879 = vld [vmem:[#allocation2 + $0x11c] sm:$0xf]
        %v2880 = vld [vmem:[#allocation2 + $0x120] sm:$0xff]
        %v2881 = vld [vmem:[#allocation2 + $0x128] sm:$0xf]
        %v2882 = vld [vmem:[#allocation2 + $0x12c] sm:$0xff]
        %v2883 = vld [vmem:[#allocation2 + $0x134] sm:$0xf]
        %v2884 = vld [vmem:[#allocation2 + $0x138] sm:$0xff]
        %v2885 = vld [vmem:[#allocation2 + $0x140] sm:$0xf]
        %v2886 = vld [vmem:[#allocation2 + $0x144] sm:$0xff]
        %v2887 = vld [vmem:[#allocation2 + $0x14c] sm:$0xf]
        %v2888 = vld [vmem:[#allocation2 + $0x150] sm:$0xff]
        %v2889 = vld [vmem:[#allocation2 + $0x158] sm:$0xf]
        %v2890 = vld [vmem:[#allocation2 + $0x15c] sm:$0xff]
        %v2891 = vld [vmem:[#allocation2 + $0x164] sm:$0xf]
        %v2892 = vld [vmem:[#allocation2 + $0x168] sm:$0xff]
        %v2893 = vld [vmem:[#allocation2 + $0x170] sm:$0xf]
        %v2894 = vld [vmem:[#allocation2 + $0x174] sm:$0xff]
        %v2895 = vld [vmem:[#allocation2 + $0x17c] sm:$0xf]
        %v2896 = vld [vmem:[#allocation2 + $0x180] sm:$0xff]
        %v2897 = vld [vmem:[#allocation2 + $0x188] sm:$0xf]
        %v2898 = vld [vmem:[#allocation2 + $0x18c] sm:$0xff]
        %v2899 = vld [vmem:[#allocation2 + $0x194] sm:$0xf]
        %v2900 = vld [vmem:[#allocation2 + $0x198] sm:$0xff]
        %v2901 = vld [vmem:[#allocation2 + $0x1a0] sm:$0xf]
        %v2902 = vld [vmem:[#allocation2 + $0x1a4] sm:$0xff]
        %v2903 = vld [vmem:[#allocation2 + $0x1ac] sm:$0xf]
        %v2904 = vld [vmem:[#allocation2 + $0x1b0] sm:$0xff]
        %v2905 = vld [vmem:[#allocation2 + $0x1b8] sm:$0xf]
        %v2906 = vld [vmem:[#allocation2 + $0x1bc] sm:$0xff]
        %v2907 = vld [vmem:[#allocation2 + $0x1c4] sm:$0xf]
        %v2908 = vld [vmem:[#allocation2 + $0x1c8] sm:$0xff]
        %v2909 = vld [vmem:[#allocation2 + $0x1d0] sm:$0xf]
        %v2910 = vld [vmem:[#allocation2 + $0x1d4] sm:$0xff]
        %v2911 = vld [vmem:[#allocation2 + $0x1dc] sm:$0xf]
        %v2912 = vld [vmem:[#allocation2 + $0x1e0] sm:$0xff]
        %v2913 = vld [vmem:[#allocation2 + $0x1e8] sm:$0xf]
        %v2914 = vld [vmem:[#allocation2 + $0x1ec] sm:$0xff]
        %v2915 = vld [vmem:[#allocation2 + $0x1f4] sm:$0xf]
        %v2916 = vld [vmem:[#allocation2 + $0x1f8] sm:$0xff]
        %v2917 = vld [vmem:[#allocation2 + $0x200] sm:$0xf]
        %v2918 = vld [vmem:[#allocation2 + $0x204] sm:$0xff]
        %v2919 = vld [vmem:[#allocation2 + $0x20c] sm:$0xf]
        %v2920 = vld [vmem:[#allocation2 + $0x210] sm:$0xff]
        %v2921 = vld [vmem:[#allocation2 + $0x218] sm:$0xf]
        %v2922 = vld [vmem:[#allocation2 + $0x21c] sm:$0xff]
        %v2923 = vld [vmem:[#allocation2 + $0x224] sm:$0xf]
        %v2924 = vld [vmem:[#allocation2 + $0x228] sm:$0xff]
        %v2925 = vld [vmem:[#allocation2 + $0x230] sm:$0xf]
        %v2926 = vld [vmem:[#allocation2 + $0x234] sm:$0xff]
        %v2927 = vld [vmem:[#allocation2 + $0x23c] sm:$0xf]
        %v2928 = vld [vmem:[#allocation2 + $0x240] sm:$0xff]
        %v2929 = vld [vmem:[#allocation2 + $0x248] sm:$0xf]
        %v2930 = vld [vmem:[#allocation2 + $0x24c] sm:$0xff]
        %v2931 = vld [vmem:[#allocation2 + $0x254] sm:$0xf]
        %v2932 = vld [vmem:[#allocation2 + $0x258] sm:$0xff]
        %v2933 = vld [vmem:[#allocation2 + $0x260] sm:$0xf]
        %v2934 = vld [vmem:[#allocation2 + $0x264] sm:$0xff]
        %v2935 = vld [vmem:[#allocation2 + $0x26c] sm:$0xf]
        %v2936 = vld [vmem:[#allocation2 + $0x270] sm:$0xff]
        %v2937 = vld [vmem:[#allocation2 + $0x278] sm:$0xf]
        %v2938 = vld [vmem:[#allocation2 + $0x27c] sm:$0xff]
        %v2939 = vld [vmem:[#allocation2 + $0x284] sm:$0xf]
        %v2940 = vld [vmem:[#allocation2 + $0x288] sm:$0xff]
        %v2941 = vld [vmem:[#allocation2 + $0x290] sm:$0xf]
        %v2942 = vld [vmem:[#allocation2 + $0x294] sm:$0xff]
        %v2943 = vld [vmem:[#allocation2 + $0x29c] sm:$0xf]
        %v2944 = vld [vmem:[#allocation2 + $0x2a0] sm:$0xff]
        %v2945 = vld [vmem:[#allocation2 + $0x2a8] sm:$0xf]
        %v2946 = vld [vmem:[#allocation2 + $0x2ac] sm:$0xff]
        %v2947 = vld [vmem:[#allocation2 + $0x2b4] sm:$0xf]
        %v2948 = vld [vmem:[#allocation2 + $0x2b8] sm:$0xff]
        %v2949 = vld [vmem:[#allocation2 + $0x2c0] sm:$0xf]
        %v2950 = vld [vmem:[#allocation2 + $0x2c4] sm:$0xff]
        %v2951 = vld [vmem:[#allocation2 + $0x2cc] sm:$0xf]
        %v2952 = vld [vmem:[#allocation2 + $0x2d0] sm:$0xff]
        %v2953 = vld [vmem:[#allocation2 + $0x2d8] sm:$0xf]
        %v2954 = vld [vmem:[#allocation2 + $0x2dc] sm:$0xff]
        %v2955 = vld [vmem:[#allocation2 + $0x2e4] sm:$0xf]
        %v2956 = vld [vmem:[#allocation2 + $0x2e8] sm:$0xff]
        %v2957 = vld [vmem:[#allocation2 + $0x2f0] sm:$0xf]
        %v2958 = vld [vmem:[#allocation2 + $0x2f4] sm:$0xff]
        %v2959 = vld [vmem:[#allocation2 + $0x2fc] sm:$0xf]
        %v2960 = vld [vmem:[#allocation8] sm:$0xf]
        %v2961 = vld [vmem:[#allocation8 + $0x4] sm:$0xf]
        %v2962 = vld [vmem:[#allocation8 + $0x8] sm:$0xf]
        %v2963 = vld [vmem:[#allocation8 + $0xc] sm:$0xf]
        %v2964 = vld [vmem:[#allocation8 + $0x10] sm:$0xf]
        %v2965 = vld [vmem:[#allocation8 + $0x14] sm:$0xf]
        %v2966 = vld [vmem:[#allocation8 + $0x18] sm:$0xf]
        %v2967 = vld [vmem:[#allocation8 + $0x1c] sm:$0xf]
        %v2968 = vld [vmem:[#allocation8 + $0x20] sm:$0xf]
        %v2969 = vld [vmem:[#allocation8 + $0x24] sm:$0xf]
        %v2970 = vld [vmem:[#allocation8 + $0x28] sm:$0xf]
        %v2971 = vld [vmem:[#allocation8 + $0x2c] sm:$0xf]
        %v2972 = vld [vmem:[#allocation8 + $0x30] sm:$0xf]
        %v2973 = vld [vmem:[#allocation8 + $0x34] sm:$0xf]
        %v2974 = vld [vmem:[#allocation8 + $0x38] sm:$0xf]
        %v2975 = vld [vmem:[#allocation8 + $0x3c] sm:$0xf]
        %v2976 = vld [vmem:[#allocation8 + $0x40] sm:$0xf]
        %v2977 = vld [vmem:[#allocation8 + $0x44] sm:$0xf]
        %v2978 = vld [vmem:[#allocation8 + $0x48] sm:$0xf]
        %v2979 = vld [vmem:[#allocation8 + $0x4c] sm:$0xf]
        %v2980 = vld [vmem:[#allocation8 + $0x50] sm:$0xf]
        %v2981 = vld [vmem:[#allocation8 + $0x54] sm:$0xf]
        %v2982 = vld [vmem:[#allocation8 + $0x58] sm:$0xf]
        %v2983 = vld [vmem:[#allocation8 + $0x5c] sm:$0xf]
        %v2984 = vld [vmem:[#allocation8 + $0x60] sm:$0xf]
        %v2985 = vld [vmem:[#allocation8 + $0x64] sm:$0xf]
        %v2986 = vld [vmem:[#allocation8 + $0x68] sm:$0xf]
        %v2987 = vld [vmem:[#allocation8 + $0x6c] sm:$0xf]
        %v2988 = vld [vmem:[#allocation8 + $0x70] sm:$0xf]
        %v2989 = vld [vmem:[#allocation8 + $0x74] sm:$0xf]
        %v2990 = vld [vmem:[#allocation8 + $0x78] sm:$0xf]
        %v2991 = vld [vmem:[#allocation8 + $0x7c] sm:$0xf]
        %v2992 = vld [vmem:[#allocation8 + $0x80] sm:$0xf]
        %v2993 = vld [vmem:[#allocation8 + $0x84] sm:$0xf]
        %v2994 = vld [vmem:[#allocation8 + $0x88] sm:$0xf]
        %v2995 = vld [vmem:[#allocation8 + $0x8c] sm:$0xf]
        %v2996 = vld [vmem:[#allocation8 + $0x90] sm:$0xf]
        %v2997 = vld [vmem:[#allocation8 + $0x94] sm:$0xf]
        %v2998 = vld [vmem:[#allocation8 + $0x98] sm:$0xf]
        %v2999 = vld [vmem:[#allocation8 + $0x9c] sm:$0xf]
        %v3000 = vld [vmem:[#allocation8 + $0xa0] sm:$0xf]
        %v3001 = vld [vmem:[#allocation8 + $0xa4] sm:$0xf]
        %v3002 = vld [vmem:[#allocation8 + $0xa8] sm:$0xf]
        %v3003 = vld [vmem:[#allocation8 + $0xac] sm:$0xf]
        %v3004 = vld [vmem:[#allocation8 + $0xb0] sm:$0xf]
        %v3005 = vld [vmem:[#allocation8 + $0xb4] sm:$0xf]
        %v3006 = vld [vmem:[#allocation8 + $0xb8] sm:$0xf]
        %v3007 = vld [vmem:[#allocation8 + $0xbc] sm:$0xf]
        %v3008 = vld [vmem:[#allocation2 + $0x300] sm:$0xff]
        %v3009 = vld [vmem:[#allocation2 + $0x308] sm:$0xf]
        %v3010 = vld [vmem:[#allocation2 + $0x30c] sm:$0xff]
        %v3011 = vld [vmem:[#allocation2 + $0x314] sm:$0xf]
        %v3012 = vld [vmem:[#allocation2 + $0x318] sm:$0xff]
        %v3013 = vld [vmem:[#allocation2 + $0x320] sm:$0xf]
        %v3014 = vld [vmem:[#allocation2 + $0x324] sm:$0xff]
        %v3015 = vld [vmem:[#allocation2 + $0x32c] sm:$0xf]
        %s3016 = scalar_lea.vmem [#allocation8], 192
        %v3017 = vld [vmem:[%s3016] sm:$0xf]
        %v3018 = vld [vmem:[%s3016 + $0x4] sm:$0xf]
        %v3019 = vld [vmem:[%s3016 + $0x8] sm:$0xf]
        %v3020 = vld [vmem:[%s3016 + $0xc] sm:$0xf]
        %v3021 = vld [vmem:[%s3016 + $0x10] sm:$0xf]
        %v3022 = vld [vmem:[%s3016 + $0x14] sm:$0xf]
        %v3023 = vld [vmem:[%s3016 + $0x18] sm:$0xf]
        %v3024 = vld [vmem:[%s3016 + $0x1c] sm:$0xf]
        %v3025 = vld [vmem:[%s3016 + $0x20] sm:$0xf]
        %v3026 = vld [vmem:[%s3016 + $0x24] sm:$0xf]
        %v3027 = vld [vmem:[%s3016 + $0x28] sm:$0xf]
        %v3028 = vld [vmem:[%s3016 + $0x2c] sm:$0xf]
        %v3029 = vld [vmem:[%s3016 + $0x30] sm:$0xf]
        %v3030 = vld [vmem:[%s3016 + $0x34] sm:$0xf]
        %v3031 = vld [vmem:[%s3016 + $0x38] sm:$0xf]
        %v3032 = vld [vmem:[%s3016 + $0x3c] sm:$0xf]
        %v3033 = vld [vmem:[%s3016 + $0x40] sm:$0xf]
        %v3034 = vld [vmem:[%s3016 + $0x44] sm:$0xf]
        %v3035 = vld [vmem:[%s3016 + $0x48] sm:$0xf]
        %v3036 = vld [vmem:[%s3016 + $0x4c] sm:$0xf]
        %v3037 = vld [vmem:[%s3016 + $0x50] sm:$0xf]
        %v3038 = vld [vmem:[%s3016 + $0x54] sm:$0xf]
        %v3039 = vld [vmem:[%s3016 + $0x58] sm:$0xf]
        %v3040 = vld [vmem:[%s3016 + $0x5c] sm:$0xf]
        %v3041 = vld [vmem:[%s3016 + $0x60] sm:$0xf]
        %v3042 = vld [vmem:[%s3016 + $0x64] sm:$0xf]
        %v3043 = vld [vmem:[%s3016 + $0x68] sm:$0xf]
        %v3044 = vld [vmem:[%s3016 + $0x6c] sm:$0xf]
        %v3045 = vld [vmem:[%s3016 + $0x70] sm:$0xf]
        %v3046 = vld [vmem:[%s3016 + $0x74] sm:$0xf]
        %v3047 = vld [vmem:[%s3016 + $0x78] sm:$0xf]
        %v3048 = vld [vmem:[%s3016 + $0x7c] sm:$0xf]
        %v3049 = vld [vmem:[%s3016 + $0x80] sm:$0xf]
        %v3050 = vld [vmem:[%s3016 + $0x84] sm:$0xf]
        %v3051 = vld [vmem:[%s3016 + $0x88] sm:$0xf]
        %v3052 = vld [vmem:[%s3016 + $0x8c] sm:$0xf]
        %v3053 = vld [vmem:[%s3016 + $0x90] sm:$0xf]
        %v3054 = vld [vmem:[%s3016 + $0x94] sm:$0xf]
        %v3055 = vld [vmem:[%s3016 + $0x98] sm:$0xf]
        %v3056 = vld [vmem:[%s3016 + $0x9c] sm:$0xf]
        %v3057 = vld [vmem:[%s3016 + $0xa0] sm:$0xf]
        %v3058 = vld [vmem:[%s3016 + $0xa4] sm:$0xf]
        %v3059 = vld [vmem:[%s3016 + $0xa8] sm:$0xf]
        %v3060 = vld [vmem:[%s3016 + $0xac] sm:$0xf]
        %v3061 = vld [vmem:[%s3016 + $0xb0] sm:$0xf]
        %v3062 = vld [vmem:[%s3016 + $0xb4] sm:$0xf]
        %v3063 = vld [vmem:[%s3016 + $0xb8] sm:$0xf]
        %v3064 = vld [vmem:[%s3016 + $0xbc] sm:$0xf]
        %v3193 = vunpack.c.l.b16 %v2840
        %v3194 = vunpack.c.h.b16 %v2840
        %v3195 = vunpack.c.l.b16 %v2841
        %v3196 = vunpack.c.l.b16 %v2842
        %v3197 = vunpack.c.h.b16 %v2842
        %v3198 = vunpack.c.l.b16 %v2843
        %v3199 = vunpack.c.l.b16 %v2844
        %v3200 = vunpack.c.h.b16 %v2844
        %v3201 = vunpack.c.l.b16 %v2845
        %v3202 = vunpack.c.l.b16 %v2846
        %v3203 = vunpack.c.h.b16 %v2846
        %v3204 = vunpack.c.l.b16 %v2847
        %v3205 = vunpack.c.l.b16 %v2848
        %v3206 = vunpack.c.h.b16 %v2848
        %v3207 = vunpack.c.l.b16 %v2849
        %v3208 = vunpack.c.l.b16 %v2850
        %v3209 = vunpack.c.h.b16 %v2850
        %v3210 = vunpack.c.l.b16 %v2851
        %v3211 = vunpack.c.l.b16 %v2852
        %v3212 = vunpack.c.h.b16 %v2852
        %v3213 = vunpack.c.l.b16 %v2853
        %v3214 = vunpack.c.l.b16 %v2854
        %v3215 = vunpack.c.h.b16 %v2854
        %v3216 = vunpack.c.l.b16 %v2855
        %v3217 = vunpack.c.l.b16 %v2856
        %v3218 = vunpack.c.h.b16 %v2856
        %v3219 = vunpack.c.l.b16 %v2857
        %v3220 = vunpack.c.l.b16 %v2858
        %v3221 = vunpack.c.h.b16 %v2858
        %v3222 = vunpack.c.l.b16 %v2859
        %v3223 = vunpack.c.l.b16 %v2860
        %v3224 = vunpack.c.h.b16 %v2860
        %v3225 = vunpack.c.l.b16 %v2861
        %v3226 = vunpack.c.l.b16 %v2862
        %v3227 = vunpack.c.h.b16 %v2862
        %v3228 = vunpack.c.l.b16 %v2863
        %v3229 = vunpack.c.l.b16 %v2864
        %v3230 = vunpack.c.h.b16 %v2864
        %v3231 = vunpack.c.l.b16 %v2865
        %v3232 = vunpack.c.l.b16 %v2866
        %v3233 = vunpack.c.h.b16 %v2866
        %v3234 = vunpack.c.l.b16 %v2867
        %v3235 = vunpack.c.l.b16 %v2868
        %v3236 = vunpack.c.h.b16 %v2868
        %v3237 = vunpack.c.l.b16 %v2869
        %v3238 = vunpack.c.l.b16 %v2870
        %v3239 = vunpack.c.h.b16 %v2870
        %v3240 = vunpack.c.l.b16 %v2871
        %v3241 = vunpack.c.l.b16 %v2872
        %v3242 = vunpack.c.h.b16 %v2872
        %v3243 = vunpack.c.l.b16 %v2873
        %v3244 = vunpack.c.l.b16 %v2874
        %v3245 = vunpack.c.h.b16 %v2874
        %v3246 = vunpack.c.l.b16 %v2875
        %v3247 = vunpack.c.l.b16 %v2876
        %v3248 = vunpack.c.h.b16 %v2876
        %v3249 = vunpack.c.l.b16 %v2877
        %v3250 = vunpack.c.l.b16 %v2878
        %v3251 = vunpack.c.h.b16 %v2878
        %v3252 = vunpack.c.l.b16 %v2879
        %v3253 = vunpack.c.l.b16 %v2880
        %v3254 = vunpack.c.h.b16 %v2880
        %v3255 = vunpack.c.l.b16 %v2881
        %v3256 = vunpack.c.l.b16 %v2882
        %v3257 = vunpack.c.h.b16 %v2882
        %v3258 = vunpack.c.l.b16 %v2883
        %v3259 = vunpack.c.l.b16 %v2884
        %v3260 = vunpack.c.h.b16 %v2884
        %v3261 = vunpack.c.l.b16 %v2885
        %v3262 = vunpack.c.l.b16 %v2886
        %v3263 = vunpack.c.h.b16 %v2886
        %v3264 = vunpack.c.l.b16 %v2887
        %v3265 = vunpack.c.l.b16 %v2888
        %v3266 = vunpack.c.h.b16 %v2888
        %v3267 = vunpack.c.l.b16 %v2889
        %v3268 = vunpack.c.l.b16 %v2890
        %v3269 = vunpack.c.h.b16 %v2890
        %v3270 = vunpack.c.l.b16 %v2891
        %v3271 = vunpack.c.l.b16 %v2892
        %v3272 = vunpack.c.h.b16 %v2892
        %v3273 = vunpack.c.l.b16 %v2893
        %v3274 = vunpack.c.l.b16 %v2894
        %v3275 = vunpack.c.h.b16 %v2894
        %v3276 = vunpack.c.l.b16 %v2895
        %v3277 = vunpack.c.l.b16 %v2896
        %v3278 = vunpack.c.h.b16 %v2896
        %v3279 = vunpack.c.l.b16 %v2897
        %v3280 = vunpack.c.l.b16 %v2898
        %v3281 = vunpack.c.h.b16 %v2898
        %v3282 = vunpack.c.l.b16 %v2899
        %v3283 = vunpack.c.l.b16 %v2900
        %v3284 = vunpack.c.h.b16 %v2900
        %v3285 = vunpack.c.l.b16 %v2901
        %v3286 = vunpack.c.l.b16 %v2902
        %v3287 = vunpack.c.h.b16 %v2902
        %v3288 = vunpack.c.l.b16 %v2903
        %v3289 = vunpack.c.l.b16 %v2904
        %v3290 = vunpack.c.h.b16 %v2904
        %v3291 = vunpack.c.l.b16 %v2905
        %v3292 = vunpack.c.l.b16 %v2906
        %v3293 = vunpack.c.h.b16 %v2906
        %v3294 = vunpack.c.l.b16 %v2907
        %v3295 = vunpack.c.l.b16 %v2908
        %v3296 = vunpack.c.h.b16 %v2908
        %v3297 = vunpack.c.l.b16 %v2909
        %v3298 = vunpack.c.l.b16 %v2910
        %v3299 = vunpack.c.h.b16 %v2910
        %v3300 = vunpack.c.l.b16 %v2911
        %v3301 = vunpack.c.l.b16 %v2912
        %v3302 = vunpack.c.h.b16 %v2912
        %v3303 = vunpack.c.l.b16 %v2913
        %v3304 = vunpack.c.l.b16 %v2914
        %v3305 = vunpack.c.h.b16 %v2914
        %v3306 = vunpack.c.l.b16 %v2915
        %v3307 = vunpack.c.l.b16 %v2916
        %v3308 = vunpack.c.h.b16 %v2916
        %v3309 = vunpack.c.l.b16 %v2917
        %v3310 = vunpack.c.l.b16 %v2918
        %v3311 = vunpack.c.h.b16 %v2918
        %v3312 = vunpack.c.l.b16 %v2919
        %v3313 = vunpack.c.l.b16 %v2920
        %v3314 = vunpack.c.h.b16 %v2920
        %v3315 = vunpack.c.l.b16 %v2921
        %v3316 = vunpack.c.l.b16 %v2922
        %v3317 = vunpack.c.h.b16 %v2922
        %v3318 = vunpack.c.l.b16 %v2923
        %v3319 = vunpack.c.l.b16 %v2924
        %v3320 = vunpack.c.h.b16 %v2924
        %v3321 = vunpack.c.l.b16 %v2925
        %v3322 = vunpack.c.l.b16 %v2926
        %v3323 = vunpack.c.h.b16 %v2926
        %v3324 = vunpack.c.l.b16 %v2927
        %v3325 = vunpack.c.l.b16 %v2928
        %v3326 = vunpack.c.h.b16 %v2928
        %v3327 = vunpack.c.l.b16 %v2929
        %v3328 = vunpack.c.l.b16 %v2930
        %v3329 = vunpack.c.h.b16 %v2930
        %v3330 = vunpack.c.l.b16 %v2931
        %v3331 = vunpack.c.l.b16 %v2932
        %v3332 = vunpack.c.h.b16 %v2932
        %v3333 = vunpack.c.l.b16 %v2933
        %v3334 = vunpack.c.l.b16 %v2934
        %v3335 = vunpack.c.h.b16 %v2934
        %v3336 = vunpack.c.l.b16 %v2935
        %v3337 = vunpack.c.l.b16 %v2936
        %v3338 = vunpack.c.h.b16 %v2936
        %v3339 = vunpack.c.l.b16 %v2937
        %v3340 = vunpack.c.l.b16 %v2938
        %v3341 = vunpack.c.h.b16 %v2938
        %v3342 = vunpack.c.l.b16 %v2939
        %v3343 = vunpack.c.l.b16 %v2940
        %v3344 = vunpack.c.h.b16 %v2940
        %v3345 = vunpack.c.l.b16 %v2941
        %v3346 = vunpack.c.l.b16 %v2942
        %v3347 = vunpack.c.h.b16 %v2942
        %v3348 = vunpack.c.l.b16 %v2943
        %v3349 = vunpack.c.l.b16 %v2944
        %v3350 = vunpack.c.h.b16 %v2944
        %v3351 = vunpack.c.l.b16 %v2945
        %v3352 = vunpack.c.l.b16 %v2946
        %v3353 = vunpack.c.h.b16 %v2946
        %v3354 = vunpack.c.l.b16 %v2947
        %v3355 = vunpack.c.l.b16 %v2948
        %v3356 = vunpack.c.h.b16 %v2948
        %v3357 = vunpack.c.l.b16 %v2949
        %v3358 = vunpack.c.l.b16 %v2950
        %v3359 = vunpack.c.h.b16 %v2950
        %v3360 = vunpack.c.l.b16 %v2951
        %v3361 = vunpack.c.l.b16 %v2952
        %v3362 = vunpack.c.h.b16 %v2952
        %v3363 = vunpack.c.l.b16 %v2953
        %v3364 = vunpack.c.l.b16 %v2954
        %v3365 = vunpack.c.h.b16 %v2954
        %v3366 = vunpack.c.l.b16 %v2955
        %v3367 = vunpack.c.l.b16 %v2956
        %v3368 = vunpack.c.h.b16 %v2956
        %v3369 = vunpack.c.l.b16 %v2957
        %v3370 = vunpack.c.l.b16 %v2958
        %v3371 = vunpack.c.h.b16 %v2958
        %v3372 = vunpack.c.l.b16 %v2959
        %v3373 = vunpack.c.l.b16 %v3008
        %v3374 = vunpack.c.h.b16 %v3008
        %v3375 = vunpack.c.l.b16 %v3009
        %v3376 = vunpack.c.l.b16 %v3010
        %v3377 = vunpack.c.h.b16 %v3010
        %v3378 = vunpack.c.l.b16 %v3011
        %v3379 = vunpack.c.l.b16 %v3012
        %v3380 = vunpack.c.h.b16 %v3012
        %v3381 = vunpack.c.l.b16 %v3013
        %v3382 = vunpack.c.l.b16 %v3014
        %v3383 = vunpack.c.h.b16 %v3014
        %v3384 = vunpack.c.l.b16 %v3015
        %v3385 = vpack.c.b16 %v3196, %v3193
        %v3386 = vpack.c.b16 %v3197, %v3194
        %v3387 = vpack.c.b16 %v3198, %v3195
        %v3388 = vpack.c.b16 %v3202, %v3199
        %v3389 = vpack.c.b16 %v3203, %v3200
        %v3390 = vpack.c.b16 %v3204, %v3201
        %v3391 = vpack.c.b16 %v3208, %v3205
        %v3392 = vpack.c.b16 %v3209, %v3206
        %v3393 = vpack.c.b16 %v3210, %v3207
        %v3394 = vpack.c.b16 %v3214, %v3211
        %v3395 = vpack.c.b16 %v3215, %v3212
        %v3396 = vpack.c.b16 %v3216, %v3213
        %v3397 = vpack.c.b16 %v3220, %v3217
        %v3398 = vpack.c.b16 %v3221, %v3218
        %v3399 = vpack.c.b16 %v3222, %v3219
        %v3400 = vpack.c.b16 %v3226, %v3223
        %v3401 = vpack.c.b16 %v3227, %v3224
        %v3402 = vpack.c.b16 %v3228, %v3225
        %v3403 = vpack.c.b16 %v3232, %v3229
        %v3404 = vpack.c.b16 %v3233, %v3230
        %v3405 = vpack.c.b16 %v3234, %v3231
        %v3406 = vpack.c.b16 %v3238, %v3235
        %v3407 = vpack.c.b16 %v3239, %v3236
        %v3408 = vpack.c.b16 %v3240, %v3237
        %v3409 = vpack.c.b16 %v3244, %v3241
        %v3410 = vpack.c.b16 %v3245, %v3242
        %v3411 = vpack.c.b16 %v3246, %v3243
        %v3412 = vpack.c.b16 %v3250, %v3247
        %v3413 = vpack.c.b16 %v3251, %v3248
        %v3414 = vpack.c.b16 %v3252, %v3249
        %v3415 = vpack.c.b16 %v3256, %v3253
        %v3416 = vpack.c.b16 %v3257, %v3254
        %v3417 = vpack.c.b16 %v3258, %v3255
        %v3418 = vpack.c.b16 %v3262, %v3259
        %v3419 = vpack.c.b16 %v3263, %v3260
        %v3420 = vpack.c.b16 %v3264, %v3261
        %v3421 = vpack.c.b16 %v3268, %v3265
        %v3422 = vpack.c.b16 %v3269, %v3266
        %v3423 = vpack.c.b16 %v3270, %v3267
        %v3424 = vpack.c.b16 %v3274, %v3271
        %v3425 = vpack.c.b16 %v3275, %v3272
        %v3426 = vpack.c.b16 %v3276, %v3273
        %v3427 = vpack.c.b16 %v3280, %v3277
        %v3428 = vpack.c.b16 %v3281, %v3278
        %v3429 = vpack.c.b16 %v3282, %v3279
        %v3430 = vpack.c.b16 %v3286, %v3283
        %v3431 = vpack.c.b16 %v3287, %v3284
        %v3432 = vpack.c.b16 %v3288, %v3285
        %v3433 = vpack.c.b16 %v3292, %v3289
        %v3434 = vpack.c.b16 %v3293, %v3290
        %v3435 = vpack.c.b16 %v3294, %v3291
        %v3436 = vpack.c.b16 %v3298, %v3295
        %v3437 = vpack.c.b16 %v3299, %v3296
        %v3438 = vpack.c.b16 %v3300, %v3297
        %v3439 = vpack.c.b16 %v3304, %v3301
        %v3440 = vpack.c.b16 %v3305, %v3302
        %v3441 = vpack.c.b16 %v3306, %v3303
        %v3442 = vpack.c.b16 %v3310, %v3307
        %v3443 = vpack.c.b16 %v3311, %v3308
        %v3444 = vpack.c.b16 %v3312, %v3309
        %v3445 = vpack.c.b16 %v3316, %v3313
        %v3446 = vpack.c.b16 %v3317, %v3314
        %v3447 = vpack.c.b16 %v3318, %v3315
        %v3448 = vpack.c.b16 %v3322, %v3319
        %v3449 = vpack.c.b16 %v3323, %v3320
        %v3450 = vpack.c.b16 %v3324, %v3321
        %v3451 = vpack.c.b16 %v3328, %v3325
        %v3452 = vpack.c.b16 %v3329, %v3326
        %v3453 = vpack.c.b16 %v3330, %v3327
        %v3454 = vpack.c.b16 %v3334, %v3331
        %v3455 = vpack.c.b16 %v3335, %v3332
        %v3456 = vpack.c.b16 %v3336, %v3333
        %v3457 = vpack.c.b16 %v3340, %v3337
        %v3458 = vpack.c.b16 %v3341, %v3338
        %v3459 = vpack.c.b16 %v3342, %v3339
        %v3460 = vpack.c.b16 %v3346, %v3343
        %v3461 = vpack.c.b16 %v3347, %v3344
        %v3462 = vpack.c.b16 %v3348, %v3345
        %v3463 = vpack.c.b16 %v3352, %v3349
        %v3464 = vpack.c.b16 %v3353, %v3350
        %v3465 = vpack.c.b16 %v3354, %v3351
        %v3466 = vpack.c.b16 %v3358, %v3355
        %v3467 = vpack.c.b16 %v3359, %v3356
        %v3468 = vpack.c.b16 %v3360, %v3357
        %v3469 = vpack.c.b16 %v3364, %v3361
        %v3470 = vpack.c.b16 %v3365, %v3362
        %v3471 = vpack.c.b16 %v3366, %v3363
        %v3472 = vpack.c.b16 %v3370, %v3367
        %v3473 = vpack.c.b16 %v3371, %v3368
        %v3474 = vpack.c.b16 %v3372, %v3369
        %v3475 = vpack.c.b16 %v3376, %v3373
        %v3476 = vpack.c.b16 %v3377, %v3374
        %v3477 = vpack.c.b16 %v3378, %v3375
        %v3478 = vpack.c.b16 %v3382, %v3379
        %v3479 = vpack.c.b16 %v3383, %v3380
        %v3480 = vpack.c.b16 %v3384, %v3381
        %v3625 = vunpack.c.l.b16 %v3017
        %v3626 = vunpack.c.l.b16 %v3018
        %v3627 = vunpack.c.l.b16 %v3019
        %v3628 = vunpack.c.l.b16 %v3020
        %v3629 = vunpack.c.l.b16 %v3021
        %v3630 = vunpack.c.l.b16 %v3022
        %v3631 = vunpack.c.l.b16 %v3023
        %v3632 = vunpack.c.l.b16 %v3024
        %v3633 = vunpack.c.l.b16 %v3025
        %v3634 = vunpack.c.l.b16 %v3026
        %v3635 = vunpack.c.l.b16 %v3027
        %v3636 = vunpack.c.l.b16 %v3028
        %v3637 = vunpack.c.l.b16 %v3029
        %v3638 = vunpack.c.l.b16 %v3030
        %v3639 = vunpack.c.l.b16 %v3031
        %v3640 = vunpack.c.l.b16 %v3032
        %v3641 = vunpack.c.l.b16 %v3033
        %v3642 = vunpack.c.l.b16 %v3034
        %v3643 = vunpack.c.l.b16 %v3035
        %v3644 = vunpack.c.l.b16 %v3036
        %v3645 = vunpack.c.l.b16 %v3037
        %v3646 = vunpack.c.l.b16 %v3038
        %v3647 = vunpack.c.l.b16 %v3039
        %v3648 = vunpack.c.l.b16 %v3040
        %v3649 = vunpack.c.l.b16 %v3041
        %v3650 = vunpack.c.l.b16 %v3042
        %v3651 = vunpack.c.l.b16 %v3043
        %v3652 = vunpack.c.l.b16 %v3044
        %v3653 = vunpack.c.l.b16 %v3045
        %v3654 = vunpack.c.l.b16 %v3046
        %v3655 = vunpack.c.l.b16 %v3047
        %v3656 = vunpack.c.l.b16 %v3048
        %v3657 = vunpack.c.l.b16 %v3049
        %v3658 = vunpack.c.l.b16 %v3050
        %v3659 = vunpack.c.l.b16 %v3051
        %v3660 = vunpack.c.l.b16 %v3052
        %v3661 = vunpack.c.l.b16 %v3053
        %v3662 = vunpack.c.l.b16 %v3054
        %v3663 = vunpack.c.l.b16 %v3055
        %v3664 = vunpack.c.l.b16 %v3056
        %v3665 = vunpack.c.l.b16 %v3057
        %v3666 = vunpack.c.l.b16 %v3058
        %v3667 = vunpack.c.l.b16 %v3059
        %v3668 = vunpack.c.l.b16 %v3060
        %v3669 = vunpack.c.l.b16 %v3061
        %v3670 = vunpack.c.l.b16 %v3062
        %v3671 = vunpack.c.l.b16 %v3063
        %v3672 = vunpack.c.l.b16 %v3064
        %v3673 = vpack.c.b16 %v3626, %v3625
        %v3674 = vpack.c.b16 %v3628, %v3627
        %v3675 = vpack.c.b16 %v3630, %v3629
        %v3676 = vpack.c.b16 %v3632, %v3631
        %v3677 = vpack.c.b16 %v3634, %v3633
        %v3678 = vpack.c.b16 %v3636, %v3635
        %v3679 = vpack.c.b16 %v3638, %v3637
        %v3680 = vpack.c.b16 %v3640, %v3639
        %v3681 = vpack.c.b16 %v3642, %v3641
        %v3682 = vpack.c.b16 %v3644, %v3643
        %v3683 = vpack.c.b16 %v3646, %v3645
        %v3684 = vpack.c.b16 %v3648, %v3647
        %v3685 = vpack.c.b16 %v3650, %v3649
        %v3686 = vpack.c.b16 %v3652, %v3651
        %v3687 = vpack.c.b16 %v3654, %v3653
        %v3688 = vpack.c.b16 %v3656, %v3655
        %v3689 = vpack.c.b16 %v3658, %v3657
        %v3690 = vpack.c.b16 %v3660, %v3659
        %v3691 = vpack.c.b16 %v3662, %v3661
        %v3692 = vpack.c.b16 %v3664, %v3663
        %v3693 = vpack.c.b16 %v3666, %v3665
        %v3694 = vpack.c.b16 %v3668, %v3667
        %v3695 = vpack.c.b16 %v3670, %v3669
        %v3696 = vpack.c.b16 %v3672, %v3671
        %3721 = vmatprep.subr.bf16.mxu0 0
        %3722 = vmatpush1.bf16.msra.mxu0 %v3680
        %3723 = vmatprep.subr.bf16.mxu0 0
        %3724 = vmatpush1.bf16.msra.mxu0 %v3679
        %3725 = vmatprep.subr.bf16.mxu0 0
        %3726 = vmatpush1.bf16.msra.mxu0 %v3678
        %3727 = vmatprep.subr.bf16.mxu0 0
        %3728 = vmatpush1.bf16.msra.mxu0 %v3677
        %3729 = vmatprep.subr.bf16.mxu0 0
        %3730 = vmatpush1.bf16.msra.mxu0 %v3676
        %3731 = vmatprep.subr.bf16.mxu0 0
        %3732 = vmatpush1.bf16.msra.mxu0 %v3675
        %3733 = vmatprep.subr.bf16.mxu0 0
        %3734 = vmatpush1.bf16.msra.mxu0 %v3674
        %3735 = vmatprep.subr.bf16.mxu0 0
        %3736 = vmatpush1.bf16.msra.mxu0 %v3673
        %3737 = vmatprep.subr.bf16.mxu0 0
        %3738 = vmatpush2.bf16.msra.mxu0 %v3688
        %3739 = vmatprep.subr.bf16.mxu0 0
        %3740 = vmatpush2.bf16.msra.mxu0 %v3687
        %3741 = vmatprep.subr.bf16.mxu0 0
        %3742 = vmatpush2.bf16.msra.mxu0 %v3686
        %3743 = vmatprep.subr.bf16.mxu0 0
        %3744 = vmatpush2.bf16.msra.mxu0 %v3685
        %3745 = vmatprep.subr.bf16.mxu0 0
        %3746 = vmatpush2.bf16.msra.mxu0 %v3684
        %3747 = vmatprep.subr.bf16.mxu0 0
        %3748 = vmatpush2.bf16.msra.mxu0 %v3683
        %3749 = vmatprep.subr.bf16.mxu0 0
        %3750 = vmatpush2.bf16.msra.mxu0 %v3682
        %3751 = vmatprep.subr.bf16.mxu0 0
        %3752 = vmatpush2.bf16.msra.mxu0 %v3681
        %3753 = vmatprep.mubr.bf16.mxu0 %v3386
        %3754 = vmatmul.mubr.bf16.gmra.mxu0 %v3385
        %v3755 = vpop.f32.mrf.mxu0
        %v3756 = vadd.f32 0.0, %v3755
        %v3757 = vpop.f32.mrf.mxu0
        %v3758 = vpop.f32.mrf.mxu0
        %v3759 = vadd.f32 0.0, %v3758
        %v3760 = vpop.f32.mrf.mxu0
        %3761 = vmatprep.mubr.bf16.mxu0 %v3389
        %3762 = vmatmul.mubr.bf16.gmra.mxu0 %v3388
        %v3763 = vpop.f32.mrf.mxu0
        %v3764 = vadd.f32 0.0, %v3763
        %v3765 = vpop.f32.mrf.mxu0
        %v3766 = vpop.f32.mrf.mxu0
        %v3767 = vadd.f32 0.0, %v3766
        %v3768 = vpop.f32.mrf.mxu0
        %3769 = vmatprep.mubr.bf16.mxu0 %v3392
        %3770 = vmatmul.mubr.bf16.gmra.mxu0 %v3391
        %v3771 = vpop.f32.mrf.mxu0
        %v3772 = vadd.f32 0.0, %v3771
        %v3773 = vpop.f32.mrf.mxu0
        %v3774 = vpop.f32.mrf.mxu0
        %v3775 = vadd.f32 0.0, %v3774
        %v3776 = vpop.f32.mrf.mxu0
        %3777 = vmatprep.mubr.bf16.mxu0 %v3395
        %3778 = vmatmul.mubr.bf16.gmra.mxu0 %v3394
        %v3779 = vpop.f32.mrf.mxu0
        %v3780 = vadd.f32 0.0, %v3779
        %v3781 = vpop.f32.mrf.mxu0
        %v3782 = vpop.f32.mrf.mxu0
        %v3783 = vadd.f32 0.0, %v3782
        %v3784 = vpop.f32.mrf.mxu0
        %3785 = vmatprep.mubr.bf16.mxu0 %v3398
        %3786 = vmatmul.mubr.bf16.gmra.mxu0 %v3397
        %v3787 = vpop.f32.mrf.mxu0
        %v3788 = vadd.f32 0.0, %v3787
        %v3789 = vpop.f32.mrf.mxu0
        %v3790 = vpop.f32.mrf.mxu0
        %v3791 = vadd.f32 0.0, %v3790
        %v3792 = vpop.f32.mrf.mxu0
        %3793 = vmatprep.mubr.bf16.mxu0 %v3401
        %3794 = vmatmul.mubr.bf16.gmra.mxu0 %v3400
        %v3795 = vpop.f32.mrf.mxu0
        %v3796 = vadd.f32 0.0, %v3795
        %v3797 = vpop.f32.mrf.mxu0
        %v3798 = vpop.f32.mrf.mxu0
        %v3799 = vadd.f32 0.0, %v3798
        %v3800 = vpop.f32.mrf.mxu0
        %3801 = vmatprep.mubr.bf16.mxu0 %v3404
        %3802 = vmatmul.mubr.bf16.gmra.mxu0 %v3403
        %v3803 = vpop.f32.mrf.mxu0
        %v3804 = vadd.f32 0.0, %v3803
        %v3805 = vpop.f32.mrf.mxu0
        %v3806 = vpop.f32.mrf.mxu0
        %v3807 = vadd.f32 0.0, %v3806
        %v3808 = vpop.f32.mrf.mxu0
        %3809 = vmatprep.mubr.bf16.mxu0 %v3407
        %3810 = vmatmul.mubr.bf16.gmra.mxu0 %v3406
        %v3811 = vpop.f32.mrf.mxu0
        %v3812 = vadd.f32 0.0, %v3811
        %v3813 = vpop.f32.mrf.mxu0
        %v3814 = vpop.f32.mrf.mxu0
        %v3815 = vadd.f32 0.0, %v3814
        %v3816 = vpop.f32.mrf.mxu0
        %3817 = vmatprep.mubr.bf16.mxu0 %v3410
        %3818 = vmatmul.mubr.bf16.gmra.mxu0 %v3409
        %v3819 = vpop.f32.mrf.mxu0
        %v3820 = vadd.f32 0.0, %v3819
        %v3821 = vpop.f32.mrf.mxu0
        %v3822 = vpop.f32.mrf.mxu0
        %v3823 = vadd.f32 0.0, %v3822
        %v3824 = vpop.f32.mrf.mxu0
        %3825 = vmatprep.mubr.bf16.mxu0 %v3413
        %3826 = vmatmul.mubr.bf16.gmra.mxu0 %v3412
        %v3827 = vpop.f32.mrf.mxu0
        %v3828 = vadd.f32 0.0, %v3827
        %v3829 = vpop.f32.mrf.mxu0
        %v3830 = vpop.f32.mrf.mxu0
        %v3831 = vadd.f32 0.0, %v3830
        %v3832 = vpop.f32.mrf.mxu0
        %3833 = vmatprep.mubr.bf16.mxu0 %v3416
        %3834 = vmatmul.mubr.bf16.gmra.mxu0 %v3415
        %v3835 = vpop.f32.mrf.mxu0
        %v3836 = vadd.f32 0.0, %v3835
        %v3837 = vpop.f32.mrf.mxu0
        %v3838 = vpop.f32.mrf.mxu0
        %v3839 = vadd.f32 0.0, %v3838
        %v3840 = vpop.f32.mrf.mxu0
        %3841 = vmatprep.mubr.bf16.mxu0 %v3419
        %3842 = vmatmul.mubr.bf16.gmra.mxu0 %v3418
        %v3843 = vpop.f32.mrf.mxu0
        %v3844 = vadd.f32 0.0, %v3843
        %v3845 = vpop.f32.mrf.mxu0
        %v3846 = vpop.f32.mrf.mxu0
        %v3847 = vadd.f32 0.0, %v3846
        %v3848 = vpop.f32.mrf.mxu0
        %3849 = vmatprep.mubr.bf16.mxu0 %v3422
        %3850 = vmatmul.mubr.bf16.gmra.mxu0 %v3421
        %v3851 = vpop.f32.mrf.mxu0
        %v3852 = vadd.f32 0.0, %v3851
        %v3853 = vpop.f32.mrf.mxu0
        %v3854 = vpop.f32.mrf.mxu0
        %v3855 = vadd.f32 0.0, %v3854
        %v3856 = vpop.f32.mrf.mxu0
        %3857 = vmatprep.mubr.bf16.mxu0 %v3425
        %3858 = vmatmul.mubr.bf16.gmra.mxu0 %v3424
        %v3859 = vpop.f32.mrf.mxu0
        %v3860 = vadd.f32 0.0, %v3859
        %v3861 = vpop.f32.mrf.mxu0
        %v3862 = vpop.f32.mrf.mxu0
        %v3863 = vadd.f32 0.0, %v3862
        %v3864 = vpop.f32.mrf.mxu0
        %3865 = vmatprep.mubr.bf16.mxu0 %v3428
        %3866 = vmatmul.mubr.bf16.gmra.mxu0 %v3427
        %v3867 = vpop.f32.mrf.mxu0
        %v3868 = vadd.f32 0.0, %v3867
        %v3869 = vpop.f32.mrf.mxu0
        %v3870 = vpop.f32.mrf.mxu0
        %v3871 = vadd.f32 0.0, %v3870
        %v3872 = vpop.f32.mrf.mxu0
        %3873 = vmatprep.mubr.bf16.mxu0 %v3431
        %3874 = vmatmul.mubr.bf16.gmra.mxu0 %v3430
        %v3875 = vpop.f32.mrf.mxu0
        %v3876 = vadd.f32 0.0, %v3875
        %v3877 = vpop.f32.mrf.mxu0
        %v3878 = vpop.f32.mrf.mxu0
        %v3879 = vadd.f32 0.0, %v3878
        %v3880 = vpop.f32.mrf.mxu0
        %3881 = vmatprep.mubr.bf16.mxu0 %v3434
        %3882 = vmatmul.mubr.bf16.gmra.mxu0 %v3433
        %v3883 = vpop.f32.mrf.mxu0
        %v3884 = vadd.f32 0.0, %v3883
        %v3885 = vpop.f32.mrf.mxu0
        %v3886 = vpop.f32.mrf.mxu0
        %v3887 = vadd.f32 0.0, %v3886
        %v3888 = vpop.f32.mrf.mxu0
        %3889 = vmatprep.mubr.bf16.mxu0 %v3437
        %3890 = vmatmul.mubr.bf16.gmra.mxu0 %v3436
        %v3891 = vpop.f32.mrf.mxu0
        %v3892 = vadd.f32 0.0, %v3891
        %v3893 = vpop.f32.mrf.mxu0
        %v3894 = vpop.f32.mrf.mxu0
        %v3895 = vadd.f32 0.0, %v3894
        %v3896 = vpop.f32.mrf.mxu0
        %3897 = vmatprep.mubr.bf16.mxu0 %v3440
        %3898 = vmatmul.mubr.bf16.gmra.mxu0 %v3439
        %v3899 = vpop.f32.mrf.mxu0
        %v3900 = vadd.f32 0.0, %v3899
        %v3901 = vpop.f32.mrf.mxu0
        %v3902 = vpop.f32.mrf.mxu0
        %v3903 = vadd.f32 0.0, %v3902
        %v3904 = vpop.f32.mrf.mxu0
        %3905 = vmatprep.mubr.bf16.mxu0 %v3443
        %3906 = vmatmul.mubr.bf16.gmra.mxu0 %v3442
        %v3907 = vpop.f32.mrf.mxu0
        %v3908 = vadd.f32 0.0, %v3907
        %v3909 = vpop.f32.mrf.mxu0
        %v3910 = vpop.f32.mrf.mxu0
        %v3911 = vadd.f32 0.0, %v3910
        %v3912 = vpop.f32.mrf.mxu0
        %3913 = vmatprep.mubr.bf16.mxu0 %v3446
        %3914 = vmatmul.mubr.bf16.gmra.mxu0 %v3445
        %v3915 = vpop.f32.mrf.mxu0
        %v3916 = vadd.f32 0.0, %v3915
        %v3917 = vpop.f32.mrf.mxu0
        %v3918 = vpop.f32.mrf.mxu0
        %v3919 = vadd.f32 0.0, %v3918
        %v3920 = vpop.f32.mrf.mxu0
        %3921 = vmatprep.mubr.bf16.mxu0 %v3449
        %3922 = vmatmul.mubr.bf16.gmra.mxu0 %v3448
        %v3923 = vpop.f32.mrf.mxu0
        %v3924 = vadd.f32 0.0, %v3923
        %v3925 = vpop.f32.mrf.mxu0
        %v3926 = vpop.f32.mrf.mxu0
        %v3927 = vadd.f32 0.0, %v3926
        %v3928 = vpop.f32.mrf.mxu0
        %3929 = vmatprep.mubr.bf16.mxu0 %v3452
        %3930 = vmatmul.mubr.bf16.gmra.mxu0 %v3451
        %v3931 = vpop.f32.mrf.mxu0
        %v3932 = vadd.f32 0.0, %v3931
        %v3933 = vpop.f32.mrf.mxu0
        %v3934 = vpop.f32.mrf.mxu0
        %v3935 = vadd.f32 0.0, %v3934
        %v3936 = vpop.f32.mrf.mxu0
        %3937 = vmatprep.mubr.bf16.mxu0 %v3455
        %3938 = vmatmul.mubr.bf16.gmra.mxu0 %v3454
        %v3939 = vpop.f32.mrf.mxu0
        %v3940 = vadd.f32 0.0, %v3939
        %v3941 = vpop.f32.mrf.mxu0
        %v3942 = vpop.f32.mrf.mxu0
        %v3943 = vadd.f32 0.0, %v3942
        %v3944 = vpop.f32.mrf.mxu0
        %3945 = vmatprep.mubr.bf16.mxu0 %v3458
        %3946 = vmatmul.mubr.bf16.gmra.mxu0 %v3457
        %v3947 = vpop.f32.mrf.mxu0
        %v3948 = vadd.f32 0.0, %v3947
        %v3949 = vpop.f32.mrf.mxu0
        %v3950 = vpop.f32.mrf.mxu0
        %v3951 = vadd.f32 0.0, %v3950
        %v3952 = vpop.f32.mrf.mxu0
        %3953 = vmatprep.mubr.bf16.mxu0 %v3461
        %3954 = vmatmul.mubr.bf16.gmra.mxu0 %v3460
        %v3955 = vpop.f32.mrf.mxu0
        %v3956 = vadd.f32 0.0, %v3955
        %v3957 = vpop.f32.mrf.mxu0
        %v3958 = vpop.f32.mrf.mxu0
        %v3959 = vadd.f32 0.0, %v3958
        %v3960 = vpop.f32.mrf.mxu0
        %3961 = vmatprep.mubr.bf16.mxu0 %v3464
        %3962 = vmatmul.mubr.bf16.gmra.mxu0 %v3463
        %v3963 = vpop.f32.mrf.mxu0
        %v3964 = vadd.f32 0.0, %v3963
        %v3965 = vpop.f32.mrf.mxu0
        %v3966 = vpop.f32.mrf.mxu0
        %v3967 = vadd.f32 0.0, %v3966
        %v3968 = vpop.f32.mrf.mxu0
        %3969 = vmatprep.mubr.bf16.mxu0 %v3467
        %3970 = vmatmul.mubr.bf16.gmra.mxu0 %v3466
        %v3971 = vpop.f32.mrf.mxu0
        %v3972 = vadd.f32 0.0, %v3971
        %v3973 = vpop.f32.mrf.mxu0
        %v3974 = vpop.f32.mrf.mxu0
        %v3975 = vadd.f32 0.0, %v3974
        %v3976 = vpop.f32.mrf.mxu0
        %3977 = vmatprep.mubr.bf16.mxu0 %v3470
        %3978 = vmatmul.mubr.bf16.gmra.mxu0 %v3469
        %v3979 = vpop.f32.mrf.mxu0
        %v3980 = vadd.f32 0.0, %v3979
        %v3981 = vpop.f32.mrf.mxu0
        %v3982 = vpop.f32.mrf.mxu0
        %v3983 = vadd.f32 0.0, %v3982
        %v3984 = vpop.f32.mrf.mxu0
        %3985 = vmatprep.mubr.bf16.mxu0 %v3473
        %3986 = vmatmul.mubr.bf16.gmra.mxu0 %v3472
        %v3987 = vpop.f32.mrf.mxu0
        %v3988 = vadd.f32 0.0, %v3987
        %v3989 = vpop.f32.mrf.mxu0
        %v3990 = vpop.f32.mrf.mxu0
        %v3991 = vadd.f32 0.0, %v3990
        %v3992 = vpop.f32.mrf.mxu0
        %3993 = vmatprep.mubr.bf16.mxu0 %v3476
        %3994 = vmatmul.mubr.bf16.gmra.mxu0 %v3475
        %v3995 = vpop.f32.mrf.mxu0
        %v3996 = vadd.f32 0.0, %v3995
        %v3997 = vpop.f32.mrf.mxu0
        %v3998 = vpop.f32.mrf.mxu0
        %v3999 = vadd.f32 0.0, %v3998
        %v4000 = vpop.f32.mrf.mxu0
        %4001 = vmatprep.mubr.bf16.mxu0 %v3479
        %4002 = vmatmul.mubr.bf16.gmra.mxu0 %v3478
        %v4003 = vpop.f32.mrf.mxu0
        %v4004 = vadd.f32 0.0, %v4003
        %v4005 = vpop.f32.mrf.mxu0
        %v4006 = vpop.f32.mrf.mxu0
        %v4007 = vadd.f32 0.0, %v4006
        %v4008 = vpop.f32.mrf.mxu0
        %4009 = vdwg.mxu0
        %4010 = vmatprep.subr.bf16.mxu0 0
        %4011 = vmatpush1.bf16.msra.mxu0 %v3696
        %4012 = vmatprep.subr.bf16.mxu0 0
        %4013 = vmatpush1.bf16.msra.mxu0 %v3695
        %4014 = vmatprep.subr.bf16.mxu0 0
        %4015 = vmatpush1.bf16.msra.mxu0 %v3694
        %4016 = vmatprep.subr.bf16.mxu0 0
        %4017 = vmatpush1.bf16.msra.mxu0 %v3693
        %4018 = vmatprep.subr.bf16.mxu0 0
        %4019 = vmatpush1.bf16.msra.mxu0 %v3692
        %4020 = vmatprep.subr.bf16.mxu0 0
        %4021 = vmatpush1.bf16.msra.mxu0 %v3691
        %4022 = vmatprep.subr.bf16.mxu0 0
        %4023 = vmatpush1.bf16.msra.mxu0 %v3690
        %4024 = vmatprep.subr.bf16.mxu0 0
        %4025 = vmatpush1.bf16.msra.mxu0 %v3689
        %4026 = vmatprep.subr.bf16.mxu0 0
        %4027 = vmatpush2.bf16.msra.mxu0 0
        %4028 = vmatprep.subr.bf16.mxu0 0
        %4029 = vmatpush2.bf16.msra.mxu0 0
        %4030 = vmatprep.subr.bf16.mxu0 0
        %4031 = vmatpush2.bf16.msra.mxu0 0
        %4032 = vmatprep.subr.bf16.mxu0 0
        %4033 = vmatpush2.bf16.msra.mxu0 0
        %4034 = vmatprep.subr.bf16.mxu0 0
        %4035 = vmatpush2.bf16.msra.mxu0 0
        %4036 = vmatprep.subr.bf16.mxu0 0
        %4037 = vmatpush2.bf16.msra.mxu0 0
        %4038 = vmatprep.subr.bf16.mxu0 0
        %4039 = vmatpush2.bf16.msra.mxu0 0
        %4040 = vmatprep.subr.bf16.mxu0 0
        %4041 = vmatpush2.bf16.msra.mxu0 0
        %4042 = vmatprep.mubr.bf16.mxu0 0
        %4043 = vmatmul.mubr.bf16.gmra.mxu0 %v3387
        %v4044 = vpop.f32.mrf.mxu0
        %v4045 = vadd.f32 %v3756, %v4044
        %v4046 = vpop.f32.mrf.mxu0
        %v4047 = vpop.f32.mrf.mxu0
        %v4048 = vadd.f32 %v3759, %v4047
        %v4049 = vpop.f32.mrf.mxu0
        %4050 = vmatprep.mubr.bf16.mxu0 0
        %4051 = vmatmul.mubr.bf16.gmra.mxu0 %v3390
        %v4052 = vpop.f32.mrf.mxu0
        %v4053 = vadd.f32 %v3764, %v4052
        %v4054 = vpop.f32.mrf.mxu0
        %v4055 = vpop.f32.mrf.mxu0
        %v4056 = vadd.f32 %v3767, %v4055
        %v4057 = vpop.f32.mrf.mxu0
        %4058 = vmatprep.mubr.bf16.mxu0 0
        %4059 = vmatmul.mubr.bf16.gmra.mxu0 %v3393
        %v4060 = vpop.f32.mrf.mxu0
        %v4061 = vadd.f32 %v3772, %v4060
        %v4062 = vpop.f32.mrf.mxu0
        %v4063 = vpop.f32.mrf.mxu0
        %v4064 = vadd.f32 %v3775, %v4063
        %v4065 = vpop.f32.mrf.mxu0
        %4066 = vmatprep.mubr.bf16.mxu0 0
        %4067 = vmatmul.mubr.bf16.gmra.mxu0 %v3396
        %v4068 = vpop.f32.mrf.mxu0
        %v4069 = vadd.f32 %v3780, %v4068
        %v4070 = vpop.f32.mrf.mxu0
        %v4071 = vpop.f32.mrf.mxu0
        %v4072 = vadd.f32 %v3783, %v4071
        %v4073 = vpop.f32.mrf.mxu0
        %4074 = vmatprep.mubr.bf16.mxu0 0
        %4075 = vmatmul.mubr.bf16.gmra.mxu0 %v3399
        %v4076 = vpop.f32.mrf.mxu0
        %v4077 = vadd.f32 %v3788, %v4076
        %v4078 = vpop.f32.mrf.mxu0
        %v4079 = vpop.f32.mrf.mxu0
        %v4080 = vadd.f32 %v3791, %v4079
        %v4081 = vpop.f32.mrf.mxu0
        %4082 = vmatprep.mubr.bf16.mxu0 0
        %4083 = vmatmul.mubr.bf16.gmra.mxu0 %v3402
        %v4084 = vpop.f32.mrf.mxu0
        %v4085 = vadd.f32 %v3796, %v4084
        %v4086 = vpop.f32.mrf.mxu0
        %v4087 = vpop.f32.mrf.mxu0
        %v4088 = vadd.f32 %v3799, %v4087
        %v4089 = vpop.f32.mrf.mxu0
        %4090 = vmatprep.mubr.bf16.mxu0 0
        %4091 = vmatmul.mubr.bf16.gmra.mxu0 %v3405
        %v4092 = vpop.f32.mrf.mxu0
        %v4093 = vadd.f32 %v3804, %v4092
        %v4094 = vpop.f32.mrf.mxu0
        %v4095 = vpop.f32.mrf.mxu0
        %v4096 = vadd.f32 %v3807, %v4095
        %v4097 = vpop.f32.mrf.mxu0
        %4098 = vmatprep.mubr.bf16.mxu0 0
        %4099 = vmatmul.mubr.bf16.gmra.mxu0 %v3408
        %v4100 = vpop.f32.mrf.mxu0
        %v4101 = vadd.f32 %v3812, %v4100
        %v4102 = vpop.f32.mrf.mxu0
        %v4103 = vpop.f32.mrf.mxu0
        %v4104 = vadd.f32 %v3815, %v4103
        %v4105 = vpop.f32.mrf.mxu0
        %4106 = vmatprep.mubr.bf16.mxu0 0
        %4107 = vmatmul.mubr.bf16.gmra.mxu0 %v3411
        %v4108 = vpop.f32.mrf.mxu0
        %v4109 = vadd.f32 %v3820, %v4108
        %v4110 = vpop.f32.mrf.mxu0
        %v4111 = vpop.f32.mrf.mxu0
        %v4112 = vadd.f32 %v3823, %v4111
        %v4113 = vpop.f32.mrf.mxu0
        %4114 = vmatprep.mubr.bf16.mxu0 0
        %4115 = vmatmul.mubr.bf16.gmra.mxu0 %v3414
        %v4116 = vpop.f32.mrf.mxu0
        %v4117 = vadd.f32 %v3828, %v4116
        %v4118 = vpop.f32.mrf.mxu0
        %v4119 = vpop.f32.mrf.mxu0
        %v4120 = vadd.f32 %v3831, %v4119
        %v4121 = vpop.f32.mrf.mxu0
        %4122 = vmatprep.mubr.bf16.mxu0 0
        %4123 = vmatmul.mubr.bf16.gmra.mxu0 %v3417
        %v4124 = vpop.f32.mrf.mxu0
        %v4125 = vadd.f32 %v3836, %v4124
        %v4126 = vpop.f32.mrf.mxu0
        %v4127 = vpop.f32.mrf.mxu0
        %v4128 = vadd.f32 %v3839, %v4127
        %v4129 = vpop.f32.mrf.mxu0
        %4130 = vmatprep.mubr.bf16.mxu0 0
        %4131 = vmatmul.mubr.bf16.gmra.mxu0 %v3420
        %v4132 = vpop.f32.mrf.mxu0
        %v4133 = vadd.f32 %v3844, %v4132
        %v4134 = vpop.f32.mrf.mxu0
        %v4135 = vpop.f32.mrf.mxu0
        %v4136 = vadd.f32 %v3847, %v4135
        %v4137 = vpop.f32.mrf.mxu0
        %4138 = vmatprep.mubr.bf16.mxu0 0
        %4139 = vmatmul.mubr.bf16.gmra.mxu0 %v3423
        %v4140 = vpop.f32.mrf.mxu0
        %v4141 = vadd.f32 %v3852, %v4140
        %v4142 = vpop.f32.mrf.mxu0
        %v4143 = vpop.f32.mrf.mxu0
        %v4144 = vadd.f32 %v3855, %v4143
        %v4145 = vpop.f32.mrf.mxu0
        %4146 = vmatprep.mubr.bf16.mxu0 0
        %4147 = vmatmul.mubr.bf16.gmra.mxu0 %v3426
        %v4148 = vpop.f32.mrf.mxu0
        %v4149 = vadd.f32 %v3860, %v4148
        %v4150 = vpop.f32.mrf.mxu0
        %v4151 = vpop.f32.mrf.mxu0
        %v4152 = vadd.f32 %v3863, %v4151
        %v4153 = vpop.f32.mrf.mxu0
        %4154 = vmatprep.mubr.bf16.mxu0 0
        %4155 = vmatmul.mubr.bf16.gmra.mxu0 %v3429
        %v4156 = vpop.f32.mrf.mxu0
        %v4157 = vadd.f32 %v3868, %v4156
        %v4158 = vpop.f32.mrf.mxu0
        %v4159 = vpop.f32.mrf.mxu0
        %v4160 = vadd.f32 %v3871, %v4159
        %v4161 = vpop.f32.mrf.mxu0
        %4162 = vmatprep.mubr.bf16.mxu0 0
        %4163 = vmatmul.mubr.bf16.gmra.mxu0 %v3432
        %v4164 = vpop.f32.mrf.mxu0
        %v4165 = vadd.f32 %v3876, %v4164
        %v4166 = vpop.f32.mrf.mxu0
        %v4167 = vpop.f32.mrf.mxu0
        %v4168 = vadd.f32 %v3879, %v4167
        %v4169 = vpop.f32.mrf.mxu0
        %4170 = vmatprep.mubr.bf16.mxu0 0
        %4171 = vmatmul.mubr.bf16.gmra.mxu0 %v3435
        %v4172 = vpop.f32.mrf.mxu0
        %v4173 = vadd.f32 %v3884, %v4172
        %v4174 = vpop.f32.mrf.mxu0
        %v4175 = vpop.f32.mrf.mxu0
        %v4176 = vadd.f32 %v3887, %v4175
        %v4177 = vpop.f32.mrf.mxu0
        %4178 = vmatprep.mubr.bf16.mxu0 0
        %4179 = vmatmul.mubr.bf16.gmra.mxu0 %v3438
        %v4180 = vpop.f32.mrf.mxu0
        %v4181 = vadd.f32 %v3892, %v4180
        %v4182 = vpop.f32.mrf.mxu0
        %v4183 = vpop.f32.mrf.mxu0
        %v4184 = vadd.f32 %v3895, %v4183
        %v4185 = vpop.f32.mrf.mxu0
        %4186 = vmatprep.mubr.bf16.mxu0 0
        %4187 = vmatmul.mubr.bf16.gmra.mxu0 %v3441
        %v4188 = vpop.f32.mrf.mxu0
        %v4189 = vadd.f32 %v3900, %v4188
        %v4190 = vpop.f32.mrf.mxu0
        %v4191 = vpop.f32.mrf.mxu0
        %v4192 = vadd.f32 %v3903, %v4191
        %v4193 = vpop.f32.mrf.mxu0
        %4194 = vmatprep.mubr.bf16.mxu0 0
        %4195 = vmatmul.mubr.bf16.gmra.mxu0 %v3444
        %v4196 = vpop.f32.mrf.mxu0
        %v4197 = vadd.f32 %v3908, %v4196
        %v4198 = vpop.f32.mrf.mxu0
        %v4199 = vpop.f32.mrf.mxu0
        %v4200 = vadd.f32 %v3911, %v4199
        %v4201 = vpop.f32.mrf.mxu0
        %4202 = vmatprep.mubr.bf16.mxu0 0
        %4203 = vmatmul.mubr.bf16.gmra.mxu0 %v3447
        %v4204 = vpop.f32.mrf.mxu0
        %v4205 = vadd.f32 %v3916, %v4204
        %v4206 = vpop.f32.mrf.mxu0
        %v4207 = vpop.f32.mrf.mxu0
        %v4208 = vadd.f32 %v3919, %v4207
        %v4209 = vpop.f32.mrf.mxu0
        %4210 = vmatprep.mubr.bf16.mxu0 0
        %4211 = vmatmul.mubr.bf16.gmra.mxu0 %v3450
        %v4212 = vpop.f32.mrf.mxu0
        %v4213 = vadd.f32 %v3924, %v4212
        %v4214 = vpop.f32.mrf.mxu0
        %v4215 = vpop.f32.mrf.mxu0
        %v4216 = vadd.f32 %v3927, %v4215
        %v4217 = vpop.f32.mrf.mxu0
        %4218 = vmatprep.mubr.bf16.mxu0 0
        %4219 = vmatmul.mubr.bf16.gmra.mxu0 %v3453
        %v4220 = vpop.f32.mrf.mxu0
        %v4221 = vadd.f32 %v3932, %v4220
        %v4222 = vpop.f32.mrf.mxu0
        %v4223 = vpop.f32.mrf.mxu0
        %v4224 = vadd.f32 %v3935, %v4223
        %v4225 = vpop.f32.mrf.mxu0
        %4226 = vmatprep.mubr.bf16.mxu0 0
        %4227 = vmatmul.mubr.bf16.gmra.mxu0 %v3456
        %v4228 = vpop.f32.mrf.mxu0
        %v4229 = vadd.f32 %v3940, %v4228
        %v4230 = vpop.f32.mrf.mxu0
        %v4231 = vpop.f32.mrf.mxu0
        %v4232 = vadd.f32 %v3943, %v4231
        %v4233 = vpop.f32.mrf.mxu0
        %4234 = vmatprep.mubr.bf16.mxu0 0
        %4235 = vmatmul.mubr.bf16.gmra.mxu0 %v3459
        %v4236 = vpop.f32.mrf.mxu0
        %v4237 = vadd.f32 %v3948, %v4236
        %v4238 = vpop.f32.mrf.mxu0
        %v4239 = vpop.f32.mrf.mxu0
        %v4240 = vadd.f32 %v3951, %v4239
        %v4241 = vpop.f32.mrf.mxu0
        %4242 = vmatprep.mubr.bf16.mxu0 0
        %4243 = vmatmul.mubr.bf16.gmra.mxu0 %v3462
        %v4244 = vpop.f32.mrf.mxu0
        %v4245 = vadd.f32 %v3956, %v4244
        %v4246 = vpop.f32.mrf.mxu0
        %v4247 = vpop.f32.mrf.mxu0
        %v4248 = vadd.f32 %v3959, %v4247
        %v4249 = vpop.f32.mrf.mxu0
        %4250 = vmatprep.mubr.bf16.mxu0 0
        %4251 = vmatmul.mubr.bf16.gmra.mxu0 %v3465
        %v4252 = vpop.f32.mrf.mxu0
        %v4253 = vadd.f32 %v3964, %v4252
        %v4254 = vpop.f32.mrf.mxu0
        %v4255 = vpop.f32.mrf.mxu0
        %v4256 = vadd.f32 %v3967, %v4255
        %v4257 = vpop.f32.mrf.mxu0
        %4258 = vmatprep.mubr.bf16.mxu0 0
        %4259 = vmatmul.mubr.bf16.gmra.mxu0 %v3468
        %v4260 = vpop.f32.mrf.mxu0
        %v4261 = vadd.f32 %v3972, %v4260
        %v4262 = vpop.f32.mrf.mxu0
        %v4263 = vpop.f32.mrf.mxu0
        %v4264 = vadd.f32 %v3975, %v4263
        %v4265 = vpop.f32.mrf.mxu0
        %4266 = vmatprep.mubr.bf16.mxu0 0
        %4267 = vmatmul.mubr.bf16.gmra.mxu0 %v3471
        %v4268 = vpop.f32.mrf.mxu0
        %v4269 = vadd.f32 %v3980, %v4268
        %v4270 = vpop.f32.mrf.mxu0
        %v4271 = vpop.f32.mrf.mxu0
        %v4272 = vadd.f32 %v3983, %v4271
        %v4273 = vpop.f32.mrf.mxu0
        %4274 = vmatprep.mubr.bf16.mxu0 0
        %4275 = vmatmul.mubr.bf16.gmra.mxu0 %v3474
        %v4276 = vpop.f32.mrf.mxu0
        %v4277 = vadd.f32 %v3988, %v4276
        %v4278 = vpop.f32.mrf.mxu0
        %v4279 = vpop.f32.mrf.mxu0
        %v4280 = vadd.f32 %v3991, %v4279
        %v4281 = vpop.f32.mrf.mxu0
        %4282 = vmatprep.mubr.bf16.mxu0 0
        %4283 = vmatmul.mubr.bf16.gmra.mxu0 %v3477
        %v4284 = vpop.f32.mrf.mxu0
        %v4285 = vadd.f32 %v3996, %v4284
        %v4286 = vpop.f32.mrf.mxu0
        %v4287 = vpop.f32.mrf.mxu0
        %v4288 = vadd.f32 %v3999, %v4287
        %v4289 = vpop.f32.mrf.mxu0
        %4290 = vmatprep.mubr.bf16.mxu0 0
        %4291 = vmatmul.mubr.bf16.gmra.mxu0 %v3480
        %v4292 = vpop.f32.mrf.mxu0
        %v4293 = vadd.f32 %v4004, %v4292
        %v4294 = vpop.f32.mrf.mxu0
        %v4295 = vpop.f32.mrf.mxu0
        %v4296 = vadd.f32 %v4007, %v4295
        %v4297 = vpop.f32.mrf.mxu0
        %4298 = vdwg.mxu0
        %v4307 = vunpack.c.l.b16 %v2832
        %v4308 = vunpack.c.h.b16 %v2832
        %v4309 = vunpack.c.l.b16 %v2833
        %v4310 = vunpack.c.l.b16 %v2834
        %v4311 = vunpack.c.h.b16 %v2834
        %v4312 = vunpack.c.l.b16 %v2835
        %v4313 = vunpack.c.l.b16 %v2836
        %v4314 = vunpack.c.h.b16 %v2836
        %v4315 = vunpack.c.l.b16 %v2837
        %v4316 = vunpack.c.l.b16 %v2838
        %v4317 = vunpack.c.h.b16 %v2838
        %v4318 = vunpack.c.l.b16 %v2839
        %v4319 = vpack.c.b16 %v4310, %v4307
        %v4320 = vpack.c.b16 %v4311, %v4308
        %v4321 = vpack.c.b16 %v4312, %v4309
        %v4322 = vpack.c.b16 %v4316, %v4313
        %v4323 = vpack.c.b16 %v4317, %v4314
        %v4324 = vpack.c.b16 %v4318, %v4315
        %v4379 = vunpack.c.l.b16 %v2960
        %v4380 = vunpack.c.l.b16 %v2961
        %v4381 = vunpack.c.l.b16 %v2962
        %v4382 = vunpack.c.l.b16 %v2963
        %v4383 = vunpack.c.l.b16 %v2964
        %v4384 = vunpack.c.l.b16 %v2965
        %v4385 = vunpack.c.l.b16 %v2966
        %v4386 = vunpack.c.l.b16 %v2967
        %v4387 = vunpack.c.l.b16 %v2968
        %v4388 = vunpack.c.l.b16 %v2969
        %v4389 = vunpack.c.l.b16 %v2970
        %v4390 = vunpack.c.l.b16 %v2971
        %v4391 = vunpack.c.l.b16 %v2972
        %v4392 = vunpack.c.l.b16 %v2973
        %v4393 = vunpack.c.l.b16 %v2974
        %v4394 = vunpack.c.l.b16 %v2975
        %v4395 = vunpack.c.l.b16 %v2976
        %v4396 = vunpack.c.l.b16 %v2977
        %v4397 = vunpack.c.l.b16 %v2978
        %v4398 = vunpack.c.l.b16 %v2979
        %v4399 = vunpack.c.l.b16 %v2980
        %v4400 = vunpack.c.l.b16 %v2981
        %v4401 = vunpack.c.l.b16 %v2982
        %v4402 = vunpack.c.l.b16 %v2983
        %v4403 = vunpack.c.l.b16 %v2984
        %v4404 = vunpack.c.l.b16 %v2985
        %v4405 = vunpack.c.l.b16 %v2986
        %v4406 = vunpack.c.l.b16 %v2987
        %v4407 = vunpack.c.l.b16 %v2988
        %v4408 = vunpack.c.l.b16 %v2989
        %v4409 = vunpack.c.l.b16 %v2990
        %v4410 = vunpack.c.l.b16 %v2991
        %v4411 = vunpack.c.l.b16 %v2992
        %v4412 = vunpack.c.l.b16 %v2993
        %v4413 = vunpack.c.l.b16 %v2994
        %v4414 = vunpack.c.l.b16 %v2995
        %v4415 = vunpack.c.l.b16 %v2996
        %v4416 = vunpack.c.l.b16 %v2997
        %v4417 = vunpack.c.l.b16 %v2998
        %v4418 = vunpack.c.l.b16 %v2999
        %v4419 = vunpack.c.l.b16 %v3000
        %v4420 = vunpack.c.l.b16 %v3001
        %v4421 = vunpack.c.l.b16 %v3002
        %v4422 = vunpack.c.l.b16 %v3003
        %v4423 = vunpack.c.l.b16 %v3004
        %v4424 = vunpack.c.l.b16 %v3005
        %v4425 = vunpack.c.l.b16 %v3006
        %v4426 = vunpack.c.l.b16 %v3007
        %v4427 = vpack.c.b16 %v4380, %v4379
        %v4428 = vpack.c.b16 %v4382, %v4381
        %v4429 = vpack.c.b16 %v4384, %v4383
        %v4430 = vpack.c.b16 %v4386, %v4385
        %v4431 = vpack.c.b16 %v4388, %v4387
        %v4432 = vpack.c.b16 %v4390, %v4389
        %v4433 = vpack.c.b16 %v4392, %v4391
        %v4434 = vpack.c.b16 %v4394, %v4393
        %v4435 = vpack.c.b16 %v4396, %v4395
        %v4436 = vpack.c.b16 %v4398, %v4397
        %v4437 = vpack.c.b16 %v4400, %v4399
        %v4438 = vpack.c.b16 %v4402, %v4401
        %v4439 = vpack.c.b16 %v4404, %v4403
        %v4440 = vpack.c.b16 %v4406, %v4405
        %v4441 = vpack.c.b16 %v4408, %v4407
        %v4442 = vpack.c.b16 %v4410, %v4409
        %v4443 = vpack.c.b16 %v4412, %v4411
        %v4444 = vpack.c.b16 %v4414, %v4413
        %v4445 = vpack.c.b16 %v4416, %v4415
        %v4446 = vpack.c.b16 %v4418, %v4417
        %v4447 = vpack.c.b16 %v4420, %v4419
        %v4448 = vpack.c.b16 %v4422, %v4421
        %v4449 = vpack.c.b16 %v4424, %v4423
        %v4450 = vpack.c.b16 %v4426, %v4425
        %4475 = vmatprep.subr.bf16.mxu0 0
        %4476 = vmatpush1.bf16.msra.mxu0 %v4434
        %4477 = vmatprep.subr.bf16.mxu0 0
        %4478 = vmatpush1.bf16.msra.mxu0 %v4433
        %4479 = vmatprep.subr.bf16.mxu0 0
        %4480 = vmatpush1.bf16.msra.mxu0 %v4432
        %4481 = vmatprep.subr.bf16.mxu0 0
        %4482 = vmatpush1.bf16.msra.mxu0 %v4431
        %4483 = vmatprep.subr.bf16.mxu0 0
        %4484 = vmatpush1.bf16.msra.mxu0 %v4430
        %4485 = vmatprep.subr.bf16.mxu0 0
        %4486 = vmatpush1.bf16.msra.mxu0 %v4429
        %4487 = vmatprep.subr.bf16.mxu0 0
        %4488 = vmatpush1.bf16.msra.mxu0 %v4428
        %4489 = vmatprep.subr.bf16.mxu0 0
        %4490 = vmatpush1.bf16.msra.mxu0 %v4427
        %4491 = vmatprep.subr.bf16.mxu0 0
        %4492 = vmatpush2.bf16.msra.mxu0 %v4442
        %4493 = vmatprep.subr.bf16.mxu0 0
        %4494 = vmatpush2.bf16.msra.mxu0 %v4441
        %4495 = vmatprep.subr.bf16.mxu0 0
        %4496 = vmatpush2.bf16.msra.mxu0 %v4440
        %4497 = vmatprep.subr.bf16.mxu0 0
        %4498 = vmatpush2.bf16.msra.mxu0 %v4439
        %4499 = vmatprep.subr.bf16.mxu0 0
        %4500 = vmatpush2.bf16.msra.mxu0 %v4438
        %4501 = vmatprep.subr.bf16.mxu0 0
        %4502 = vmatpush2.bf16.msra.mxu0 %v4437
        %4503 = vmatprep.subr.bf16.mxu0 0
        %4504 = vmatpush2.bf16.msra.mxu0 %v4436
        %4505 = vmatprep.subr.bf16.mxu0 0
        %4506 = vmatpush2.bf16.msra.mxu0 %v4435
        %4507 = vmatprep.mubr.bf16.mxu0 %v4320
        %4508 = vmatmul.mubr.bf16.gmra.mxu0 %v4319
        %v4509 = vpop.f32.mrf.mxu0
        %v4510 = vadd.f32 %v4045, %v4509
        %v4511 = vpop.f32.mrf.mxu0
        %v4512 = vpop.f32.mrf.mxu0
        %v4513 = vadd.f32 %v4048, %v4512
        %v4514 = vpop.f32.mrf.mxu0
        %4515 = vmatprep.mubr.bf16.mxu0 %v4323
        %4516 = vmatmul.mubr.bf16.gmra.mxu0 %v4322
        %v4517 = vpop.f32.mrf.mxu0
        %v4518 = vadd.f32 %v4053, %v4517
        %v4519 = vpop.f32.mrf.mxu0
        %v4520 = vpop.f32.mrf.mxu0
        %v4521 = vadd.f32 %v4056, %v4520
        %v4522 = vpop.f32.mrf.mxu0
        %4523 = vmatprep.mubr.bf16.mxu0 %v3386
        %4524 = vmatmul.mubr.bf16.gmra.mxu0 %v3385
        %v4525 = vpop.f32.mrf.mxu0
        %v4526 = vadd.f32 %v4061, %v4525
        %v4527 = vpop.f32.mrf.mxu0
        %v4528 = vpop.f32.mrf.mxu0
        %v4529 = vadd.f32 %v4064, %v4528
        %v4530 = vpop.f32.mrf.mxu0
        %4531 = vmatprep.mubr.bf16.mxu0 %v3389
        %4532 = vmatmul.mubr.bf16.gmra.mxu0 %v3388
        %v4533 = vpop.f32.mrf.mxu0
        %v4534 = vadd.f32 %v4069, %v4533
        %v4535 = vpop.f32.mrf.mxu0
        %v4536 = vpop.f32.mrf.mxu0
        %v4537 = vadd.f32 %v4072, %v4536
        %v4538 = vpop.f32.mrf.mxu0
        %4539 = vmatprep.mubr.bf16.mxu0 %v3392
        %4540 = vmatmul.mubr.bf16.gmra.mxu0 %v3391
        %v4541 = vpop.f32.mrf.mxu0
        %v4542 = vadd.f32 %v4077, %v4541
        %v4543 = vpop.f32.mrf.mxu0
        %v4544 = vpop.f32.mrf.mxu0
        %v4545 = vadd.f32 %v4080, %v4544
        %v4546 = vpop.f32.mrf.mxu0
        %4547 = vmatprep.mubr.bf16.mxu0 %v3395
        %4548 = vmatmul.mubr.bf16.gmra.mxu0 %v3394
        %v4549 = vpop.f32.mrf.mxu0
        %v4550 = vadd.f32 %v4085, %v4549
        %v4551 = vpop.f32.mrf.mxu0
        %v4552 = vpop.f32.mrf.mxu0
        %v4553 = vadd.f32 %v4088, %v4552
        %v4554 = vpop.f32.mrf.mxu0
        %4555 = vmatprep.mubr.bf16.mxu0 %v3398
        %4556 = vmatmul.mubr.bf16.gmra.mxu0 %v3397
        %v4557 = vpop.f32.mrf.mxu0
        %v4558 = vadd.f32 %v4093, %v4557
        %v4559 = vpop.f32.mrf.mxu0
        %v4560 = vpop.f32.mrf.mxu0
        %v4561 = vadd.f32 %v4096, %v4560
        %v4562 = vpop.f32.mrf.mxu0
        %4563 = vmatprep.mubr.bf16.mxu0 %v3401
        %4564 = vmatmul.mubr.bf16.gmra.mxu0 %v3400
        %v4565 = vpop.f32.mrf.mxu0
        %v4566 = vadd.f32 %v4101, %v4565
        %v4567 = vpop.f32.mrf.mxu0
        %v4568 = vpop.f32.mrf.mxu0
        %v4569 = vadd.f32 %v4104, %v4568
        %v4570 = vpop.f32.mrf.mxu0
        %4571 = vmatprep.mubr.bf16.mxu0 %v3404
        %4572 = vmatmul.mubr.bf16.gmra.mxu0 %v3403
        %v4573 = vpop.f32.mrf.mxu0
        %v4574 = vadd.f32 %v4109, %v4573
        %v4575 = vpop.f32.mrf.mxu0
        %v4576 = vpop.f32.mrf.mxu0
        %v4577 = vadd.f32 %v4112, %v4576
        %v4578 = vpop.f32.mrf.mxu0
        %4579 = vmatprep.mubr.bf16.mxu0 %v3407
        %4580 = vmatmul.mubr.bf16.gmra.mxu0 %v3406
        %v4581 = vpop.f32.mrf.mxu0
        %v4582 = vadd.f32 %v4117, %v4581
        %v4583 = vpop.f32.mrf.mxu0
        %v4584 = vpop.f32.mrf.mxu0
        %v4585 = vadd.f32 %v4120, %v4584
        %v4586 = vpop.f32.mrf.mxu0
        %4587 = vmatprep.mubr.bf16.mxu0 %v3410
        %4588 = vmatmul.mubr.bf16.gmra.mxu0 %v3409
        %v4589 = vpop.f32.mrf.mxu0
        %v4590 = vadd.f32 %v4125, %v4589
        %v4591 = vpop.f32.mrf.mxu0
        %v4592 = vpop.f32.mrf.mxu0
        %v4593 = vadd.f32 %v4128, %v4592
        %v4594 = vpop.f32.mrf.mxu0
        %4595 = vmatprep.mubr.bf16.mxu0 %v3413
        %4596 = vmatmul.mubr.bf16.gmra.mxu0 %v3412
        %v4597 = vpop.f32.mrf.mxu0
        %v4598 = vadd.f32 %v4133, %v4597
        %v4599 = vpop.f32.mrf.mxu0
        %v4600 = vpop.f32.mrf.mxu0
        %v4601 = vadd.f32 %v4136, %v4600
        %v4602 = vpop.f32.mrf.mxu0
        %4603 = vmatprep.mubr.bf16.mxu0 %v3416
        %4604 = vmatmul.mubr.bf16.gmra.mxu0 %v3415
        %v4605 = vpop.f32.mrf.mxu0
        %v4606 = vadd.f32 %v4141, %v4605
        %v4607 = vpop.f32.mrf.mxu0
        %v4608 = vpop.f32.mrf.mxu0
        %v4609 = vadd.f32 %v4144, %v4608
        %v4610 = vpop.f32.mrf.mxu0
        %4611 = vmatprep.mubr.bf16.mxu0 %v3419
        %4612 = vmatmul.mubr.bf16.gmra.mxu0 %v3418
        %v4613 = vpop.f32.mrf.mxu0
        %v4614 = vadd.f32 %v4149, %v4613
        %v4615 = vpop.f32.mrf.mxu0
        %v4616 = vpop.f32.mrf.mxu0
        %v4617 = vadd.f32 %v4152, %v4616
        %v4618 = vpop.f32.mrf.mxu0
        %4619 = vmatprep.mubr.bf16.mxu0 %v3422
        %4620 = vmatmul.mubr.bf16.gmra.mxu0 %v3421
        %v4621 = vpop.f32.mrf.mxu0
        %v4622 = vadd.f32 %v4157, %v4621
        %v4623 = vpop.f32.mrf.mxu0
        %v4624 = vpop.f32.mrf.mxu0
        %v4625 = vadd.f32 %v4160, %v4624
        %v4626 = vpop.f32.mrf.mxu0
        %4627 = vmatprep.mubr.bf16.mxu0 %v3425
        %4628 = vmatmul.mubr.bf16.gmra.mxu0 %v3424
        %v4629 = vpop.f32.mrf.mxu0
        %v4630 = vadd.f32 %v4165, %v4629
        %v4631 = vpop.f32.mrf.mxu0
        %v4632 = vpop.f32.mrf.mxu0
        %v4633 = vadd.f32 %v4168, %v4632
        %v4634 = vpop.f32.mrf.mxu0
        %4635 = vmatprep.mubr.bf16.mxu0 %v3428
        %4636 = vmatmul.mubr.bf16.gmra.mxu0 %v3427
        %v4637 = vpop.f32.mrf.mxu0
        %v4638 = vadd.f32 %v4173, %v4637
        %v4639 = vpop.f32.mrf.mxu0
        %v4640 = vpop.f32.mrf.mxu0
        %v4641 = vadd.f32 %v4176, %v4640
        %v4642 = vpop.f32.mrf.mxu0
        %4643 = vmatprep.mubr.bf16.mxu0 %v3431
        %4644 = vmatmul.mubr.bf16.gmra.mxu0 %v3430
        %v4645 = vpop.f32.mrf.mxu0
        %v4646 = vadd.f32 %v4181, %v4645
        %v4647 = vpop.f32.mrf.mxu0
        %v4648 = vpop.f32.mrf.mxu0
        %v4649 = vadd.f32 %v4184, %v4648
        %v4650 = vpop.f32.mrf.mxu0
        %4651 = vmatprep.mubr.bf16.mxu0 %v3434
        %4652 = vmatmul.mubr.bf16.gmra.mxu0 %v3433
        %v4653 = vpop.f32.mrf.mxu0
        %v4654 = vadd.f32 %v4189, %v4653
        %v4655 = vpop.f32.mrf.mxu0
        %v4656 = vpop.f32.mrf.mxu0
        %v4657 = vadd.f32 %v4192, %v4656
        %v4658 = vpop.f32.mrf.mxu0
        %4659 = vmatprep.mubr.bf16.mxu0 %v3437
        %4660 = vmatmul.mubr.bf16.gmra.mxu0 %v3436
        %v4661 = vpop.f32.mrf.mxu0
        %v4662 = vadd.f32 %v4197, %v4661
        %v4663 = vpop.f32.mrf.mxu0
        %v4664 = vpop.f32.mrf.mxu0
        %v4665 = vadd.f32 %v4200, %v4664
        %v4666 = vpop.f32.mrf.mxu0
        %4667 = vmatprep.mubr.bf16.mxu0 %v3440
        %4668 = vmatmul.mubr.bf16.gmra.mxu0 %v3439
        %v4669 = vpop.f32.mrf.mxu0
        %v4670 = vadd.f32 %v4205, %v4669
        %v4671 = vpop.f32.mrf.mxu0
        %v4672 = vpop.f32.mrf.mxu0
        %v4673 = vadd.f32 %v4208, %v4672
        %v4674 = vpop.f32.mrf.mxu0
        %4675 = vmatprep.mubr.bf16.mxu0 %v3443
        %4676 = vmatmul.mubr.bf16.gmra.mxu0 %v3442
        %v4677 = vpop.f32.mrf.mxu0
        %v4678 = vadd.f32 %v4213, %v4677
        %v4679 = vpop.f32.mrf.mxu0
        %v4680 = vpop.f32.mrf.mxu0
        %v4681 = vadd.f32 %v4216, %v4680
        %v4682 = vpop.f32.mrf.mxu0
        %4683 = vmatprep.mubr.bf16.mxu0 %v3446
        %4684 = vmatmul.mubr.bf16.gmra.mxu0 %v3445
        %v4685 = vpop.f32.mrf.mxu0
        %v4686 = vadd.f32 %v4221, %v4685
        %v4687 = vpop.f32.mrf.mxu0
        %v4688 = vpop.f32.mrf.mxu0
        %v4689 = vadd.f32 %v4224, %v4688
        %v4690 = vpop.f32.mrf.mxu0
        %4691 = vmatprep.mubr.bf16.mxu0 %v3449
        %4692 = vmatmul.mubr.bf16.gmra.mxu0 %v3448
        %v4693 = vpop.f32.mrf.mxu0
        %v4694 = vadd.f32 %v4229, %v4693
        %v4695 = vpop.f32.mrf.mxu0
        %v4696 = vpop.f32.mrf.mxu0
        %v4697 = vadd.f32 %v4232, %v4696
        %v4698 = vpop.f32.mrf.mxu0
        %4699 = vmatprep.mubr.bf16.mxu0 %v3452
        %4700 = vmatmul.mubr.bf16.gmra.mxu0 %v3451
        %v4701 = vpop.f32.mrf.mxu0
        %v4702 = vadd.f32 %v4237, %v4701
        %v4703 = vpop.f32.mrf.mxu0
        %v4704 = vpop.f32.mrf.mxu0
        %v4705 = vadd.f32 %v4240, %v4704
        %v4706 = vpop.f32.mrf.mxu0
        %4707 = vmatprep.mubr.bf16.mxu0 %v3455
        %4708 = vmatmul.mubr.bf16.gmra.mxu0 %v3454
        %v4709 = vpop.f32.mrf.mxu0
        %v4710 = vadd.f32 %v4245, %v4709
        %v4711 = vpop.f32.mrf.mxu0
        %v4712 = vpop.f32.mrf.mxu0
        %v4713 = vadd.f32 %v4248, %v4712
        %v4714 = vpop.f32.mrf.mxu0
        %4715 = vmatprep.mubr.bf16.mxu0 %v3458
        %4716 = vmatmul.mubr.bf16.gmra.mxu0 %v3457
        %v4717 = vpop.f32.mrf.mxu0
        %v4718 = vadd.f32 %v4253, %v4717
        %v4719 = vpop.f32.mrf.mxu0
        %v4720 = vpop.f32.mrf.mxu0
        %v4721 = vadd.f32 %v4256, %v4720
        %v4722 = vpop.f32.mrf.mxu0
        %4723 = vmatprep.mubr.bf16.mxu0 %v3461
        %4724 = vmatmul.mubr.bf16.gmra.mxu0 %v3460
        %v4725 = vpop.f32.mrf.mxu0
        %v4726 = vadd.f32 %v4261, %v4725
        %v4727 = vpop.f32.mrf.mxu0
        %v4728 = vpop.f32.mrf.mxu0
        %v4729 = vadd.f32 %v4264, %v4728
        %v4730 = vpop.f32.mrf.mxu0
        %4731 = vmatprep.mubr.bf16.mxu0 %v3464
        %4732 = vmatmul.mubr.bf16.gmra.mxu0 %v3463
        %v4733 = vpop.f32.mrf.mxu0
        %v4734 = vadd.f32 %v4269, %v4733
        %v4735 = vpop.f32.mrf.mxu0
        %v4736 = vpop.f32.mrf.mxu0
        %v4737 = vadd.f32 %v4272, %v4736
        %v4738 = vpop.f32.mrf.mxu0
        %4739 = vmatprep.mubr.bf16.mxu0 %v3467
        %4740 = vmatmul.mubr.bf16.gmra.mxu0 %v3466
        %v4741 = vpop.f32.mrf.mxu0
        %v4742 = vadd.f32 %v4277, %v4741
        %v4743 = vpop.f32.mrf.mxu0
        %v4744 = vpop.f32.mrf.mxu0
        %v4745 = vadd.f32 %v4280, %v4744
        %v4746 = vpop.f32.mrf.mxu0
        %4747 = vmatprep.mubr.bf16.mxu0 %v3470
        %4748 = vmatmul.mubr.bf16.gmra.mxu0 %v3469
        %v4749 = vpop.f32.mrf.mxu0
        %v4750 = vadd.f32 %v4285, %v4749
        %v4751 = vpop.f32.mrf.mxu0
        %v4752 = vpop.f32.mrf.mxu0
        %v4753 = vadd.f32 %v4288, %v4752
        %v4754 = vpop.f32.mrf.mxu0
        %4755 = vmatprep.mubr.bf16.mxu0 %v3473
        %4756 = vmatmul.mubr.bf16.gmra.mxu0 %v3472
        %v4757 = vpop.f32.mrf.mxu0
        %v4758 = vadd.f32 %v4293, %v4757
        %v4759 = vpop.f32.mrf.mxu0
        %v4760 = vpop.f32.mrf.mxu0
        %v4761 = vadd.f32 %v4296, %v4760
        %v4762 = vpop.f32.mrf.mxu0
        %4763 = vdwg.mxu0
        %4764 = vmatprep.subr.bf16.mxu0 0
        %4765 = vmatpush1.bf16.msra.mxu0 %v4450
        %4766 = vmatprep.subr.bf16.mxu0 0
        %4767 = vmatpush1.bf16.msra.mxu0 %v4449
        %4768 = vmatprep.subr.bf16.mxu0 0
        %4769 = vmatpush1.bf16.msra.mxu0 %v4448
        %4770 = vmatprep.subr.bf16.mxu0 0
        %4771 = vmatpush1.bf16.msra.mxu0 %v4447
        %4772 = vmatprep.subr.bf16.mxu0 0
        %4773 = vmatpush1.bf16.msra.mxu0 %v4446
        %4774 = vmatprep.subr.bf16.mxu0 0
        %4775 = vmatpush1.bf16.msra.mxu0 %v4445
        %4776 = vmatprep.subr.bf16.mxu0 0
        %4777 = vmatpush1.bf16.msra.mxu0 %v4444
        %4778 = vmatprep.subr.bf16.mxu0 0
        %4779 = vmatpush1.bf16.msra.mxu0 %v4443
        %4780 = vmatprep.subr.bf16.mxu0 0
        %4781 = vmatpush2.bf16.msra.mxu0 0
        %4782 = vmatprep.subr.bf16.mxu0 0
        %4783 = vmatpush2.bf16.msra.mxu0 0
        %4784 = vmatprep.subr.bf16.mxu0 0
        %4785 = vmatpush2.bf16.msra.mxu0 0
        %4786 = vmatprep.subr.bf16.mxu0 0
        %4787 = vmatpush2.bf16.msra.mxu0 0
        %4788 = vmatprep.subr.bf16.mxu0 0
        %4789 = vmatpush2.bf16.msra.mxu0 0
        %4790 = vmatprep.subr.bf16.mxu0 0
        %4791 = vmatpush2.bf16.msra.mxu0 0
        %4792 = vmatprep.subr.bf16.mxu0 0
        %4793 = vmatpush2.bf16.msra.mxu0 0
        %4794 = vmatprep.subr.bf16.mxu0 0
        %4795 = vmatpush2.bf16.msra.mxu0 0
        %4796 = vmatprep.mubr.bf16.mxu0 0
        %4797 = vmatmul.mubr.bf16.gmra.mxu0 %v4321
        %v4798 = vpop.f32.mrf.mxu0
        %v4799 = vadd.f32 %v4510, %v4798
        %v4800 = vpop.f32.mrf.mxu0
        %v4801 = vpop.f32.mrf.mxu0
        %v4802 = vadd.f32 %v4513, %v4801
        %v4803 = vpop.f32.mrf.mxu0
        %4804 = vmatprep.mubr.bf16.mxu0 0
        %4805 = vmatmul.mubr.bf16.gmra.mxu0 %v4324
        %v4806 = vpop.f32.mrf.mxu0
        %v4807 = vadd.f32 %v4518, %v4806
        %v4808 = vpop.f32.mrf.mxu0
        %v4809 = vpop.f32.mrf.mxu0
        %v4810 = vadd.f32 %v4521, %v4809
        %v4811 = vpop.f32.mrf.mxu0
        %4812 = vmatprep.mubr.bf16.mxu0 0
        %4813 = vmatmul.mubr.bf16.gmra.mxu0 %v3387
        %v4814 = vpop.f32.mrf.mxu0
        %v4815 = vadd.f32 %v4526, %v4814
        %v4816 = vpop.f32.mrf.mxu0
        %v4817 = vpop.f32.mrf.mxu0
        %v4818 = vadd.f32 %v4529, %v4817
        %v4819 = vpop.f32.mrf.mxu0
        %4820 = vmatprep.mubr.bf16.mxu0 0
        %4821 = vmatmul.mubr.bf16.gmra.mxu0 %v3390
        %v4822 = vpop.f32.mrf.mxu0
        %v4823 = vadd.f32 %v4534, %v4822
        %v4824 = vpop.f32.mrf.mxu0
        %v4825 = vpop.f32.mrf.mxu0
        %v4826 = vadd.f32 %v4537, %v4825
        %v4827 = vpop.f32.mrf.mxu0
        %4828 = vmatprep.mubr.bf16.mxu0 0
        %4829 = vmatmul.mubr.bf16.gmra.mxu0 %v3393
        %v4830 = vpop.f32.mrf.mxu0
        %v4831 = vadd.f32 %v4542, %v4830
        %v4832 = vpop.f32.mrf.mxu0
        %v4833 = vpop.f32.mrf.mxu0
        %v4834 = vadd.f32 %v4545, %v4833
        %v4835 = vpop.f32.mrf.mxu0
        %4836 = vmatprep.mubr.bf16.mxu0 0
        %4837 = vmatmul.mubr.bf16.gmra.mxu0 %v3396
        %v4838 = vpop.f32.mrf.mxu0
        %v4839 = vadd.f32 %v4550, %v4838
        %v4840 = vpop.f32.mrf.mxu0
        %v4841 = vpop.f32.mrf.mxu0
        %v4842 = vadd.f32 %v4553, %v4841
        %v4843 = vpop.f32.mrf.mxu0
        %4844 = vmatprep.mubr.bf16.mxu0 0
        %4845 = vmatmul.mubr.bf16.gmra.mxu0 %v3399
        %v4846 = vpop.f32.mrf.mxu0
        %v4847 = vadd.f32 %v4558, %v4846
        %v4848 = vpop.f32.mrf.mxu0
        %v4849 = vpop.f32.mrf.mxu0
        %v4850 = vadd.f32 %v4561, %v4849
        %v4851 = vpop.f32.mrf.mxu0
        %4852 = vmatprep.mubr.bf16.mxu0 0
        %4853 = vmatmul.mubr.bf16.gmra.mxu0 %v3402
        %v4854 = vpop.f32.mrf.mxu0
        %v4855 = vadd.f32 %v4566, %v4854
        %v4856 = vpop.f32.mrf.mxu0
        %v4857 = vpop.f32.mrf.mxu0
        %v4858 = vadd.f32 %v4569, %v4857
        %v4859 = vpop.f32.mrf.mxu0
        %4860 = vmatprep.mubr.bf16.mxu0 0
        %4861 = vmatmul.mubr.bf16.gmra.mxu0 %v3405
        %v4862 = vpop.f32.mrf.mxu0
        %v4863 = vadd.f32 %v4574, %v4862
        %v4864 = vpop.f32.mrf.mxu0
        %v4865 = vpop.f32.mrf.mxu0
        %v4866 = vadd.f32 %v4577, %v4865
        %v4867 = vpop.f32.mrf.mxu0
        %4868 = vmatprep.mubr.bf16.mxu0 0
        %4869 = vmatmul.mubr.bf16.gmra.mxu0 %v3408
        %v4870 = vpop.f32.mrf.mxu0
        %v4871 = vadd.f32 %v4582, %v4870
        %v4872 = vpop.f32.mrf.mxu0
        %v4873 = vpop.f32.mrf.mxu0
        %v4874 = vadd.f32 %v4585, %v4873
        %v4875 = vpop.f32.mrf.mxu0
        %4876 = vmatprep.mubr.bf16.mxu0 0
        %4877 = vmatmul.mubr.bf16.gmra.mxu0 %v3411
        %v4878 = vpop.f32.mrf.mxu0
        %v4879 = vadd.f32 %v4590, %v4878
        %v4880 = vpop.f32.mrf.mxu0
        %v4881 = vpop.f32.mrf.mxu0
        %v4882 = vadd.f32 %v4593, %v4881
        %v4883 = vpop.f32.mrf.mxu0
        %4884 = vmatprep.mubr.bf16.mxu0 0
        %4885 = vmatmul.mubr.bf16.gmra.mxu0 %v3414
        %v4886 = vpop.f32.mrf.mxu0
        %v4887 = vadd.f32 %v4598, %v4886
        %v4888 = vpop.f32.mrf.mxu0
        %v4889 = vpop.f32.mrf.mxu0
        %v4890 = vadd.f32 %v4601, %v4889
        %v4891 = vpop.f32.mrf.mxu0
        %4892 = vmatprep.mubr.bf16.mxu0 0
        %4893 = vmatmul.mubr.bf16.gmra.mxu0 %v3417
        %v4894 = vpop.f32.mrf.mxu0
        %v4895 = vadd.f32 %v4606, %v4894
        %v4896 = vpop.f32.mrf.mxu0
        %v4897 = vpop.f32.mrf.mxu0
        %v4898 = vadd.f32 %v4609, %v4897
        %v4899 = vpop.f32.mrf.mxu0
        %4900 = vmatprep.mubr.bf16.mxu0 0
        %4901 = vmatmul.mubr.bf16.gmra.mxu0 %v3420
        %v4902 = vpop.f32.mrf.mxu0
        %v4903 = vadd.f32 %v4614, %v4902
        %v4904 = vpop.f32.mrf.mxu0
        %v4905 = vpop.f32.mrf.mxu0
        %v4906 = vadd.f32 %v4617, %v4905
        %v4907 = vpop.f32.mrf.mxu0
        %4908 = vmatprep.mubr.bf16.mxu0 0
        %4909 = vmatmul.mubr.bf16.gmra.mxu0 %v3423
        %v4910 = vpop.f32.mrf.mxu0
        %v4911 = vadd.f32 %v4622, %v4910
        %v4912 = vpop.f32.mrf.mxu0
        %v4913 = vpop.f32.mrf.mxu0
        %v4914 = vadd.f32 %v4625, %v4913
        %v4915 = vpop.f32.mrf.mxu0
        %4916 = vmatprep.mubr.bf16.mxu0 0
        %4917 = vmatmul.mubr.bf16.gmra.mxu0 %v3426
        %v4918 = vpop.f32.mrf.mxu0
        %v4919 = vadd.f32 %v4630, %v4918
        %v4920 = vpop.f32.mrf.mxu0
        %v4921 = vpop.f32.mrf.mxu0
        %v4922 = vadd.f32 %v4633, %v4921
        %v4923 = vpop.f32.mrf.mxu0
        %4924 = vmatprep.mubr.bf16.mxu0 0
        %4925 = vmatmul.mubr.bf16.gmra.mxu0 %v3429
        %v4926 = vpop.f32.mrf.mxu0
        %v4927 = vadd.f32 %v4638, %v4926
        %v4928 = vpop.f32.mrf.mxu0
        %v4929 = vpop.f32.mrf.mxu0
        %v4930 = vadd.f32 %v4641, %v4929
        %v4931 = vpop.f32.mrf.mxu0
        %4932 = vmatprep.mubr.bf16.mxu0 0
        %4933 = vmatmul.mubr.bf16.gmra.mxu0 %v3432
        %v4934 = vpop.f32.mrf.mxu0
        %v4935 = vadd.f32 %v4646, %v4934
        %v4936 = vpop.f32.mrf.mxu0
        %v4937 = vpop.f32.mrf.mxu0
        %v4938 = vadd.f32 %v4649, %v4937
        %v4939 = vpop.f32.mrf.mxu0
        %4940 = vmatprep.mubr.bf16.mxu0 0
        %4941 = vmatmul.mubr.bf16.gmra.mxu0 %v3435
        %v4942 = vpop.f32.mrf.mxu0
        %v4943 = vadd.f32 %v4654, %v4942
        %v4944 = vpop.f32.mrf.mxu0
        %v4945 = vpop.f32.mrf.mxu0
        %v4946 = vadd.f32 %v4657, %v4945
        %v4947 = vpop.f32.mrf.mxu0
        %4948 = vmatprep.mubr.bf16.mxu0 0
        %4949 = vmatmul.mubr.bf16.gmra.mxu0 %v3438
        %v4950 = vpop.f32.mrf.mxu0
        %v4951 = vadd.f32 %v4662, %v4950
        %v4952 = vpop.f32.mrf.mxu0
        %v4953 = vpop.f32.mrf.mxu0
        %v4954 = vadd.f32 %v4665, %v4953
        %v4955 = vpop.f32.mrf.mxu0
        %4956 = vmatprep.mubr.bf16.mxu0 0
        %4957 = vmatmul.mubr.bf16.gmra.mxu0 %v3441
        %v4958 = vpop.f32.mrf.mxu0
        %v4959 = vadd.f32 %v4670, %v4958
        %v4960 = vpop.f32.mrf.mxu0
        %v4961 = vpop.f32.mrf.mxu0
        %v4962 = vadd.f32 %v4673, %v4961
        %v4963 = vpop.f32.mrf.mxu0
        %4964 = vmatprep.mubr.bf16.mxu0 0
        %4965 = vmatmul.mubr.bf16.gmra.mxu0 %v3444
        %v4966 = vpop.f32.mrf.mxu0
        %v4967 = vadd.f32 %v4678, %v4966
        %v4968 = vpop.f32.mrf.mxu0
        %v4969 = vpop.f32.mrf.mxu0
        %v4970 = vadd.f32 %v4681, %v4969
        %v4971 = vpop.f32.mrf.mxu0
        %4972 = vmatprep.mubr.bf16.mxu0 0
        %4973 = vmatmul.mubr.bf16.gmra.mxu0 %v3447
        %v4974 = vpop.f32.mrf.mxu0
        %v4975 = vadd.f32 %v4686, %v4974
        %v4976 = vpop.f32.mrf.mxu0
        %v4977 = vpop.f32.mrf.mxu0
        %v4978 = vadd.f32 %v4689, %v4977
        %v4979 = vpop.f32.mrf.mxu0
        %4980 = vmatprep.mubr.bf16.mxu0 0
        %4981 = vmatmul.mubr.bf16.gmra.mxu0 %v3450
        %v4982 = vpop.f32.mrf.mxu0
        %v4983 = vadd.f32 %v4694, %v4982
        %v4984 = vpop.f32.mrf.mxu0
        %v4985 = vpop.f32.mrf.mxu0
        %v4986 = vadd.f32 %v4697, %v4985
        %v4987 = vpop.f32.mrf.mxu0
        %4988 = vmatprep.mubr.bf16.mxu0 0
        %4989 = vmatmul.mubr.bf16.gmra.mxu0 %v3453
        %v4990 = vpop.f32.mrf.mxu0
        %v4991 = vadd.f32 %v4702, %v4990
        %v4992 = vpop.f32.mrf.mxu0
        %v4993 = vpop.f32.mrf.mxu0
        %v4994 = vadd.f32 %v4705, %v4993
        %v4995 = vpop.f32.mrf.mxu0
        %4996 = vmatprep.mubr.bf16.mxu0 0
        %4997 = vmatmul.mubr.bf16.gmra.mxu0 %v3456
        %v4998 = vpop.f32.mrf.mxu0
        %v4999 = vadd.f32 %v4710, %v4998
        %v5000 = vpop.f32.mrf.mxu0
        %v5001 = vpop.f32.mrf.mxu0
        %v5002 = vadd.f32 %v4713, %v5001
        %v5003 = vpop.f32.mrf.mxu0
        %5004 = vmatprep.mubr.bf16.mxu0 0
        %5005 = vmatmul.mubr.bf16.gmra.mxu0 %v3459
        %v5006 = vpop.f32.mrf.mxu0
        %v5007 = vadd.f32 %v4718, %v5006
        %v5008 = vpop.f32.mrf.mxu0
        %v5009 = vpop.f32.mrf.mxu0
        %v5010 = vadd.f32 %v4721, %v5009
        %v5011 = vpop.f32.mrf.mxu0
        %5012 = vmatprep.mubr.bf16.mxu0 0
        %5013 = vmatmul.mubr.bf16.gmra.mxu0 %v3462
        %v5014 = vpop.f32.mrf.mxu0
        %v5015 = vadd.f32 %v4726, %v5014
        %v5016 = vpop.f32.mrf.mxu0
        %v5017 = vpop.f32.mrf.mxu0
        %v5018 = vadd.f32 %v4729, %v5017
        %v5019 = vpop.f32.mrf.mxu0
        %5020 = vmatprep.mubr.bf16.mxu0 0
        %5021 = vmatmul.mubr.bf16.gmra.mxu0 %v3465
        %v5022 = vpop.f32.mrf.mxu0
        %v5023 = vadd.f32 %v4734, %v5022
        %v5024 = vpop.f32.mrf.mxu0
        %v5025 = vpop.f32.mrf.mxu0
        %v5026 = vadd.f32 %v4737, %v5025
        %v5027 = vpop.f32.mrf.mxu0
        %5028 = vmatprep.mubr.bf16.mxu0 0
        %5029 = vmatmul.mubr.bf16.gmra.mxu0 %v3468
        %v5030 = vpop.f32.mrf.mxu0
        %v5031 = vadd.f32 %v4742, %v5030
        %v5032 = vpop.f32.mrf.mxu0
        %v5033 = vpop.f32.mrf.mxu0
        %v5034 = vadd.f32 %v4745, %v5033
        %v5035 = vpop.f32.mrf.mxu0
        %5036 = vmatprep.mubr.bf16.mxu0 0
        %5037 = vmatmul.mubr.bf16.gmra.mxu0 %v3471
        %v5038 = vpop.f32.mrf.mxu0
        %v5039 = vadd.f32 %v4750, %v5038
        %v5040 = vpop.f32.mrf.mxu0
        %v5041 = vpop.f32.mrf.mxu0
        %v5042 = vadd.f32 %v4753, %v5041
        %v5043 = vpop.f32.mrf.mxu0
        %5044 = vmatprep.mubr.bf16.mxu0 0
        %5045 = vmatmul.mubr.bf16.gmra.mxu0 %v3474
        %v5046 = vpop.f32.mrf.mxu0
        %v5047 = vadd.f32 %v4758, %v5046
        %v5048 = vpop.f32.mrf.mxu0
        %v5049 = vpop.f32.mrf.mxu0
        %v5050 = vadd.f32 %v4761, %v5049
        %v5051 = vpop.f32.mrf.mxu0
        %5052 = vdwg.mxu0
        %v5053 = vld [vmem:[#allocation2 + $0x60] sm:$0xff]
        %v5054 = vld [vmem:[#allocation2 + $0x68] sm:$0xf]
        %v5055 = vld [vmem:[#allocation2 + $0x6c] sm:$0xff]
        %v5056 = vld [vmem:[#allocation2 + $0x74] sm:$0xf]
        %v5057 = vld [vmem:[#allocation2 + $0x78] sm:$0xff]
        %v5058 = vld [vmem:[#allocation2 + $0x80] sm:$0xf]
        %v5059 = vld [vmem:[#allocation2 + $0x84] sm:$0xff]
        %v5060 = vld [vmem:[#allocation2 + $0x8c] sm:$0xf]
        %v5061 = vld [vmem:[#allocation2 + $0x90] sm:$0xff]
        %v5062 = vld [vmem:[#allocation2 + $0x98] sm:$0xf]
        %v5063 = vld [vmem:[#allocation2 + $0x9c] sm:$0xff]
        %v5064 = vld [vmem:[#allocation2 + $0xa4] sm:$0xf]
        %v5065 = vld [vmem:[#allocation2 + $0xa8] sm:$0xff]
        %v5066 = vld [vmem:[#allocation2 + $0xb0] sm:$0xf]
        %v5067 = vld [vmem:[#allocation2 + $0xb4] sm:$0xff]
        %v5068 = vld [vmem:[#allocation2 + $0xbc] sm:$0xf]
        %v5069 = vld [vmem:[#allocation2 + $0xc0] sm:$0xff]
        %v5070 = vld [vmem:[#allocation2 + $0xc8] sm:$0xf]
        %v5071 = vld [vmem:[#allocation2 + $0xcc] sm:$0xff]
        %v5072 = vld [vmem:[#allocation2 + $0xd4] sm:$0xf]
        %v5073 = vld [vmem:[#allocation2 + $0xd8] sm:$0xff]
        %v5074 = vld [vmem:[#allocation2 + $0xe0] sm:$0xf]
        %v5075 = vld [vmem:[#allocation2 + $0xe4] sm:$0xff]
        %v5076 = vld [vmem:[#allocation2 + $0xec] sm:$0xf]
        %v5077 = vld [vmem:[#allocation2 + $0xf0] sm:$0xff]
        %v5078 = vld [vmem:[#allocation2 + $0xf8] sm:$0xf]
        %v5079 = vld [vmem:[#allocation2 + $0xfc] sm:$0xff]
        %v5080 = vld [vmem:[#allocation2 + $0x104] sm:$0xf]
        %v5081 = vld [vmem:[#allocation2 + $0x108] sm:$0xff]
        %v5082 = vld [vmem:[#allocation2 + $0x110] sm:$0xf]
        %v5083 = vld [vmem:[#allocation2 + $0x114] sm:$0xff]
        %v5084 = vld [vmem:[#allocation2 + $0x11c] sm:$0xf]
        %v5085 = vld [vmem:[#allocation2 + $0x120] sm:$0xff]
        %v5086 = vld [vmem:[#allocation2 + $0x128] sm:$0xf]
        %v5087 = vld [vmem:[#allocation2 + $0x12c] sm:$0xff]
        %v5088 = vld [vmem:[#allocation2 + $0x134] sm:$0xf]
        %v5089 = vld [vmem:[#allocation2 + $0x138] sm:$0xff]
        %v5090 = vld [vmem:[#allocation2 + $0x140] sm:$0xf]
        %v5091 = vld [vmem:[#allocation2 + $0x144] sm:$0xff]
        %v5092 = vld [vmem:[#allocation2 + $0x14c] sm:$0xf]
        %v5093 = vld [vmem:[#allocation2 + $0x150] sm:$0xff]
        %v5094 = vld [vmem:[#allocation2 + $0x158] sm:$0xf]
        %v5095 = vld [vmem:[#allocation2 + $0x15c] sm:$0xff]
        %v5096 = vld [vmem:[#allocation2 + $0x164] sm:$0xf]
        %v5097 = vld [vmem:[#allocation2 + $0x168] sm:$0xff]
        %v5098 = vld [vmem:[#allocation2 + $0x170] sm:$0xf]
        %v5099 = vld [vmem:[#allocation2 + $0x174] sm:$0xff]
        %v5100 = vld [vmem:[#allocation2 + $0x17c] sm:$0xf]
        %v5101 = vld [vmem:[#allocation2 + $0x180] sm:$0xff]
        %v5102 = vld [vmem:[#allocation2 + $0x188] sm:$0xf]
        %v5103 = vld [vmem:[#allocation2 + $0x18c] sm:$0xff]
        %v5104 = vld [vmem:[#allocation2 + $0x194] sm:$0xf]
        %v5105 = vld [vmem:[#allocation2 + $0x198] sm:$0xff]
        %v5106 = vld [vmem:[#allocation2 + $0x1a0] sm:$0xf]
        %v5107 = vld [vmem:[#allocation2 + $0x1a4] sm:$0xff]
        %v5108 = vld [vmem:[#allocation2 + $0x1ac] sm:$0xf]
        %v5109 = vld [vmem:[#allocation2 + $0x1b0] sm:$0xff]
        %v5110 = vld [vmem:[#allocation2 + $0x1b8] sm:$0xf]
        %v5111 = vld [vmem:[#allocation2 + $0x1bc] sm:$0xff]
        %v5112 = vld [vmem:[#allocation2 + $0x1c4] sm:$0xf]
        %v5113 = vld [vmem:[#allocation2 + $0x1c8] sm:$0xff]
        %v5114 = vld [vmem:[#allocation2 + $0x1d0] sm:$0xf]
        %v5115 = vld [vmem:[#allocation2 + $0x1d4] sm:$0xff]
        %v5116 = vld [vmem:[#allocation2 + $0x1dc] sm:$0xf]
        %v5117 = vld [vmem:[#allocation2 + $0x1e0] sm:$0xff]
        %v5118 = vld [vmem:[#allocation2 + $0x1e8] sm:$0xf]
        %v5119 = vld [vmem:[#allocation2 + $0x1ec] sm:$0xff]
        %v5120 = vld [vmem:[#allocation2 + $0x1f4] sm:$0xf]
        %v5121 = vld [vmem:[#allocation2 + $0x1f8] sm:$0xff]
        %v5122 = vld [vmem:[#allocation2 + $0x200] sm:$0xf]
        %v5123 = vld [vmem:[#allocation2 + $0x204] sm:$0xff]
        %v5124 = vld [vmem:[#allocation2 + $0x20c] sm:$0xf]
        %v5125 = vld [vmem:[#allocation2 + $0x210] sm:$0xff]
        %v5126 = vld [vmem:[#allocation2 + $0x218] sm:$0xf]
        %v5127 = vld [vmem:[#allocation2 + $0x21c] sm:$0xff]
        %v5128 = vld [vmem:[#allocation2 + $0x224] sm:$0xf]
        %v5129 = vld [vmem:[#allocation2 + $0x228] sm:$0xff]
        %v5130 = vld [vmem:[#allocation2 + $0x230] sm:$0xf]
        %v5131 = vld [vmem:[#allocation2 + $0x234] sm:$0xff]
        %v5132 = vld [vmem:[#allocation2 + $0x23c] sm:$0xf]
        %v5133 = vld [vmem:[#allocation2 + $0x240] sm:$0xff]
        %v5134 = vld [vmem:[#allocation2 + $0x248] sm:$0xf]
        %v5135 = vld [vmem:[#allocation2 + $0x24c] sm:$0xff]
        %v5136 = vld [vmem:[#allocation2 + $0x254] sm:$0xf]
        %v5137 = vld [vmem:[#allocation2 + $0x258] sm:$0xff]
        %v5138 = vld [vmem:[#allocation2 + $0x260] sm:$0xf]
        %v5139 = vld [vmem:[#allocation2 + $0x264] sm:$0xff]
        %v5140 = vld [vmem:[#allocation2 + $0x26c] sm:$0xf]
        %v5141 = vld [vmem:[#allocation2 + $0x270] sm:$0xff]
        %v5142 = vld [vmem:[#allocation2 + $0x278] sm:$0xf]
        %v5143 = vld [vmem:[#allocation2 + $0x27c] sm:$0xff]
        %v5144 = vld [vmem:[#allocation2 + $0x284] sm:$0xf]
        %v5145 = vld [vmem:[#allocation2 + $0x288] sm:$0xff]
        %v5146 = vld [vmem:[#allocation2 + $0x290] sm:$0xf]
        %v5147 = vld [vmem:[#allocation2 + $0x294] sm:$0xff]
        %v5148 = vld [vmem:[#allocation2 + $0x29c] sm:$0xf]
        %v5149 = vld [vmem:[#allocation2 + $0x2a0] sm:$0xff]
        %v5150 = vld [vmem:[#allocation2 + $0x2a8] sm:$0xf]
        %v5151 = vld [vmem:[#allocation2 + $0x2ac] sm:$0xff]
        %v5152 = vld [vmem:[#allocation2 + $0x2b4] sm:$0xf]
        %v5153 = vld [vmem:[#allocation2 + $0x2b8] sm:$0xff]
        %v5154 = vld [vmem:[#allocation2 + $0x2c0] sm:$0xf]
        %v5155 = vld [vmem:[#allocation2 + $0x2c4] sm:$0xff]
        %v5156 = vld [vmem:[#allocation2 + $0x2cc] sm:$0xf]
        %v5157 = vld [vmem:[#allocation2 + $0x2d0] sm:$0xff]
        %v5158 = vld [vmem:[#allocation2 + $0x2d8] sm:$0xf]
        %v5159 = vld [vmem:[#allocation2 + $0x2dc] sm:$0xff]
        %v5160 = vld [vmem:[#allocation2 + $0x2e4] sm:$0xf]
        %v5161 = vld [vmem:[#allocation2 + $0x2e8] sm:$0xff]
        %v5162 = vld [vmem:[#allocation2 + $0x2f0] sm:$0xf]
        %v5163 = vld [vmem:[#allocation2 + $0x2f4] sm:$0xff]
        %v5164 = vld [vmem:[#allocation2 + $0x2fc] sm:$0xf]
        %v5165 = vld [vmem:[#allocation2 + $0x300] sm:$0xff]
        %v5166 = vld [vmem:[#allocation2 + $0x308] sm:$0xf]
        %v5167 = vld [vmem:[#allocation2 + $0x30c] sm:$0xff]
        %v5168 = vld [vmem:[#allocation2 + $0x314] sm:$0xf]
        %v5169 = vld [vmem:[#allocation2 + $0x318] sm:$0xff]
        %v5170 = vld [vmem:[#allocation2 + $0x320] sm:$0xf]
        %v5171 = vld [vmem:[#allocation2 + $0x324] sm:$0xff]
        %v5172 = vld [vmem:[#allocation2 + $0x32c] sm:$0xf]
        %v5173 = vld [vmem:[#allocation2 + $0x330] sm:$0xff]
        %v5174 = vld [vmem:[#allocation2 + $0x338] sm:$0xf]
        %v5175 = vld [vmem:[#allocation2 + $0x33c] sm:$0xff]
        %v5176 = vld [vmem:[#allocation2 + $0x344] sm:$0xf]
        %v5177 = vld [vmem:[#allocation2 + $0x348] sm:$0xff]
        %v5178 = vld [vmem:[#allocation2 + $0x350] sm:$0xf]
        %v5179 = vld [vmem:[#allocation2 + $0x354] sm:$0xff]
        %v5180 = vld [vmem:[#allocation2 + $0x35c] sm:$0xf]
        %s5181 = scalar_lea.vmem [#allocation8], 384
        %v5182 = vld [vmem:[%s5181] sm:$0xf]
        %v5183 = vld [vmem:[%s5181 + $0x4] sm:$0xf]
        %v5184 = vld [vmem:[%s5181 + $0x8] sm:$0xf]
        %v5185 = vld [vmem:[%s5181 + $0xc] sm:$0xf]
        %v5186 = vld [vmem:[%s5181 + $0x10] sm:$0xf]
        %v5187 = vld [vmem:[%s5181 + $0x14] sm:$0xf]
        %v5188 = vld [vmem:[%s5181 + $0x18] sm:$0xf]
        %v5189 = vld [vmem:[%s5181 + $0x1c] sm:$0xf]
        %v5190 = vld [vmem:[%s5181 + $0x20] sm:$0xf]
        %v5191 = vld [vmem:[%s5181 + $0x24] sm:$0xf]
        %v5192 = vld [vmem:[%s5181 + $0x28] sm:$0xf]
        %v5193 = vld [vmem:[%s5181 + $0x2c] sm:$0xf]
        %v5194 = vld [vmem:[%s5181 + $0x30] sm:$0xf]
        %v5195 = vld [vmem:[%s5181 + $0x34] sm:$0xf]
        %v5196 = vld [vmem:[%s5181 + $0x38] sm:$0xf]
        %v5197 = vld [vmem:[%s5181 + $0x3c] sm:$0xf]
        %v5198 = vld [vmem:[%s5181 + $0x40] sm:$0xf]
        %v5199 = vld [vmem:[%s5181 + $0x44] sm:$0xf]
        %v5200 = vld [vmem:[%s5181 + $0x48] sm:$0xf]
        %v5201 = vld [vmem:[%s5181 + $0x4c] sm:$0xf]
        %v5202 = vld [vmem:[%s5181 + $0x50] sm:$0xf]
        %v5203 = vld [vmem:[%s5181 + $0x54] sm:$0xf]
        %v5204 = vld [vmem:[%s5181 + $0x58] sm:$0xf]
        %v5205 = vld [vmem:[%s5181 + $0x5c] sm:$0xf]
        %v5206 = vld [vmem:[%s5181 + $0x60] sm:$0xf]
        %v5207 = vld [vmem:[%s5181 + $0x64] sm:$0xf]
        %v5208 = vld [vmem:[%s5181 + $0x68] sm:$0xf]
        %v5209 = vld [vmem:[%s5181 + $0x6c] sm:$0xf]
        %v5210 = vld [vmem:[%s5181 + $0x70] sm:$0xf]
        %v5211 = vld [vmem:[%s5181 + $0x74] sm:$0xf]
        %v5212 = vld [vmem:[%s5181 + $0x78] sm:$0xf]
        %v5213 = vld [vmem:[%s5181 + $0x7c] sm:$0xf]
        %v5214 = vld [vmem:[%s5181 + $0x80] sm:$0xf]
        %v5215 = vld [vmem:[%s5181 + $0x84] sm:$0xf]
        %v5216 = vld [vmem:[%s5181 + $0x88] sm:$0xf]
        %v5217 = vld [vmem:[%s5181 + $0x8c] sm:$0xf]
        %v5218 = vld [vmem:[%s5181 + $0x90] sm:$0xf]
        %v5219 = vld [vmem:[%s5181 + $0x94] sm:$0xf]
        %v5220 = vld [vmem:[%s5181 + $0x98] sm:$0xf]
        %v5221 = vld [vmem:[%s5181 + $0x9c] sm:$0xf]
        %v5222 = vld [vmem:[%s5181 + $0xa0] sm:$0xf]
        %v5223 = vld [vmem:[%s5181 + $0xa4] sm:$0xf]
        %v5224 = vld [vmem:[%s5181 + $0xa8] sm:$0xf]
        %v5225 = vld [vmem:[%s5181 + $0xac] sm:$0xf]
        %v5226 = vld [vmem:[%s5181 + $0xb0] sm:$0xf]
        %v5227 = vld [vmem:[%s5181 + $0xb4] sm:$0xf]
        %v5228 = vld [vmem:[%s5181 + $0xb8] sm:$0xf]
        %v5229 = vld [vmem:[%s5181 + $0xbc] sm:$0xf]
        %v5358 = vunpack.c.l.b16 %v5053
        %v5359 = vunpack.c.h.b16 %v5053
        %v5360 = vunpack.c.l.b16 %v5054
        %v5361 = vunpack.c.l.b16 %v5055
        %v5362 = vunpack.c.h.b16 %v5055
        %v5363 = vunpack.c.l.b16 %v5056
        %v5364 = vunpack.c.l.b16 %v5057
        %v5365 = vunpack.c.h.b16 %v5057
        %v5366 = vunpack.c.l.b16 %v5058
        %v5367 = vunpack.c.l.b16 %v5059
        %v5368 = vunpack.c.h.b16 %v5059
        %v5369 = vunpack.c.l.b16 %v5060
        %v5370 = vunpack.c.l.b16 %v5061
        %v5371 = vunpack.c.h.b16 %v5061
        %v5372 = vunpack.c.l.b16 %v5062
        %v5373 = vunpack.c.l.b16 %v5063
        %v5374 = vunpack.c.h.b16 %v5063
        %v5375 = vunpack.c.l.b16 %v5064
        %v5376 = vunpack.c.l.b16 %v5065
        %v5377 = vunpack.c.h.b16 %v5065
        %v5378 = vunpack.c.l.b16 %v5066
        %v5379 = vunpack.c.l.b16 %v5067
        %v5380 = vunpack.c.h.b16 %v5067
        %v5381 = vunpack.c.l.b16 %v5068
        %v5382 = vunpack.c.l.b16 %v5069
        %v5383 = vunpack.c.h.b16 %v5069
        %v5384 = vunpack.c.l.b16 %v5070
        %v5385 = vunpack.c.l.b16 %v5071
        %v5386 = vunpack.c.h.b16 %v5071
        %v5387 = vunpack.c.l.b16 %v5072
        %v5388 = vunpack.c.l.b16 %v5073
        %v5389 = vunpack.c.h.b16 %v5073
        %v5390 = vunpack.c.l.b16 %v5074
        %v5391 = vunpack.c.l.b16 %v5075
        %v5392 = vunpack.c.h.b16 %v5075
        %v5393 = vunpack.c.l.b16 %v5076
        %v5394 = vunpack.c.l.b16 %v5077
        %v5395 = vunpack.c.h.b16 %v5077
        %v5396 = vunpack.c.l.b16 %v5078
        %v5397 = vunpack.c.l.b16 %v5079
        %v5398 = vunpack.c.h.b16 %v5079
        %v5399 = vunpack.c.l.b16 %v5080
        %v5400 = vunpack.c.l.b16 %v5081
        %v5401 = vunpack.c.h.b16 %v5081
        %v5402 = vunpack.c.l.b16 %v5082
        %v5403 = vunpack.c.l.b16 %v5083
        %v5404 = vunpack.c.h.b16 %v5083
        %v5405 = vunpack.c.l.b16 %v5084
        %v5406 = vunpack.c.l.b16 %v5085
        %v5407 = vunpack.c.h.b16 %v5085
        %v5408 = vunpack.c.l.b16 %v5086
        %v5409 = vunpack.c.l.b16 %v5087
        %v5410 = vunpack.c.h.b16 %v5087
        %v5411 = vunpack.c.l.b16 %v5088
        %v5412 = vunpack.c.l.b16 %v5089
        %v5413 = vunpack.c.h.b16 %v5089
        %v5414 = vunpack.c.l.b16 %v5090
        %v5415 = vunpack.c.l.b16 %v5091
        %v5416 = vunpack.c.h.b16 %v5091
        %v5417 = vunpack.c.l.b16 %v5092
        %v5418 = vunpack.c.l.b16 %v5093
        %v5419 = vunpack.c.h.b16 %v5093
        %v5420 = vunpack.c.l.b16 %v5094
        %v5421 = vunpack.c.l.b16 %v5095
        %v5422 = vunpack.c.h.b16 %v5095
        %v5423 = vunpack.c.l.b16 %v5096
        %v5424 = vunpack.c.l.b16 %v5097
        %v5425 = vunpack.c.h.b16 %v5097
        %v5426 = vunpack.c.l.b16 %v5098
        %v5427 = vunpack.c.l.b16 %v5099
        %v5428 = vunpack.c.h.b16 %v5099
        %v5429 = vunpack.c.l.b16 %v5100
        %v5430 = vunpack.c.l.b16 %v5101
        %v5431 = vunpack.c.h.b16 %v5101
        %v5432 = vunpack.c.l.b16 %v5102
        %v5433 = vunpack.c.l.b16 %v5103
        %v5434 = vunpack.c.h.b16 %v5103
        %v5435 = vunpack.c.l.b16 %v5104
        %v5436 = vunpack.c.l.b16 %v5105
        %v5437 = vunpack.c.h.b16 %v5105
        %v5438 = vunpack.c.l.b16 %v5106
        %v5439 = vunpack.c.l.b16 %v5107
        %v5440 = vunpack.c.h.b16 %v5107
        %v5441 = vunpack.c.l.b16 %v5108
        %v5442 = vunpack.c.l.b16 %v5109
        %v5443 = vunpack.c.h.b16 %v5109
        %v5444 = vunpack.c.l.b16 %v5110
        %v5445 = vunpack.c.l.b16 %v5111
        %v5446 = vunpack.c.h.b16 %v5111
        %v5447 = vunpack.c.l.b16 %v5112
        %v5448 = vunpack.c.l.b16 %v5113
        %v5449 = vunpack.c.h.b16 %v5113
        %v5450 = vunpack.c.l.b16 %v5114
        %v5451 = vunpack.c.l.b16 %v5115
        %v5452 = vunpack.c.h.b16 %v5115
        %v5453 = vunpack.c.l.b16 %v5116
        %v5454 = vunpack.c.l.b16 %v5117
        %v5455 = vunpack.c.h.b16 %v5117
        %v5456 = vunpack.c.l.b16 %v5118
        %v5457 = vunpack.c.l.b16 %v5119
        %v5458 = vunpack.c.h.b16 %v5119
        %v5459 = vunpack.c.l.b16 %v5120
        %v5460 = vunpack.c.l.b16 %v5121
        %v5461 = vunpack.c.h.b16 %v5121
        %v5462 = vunpack.c.l.b16 %v5122
        %v5463 = vunpack.c.l.b16 %v5123
        %v5464 = vunpack.c.h.b16 %v5123
        %v5465 = vunpack.c.l.b16 %v5124
        %v5466 = vunpack.c.l.b16 %v5125
        %v5467 = vunpack.c.h.b16 %v5125
        %v5468 = vunpack.c.l.b16 %v5126
        %v5469 = vunpack.c.l.b16 %v5127
        %v5470 = vunpack.c.h.b16 %v5127
        %v5471 = vunpack.c.l.b16 %v5128
        %v5472 = vunpack.c.l.b16 %v5129
        %v5473 = vunpack.c.h.b16 %v5129
        %v5474 = vunpack.c.l.b16 %v5130
        %v5475 = vunpack.c.l.b16 %v5131
        %v5476 = vunpack.c.h.b16 %v5131
        %v5477 = vunpack.c.l.b16 %v5132
        %v5478 = vunpack.c.l.b16 %v5133
        %v5479 = vunpack.c.h.b16 %v5133
        %v5480 = vunpack.c.l.b16 %v5134
        %v5481 = vunpack.c.l.b16 %v5135
        %v5482 = vunpack.c.h.b16 %v5135
        %v5483 = vunpack.c.l.b16 %v5136
        %v5484 = vunpack.c.l.b16 %v5137
        %v5485 = vunpack.c.h.b16 %v5137
        %v5486 = vunpack.c.l.b16 %v5138
        %v5487 = vunpack.c.l.b16 %v5139
        %v5488 = vunpack.c.h.b16 %v5139
        %v5489 = vunpack.c.l.b16 %v5140
        %v5490 = vunpack.c.l.b16 %v5141
        %v5491 = vunpack.c.h.b16 %v5141
        %v5492 = vunpack.c.l.b16 %v5142
        %v5493 = vunpack.c.l.b16 %v5143
        %v5494 = vunpack.c.h.b16 %v5143
        %v5495 = vunpack.c.l.b16 %v5144
        %v5496 = vunpack.c.l.b16 %v5145
        %v5497 = vunpack.c.h.b16 %v5145
        %v5498 = vunpack.c.l.b16 %v5146
        %v5499 = vunpack.c.l.b16 %v5147
        %v5500 = vunpack.c.h.b16 %v5147
        %v5501 = vunpack.c.l.b16 %v5148
        %v5502 = vunpack.c.l.b16 %v5149
        %v5503 = vunpack.c.h.b16 %v5149
        %v5504 = vunpack.c.l.b16 %v5150
        %v5505 = vunpack.c.l.b16 %v5151
        %v5506 = vunpack.c.h.b16 %v5151
        %v5507 = vunpack.c.l.b16 %v5152
        %v5508 = vunpack.c.l.b16 %v5153
        %v5509 = vunpack.c.h.b16 %v5153
        %v5510 = vunpack.c.l.b16 %v5154
        %v5511 = vunpack.c.l.b16 %v5155
        %v5512 = vunpack.c.h.b16 %v5155
        %v5513 = vunpack.c.l.b16 %v5156
        %v5514 = vunpack.c.l.b16 %v5157
        %v5515 = vunpack.c.h.b16 %v5157
        %v5516 = vunpack.c.l.b16 %v5158
        %v5517 = vunpack.c.l.b16 %v5159
        %v5518 = vunpack.c.h.b16 %v5159
        %v5519 = vunpack.c.l.b16 %v5160
        %v5520 = vunpack.c.l.b16 %v5161
        %v5521 = vunpack.c.h.b16 %v5161
        %v5522 = vunpack.c.l.b16 %v5162
        %v5523 = vunpack.c.l.b16 %v5163
        %v5524 = vunpack.c.h.b16 %v5163
        %v5525 = vunpack.c.l.b16 %v5164
        %v5526 = vunpack.c.l.b16 %v5165
        %v5527 = vunpack.c.h.b16 %v5165
        %v5528 = vunpack.c.l.b16 %v5166
        %v5529 = vunpack.c.l.b16 %v5167
        %v5530 = vunpack.c.h.b16 %v5167
        %v5531 = vunpack.c.l.b16 %v5168
        %v5532 = vunpack.c.l.b16 %v5169
        %v5533 = vunpack.c.h.b16 %v5169
        %v5534 = vunpack.c.l.b16 %v5170
        %v5535 = vunpack.c.l.b16 %v5171
        %v5536 = vunpack.c.h.b16 %v5171
        %v5537 = vunpack.c.l.b16 %v5172
        %v5538 = vunpack.c.l.b16 %v5173
        %v5539 = vunpack.c.h.b16 %v5173
        %v5540 = vunpack.c.l.b16 %v5174
        %v5541 = vunpack.c.l.b16 %v5175
        %v5542 = vunpack.c.h.b16 %v5175
        %v5543 = vunpack.c.l.b16 %v5176
        %v5544 = vunpack.c.l.b16 %v5177
        %v5545 = vunpack.c.h.b16 %v5177
        %v5546 = vunpack.c.l.b16 %v5178
        %v5547 = vunpack.c.l.b16 %v5179
        %v5548 = vunpack.c.h.b16 %v5179
        %v5549 = vunpack.c.l.b16 %v5180
        %v5550 = vpack.c.b16 %v5361, %v5358
        %v5551 = vpack.c.b16 %v5362, %v5359
        %v5552 = vpack.c.b16 %v5363, %v5360
        %v5553 = vpack.c.b16 %v5367, %v5364
        %v5554 = vpack.c.b16 %v5368, %v5365
        %v5555 = vpack.c.b16 %v5369, %v5366
        %v5556 = vpack.c.b16 %v5373, %v5370
        %v5557 = vpack.c.b16 %v5374, %v5371
        %v5558 = vpack.c.b16 %v5375, %v5372
        %v5559 = vpack.c.b16 %v5379, %v5376
        %v5560 = vpack.c.b16 %v5380, %v5377
        %v5561 = vpack.c.b16 %v5381, %v5378
        %v5562 = vpack.c.b16 %v5385, %v5382
        %v5563 = vpack.c.b16 %v5386, %v5383
        %v5564 = vpack.c.b16 %v5387, %v5384
        %v5565 = vpack.c.b16 %v5391, %v5388
        %v5566 = vpack.c.b16 %v5392, %v5389
        %v5567 = vpack.c.b16 %v5393, %v5390
        %v5568 = vpack.c.b16 %v5397, %v5394
        %v5569 = vpack.c.b16 %v5398, %v5395
        %v5570 = vpack.c.b16 %v5399, %v5396
        %v5571 = vpack.c.b16 %v5403, %v5400
        %v5572 = vpack.c.b16 %v5404, %v5401
        %v5573 = vpack.c.b16 %v5405, %v5402
        %v5574 = vpack.c.b16 %v5409, %v5406
        %v5575 = vpack.c.b16 %v5410, %v5407
        %v5576 = vpack.c.b16 %v5411, %v5408
        %v5577 = vpack.c.b16 %v5415, %v5412
        %v5578 = vpack.c.b16 %v5416, %v5413
        %v5579 = vpack.c.b16 %v5417, %v5414
        %v5580 = vpack.c.b16 %v5421, %v5418
        %v5581 = vpack.c.b16 %v5422, %v5419
        %v5582 = vpack.c.b16 %v5423, %v5420
        %v5583 = vpack.c.b16 %v5427, %v5424
        %v5584 = vpack.c.b16 %v5428, %v5425
        %v5585 = vpack.c.b16 %v5429, %v5426
        %v5586 = vpack.c.b16 %v5433, %v5430
        %v5587 = vpack.c.b16 %v5434, %v5431
        %v5588 = vpack.c.b16 %v5435, %v5432
        %v5589 = vpack.c.b16 %v5439, %v5436
        %v5590 = vpack.c.b16 %v5440, %v5437
        %v5591 = vpack.c.b16 %v5441, %v5438
        %v5592 = vpack.c.b16 %v5445, %v5442
        %v5593 = vpack.c.b16 %v5446, %v5443
        %v5594 = vpack.c.b16 %v5447, %v5444
        %v5595 = vpack.c.b16 %v5451, %v5448
        %v5596 = vpack.c.b16 %v5452, %v5449
        %v5597 = vpack.c.b16 %v5453, %v5450
        %v5598 = vpack.c.b16 %v5457, %v5454
        %v5599 = vpack.c.b16 %v5458, %v5455
        %v5600 = vpack.c.b16 %v5459, %v5456
        %v5601 = vpack.c.b16 %v5463, %v5460
        %v5602 = vpack.c.b16 %v5464, %v5461
        %v5603 = vpack.c.b16 %v5465, %v5462
        %v5604 = vpack.c.b16 %v5469, %v5466
        %v5605 = vpack.c.b16 %v5470, %v5467
        %v5606 = vpack.c.b16 %v5471, %v5468
        %v5607 = vpack.c.b16 %v5475, %v5472
        %v5608 = vpack.c.b16 %v5476, %v5473
        %v5609 = vpack.c.b16 %v5477, %v5474
        %v5610 = vpack.c.b16 %v5481, %v5478
        %v5611 = vpack.c.b16 %v5482, %v5479
        %v5612 = vpack.c.b16 %v5483, %v5480
        %v5613 = vpack.c.b16 %v5487, %v5484
        %v5614 = vpack.c.b16 %v5488, %v5485
        %v5615 = vpack.c.b16 %v5489, %v5486
        %v5616 = vpack.c.b16 %v5493, %v5490
        %v5617 = vpack.c.b16 %v5494, %v5491
        %v5618 = vpack.c.b16 %v5495, %v5492
        %v5619 = vpack.c.b16 %v5499, %v5496
        %v5620 = vpack.c.b16 %v5500, %v5497
        %v5621 = vpack.c.b16 %v5501, %v5498
        %v5622 = vpack.c.b16 %v5505, %v5502
        %v5623 = vpack.c.b16 %v5506, %v5503
        %v5624 = vpack.c.b16 %v5507, %v5504
        %v5625 = vpack.c.b16 %v5511, %v5508
        %v5626 = vpack.c.b16 %v5512, %v5509
        %v5627 = vpack.c.b16 %v5513, %v5510
        %v5628 = vpack.c.b16 %v5517, %v5514
        %v5629 = vpack.c.b16 %v5518, %v5515
        %v5630 = vpack.c.b16 %v5519, %v5516
        %v5631 = vpack.c.b16 %v5523, %v5520
        %v5632 = vpack.c.b16 %v5524, %v5521
        %v5633 = vpack.c.b16 %v5525, %v5522
        %v5634 = vpack.c.b16 %v5529, %v5526
        %v5635 = vpack.c.b16 %v5530, %v5527
        %v5636 = vpack.c.b16 %v5531, %v5528
        %v5637 = vpack.c.b16 %v5535, %v5532
        %v5638 = vpack.c.b16 %v5536, %v5533
        %v5639 = vpack.c.b16 %v5537, %v5534
        %v5640 = vpack.c.b16 %v5541, %v5538
        %v5641 = vpack.c.b16 %v5542, %v5539
        %v5642 = vpack.c.b16 %v5543, %v5540
        %v5643 = vpack.c.b16 %v5547, %v5544
        %v5644 = vpack.c.b16 %v5548, %v5545
        %v5645 = vpack.c.b16 %v5549, %v5546
        %v5790 = vunpack.c.l.b16 %v5182
        %v5791 = vunpack.c.l.b16 %v5183
        %v5792 = vunpack.c.l.b16 %v5184
        %v5793 = vunpack.c.l.b16 %v5185
        %v5794 = vunpack.c.l.b16 %v5186
        %v5795 = vunpack.c.l.b16 %v5187
        %v5796 = vunpack.c.l.b16 %v5188
        %v5797 = vunpack.c.l.b16 %v5189
        %v5798 = vunpack.c.l.b16 %v5190
        %v5799 = vunpack.c.l.b16 %v5191
        %v5800 = vunpack.c.l.b16 %v5192
        %v5801 = vunpack.c.l.b16 %v5193
        %v5802 = vunpack.c.l.b16 %v5194
        %v5803 = vunpack.c.l.b16 %v5195
        %v5804 = vunpack.c.l.b16 %v5196
        %v5805 = vunpack.c.l.b16 %v5197
        %v5806 = vunpack.c.l.b16 %v5198
        %v5807 = vunpack.c.l.b16 %v5199
        %v5808 = vunpack.c.l.b16 %v5200
        %v5809 = vunpack.c.l.b16 %v5201
        %v5810 = vunpack.c.l.b16 %v5202
        %v5811 = vunpack.c.l.b16 %v5203
        %v5812 = vunpack.c.l.b16 %v5204
        %v5813 = vunpack.c.l.b16 %v5205
        %v5814 = vunpack.c.l.b16 %v5206
        %v5815 = vunpack.c.l.b16 %v5207
        %v5816 = vunpack.c.l.b16 %v5208
        %v5817 = vunpack.c.l.b16 %v5209
        %v5818 = vunpack.c.l.b16 %v5210
        %v5819 = vunpack.c.l.b16 %v5211
        %v5820 = vunpack.c.l.b16 %v5212
        %v5821 = vunpack.c.l.b16 %v5213
        %v5822 = vunpack.c.l.b16 %v5214
        %v5823 = vunpack.c.l.b16 %v5215
        %v5824 = vunpack.c.l.b16 %v5216
        %v5825 = vunpack.c.l.b16 %v5217
        %v5826 = vunpack.c.l.b16 %v5218
        %v5827 = vunpack.c.l.b16 %v5219
        %v5828 = vunpack.c.l.b16 %v5220
        %v5829 = vunpack.c.l.b16 %v5221
        %v5830 = vunpack.c.l.b16 %v5222
        %v5831 = vunpack.c.l.b16 %v5223
        %v5832 = vunpack.c.l.b16 %v5224
        %v5833 = vunpack.c.l.b16 %v5225
        %v5834 = vunpack.c.l.b16 %v5226
        %v5835 = vunpack.c.l.b16 %v5227
        %v5836 = vunpack.c.l.b16 %v5228
        %v5837 = vunpack.c.l.b16 %v5229
        %v5838 = vpack.c.b16 %v5791, %v5790
        %v5839 = vpack.c.b16 %v5793, %v5792
        %v5840 = vpack.c.b16 %v5795, %v5794
        %v5841 = vpack.c.b16 %v5797, %v5796
        %v5842 = vpack.c.b16 %v5799, %v5798
        %v5843 = vpack.c.b16 %v5801, %v5800
        %v5844 = vpack.c.b16 %v5803, %v5802
        %v5845 = vpack.c.b16 %v5805, %v5804
        %v5846 = vpack.c.b16 %v5807, %v5806
        %v5847 = vpack.c.b16 %v5809, %v5808
        %v5848 = vpack.c.b16 %v5811, %v5810
        %v5849 = vpack.c.b16 %v5813, %v5812
        %v5850 = vpack.c.b16 %v5815, %v5814
        %v5851 = vpack.c.b16 %v5817, %v5816
        %v5852 = vpack.c.b16 %v5819, %v5818
        %v5853 = vpack.c.b16 %v5821, %v5820
        %v5854 = vpack.c.b16 %v5823, %v5822
        %v5855 = vpack.c.b16 %v5825, %v5824
        %v5856 = vpack.c.b16 %v5827, %v5826
        %v5857 = vpack.c.b16 %v5829, %v5828
        %v5858 = vpack.c.b16 %v5831, %v5830
        %v5859 = vpack.c.b16 %v5833, %v5832
        %v5860 = vpack.c.b16 %v5835, %v5834
        %v5861 = vpack.c.b16 %v5837, %v5836
        %5886 = vmatprep.subr.bf16.mxu0 0
        %5887 = vmatpush1.bf16.msra.mxu0 %v5845
        %5888 = vmatprep.subr.bf16.mxu0 0
        %5889 = vmatpush1.bf16.msra.mxu0 %v5844
        %5890 = vmatprep.subr.bf16.mxu0 0
        %5891 = vmatpush1.bf16.msra.mxu0 %v5843
        %5892 = vmatprep.subr.bf16.mxu0 0
        %5893 = vmatpush1.bf16.msra.mxu0 %v5842
        %5894 = vmatprep.subr.bf16.mxu0 0
        %5895 = vmatpush1.bf16.msra.mxu0 %v5841
        %5896 = vmatprep.subr.bf16.mxu0 0
        %5897 = vmatpush1.bf16.msra.mxu0 %v5840
        %5898 = vmatprep.subr.bf16.mxu0 0
        %5899 = vmatpush1.bf16.msra.mxu0 %v5839
        %5900 = vmatprep.subr.bf16.mxu0 0
        %5901 = vmatpush1.bf16.msra.mxu0 %v5838
        %5902 = vmatprep.subr.bf16.mxu0 0
        %5903 = vmatpush2.bf16.msra.mxu0 %v5853
        %5904 = vmatprep.subr.bf16.mxu0 0
        %5905 = vmatpush2.bf16.msra.mxu0 %v5852
        %5906 = vmatprep.subr.bf16.mxu0 0
        %5907 = vmatpush2.bf16.msra.mxu0 %v5851
        %5908 = vmatprep.subr.bf16.mxu0 0
        %5909 = vmatpush2.bf16.msra.mxu0 %v5850
        %5910 = vmatprep.subr.bf16.mxu0 0
        %5911 = vmatpush2.bf16.msra.mxu0 %v5849
        %5912 = vmatprep.subr.bf16.mxu0 0
        %5913 = vmatpush2.bf16.msra.mxu0 %v5848
        %5914 = vmatprep.subr.bf16.mxu0 0
        %5915 = vmatpush2.bf16.msra.mxu0 %v5847
        %5916 = vmatprep.subr.bf16.mxu0 0
        %5917 = vmatpush2.bf16.msra.mxu0 %v5846
        %5918 = vmatprep.mubr.bf16.mxu0 %v5551
        %5919 = vmatmul.mubr.bf16.gmra.mxu0 %v5550
        %v5920 = vpop.f32.mrf.mxu0
        %v5921 = vadd.f32 0.0, %v5920
        %v5922 = vpop.f32.mrf.mxu0
        %v5923 = vpop.f32.mrf.mxu0
        %v5924 = vadd.f32 0.0, %v5923
        %v5925 = vpop.f32.mrf.mxu0
        %5926 = vmatprep.mubr.bf16.mxu0 %v5554
        %5927 = vmatmul.mubr.bf16.gmra.mxu0 %v5553
        %v5928 = vpop.f32.mrf.mxu0
        %v5929 = vadd.f32 0.0, %v5928
        %v5930 = vpop.f32.mrf.mxu0
        %v5931 = vpop.f32.mrf.mxu0
        %v5932 = vadd.f32 0.0, %v5931
        %v5933 = vpop.f32.mrf.mxu0
        %5934 = vmatprep.mubr.bf16.mxu0 %v5557
        %5935 = vmatmul.mubr.bf16.gmra.mxu0 %v5556
        %v5936 = vpop.f32.mrf.mxu0
        %v5937 = vadd.f32 0.0, %v5936
        %v5938 = vpop.f32.mrf.mxu0
        %v5939 = vpop.f32.mrf.mxu0
        %v5940 = vadd.f32 0.0, %v5939
        %v5941 = vpop.f32.mrf.mxu0
        %5942 = vmatprep.mubr.bf16.mxu0 %v5560
        %5943 = vmatmul.mubr.bf16.gmra.mxu0 %v5559
        %v5944 = vpop.f32.mrf.mxu0
        %v5945 = vadd.f32 0.0, %v5944
        %v5946 = vpop.f32.mrf.mxu0
        %v5947 = vpop.f32.mrf.mxu0
        %v5948 = vadd.f32 0.0, %v5947
        %v5949 = vpop.f32.mrf.mxu0
        %5950 = vmatprep.mubr.bf16.mxu0 %v5563
        %5951 = vmatmul.mubr.bf16.gmra.mxu0 %v5562
        %v5952 = vpop.f32.mrf.mxu0
        %v5953 = vadd.f32 0.0, %v5952
        %v5954 = vpop.f32.mrf.mxu0
        %v5955 = vpop.f32.mrf.mxu0
        %v5956 = vadd.f32 0.0, %v5955
        %v5957 = vpop.f32.mrf.mxu0
        %5958 = vmatprep.mubr.bf16.mxu0 %v5566
        %5959 = vmatmul.mubr.bf16.gmra.mxu0 %v5565
        %v5960 = vpop.f32.mrf.mxu0
        %v5961 = vadd.f32 0.0, %v5960
        %v5962 = vpop.f32.mrf.mxu0
        %v5963 = vpop.f32.mrf.mxu0
        %v5964 = vadd.f32 0.0, %v5963
        %v5965 = vpop.f32.mrf.mxu0
        %5966 = vmatprep.mubr.bf16.mxu0 %v5569
        %5967 = vmatmul.mubr.bf16.gmra.mxu0 %v5568
        %v5968 = vpop.f32.mrf.mxu0
        %v5969 = vadd.f32 0.0, %v5968
        %v5970 = vpop.f32.mrf.mxu0
        %v5971 = vpop.f32.mrf.mxu0
        %v5972 = vadd.f32 0.0, %v5971
        %v5973 = vpop.f32.mrf.mxu0
        %5974 = vmatprep.mubr.bf16.mxu0 %v5572
        %5975 = vmatmul.mubr.bf16.gmra.mxu0 %v5571
        %v5976 = vpop.f32.mrf.mxu0
        %v5977 = vadd.f32 0.0, %v5976
        %v5978 = vpop.f32.mrf.mxu0
        %v5979 = vpop.f32.mrf.mxu0
        %v5980 = vadd.f32 0.0, %v5979
        %v5981 = vpop.f32.mrf.mxu0
        %5982 = vmatprep.mubr.bf16.mxu0 %v5575
        %5983 = vmatmul.mubr.bf16.gmra.mxu0 %v5574
        %v5984 = vpop.f32.mrf.mxu0
        %v5985 = vadd.f32 0.0, %v5984
        %v5986 = vpop.f32.mrf.mxu0
        %v5987 = vpop.f32.mrf.mxu0
        %v5988 = vadd.f32 0.0, %v5987
        %v5989 = vpop.f32.mrf.mxu0
        %5990 = vmatprep.mubr.bf16.mxu0 %v5578
        %5991 = vmatmul.mubr.bf16.gmra.mxu0 %v5577
        %v5992 = vpop.f32.mrf.mxu0
        %v5993 = vadd.f32 0.0, %v5992
        %v5994 = vpop.f32.mrf.mxu0
        %v5995 = vpop.f32.mrf.mxu0
        %v5996 = vadd.f32 0.0, %v5995
        %v5997 = vpop.f32.mrf.mxu0
        %5998 = vmatprep.mubr.bf16.mxu0 %v5581
        %5999 = vmatmul.mubr.bf16.gmra.mxu0 %v5580
        %v6000 = vpop.f32.mrf.mxu0
        %v6001 = vadd.f32 0.0, %v6000
        %v6002 = vpop.f32.mrf.mxu0
        %v6003 = vpop.f32.mrf.mxu0
        %v6004 = vadd.f32 0.0, %v6003
        %v6005 = vpop.f32.mrf.mxu0
        %6006 = vmatprep.mubr.bf16.mxu0 %v5584
        %6007 = vmatmul.mubr.bf16.gmra.mxu0 %v5583
        %v6008 = vpop.f32.mrf.mxu0
        %v6009 = vadd.f32 0.0, %v6008
        %v6010 = vpop.f32.mrf.mxu0
        %v6011 = vpop.f32.mrf.mxu0
        %v6012 = vadd.f32 0.0, %v6011
        %v6013 = vpop.f32.mrf.mxu0
        %6014 = vmatprep.mubr.bf16.mxu0 %v5587
        %6015 = vmatmul.mubr.bf16.gmra.mxu0 %v5586
        %v6016 = vpop.f32.mrf.mxu0
        %v6017 = vadd.f32 0.0, %v6016
        %v6018 = vpop.f32.mrf.mxu0
        %v6019 = vpop.f32.mrf.mxu0
        %v6020 = vadd.f32 0.0, %v6019
        %v6021 = vpop.f32.mrf.mxu0
        %6022 = vmatprep.mubr.bf16.mxu0 %v5590
        %6023 = vmatmul.mubr.bf16.gmra.mxu0 %v5589
        %v6024 = vpop.f32.mrf.mxu0
        %v6025 = vadd.f32 0.0, %v6024
        %v6026 = vpop.f32.mrf.mxu0
        %v6027 = vpop.f32.mrf.mxu0
        %v6028 = vadd.f32 0.0, %v6027
        %v6029 = vpop.f32.mrf.mxu0
        %6030 = vmatprep.mubr.bf16.mxu0 %v5593
        %6031 = vmatmul.mubr.bf16.gmra.mxu0 %v5592
        %v6032 = vpop.f32.mrf.mxu0
        %v6033 = vadd.f32 0.0, %v6032
        %v6034 = vpop.f32.mrf.mxu0
        %v6035 = vpop.f32.mrf.mxu0
        %v6036 = vadd.f32 0.0, %v6035
        %v6037 = vpop.f32.mrf.mxu0
        %6038 = vmatprep.mubr.bf16.mxu0 %v5596
        %6039 = vmatmul.mubr.bf16.gmra.mxu0 %v5595
        %v6040 = vpop.f32.mrf.mxu0
        %v6041 = vadd.f32 0.0, %v6040
        %v6042 = vpop.f32.mrf.mxu0
        %v6043 = vpop.f32.mrf.mxu0
        %v6044 = vadd.f32 0.0, %v6043
        %v6045 = vpop.f32.mrf.mxu0
        %6046 = vmatprep.mubr.bf16.mxu0 %v5599
        %6047 = vmatmul.mubr.bf16.gmra.mxu0 %v5598
        %v6048 = vpop.f32.mrf.mxu0
        %v6049 = vadd.f32 0.0, %v6048
        %v6050 = vpop.f32.mrf.mxu0
        %v6051 = vpop.f32.mrf.mxu0
        %v6052 = vadd.f32 0.0, %v6051
        %v6053 = vpop.f32.mrf.mxu0
        %6054 = vmatprep.mubr.bf16.mxu0 %v5602
        %6055 = vmatmul.mubr.bf16.gmra.mxu0 %v5601
        %v6056 = vpop.f32.mrf.mxu0
        %v6057 = vadd.f32 0.0, %v6056
        %v6058 = vpop.f32.mrf.mxu0
        %v6059 = vpop.f32.mrf.mxu0
        %v6060 = vadd.f32 0.0, %v6059
        %v6061 = vpop.f32.mrf.mxu0
        %6062 = vmatprep.mubr.bf16.mxu0 %v5605
        %6063 = vmatmul.mubr.bf16.gmra.mxu0 %v5604
        %v6064 = vpop.f32.mrf.mxu0
        %v6065 = vadd.f32 0.0, %v6064
        %v6066 = vpop.f32.mrf.mxu0
        %v6067 = vpop.f32.mrf.mxu0
        %v6068 = vadd.f32 0.0, %v6067
        %v6069 = vpop.f32.mrf.mxu0
        %6070 = vmatprep.mubr.bf16.mxu0 %v5608
        %6071 = vmatmul.mubr.bf16.gmra.mxu0 %v5607
        %v6072 = vpop.f32.mrf.mxu0
        %v6073 = vadd.f32 0.0, %v6072
        %v6074 = vpop.f32.mrf.mxu0
        %v6075 = vpop.f32.mrf.mxu0
        %v6076 = vadd.f32 0.0, %v6075
        %v6077 = vpop.f32.mrf.mxu0
        %6078 = vmatprep.mubr.bf16.mxu0 %v5611
        %6079 = vmatmul.mubr.bf16.gmra.mxu0 %v5610
        %v6080 = vpop.f32.mrf.mxu0
        %v6081 = vadd.f32 0.0, %v6080
        %v6082 = vpop.f32.mrf.mxu0
        %v6083 = vpop.f32.mrf.mxu0
        %v6084 = vadd.f32 0.0, %v6083
        %v6085 = vpop.f32.mrf.mxu0
        %6086 = vmatprep.mubr.bf16.mxu0 %v5614
        %6087 = vmatmul.mubr.bf16.gmra.mxu0 %v5613
        %v6088 = vpop.f32.mrf.mxu0
        %v6089 = vadd.f32 0.0, %v6088
        %v6090 = vpop.f32.mrf.mxu0
        %v6091 = vpop.f32.mrf.mxu0
        %v6092 = vadd.f32 0.0, %v6091
        %v6093 = vpop.f32.mrf.mxu0
        %6094 = vmatprep.mubr.bf16.mxu0 %v5617
        %6095 = vmatmul.mubr.bf16.gmra.mxu0 %v5616
        %v6096 = vpop.f32.mrf.mxu0
        %v6097 = vadd.f32 0.0, %v6096
        %v6098 = vpop.f32.mrf.mxu0
        %v6099 = vpop.f32.mrf.mxu0
        %v6100 = vadd.f32 0.0, %v6099
        %v6101 = vpop.f32.mrf.mxu0
        %6102 = vmatprep.mubr.bf16.mxu0 %v5620
        %6103 = vmatmul.mubr.bf16.gmra.mxu0 %v5619
        %v6104 = vpop.f32.mrf.mxu0
        %v6105 = vadd.f32 0.0, %v6104
        %v6106 = vpop.f32.mrf.mxu0
        %v6107 = vpop.f32.mrf.mxu0
        %v6108 = vadd.f32 0.0, %v6107
        %v6109 = vpop.f32.mrf.mxu0
        %6110 = vmatprep.mubr.bf16.mxu0 %v5623
        %6111 = vmatmul.mubr.bf16.gmra.mxu0 %v5622
        %v6112 = vpop.f32.mrf.mxu0
        %v6113 = vadd.f32 0.0, %v6112
        %v6114 = vpop.f32.mrf.mxu0
        %v6115 = vpop.f32.mrf.mxu0
        %v6116 = vadd.f32 0.0, %v6115
        %v6117 = vpop.f32.mrf.mxu0
        %6118 = vmatprep.mubr.bf16.mxu0 %v5626
        %6119 = vmatmul.mubr.bf16.gmra.mxu0 %v5625
        %v6120 = vpop.f32.mrf.mxu0
        %v6121 = vadd.f32 0.0, %v6120
        %v6122 = vpop.f32.mrf.mxu0
        %v6123 = vpop.f32.mrf.mxu0
        %v6124 = vadd.f32 0.0, %v6123
        %v6125 = vpop.f32.mrf.mxu0
        %6126 = vmatprep.mubr.bf16.mxu0 %v5629
        %6127 = vmatmul.mubr.bf16.gmra.mxu0 %v5628
        %v6128 = vpop.f32.mrf.mxu0
        %v6129 = vadd.f32 0.0, %v6128
        %v6130 = vpop.f32.mrf.mxu0
        %v6131 = vpop.f32.mrf.mxu0
        %v6132 = vadd.f32 0.0, %v6131
        %v6133 = vpop.f32.mrf.mxu0
        %6134 = vmatprep.mubr.bf16.mxu0 %v5632
        %6135 = vmatmul.mubr.bf16.gmra.mxu0 %v5631
        %v6136 = vpop.f32.mrf.mxu0
        %v6137 = vadd.f32 0.0, %v6136
        %v6138 = vpop.f32.mrf.mxu0
        %v6139 = vpop.f32.mrf.mxu0
        %v6140 = vadd.f32 0.0, %v6139
        %v6141 = vpop.f32.mrf.mxu0
        %6142 = vmatprep.mubr.bf16.mxu0 %v5635
        %6143 = vmatmul.mubr.bf16.gmra.mxu0 %v5634
        %v6144 = vpop.f32.mrf.mxu0
        %v6145 = vadd.f32 0.0, %v6144
        %v6146 = vpop.f32.mrf.mxu0
        %v6147 = vpop.f32.mrf.mxu0
        %v6148 = vadd.f32 0.0, %v6147
        %v6149 = vpop.f32.mrf.mxu0
        %6150 = vmatprep.mubr.bf16.mxu0 %v5638
        %6151 = vmatmul.mubr.bf16.gmra.mxu0 %v5637
        %v6152 = vpop.f32.mrf.mxu0
        %v6153 = vadd.f32 0.0, %v6152
        %v6154 = vpop.f32.mrf.mxu0
        %v6155 = vpop.f32.mrf.mxu0
        %v6156 = vadd.f32 0.0, %v6155
        %v6157 = vpop.f32.mrf.mxu0
        %6158 = vmatprep.mubr.bf16.mxu0 %v5641
        %6159 = vmatmul.mubr.bf16.gmra.mxu0 %v5640
        %v6160 = vpop.f32.mrf.mxu0
        %v6161 = vadd.f32 0.0, %v6160
        %v6162 = vpop.f32.mrf.mxu0
        %v6163 = vpop.f32.mrf.mxu0
        %v6164 = vadd.f32 0.0, %v6163
        %v6165 = vpop.f32.mrf.mxu0
        %6166 = vmatprep.mubr.bf16.mxu0 %v5644
        %6167 = vmatmul.mubr.bf16.gmra.mxu0 %v5643
        %v6168 = vpop.f32.mrf.mxu0
        %v6169 = vadd.f32 0.0, %v6168
        %v6170 = vpop.f32.mrf.mxu0
        %v6171 = vpop.f32.mrf.mxu0
        %v6172 = vadd.f32 0.0, %v6171
        %v6173 = vpop.f32.mrf.mxu0
        %6174 = vdwg.mxu0
        %6175 = vmatprep.subr.bf16.mxu0 0
        %6176 = vmatpush1.bf16.msra.mxu0 %v5861
        %6177 = vmatprep.subr.bf16.mxu0 0
        %6178 = vmatpush1.bf16.msra.mxu0 %v5860
        %6179 = vmatprep.subr.bf16.mxu0 0
        %6180 = vmatpush1.bf16.msra.mxu0 %v5859
        %6181 = vmatprep.subr.bf16.mxu0 0
        %6182 = vmatpush1.bf16.msra.mxu0 %v5858
        %6183 = vmatprep.subr.bf16.mxu0 0
        %6184 = vmatpush1.bf16.msra.mxu0 %v5857
        %6185 = vmatprep.subr.bf16.mxu0 0
        %6186 = vmatpush1.bf16.msra.mxu0 %v5856
        %6187 = vmatprep.subr.bf16.mxu0 0
        %6188 = vmatpush1.bf16.msra.mxu0 %v5855
        %6189 = vmatprep.subr.bf16.mxu0 0
        %6190 = vmatpush1.bf16.msra.mxu0 %v5854
        %6191 = vmatprep.subr.bf16.mxu0 0
        %6192 = vmatpush2.bf16.msra.mxu0 0
        %6193 = vmatprep.subr.bf16.mxu0 0
        %6194 = vmatpush2.bf16.msra.mxu0 0
        %6195 = vmatprep.subr.bf16.mxu0 0
        %6196 = vmatpush2.bf16.msra.mxu0 0
        %6197 = vmatprep.subr.bf16.mxu0 0
        %6198 = vmatpush2.bf16.msra.mxu0 0
        %6199 = vmatprep.subr.bf16.mxu0 0
        %6200 = vmatpush2.bf16.msra.mxu0 0
        %6201 = vmatprep.subr.bf16.mxu0 0
        %6202 = vmatpush2.bf16.msra.mxu0 0
        %6203 = vmatprep.subr.bf16.mxu0 0
        %6204 = vmatpush2.bf16.msra.mxu0 0
        %6205 = vmatprep.subr.bf16.mxu0 0
        %6206 = vmatpush2.bf16.msra.mxu0 0
        %6207 = vmatprep.mubr.bf16.mxu0 0
        %6208 = vmatmul.mubr.bf16.gmra.mxu0 %v5552
        %v6209 = vpop.f32.mrf.mxu0
        %v6210 = vadd.f32 %v5921, %v6209
        %v6211 = vpop.f32.mrf.mxu0
        %v6212 = vpop.f32.mrf.mxu0
        %v6213 = vadd.f32 %v5924, %v6212
        %v6214 = vpop.f32.mrf.mxu0
        %6215 = vmatprep.mubr.bf16.mxu0 0
        %6216 = vmatmul.mubr.bf16.gmra.mxu0 %v5555
        %v6217 = vpop.f32.mrf.mxu0
        %v6218 = vadd.f32 %v5929, %v6217
        %v6219 = vpop.f32.mrf.mxu0
        %v6220 = vpop.f32.mrf.mxu0
        %v6221 = vadd.f32 %v5932, %v6220
        %v6222 = vpop.f32.mrf.mxu0
        %6223 = vmatprep.mubr.bf16.mxu0 0
        %6224 = vmatmul.mubr.bf16.gmra.mxu0 %v5558
        %v6225 = vpop.f32.mrf.mxu0
        %v6226 = vadd.f32 %v5937, %v6225
        %v6227 = vpop.f32.mrf.mxu0
        %v6228 = vpop.f32.mrf.mxu0
        %v6229 = vadd.f32 %v5940, %v6228
        %v6230 = vpop.f32.mrf.mxu0
        %6231 = vmatprep.mubr.bf16.mxu0 0
        %6232 = vmatmul.mubr.bf16.gmra.mxu0 %v5561
        %v6233 = vpop.f32.mrf.mxu0
        %v6234 = vadd.f32 %v5945, %v6233
        %v6235 = vpop.f32.mrf.mxu0
        %v6236 = vpop.f32.mrf.mxu0
        %v6237 = vadd.f32 %v5948, %v6236
        %v6238 = vpop.f32.mrf.mxu0
        %6239 = vmatprep.mubr.bf16.mxu0 0
        %6240 = vmatmul.mubr.bf16.gmra.mxu0 %v5564
        %v6241 = vpop.f32.mrf.mxu0
        %v6242 = vadd.f32 %v5953, %v6241
        %v6243 = vpop.f32.mrf.mxu0
        %v6244 = vpop.f32.mrf.mxu0
        %v6245 = vadd.f32 %v5956, %v6244
        %v6246 = vpop.f32.mrf.mxu0
        %6247 = vmatprep.mubr.bf16.mxu0 0
        %6248 = vmatmul.mubr.bf16.gmra.mxu0 %v5567
        %v6249 = vpop.f32.mrf.mxu0
        %v6250 = vadd.f32 %v5961, %v6249
        %v6251 = vpop.f32.mrf.mxu0
        %v6252 = vpop.f32.mrf.mxu0
        %v6253 = vadd.f32 %v5964, %v6252
        %v6254 = vpop.f32.mrf.mxu0
        %6255 = vmatprep.mubr.bf16.mxu0 0
        %6256 = vmatmul.mubr.bf16.gmra.mxu0 %v5570
        %v6257 = vpop.f32.mrf.mxu0
        %v6258 = vadd.f32 %v5969, %v6257
        %v6259 = vpop.f32.mrf.mxu0
        %v6260 = vpop.f32.mrf.mxu0
        %v6261 = vadd.f32 %v5972, %v6260
        %v6262 = vpop.f32.mrf.mxu0
        %6263 = vmatprep.mubr.bf16.mxu0 0
        %6264 = vmatmul.mubr.bf16.gmra.mxu0 %v5573
        %v6265 = vpop.f32.mrf.mxu0
        %v6266 = vadd.f32 %v5977, %v6265
        %v6267 = vpop.f32.mrf.mxu0
        %v6268 = vpop.f32.mrf.mxu0
        %v6269 = vadd.f32 %v5980, %v6268
        %v6270 = vpop.f32.mrf.mxu0
        %6271 = vmatprep.mubr.bf16.mxu0 0
        %6272 = vmatmul.mubr.bf16.gmra.mxu0 %v5576
        %v6273 = vpop.f32.mrf.mxu0
        %v6274 = vadd.f32 %v5985, %v6273
        %v6275 = vpop.f32.mrf.mxu0
        %v6276 = vpop.f32.mrf.mxu0
        %v6277 = vadd.f32 %v5988, %v6276
        %v6278 = vpop.f32.mrf.mxu0
        %6279 = vmatprep.mubr.bf16.mxu0 0
        %6280 = vmatmul.mubr.bf16.gmra.mxu0 %v5579
        %v6281 = vpop.f32.mrf.mxu0
        %v6282 = vadd.f32 %v5993, %v6281
        %v6283 = vpop.f32.mrf.mxu0
        %v6284 = vpop.f32.mrf.mxu0
        %v6285 = vadd.f32 %v5996, %v6284
        %v6286 = vpop.f32.mrf.mxu0
        %6287 = vmatprep.mubr.bf16.mxu0 0
        %6288 = vmatmul.mubr.bf16.gmra.mxu0 %v5582
        %v6289 = vpop.f32.mrf.mxu0
        %v6290 = vadd.f32 %v6001, %v6289
        %v6291 = vpop.f32.mrf.mxu0
        %v6292 = vpop.f32.mrf.mxu0
        %v6293 = vadd.f32 %v6004, %v6292
        %v6294 = vpop.f32.mrf.mxu0
        %6295 = vmatprep.mubr.bf16.mxu0 0
        %6296 = vmatmul.mubr.bf16.gmra.mxu0 %v5585
        %v6297 = vpop.f32.mrf.mxu0
        %v6298 = vadd.f32 %v6009, %v6297
        %v6299 = vpop.f32.mrf.mxu0
        %v6300 = vpop.f32.mrf.mxu0
        %v6301 = vadd.f32 %v6012, %v6300
        %v6302 = vpop.f32.mrf.mxu0
        %6303 = vmatprep.mubr.bf16.mxu0 0
        %6304 = vmatmul.mubr.bf16.gmra.mxu0 %v5588
        %v6305 = vpop.f32.mrf.mxu0
        %v6306 = vadd.f32 %v6017, %v6305
        %v6307 = vpop.f32.mrf.mxu0
        %v6308 = vpop.f32.mrf.mxu0
        %v6309 = vadd.f32 %v6020, %v6308
        %v6310 = vpop.f32.mrf.mxu0
        %6311 = vmatprep.mubr.bf16.mxu0 0
        %6312 = vmatmul.mubr.bf16.gmra.mxu0 %v5591
        %v6313 = vpop.f32.mrf.mxu0
        %v6314 = vadd.f32 %v6025, %v6313
        %v6315 = vpop.f32.mrf.mxu0
        %v6316 = vpop.f32.mrf.mxu0
        %v6317 = vadd.f32 %v6028, %v6316
        %v6318 = vpop.f32.mrf.mxu0
        %6319 = vmatprep.mubr.bf16.mxu0 0
        %6320 = vmatmul.mubr.bf16.gmra.mxu0 %v5594
        %v6321 = vpop.f32.mrf.mxu0
        %v6322 = vadd.f32 %v6033, %v6321
        %v6323 = vpop.f32.mrf.mxu0
        %v6324 = vpop.f32.mrf.mxu0
        %v6325 = vadd.f32 %v6036, %v6324
        %v6326 = vpop.f32.mrf.mxu0
        %6327 = vmatprep.mubr.bf16.mxu0 0
        %6328 = vmatmul.mubr.bf16.gmra.mxu0 %v5597
        %v6329 = vpop.f32.mrf.mxu0
        %v6330 = vadd.f32 %v6041, %v6329
        %v6331 = vpop.f32.mrf.mxu0
        %v6332 = vpop.f32.mrf.mxu0
        %v6333 = vadd.f32 %v6044, %v6332
        %v6334 = vpop.f32.mrf.mxu0
        %6335 = vmatprep.mubr.bf16.mxu0 0
        %6336 = vmatmul.mubr.bf16.gmra.mxu0 %v5600
        %v6337 = vpop.f32.mrf.mxu0
        %v6338 = vadd.f32 %v6049, %v6337
        %v6339 = vpop.f32.mrf.mxu0
        %v6340 = vpop.f32.mrf.mxu0
        %v6341 = vadd.f32 %v6052, %v6340
        %v6342 = vpop.f32.mrf.mxu0
        %6343 = vmatprep.mubr.bf16.mxu0 0
        %6344 = vmatmul.mubr.bf16.gmra.mxu0 %v5603
        %v6345 = vpop.f32.mrf.mxu0
        %v6346 = vadd.f32 %v6057, %v6345
        %v6347 = vpop.f32.mrf.mxu0
        %v6348 = vpop.f32.mrf.mxu0
        %v6349 = vadd.f32 %v6060, %v6348
        %v6350 = vpop.f32.mrf.mxu0
        %6351 = vmatprep.mubr.bf16.mxu0 0
        %6352 = vmatmul.mubr.bf16.gmra.mxu0 %v5606
        %v6353 = vpop.f32.mrf.mxu0
        %v6354 = vadd.f32 %v6065, %v6353
        %v6355 = vpop.f32.mrf.mxu0
        %v6356 = vpop.f32.mrf.mxu0
        %v6357 = vadd.f32 %v6068, %v6356
        %v6358 = vpop.f32.mrf.mxu0
        %6359 = vmatprep.mubr.bf16.mxu0 0
        %6360 = vmatmul.mubr.bf16.gmra.mxu0 %v5609
        %v6361 = vpop.f32.mrf.mxu0
        %v6362 = vadd.f32 %v6073, %v6361
        %v6363 = vpop.f32.mrf.mxu0
        %v6364 = vpop.f32.mrf.mxu0
        %v6365 = vadd.f32 %v6076, %v6364
        %v6366 = vpop.f32.mrf.mxu0
        %6367 = vmatprep.mubr.bf16.mxu0 0
        %6368 = vmatmul.mubr.bf16.gmra.mxu0 %v5612
        %v6369 = vpop.f32.mrf.mxu0
        %v6370 = vadd.f32 %v6081, %v6369
        %v6371 = vpop.f32.mrf.mxu0
        %v6372 = vpop.f32.mrf.mxu0
        %v6373 = vadd.f32 %v6084, %v6372
        %v6374 = vpop.f32.mrf.mxu0
        %6375 = vmatprep.mubr.bf16.mxu0 0
        %6376 = vmatmul.mubr.bf16.gmra.mxu0 %v5615
        %v6377 = vpop.f32.mrf.mxu0
        %v6378 = vadd.f32 %v6089, %v6377
        %v6379 = vpop.f32.mrf.mxu0
        %v6380 = vpop.f32.mrf.mxu0
        %v6381 = vadd.f32 %v6092, %v6380
        %v6382 = vpop.f32.mrf.mxu0
        %6383 = vmatprep.mubr.bf16.mxu0 0
        %6384 = vmatmul.mubr.bf16.gmra.mxu0 %v5618
        %v6385 = vpop.f32.mrf.mxu0
        %v6386 = vadd.f32 %v6097, %v6385
        %v6387 = vpop.f32.mrf.mxu0
        %v6388 = vpop.f32.mrf.mxu0
        %v6389 = vadd.f32 %v6100, %v6388
        %v6390 = vpop.f32.mrf.mxu0
        %6391 = vmatprep.mubr.bf16.mxu0 0
        %6392 = vmatmul.mubr.bf16.gmra.mxu0 %v5621
        %v6393 = vpop.f32.mrf.mxu0
        %v6394 = vadd.f32 %v6105, %v6393
        %v6395 = vpop.f32.mrf.mxu0
        %v6396 = vpop.f32.mrf.mxu0
        %v6397 = vadd.f32 %v6108, %v6396
        %v6398 = vpop.f32.mrf.mxu0
        %6399 = vmatprep.mubr.bf16.mxu0 0
        %6400 = vmatmul.mubr.bf16.gmra.mxu0 %v5624
        %v6401 = vpop.f32.mrf.mxu0
        %v6402 = vadd.f32 %v6113, %v6401
        %v6403 = vpop.f32.mrf.mxu0
        %v6404 = vpop.f32.mrf.mxu0
        %v6405 = vadd.f32 %v6116, %v6404
        %v6406 = vpop.f32.mrf.mxu0
        %6407 = vmatprep.mubr.bf16.mxu0 0
        %6408 = vmatmul.mubr.bf16.gmra.mxu0 %v5627
        %v6409 = vpop.f32.mrf.mxu0
        %v6410 = vadd.f32 %v6121, %v6409
        %v6411 = vpop.f32.mrf.mxu0
        %v6412 = vpop.f32.mrf.mxu0
        %v6413 = vadd.f32 %v6124, %v6412
        %v6414 = vpop.f32.mrf.mxu0
        %6415 = vmatprep.mubr.bf16.mxu0 0
        %6416 = vmatmul.mubr.bf16.gmra.mxu0 %v5630
        %v6417 = vpop.f32.mrf.mxu0
        %v6418 = vadd.f32 %v6129, %v6417
        %v6419 = vpop.f32.mrf.mxu0
        %v6420 = vpop.f32.mrf.mxu0
        %v6421 = vadd.f32 %v6132, %v6420
        %v6422 = vpop.f32.mrf.mxu0
        %6423 = vmatprep.mubr.bf16.mxu0 0
        %6424 = vmatmul.mubr.bf16.gmra.mxu0 %v5633
        %v6425 = vpop.f32.mrf.mxu0
        %v6426 = vadd.f32 %v6137, %v6425
        %v6427 = vpop.f32.mrf.mxu0
        %v6428 = vpop.f32.mrf.mxu0
        %v6429 = vadd.f32 %v6140, %v6428
        %v6430 = vpop.f32.mrf.mxu0
        %6431 = vmatprep.mubr.bf16.mxu0 0
        %6432 = vmatmul.mubr.bf16.gmra.mxu0 %v5636
        %v6433 = vpop.f32.mrf.mxu0
        %v6434 = vadd.f32 %v6145, %v6433
        %v6435 = vpop.f32.mrf.mxu0
        %v6436 = vpop.f32.mrf.mxu0
        %v6437 = vadd.f32 %v6148, %v6436
        %v6438 = vpop.f32.mrf.mxu0
        %6439 = vmatprep.mubr.bf16.mxu0 0
        %6440 = vmatmul.mubr.bf16.gmra.mxu0 %v5639
        %v6441 = vpop.f32.mrf.mxu0
        %v6442 = vadd.f32 %v6153, %v6441
        %v6443 = vpop.f32.mrf.mxu0
        %v6444 = vpop.f32.mrf.mxu0
        %v6445 = vadd.f32 %v6156, %v6444
        %v6446 = vpop.f32.mrf.mxu0
        %6447 = vmatprep.mubr.bf16.mxu0 0
        %6448 = vmatmul.mubr.bf16.gmra.mxu0 %v5642
        %v6449 = vpop.f32.mrf.mxu0
        %v6450 = vadd.f32 %v6161, %v6449
        %v6451 = vpop.f32.mrf.mxu0
        %v6452 = vpop.f32.mrf.mxu0
        %v6453 = vadd.f32 %v6164, %v6452
        %v6454 = vpop.f32.mrf.mxu0
        %6455 = vmatprep.mubr.bf16.mxu0 0
        %6456 = vmatmul.mubr.bf16.gmra.mxu0 %v5645
        %v6457 = vpop.f32.mrf.mxu0
        %v6458 = vadd.f32 %v6169, %v6457
        %v6459 = vpop.f32.mrf.mxu0
        %v6460 = vpop.f32.mrf.mxu0
        %v6461 = vadd.f32 %v6172, %v6460
        %v6462 = vpop.f32.mrf.mxu0
        %6463 = vdwg.mxu0
        %v6464 = vadd.f32 %v4799, %v6210
        %v6465 = vadd.f32 %v4802, %v6213
        %v6466 = vadd.f32 %v4807, %v6218
        %v6467 = vadd.f32 %v4810, %v6221
        %v6468 = vadd.f32 %v4815, %v6226
        %v6469 = vadd.f32 %v4818, %v6229
        %v6470 = vadd.f32 %v4823, %v6234
        %v6471 = vadd.f32 %v4826, %v6237
        %v6472 = vadd.f32 %v4831, %v6242
        %v6473 = vadd.f32 %v4834, %v6245
        %v6474 = vadd.f32 %v4839, %v6250
        %v6475 = vadd.f32 %v4842, %v6253
        %v6476 = vadd.f32 %v4847, %v6258
        %v6477 = vadd.f32 %v4850, %v6261
        %v6478 = vadd.f32 %v4855, %v6266
        %v6479 = vadd.f32 %v4858, %v6269
        %v6480 = vadd.f32 %v4863, %v6274
        %v6481 = vadd.f32 %v4866, %v6277
        %v6482 = vadd.f32 %v4871, %v6282
        %v6483 = vadd.f32 %v4874, %v6285
        %v6484 = vadd.f32 %v4879, %v6290
        %v6485 = vadd.f32 %v4882, %v6293
        %v6486 = vadd.f32 %v4887, %v6298
        %v6487 = vadd.f32 %v4890, %v6301
        %v6488 = vadd.f32 %v4895, %v6306
        %v6489 = vadd.f32 %v4898, %v6309
        %v6490 = vadd.f32 %v4903, %v6314
        %v6491 = vadd.f32 %v4906, %v6317
        %v6492 = vadd.f32 %v4911, %v6322
        %v6493 = vadd.f32 %v4914, %v6325
        %v6494 = vadd.f32 %v4919, %v6330
        %v6495 = vadd.f32 %v4922, %v6333
        %v6496 = vadd.f32 %v4927, %v6338
        %v6497 = vadd.f32 %v4930, %v6341
        %v6498 = vadd.f32 %v4935, %v6346
        %v6499 = vadd.f32 %v4938, %v6349
        %v6500 = vadd.f32 %v4943, %v6354
        %v6501 = vadd.f32 %v4946, %v6357
        %v6502 = vadd.f32 %v4951, %v6362
        %v6503 = vadd.f32 %v4954, %v6365
        %v6504 = vadd.f32 %v4959, %v6370
        %v6505 = vadd.f32 %v4962, %v6373
        %v6506 = vadd.f32 %v4967, %v6378
        %v6507 = vadd.f32 %v4970, %v6381
        %v6508 = vadd.f32 %v4975, %v6386
        %v6509 = vadd.f32 %v4978, %v6389
        %v6510 = vadd.f32 %v4983, %v6394
        %v6511 = vadd.f32 %v4986, %v6397
        %v6512 = vadd.f32 %v4991, %v6402
        %v6513 = vadd.f32 %v4994, %v6405
        %v6514 = vadd.f32 %v4999, %v6410
        %v6515 = vadd.f32 %v5002, %v6413
        %v6516 = vadd.f32 %v5007, %v6418
        %v6517 = vadd.f32 %v5010, %v6421
        %v6518 = vadd.f32 %v5015, %v6426
        %v6519 = vadd.f32 %v5018, %v6429
        %v6520 = vadd.f32 %v5023, %v6434
        %v6521 = vadd.f32 %v5026, %v6437
        %v6522 = vadd.f32 %v5031, %v6442
        %v6523 = vadd.f32 %v5034, %v6445
        %v6524 = vadd.f32 %v5039, %v6450
        %v6525 = vadd.f32 %v5042, %v6453
        %v6526 = vadd.f32 %v5047, %v6458
        %v6527 = vadd.f32 %v5050, %v6461
        %v6528 = vld [vmem:[%s4] sm:$0x1]
        %v6530 = vlaneseq
        %v6531 = vshrl.u32 %v6530, 7
        %v6532 = vsub.s32 0, %v6531
        %v6533 = vrot.slane %v6528, %v6532
        %v6535 = vadd.f32 %v6464, %v6533
        %v6536 = vadd.f32 %v6465, %v6533
        %v6537 = vadd.f32 %v6466, %v6533
        %v6538 = vadd.f32 %v6467, %v6533
        %v6539 = vadd.f32 %v6468, %v6533
        %v6540 = vadd.f32 %v6469, %v6533
        %v6541 = vadd.f32 %v6470, %v6533
        %v6542 = vadd.f32 %v6471, %v6533
        %v6543 = vadd.f32 %v6472, %v6533
        %v6544 = vadd.f32 %v6473, %v6533
        %v6545 = vadd.f32 %v6474, %v6533
        %v6546 = vadd.f32 %v6475, %v6533
        %v6547 = vadd.f32 %v6476, %v6533
        %v6548 = vadd.f32 %v6477, %v6533
        %v6549 = vadd.f32 %v6478, %v6533
        %v6550 = vadd.f32 %v6479, %v6533
        %v6551 = vadd.f32 %v6480, %v6533
        %v6552 = vadd.f32 %v6481, %v6533
        %v6553 = vadd.f32 %v6482, %v6533
        %v6554 = vadd.f32 %v6483, %v6533
        %v6555 = vadd.f32 %v6484, %v6533
        %v6556 = vadd.f32 %v6485, %v6533
        %v6557 = vadd.f32 %v6486, %v6533
        %v6558 = vadd.f32 %v6487, %v6533
        %v6559 = vadd.f32 %v6488, %v6533
        %v6560 = vadd.f32 %v6489, %v6533
        %v6561 = vadd.f32 %v6490, %v6533
        %v6562 = vadd.f32 %v6491, %v6533
        %v6563 = vadd.f32 %v6492, %v6533
        %v6564 = vadd.f32 %v6493, %v6533
        %v6565 = vadd.f32 %v6494, %v6533
        %v6566 = vadd.f32 %v6495, %v6533
        %v6567 = vadd.f32 %v6496, %v6533
        %v6568 = vadd.f32 %v6497, %v6533
        %v6569 = vadd.f32 %v6498, %v6533
        %v6570 = vadd.f32 %v6499, %v6533
        %v6571 = vadd.f32 %v6500, %v6533
        %v6572 = vadd.f32 %v6501, %v6533
        %v6573 = vadd.f32 %v6502, %v6533
        %v6574 = vadd.f32 %v6503, %v6533
        %v6575 = vadd.f32 %v6504, %v6533
        %v6576 = vadd.f32 %v6505, %v6533
        %v6577 = vadd.f32 %v6506, %v6533
        %v6578 = vadd.f32 %v6507, %v6533
        %v6579 = vadd.f32 %v6508, %v6533
        %v6580 = vadd.f32 %v6509, %v6533
        %v6581 = vadd.f32 %v6510, %v6533
        %v6582 = vadd.f32 %v6511, %v6533
        %v6583 = vadd.f32 %v6512, %v6533
        %v6584 = vadd.f32 %v6513, %v6533
        %v6585 = vadd.f32 %v6514, %v6533
        %v6586 = vadd.f32 %v6515, %v6533
        %v6587 = vadd.f32 %v6516, %v6533
        %v6588 = vadd.f32 %v6517, %v6533
        %v6589 = vadd.f32 %v6518, %v6533
        %v6590 = vadd.f32 %v6519, %v6533
        %v6591 = vadd.f32 %v6520, %v6533
        %v6592 = vadd.f32 %v6521, %v6533
        %v6593 = vadd.f32 %v6522, %v6533
        %v6594 = vadd.f32 %v6523, %v6533
        %v6595 = vadd.f32 %v6524, %v6533
        %v6596 = vadd.f32 %v6525, %v6533
        %v6597 = vadd.f32 %v6526, %v6533
        %v6598 = vadd.f32 %v6527, %v6533
        %v6599 = vmax.f32 %v6535, 0.0
        %v6600 = vmax.f32 %v6536, 0.0
        %v6601 = vmax.f32 %v6537, 0.0
        %v6602 = vmax.f32 %v6538, 0.0
        %v6603 = vmax.f32 %v6539, 0.0
        %v6604 = vmax.f32 %v6540, 0.0
        %v6605 = vmax.f32 %v6541, 0.0
        %v6606 = vmax.f32 %v6542, 0.0
        %v6607 = vmax.f32 %v6543, 0.0
        %v6608 = vmax.f32 %v6544, 0.0
        %v6609 = vmax.f32 %v6545, 0.0
        %v6610 = vmax.f32 %v6546, 0.0
        %v6611 = vmax.f32 %v6547, 0.0
        %v6612 = vmax.f32 %v6548, 0.0
        %v6613 = vmax.f32 %v6549, 0.0
        %v6614 = vmax.f32 %v6550, 0.0
        %v6615 = vmax.f32 %v6551, 0.0
        %v6616 = vmax.f32 %v6552, 0.0
        %v6617 = vmax.f32 %v6553, 0.0
        %v6618 = vmax.f32 %v6554, 0.0
        %v6619 = vmax.f32 %v6555, 0.0
        %v6620 = vmax.f32 %v6556, 0.0
        %v6621 = vmax.f32 %v6557, 0.0
        %v6622 = vmax.f32 %v6558, 0.0
        %v6623 = vmax.f32 %v6559, 0.0
        %v6624 = vmax.f32 %v6560, 0.0
        %v6625 = vmax.f32 %v6561, 0.0
        %v6626 = vmax.f32 %v6562, 0.0
        %v6627 = vmax.f32 %v6563, 0.0
        %v6628 = vmax.f32 %v6564, 0.0
        %v6629 = vmax.f32 %v6565, 0.0
        %v6630 = vmax.f32 %v6566, 0.0
        %v6631 = vmax.f32 %v6567, 0.0
        %v6632 = vmax.f32 %v6568, 0.0
        %v6633 = vmax.f32 %v6569, 0.0
        %v6634 = vmax.f32 %v6570, 0.0
        %v6635 = vmax.f32 %v6571, 0.0
        %v6636 = vmax.f32 %v6572, 0.0
        %v6637 = vmax.f32 %v6573, 0.0
        %v6638 = vmax.f32 %v6574, 0.0
        %v6639 = vmax.f32 %v6575, 0.0
        %v6640 = vmax.f32 %v6576, 0.0
        %v6641 = vmax.f32 %v6577, 0.0
        %v6642 = vmax.f32 %v6578, 0.0
        %v6643 = vmax.f32 %v6579, 0.0
        %v6644 = vmax.f32 %v6580, 0.0
        %v6645 = vmax.f32 %v6581, 0.0
        %v6646 = vmax.f32 %v6582, 0.0
        %v6647 = vmax.f32 %v6583, 0.0
        %v6648 = vmax.f32 %v6584, 0.0
        %v6649 = vmax.f32 %v6585, 0.0
        %v6650 = vmax.f32 %v6586, 0.0
        %v6651 = vmax.f32 %v6587, 0.0
        %v6652 = vmax.f32 %v6588, 0.0
        %v6653 = vmax.f32 %v6589, 0.0
        %v6654 = vmax.f32 %v6590, 0.0
        %v6655 = vmax.f32 %v6591, 0.0
        %v6656 = vmax.f32 %v6592, 0.0
        %v6657 = vmax.f32 %v6593, 0.0
        %v6658 = vmax.f32 %v6594, 0.0
        %v6659 = vmax.f32 %v6595, 0.0
        %v6660 = vmax.f32 %v6596, 0.0
        %v6661 = vmax.f32 %v6597, 0.0
        %v6662 = vmax.f32 %v6598, 0.0
        %v6663 = vpack.c.bf16 %v6600, %v6599
        %v6664 = vpack.c.bf16 %v6602, %v6601
        %v6665 = vpack.c.bf16 %v6604, %v6603
        %v6666 = vpack.c.bf16 %v6606, %v6605
        %v6667 = vpack.c.bf16 %v6608, %v6607
        %v6668 = vpack.c.bf16 %v6610, %v6609
        %v6669 = vpack.c.bf16 %v6612, %v6611
        %v6670 = vpack.c.bf16 %v6614, %v6613
        %v6671 = vpack.c.bf16 %v6616, %v6615
        %v6672 = vpack.c.bf16 %v6618, %v6617
        %v6673 = vpack.c.bf16 %v6620, %v6619
        %v6674 = vpack.c.bf16 %v6622, %v6621
        %v6675 = vpack.c.bf16 %v6624, %v6623
        %v6676 = vpack.c.bf16 %v6626, %v6625
        %v6677 = vpack.c.bf16 %v6628, %v6627
        %v6678 = vpack.c.bf16 %v6630, %v6629
        %v6679 = vpack.c.bf16 %v6632, %v6631
        %v6680 = vpack.c.bf16 %v6634, %v6633
        %v6681 = vpack.c.bf16 %v6636, %v6635
        %v6682 = vpack.c.bf16 %v6638, %v6637
        %v6683 = vpack.c.bf16 %v6640, %v6639
        %v6684 = vpack.c.bf16 %v6642, %v6641
        %v6685 = vpack.c.bf16 %v6644, %v6643
        %v6686 = vpack.c.bf16 %v6646, %v6645
        %v6687 = vpack.c.bf16 %v6648, %v6647
        %v6688 = vpack.c.bf16 %v6650, %v6649
        %v6689 = vpack.c.bf16 %v6652, %v6651
        %v6690 = vpack.c.bf16 %v6654, %v6653
        %v6691 = vpack.c.bf16 %v6656, %v6655
        %v6692 = vpack.c.bf16 %v6658, %v6657
        %v6693 = vpack.c.bf16 %v6660, %v6659
        %v6694 = vpack.c.bf16 %v6662, %v6661
        %v6695 = vld [vmem:[#allocation9] sm:$0xf]
        %v6696 = vld [vmem:[#allocation9 + $0x4] sm:$0xf]
        %v6697 = vld [vmem:[#allocation9 + $0x8] sm:$0xf]
        %v6698 = vld [vmem:[#allocation9 + $0xc] sm:$0xf]
        %v6699 = vld [vmem:[#allocation9 + $0x10] sm:$0xf]
        %v6700 = vld [vmem:[#allocation9 + $0x14] sm:$0xf]
        %v6701 = vld [vmem:[#allocation9 + $0x18] sm:$0xf]
        %v6702 = vld [vmem:[#allocation9 + $0x1c] sm:$0xf]
        %v6703 = vld [vmem:[#allocation9 + $0x20] sm:$0xf]
        %v6704 = vld [vmem:[#allocation9 + $0x24] sm:$0xf]
        %v6705 = vld [vmem:[#allocation9 + $0x28] sm:$0xf]
        %v6706 = vld [vmem:[#allocation9 + $0x2c] sm:$0xf]
        %v6707 = vld [vmem:[#allocation9 + $0x30] sm:$0xf]
        %v6708 = vld [vmem:[#allocation9 + $0x34] sm:$0xf]
        %v6709 = vld [vmem:[#allocation9 + $0x38] sm:$0xf]
        %v6710 = vld [vmem:[#allocation9 + $0x3c] sm:$0xf]
        %v6711 = vld [vmem:[%s6] sm:$0x1]
        %v6713 = vlaneseq
        %v6714 = vshrl.u32 %v6713, 7
        %v6715 = vsub.s32 0, %v6714
        %v6716 = vrot.slane %v6711, %v6715
        %v6734 = vunpack.c.l.b16 %v6695
        %v6735 = vunpack.c.l.b16 %v6696
        %v6736 = vunpack.c.l.b16 %v6697
        %v6737 = vunpack.c.l.b16 %v6698
        %v6738 = vunpack.c.l.b16 %v6699
        %v6739 = vunpack.c.l.b16 %v6700
        %v6740 = vunpack.c.l.b16 %v6701
        %v6741 = vunpack.c.l.b16 %v6702
        %v6742 = vunpack.c.l.b16 %v6703
        %v6743 = vunpack.c.l.b16 %v6704
        %v6744 = vunpack.c.l.b16 %v6705
        %v6745 = vunpack.c.l.b16 %v6706
        %v6746 = vunpack.c.l.b16 %v6707
        %v6747 = vunpack.c.l.b16 %v6708
        %v6748 = vunpack.c.l.b16 %v6709
        %v6749 = vunpack.c.l.b16 %v6710
        %v6750 = vpack.c.b16 %v6735, %v6734
        %v6751 = vpack.c.b16 %v6737, %v6736
        %v6752 = vpack.c.b16 %v6739, %v6738
        %v6753 = vpack.c.b16 %v6741, %v6740
        %v6754 = vpack.c.b16 %v6743, %v6742
        %v6755 = vpack.c.b16 %v6745, %v6744
        %v6756 = vpack.c.b16 %v6747, %v6746
        %v6757 = vpack.c.b16 %v6749, %v6748
        %6766 = vmatprep.subr.bf16.mxu0 0
        %6767 = vmatpush1.bf16.msra.mxu0 %v6757
        %6768 = vmatprep.subr.bf16.mxu0 0
        %6769 = vmatpush1.bf16.msra.mxu0 %v6756
        %6770 = vmatprep.subr.bf16.mxu0 0
        %6771 = vmatpush1.bf16.msra.mxu0 %v6755
        %6772 = vmatprep.subr.bf16.mxu0 0
        %6773 = vmatpush1.bf16.msra.mxu0 %v6754
        %6774 = vmatprep.subr.bf16.mxu0 0
        %6775 = vmatpush1.bf16.msra.mxu0 %v6753
        %6776 = vmatprep.subr.bf16.mxu0 0
        %6777 = vmatpush1.bf16.msra.mxu0 %v6752
        %6778 = vmatprep.subr.bf16.mxu0 0
        %6779 = vmatpush1.bf16.msra.mxu0 %v6751
        %6780 = vmatprep.subr.bf16.mxu0 0
        %6781 = vmatpush1.bf16.msra.mxu0 %v6750
        %6782 = vmatprep.subr.bf16.mxu0 0
        %6783 = vmatpush2.bf16.msra.mxu0 0
        %6784 = vmatprep.subr.bf16.mxu0 0
        %6785 = vmatpush2.bf16.msra.mxu0 0
        %6786 = vmatprep.subr.bf16.mxu0 0
        %6787 = vmatpush2.bf16.msra.mxu0 0
        %6788 = vmatprep.subr.bf16.mxu0 0
        %6789 = vmatpush2.bf16.msra.mxu0 0
        %6790 = vmatprep.subr.bf16.mxu0 0
        %6791 = vmatpush2.bf16.msra.mxu0 0
        %6792 = vmatprep.subr.bf16.mxu0 0
        %6793 = vmatpush2.bf16.msra.mxu0 0
        %6794 = vmatprep.subr.bf16.mxu0 0
        %6795 = vmatpush2.bf16.msra.mxu0 0
        %6796 = vmatprep.subr.bf16.mxu0 0
        %6797 = vmatpush2.bf16.msra.mxu0 0
        %6798 = vmatprep.mubr.bf16.mxu0 0
        %6799 = vmatmul.mubr.bf16.gmra.mxu0 %v6663
        %v6800 = vpop.f32.mrf.mxu0
        %v6801 = vadd.f32 %v6716, %v6800
        %v6802 = vpop.f32.mrf.mxu0
        %v6803 = vpop.f32.mrf.mxu0
        %v6804 = vadd.f32 %v6716, %v6803
        %v6805 = vpop.f32.mrf.mxu0
        %6806 = vmatprep.mubr.bf16.mxu0 0
        %6807 = vmatmul.mubr.bf16.gmra.mxu0 %v6664
        %v6808 = vpop.f32.mrf.mxu0
        %v6809 = vpop.f32.mrf.mxu0
        %v6810 = vpop.f32.mrf.mxu0
        %v6811 = vpop.f32.mrf.mxu0
        %6812 = vmatprep.mubr.bf16.mxu0 0
        %6813 = vmatmul.mubr.bf16.gmra.mxu0 %v6665
        %v6814 = vpop.f32.mrf.mxu0
        %v6815 = vadd.f32 %v6716, %v6814
        %v6816 = vpop.f32.mrf.mxu0
        %v6817 = vpop.f32.mrf.mxu0
        %v6818 = vadd.f32 %v6716, %v6817
        %v6819 = vpop.f32.mrf.mxu0
        %6820 = vmatprep.mubr.bf16.mxu0 0
        %6821 = vmatmul.mubr.bf16.gmra.mxu0 %v6666
        %v6822 = vpop.f32.mrf.mxu0
        %v6823 = vpop.f32.mrf.mxu0
        %v6824 = vpop.f32.mrf.mxu0
        %v6825 = vpop.f32.mrf.mxu0
        %6826 = vmatprep.mubr.bf16.mxu0 0
        %6827 = vmatmul.mubr.bf16.gmra.mxu0 %v6667
        %v6828 = vpop.f32.mrf.mxu0
        %v6829 = vadd.f32 %v6716, %v6828
        %v6830 = vpop.f32.mrf.mxu0
        %v6831 = vpop.f32.mrf.mxu0
        %v6832 = vadd.f32 %v6716, %v6831
        %v6833 = vpop.f32.mrf.mxu0
        %6834 = vmatprep.mubr.bf16.mxu0 0
        %6835 = vmatmul.mubr.bf16.gmra.mxu0 %v6668
        %v6836 = vpop.f32.mrf.mxu0
        %v6837 = vpop.f32.mrf.mxu0
        %v6838 = vpop.f32.mrf.mxu0
        %v6839 = vpop.f32.mrf.mxu0
        %6840 = vmatprep.mubr.bf16.mxu0 0
        %6841 = vmatmul.mubr.bf16.gmra.mxu0 %v6669
        %v6842 = vpop.f32.mrf.mxu0
        %v6843 = vadd.f32 %v6716, %v6842
        %v6844 = vpop.f32.mrf.mxu0
        %v6845 = vpop.f32.mrf.mxu0
        %v6846 = vadd.f32 %v6716, %v6845
        %v6847 = vpop.f32.mrf.mxu0
        %6848 = vmatprep.mubr.bf16.mxu0 0
        %6849 = vmatmul.mubr.bf16.gmra.mxu0 %v6670
        %v6850 = vpop.f32.mrf.mxu0
        %v6851 = vpop.f32.mrf.mxu0
        %v6852 = vpop.f32.mrf.mxu0
        %v6853 = vpop.f32.mrf.mxu0
        %6854 = vmatprep.mubr.bf16.mxu0 0
        %6855 = vmatmul.mubr.bf16.gmra.mxu0 %v6671
        %v6856 = vpop.f32.mrf.mxu0
        %v6857 = vadd.f32 %v6716, %v6856
        %v6858 = vpop.f32.mrf.mxu0
        %v6859 = vpop.f32.mrf.mxu0
        %v6860 = vadd.f32 %v6716, %v6859
        %v6861 = vpop.f32.mrf.mxu0
        %6862 = vmatprep.mubr.bf16.mxu0 0
        %6863 = vmatmul.mubr.bf16.gmra.mxu0 %v6672
        %v6864 = vpop.f32.mrf.mxu0
        %v6865 = vpop.f32.mrf.mxu0
        %v6866 = vpop.f32.mrf.mxu0
        %v6867 = vpop.f32.mrf.mxu0
        %6868 = vmatprep.mubr.bf16.mxu0 0
        %6869 = vmatmul.mubr.bf16.gmra.mxu0 %v6673
        %v6870 = vpop.f32.mrf.mxu0
        %v6871 = vadd.f32 %v6716, %v6870
        %v6872 = vpop.f32.mrf.mxu0
        %v6873 = vpop.f32.mrf.mxu0
        %v6874 = vadd.f32 %v6716, %v6873
        %v6875 = vpop.f32.mrf.mxu0
        %6876 = vmatprep.mubr.bf16.mxu0 0
        %6877 = vmatmul.mubr.bf16.gmra.mxu0 %v6674
        %v6878 = vpop.f32.mrf.mxu0
        %v6879 = vpop.f32.mrf.mxu0
        %v6880 = vpop.f32.mrf.mxu0
        %v6881 = vpop.f32.mrf.mxu0
        %6882 = vmatprep.mubr.bf16.mxu0 0
        %6883 = vmatmul.mubr.bf16.gmra.mxu0 %v6675
        %v6884 = vpop.f32.mrf.mxu0
        %v6885 = vadd.f32 %v6716, %v6884
        %v6886 = vpop.f32.mrf.mxu0
        %v6887 = vpop.f32.mrf.mxu0
        %v6888 = vadd.f32 %v6716, %v6887
        %v6889 = vpop.f32.mrf.mxu0
        %6890 = vmatprep.mubr.bf16.mxu0 0
        %6891 = vmatmul.mubr.bf16.gmra.mxu0 %v6676
        %v6892 = vpop.f32.mrf.mxu0
        %v6893 = vpop.f32.mrf.mxu0
        %v6894 = vpop.f32.mrf.mxu0
        %v6895 = vpop.f32.mrf.mxu0
        %6896 = vmatprep.mubr.bf16.mxu0 0
        %6897 = vmatmul.mubr.bf16.gmra.mxu0 %v6677
        %v6898 = vpop.f32.mrf.mxu0
        %v6899 = vadd.f32 %v6716, %v6898
        %v6900 = vpop.f32.mrf.mxu0
        %v6901 = vpop.f32.mrf.mxu0
        %v6902 = vadd.f32 %v6716, %v6901
        %v6903 = vpop.f32.mrf.mxu0
        %6904 = vmatprep.mubr.bf16.mxu0 0
        %6905 = vmatmul.mubr.bf16.gmra.mxu0 %v6678
        %v6906 = vpop.f32.mrf.mxu0
        %v6907 = vpop.f32.mrf.mxu0
        %v6908 = vpop.f32.mrf.mxu0
        %v6909 = vpop.f32.mrf.mxu0
        %6910 = vmatprep.mubr.bf16.mxu0 0
        %6911 = vmatmul.mubr.bf16.gmra.mxu0 %v6679
        %v6912 = vpop.f32.mrf.mxu0
        %v6913 = vadd.f32 %v6716, %v6912
        %v6914 = vpop.f32.mrf.mxu0
        %v6915 = vpop.f32.mrf.mxu0
        %v6916 = vadd.f32 %v6716, %v6915
        %v6917 = vpop.f32.mrf.mxu0
        %6918 = vmatprep.mubr.bf16.mxu0 0
        %6919 = vmatmul.mubr.bf16.gmra.mxu0 %v6680
        %v6920 = vpop.f32.mrf.mxu0
        %v6921 = vpop.f32.mrf.mxu0
        %v6922 = vpop.f32.mrf.mxu0
        %v6923 = vpop.f32.mrf.mxu0
        %6924 = vmatprep.mubr.bf16.mxu0 0
        %6925 = vmatmul.mubr.bf16.gmra.mxu0 %v6681
        %v6926 = vpop.f32.mrf.mxu0
        %v6927 = vadd.f32 %v6716, %v6926
        %v6928 = vpop.f32.mrf.mxu0
        %v6929 = vpop.f32.mrf.mxu0
        %v6930 = vadd.f32 %v6716, %v6929
        %v6931 = vpop.f32.mrf.mxu0
        %6932 = vmatprep.mubr.bf16.mxu0 0
        %6933 = vmatmul.mubr.bf16.gmra.mxu0 %v6682
        %v6934 = vpop.f32.mrf.mxu0
        %v6935 = vpop.f32.mrf.mxu0
        %v6936 = vpop.f32.mrf.mxu0
        %v6937 = vpop.f32.mrf.mxu0
        %6938 = vmatprep.mubr.bf16.mxu0 0
        %6939 = vmatmul.mubr.bf16.gmra.mxu0 %v6683
        %v6940 = vpop.f32.mrf.mxu0
        %v6941 = vadd.f32 %v6716, %v6940
        %v6942 = vpop.f32.mrf.mxu0
        %v6943 = vpop.f32.mrf.mxu0
        %v6944 = vadd.f32 %v6716, %v6943
        %v6945 = vpop.f32.mrf.mxu0
        %6946 = vmatprep.mubr.bf16.mxu0 0
        %6947 = vmatmul.mubr.bf16.gmra.mxu0 %v6684
        %v6948 = vpop.f32.mrf.mxu0
        %v6949 = vpop.f32.mrf.mxu0
        %v6950 = vpop.f32.mrf.mxu0
        %v6951 = vpop.f32.mrf.mxu0
        %6952 = vmatprep.mubr.bf16.mxu0 0
        %6953 = vmatmul.mubr.bf16.gmra.mxu0 %v6685
        %v6954 = vpop.f32.mrf.mxu0
        %v6955 = vadd.f32 %v6716, %v6954
        %v6956 = vpop.f32.mrf.mxu0
        %v6957 = vpop.f32.mrf.mxu0
        %v6958 = vadd.f32 %v6716, %v6957
        %v6959 = vpop.f32.mrf.mxu0
        %6960 = vmatprep.mubr.bf16.mxu0 0
        %6961 = vmatmul.mubr.bf16.gmra.mxu0 %v6686
        %v6962 = vpop.f32.mrf.mxu0
        %v6963 = vpop.f32.mrf.mxu0
        %v6964 = vpop.f32.mrf.mxu0
        %v6965 = vpop.f32.mrf.mxu0
        %6966 = vmatprep.mubr.bf16.mxu0 0
        %6967 = vmatmul.mubr.bf16.gmra.mxu0 %v6687
        %v6968 = vpop.f32.mrf.mxu0
        %v6969 = vadd.f32 %v6716, %v6968
        %v6970 = vpop.f32.mrf.mxu0
        %v6971 = vpop.f32.mrf.mxu0
        %v6972 = vadd.f32 %v6716, %v6971
        %v6973 = vpop.f32.mrf.mxu0
        %6974 = vmatprep.mubr.bf16.mxu0 0
        %6975 = vmatmul.mubr.bf16.gmra.mxu0 %v6688
        %v6976 = vpop.f32.mrf.mxu0
        %v6977 = vpop.f32.mrf.mxu0
        %v6978 = vpop.f32.mrf.mxu0
        %v6979 = vpop.f32.mrf.mxu0
        %6980 = vmatprep.mubr.bf16.mxu0 0
        %6981 = vmatmul.mubr.bf16.gmra.mxu0 %v6689
        %v6982 = vpop.f32.mrf.mxu0
        %v6983 = vadd.f32 %v6716, %v6982
        %v6984 = vpop.f32.mrf.mxu0
        %v6985 = vpop.f32.mrf.mxu0
        %v6986 = vadd.f32 %v6716, %v6985
        %v6987 = vpop.f32.mrf.mxu0
        %6988 = vmatprep.mubr.bf16.mxu0 0
        %6989 = vmatmul.mubr.bf16.gmra.mxu0 %v6690
        %v6990 = vpop.f32.mrf.mxu0
        %v6991 = vpop.f32.mrf.mxu0
        %v6992 = vpop.f32.mrf.mxu0
        %v6993 = vpop.f32.mrf.mxu0
        %6994 = vmatprep.mubr.bf16.mxu0 0
        %6995 = vmatmul.mubr.bf16.gmra.mxu0 %v6691
        %v6996 = vpop.f32.mrf.mxu0
        %v6997 = vadd.f32 %v6716, %v6996
        %v6998 = vpop.f32.mrf.mxu0
        %v6999 = vpop.f32.mrf.mxu0
        %v7000 = vadd.f32 %v6716, %v6999
        %v7001 = vpop.f32.mrf.mxu0
        %7002 = vmatprep.mubr.bf16.mxu0 0
        %7003 = vmatmul.mubr.bf16.gmra.mxu0 %v6692
        %v7004 = vpop.f32.mrf.mxu0
        %v7005 = vpop.f32.mrf.mxu0
        %v7006 = vpop.f32.mrf.mxu0
        %v7007 = vpop.f32.mrf.mxu0
        %7008 = vmatprep.mubr.bf16.mxu0 0
        %7009 = vmatmul.mubr.bf16.gmra.mxu0 %v6693
        %v7010 = vpop.f32.mrf.mxu0
        %v7011 = vadd.f32 %v6716, %v7010
        %v7012 = vpop.f32.mrf.mxu0
        %v7013 = vpop.f32.mrf.mxu0
        %v7014 = vadd.f32 %v6716, %v7013
        %v7015 = vpop.f32.mrf.mxu0
        %7016 = vmatprep.mubr.bf16.mxu0 0
        %7017 = vmatmul.mubr.bf16.gmra.mxu0 %v6694
        %v7018 = vpop.f32.mrf.mxu0
        %v7019 = vpop.f32.mrf.mxu0
        %v7020 = vpop.f32.mrf.mxu0
        %v7021 = vpop.f32.mrf.mxu0
        %7022 = vdwg.mxu0
        %s7023 = sadd.s32 %s357, 1
        %s7024 = smul.u32 %s7023, 4
        %s7025 = smul.addr %s7024, 4
        %s7026 = scalar_lea.vmem %s312, %s7025 [#allocation3]
        %v7027 = vld [vmem:[%s7026] sm:$0xf]
        %v7028 = vld [vmem:[%s7026 + $0x4] sm:$0xf]
        %v7029 = vld [vmem:[%s7026 + $0x8] sm:$0xf]
        %v7030 = vld [vmem:[%s7026 + $0x10] sm:$0xf]
        %v7031 = vld [vmem:[%s7026 + $0x14] sm:$0xf]
        %v7032 = vld [vmem:[%s7026 + $0x18] sm:$0xf]
        %v7033 = vld [vmem:[%s7026 + $0x20] sm:$0xf]
        %v7034 = vld [vmem:[%s7026 + $0x24] sm:$0xf]
        %v7035 = vld [vmem:[%s7026 + $0x28] sm:$0xf]
        %v7036 = vld [vmem:[%s7026 + $0x30] sm:$0xf]
        %v7037 = vld [vmem:[%s7026 + $0x34] sm:$0xf]
        %v7038 = vld [vmem:[%s7026 + $0x38] sm:$0xf]
        %v7039 = vld [vmem:[%s7026 + $0x40] sm:$0xf]
        %v7040 = vld [vmem:[%s7026 + $0x44] sm:$0xf]
        %v7041 = vld [vmem:[%s7026 + $0x48] sm:$0xf]
        %v7042 = vld [vmem:[%s7026 + $0x50] sm:$0xf]
        %v7043 = vld [vmem:[%s7026 + $0x54] sm:$0xf]
        %v7044 = vld [vmem:[%s7026 + $0x58] sm:$0xf]
        %v7045 = vld [vmem:[%s7026 + $0x60] sm:$0xf]
        %v7046 = vld [vmem:[%s7026 + $0x64] sm:$0xf]
        %v7047 = vld [vmem:[%s7026 + $0x68] sm:$0xf]
        %v7048 = vld [vmem:[%s7026 + $0x70] sm:$0xf]
        %v7049 = vld [vmem:[%s7026 + $0x74] sm:$0xf]
        %v7050 = vld [vmem:[%s7026 + $0x78] sm:$0xf]
        %v7051 = vld [vmem:[%s7026 + $0x80] sm:$0xf]
        %v7052 = vld [vmem:[%s7026 + $0x84] sm:$0xf]
        %v7053 = vld [vmem:[%s7026 + $0x88] sm:$0xf]
        %v7054 = vld [vmem:[%s7026 + $0x90] sm:$0xf]
        %v7055 = vld [vmem:[%s7026 + $0x94] sm:$0xf]
        %v7056 = vld [vmem:[%s7026 + $0x98] sm:$0xf]
        %v7057 = vld [vmem:[%s7026 + $0xa0] sm:$0xf]
        %v7058 = vld [vmem:[%s7026 + $0xa4] sm:$0xf]
        %v7059 = vld [vmem:[%s7026 + $0xa8] sm:$0xf]
        %v7060 = vld [vmem:[%s7026 + $0xb0] sm:$0xf]
        %v7061 = vld [vmem:[%s7026 + $0xb4] sm:$0xf]
        %v7062 = vld [vmem:[%s7026 + $0xb8] sm:$0xf]
        %v7063 = vld [vmem:[%s7026 + $0xc0] sm:$0xf]
        %v7064 = vld [vmem:[%s7026 + $0xc4] sm:$0xf]
        %v7065 = vld [vmem:[%s7026 + $0xc8] sm:$0xf]
        %v7066 = vld [vmem:[%s7026 + $0xd0] sm:$0xf]
        %v7067 = vld [vmem:[%s7026 + $0xd4] sm:$0xf]
        %v7068 = vld [vmem:[%s7026 + $0xd8] sm:$0xf]
        %v7069 = vld [vmem:[%s7026 + $0xe0] sm:$0xf]
        %v7070 = vld [vmem:[%s7026 + $0xe4] sm:$0xf]
        %v7071 = vld [vmem:[%s7026 + $0xe8] sm:$0xf]
        %v7072 = vld [vmem:[%s7026 + $0xf0] sm:$0xf]
        %v7073 = vld [vmem:[%s7026 + $0xf4] sm:$0xf]
        %v7074 = vld [vmem:[%s7026 + $0xf8] sm:$0xf]
        %v7075 = vunpack.c.l.bf16 %v7027
        %v7076 = vunpack.c.l.bf16 %v7028
        %v7077 = vunpack.c.l.bf16 %v7029
        %v7078 = vunpack.c.l.bf16 %v7030
        %v7079 = vunpack.c.l.bf16 %v7031
        %v7080 = vunpack.c.l.bf16 %v7032
        %v7081 = vunpack.c.l.bf16 %v7033
        %v7082 = vunpack.c.l.bf16 %v7034
        %v7083 = vunpack.c.l.bf16 %v7035
        %v7084 = vunpack.c.l.bf16 %v7036
        %v7085 = vunpack.c.l.bf16 %v7037
        %v7086 = vunpack.c.l.bf16 %v7038
        %v7087 = vunpack.c.l.bf16 %v7039
        %v7088 = vunpack.c.l.bf16 %v7040
        %v7089 = vunpack.c.l.bf16 %v7041
        %v7090 = vunpack.c.l.bf16 %v7042
        %v7091 = vunpack.c.l.bf16 %v7043
        %v7092 = vunpack.c.l.bf16 %v7044
        %v7093 = vunpack.c.l.bf16 %v7045
        %v7094 = vunpack.c.l.bf16 %v7046
        %v7095 = vunpack.c.l.bf16 %v7047
        %v7096 = vunpack.c.l.bf16 %v7048
        %v7097 = vunpack.c.l.bf16 %v7049
        %v7098 = vunpack.c.l.bf16 %v7050
        %v7099 = vunpack.c.l.bf16 %v7051
        %v7100 = vunpack.c.l.bf16 %v7052
        %v7101 = vunpack.c.l.bf16 %v7053
        %v7102 = vunpack.c.l.bf16 %v7054
        %v7103 = vunpack.c.l.bf16 %v7055
        %v7104 = vunpack.c.l.bf16 %v7056
        %v7105 = vunpack.c.l.bf16 %v7057
        %v7106 = vunpack.c.l.bf16 %v7058
        %v7107 = vunpack.c.l.bf16 %v7059
        %v7108 = vunpack.c.l.bf16 %v7060
        %v7109 = vunpack.c.l.bf16 %v7061
        %v7110 = vunpack.c.l.bf16 %v7062
        %v7111 = vunpack.c.l.bf16 %v7063
        %v7112 = vunpack.c.l.bf16 %v7064
        %v7113 = vunpack.c.l.bf16 %v7065
        %v7114 = vunpack.c.l.bf16 %v7066
        %v7115 = vunpack.c.l.bf16 %v7067
        %v7116 = vunpack.c.l.bf16 %v7068
        %v7117 = vunpack.c.l.bf16 %v7069
        %v7118 = vunpack.c.l.bf16 %v7070
        %v7119 = vunpack.c.l.bf16 %v7071
        %v7120 = vunpack.c.l.bf16 %v7072
        %v7121 = vunpack.c.l.bf16 %v7073
        %v7122 = vunpack.c.l.bf16 %v7074
        %v7171 = vrot.slane %v7075, 1
        %v7172 = vrot.slane %v7076, 1
        %v7173 = vsel %vm1678, %v7171, %v7172
        %v7174 = vrot.slane %v7077, 1
        %v7175 = vsel %vm1678, %v7172, %v7174
        %v7176 = vrot.slane %v7078, 1
        %v7177 = vrot.slane %v7079, 1
        %v7178 = vsel %vm1678, %v7176, %v7177
        %v7179 = vrot.slane %v7080, 1
        %v7180 = vsel %vm1678, %v7177, %v7179
        %v7181 = vrot.slane %v7081, 1
        %v7182 = vrot.slane %v7082, 1
        %v7183 = vsel %vm1678, %v7181, %v7182
        %v7184 = vrot.slane %v7083, 1
        %v7185 = vsel %vm1678, %v7182, %v7184
        %v7186 = vrot.slane %v7084, 1
        %v7187 = vrot.slane %v7085, 1
        %v7188 = vsel %vm1678, %v7186, %v7187
        %v7189 = vrot.slane %v7086, 1
        %v7190 = vsel %vm1678, %v7187, %v7189
        %v7191 = vrot.slane %v7087, 1
        %v7192 = vrot.slane %v7088, 1
        %v7193 = vsel %vm1678, %v7191, %v7192
        %v7194 = vrot.slane %v7089, 1
        %v7195 = vsel %vm1678, %v7192, %v7194
        %v7196 = vrot.slane %v7090, 1
        %v7197 = vrot.slane %v7091, 1
        %v7198 = vsel %vm1678, %v7196, %v7197
        %v7199 = vrot.slane %v7092, 1
        %v7200 = vsel %vm1678, %v7197, %v7199
        %v7201 = vrot.slane %v7093, 1
        %v7202 = vrot.slane %v7094, 1
        %v7203 = vsel %vm1678, %v7201, %v7202
        %v7204 = vrot.slane %v7095, 1
        %v7205 = vsel %vm1678, %v7202, %v7204
        %v7206 = vrot.slane %v7096, 1
        %v7207 = vrot.slane %v7097, 1
        %v7208 = vsel %vm1678, %v7206, %v7207
        %v7209 = vrot.slane %v7098, 1
        %v7210 = vsel %vm1678, %v7207, %v7209
        %v7211 = vrot.slane %v7099, 1
        %v7212 = vrot.slane %v7100, 1
        %v7213 = vsel %vm1678, %v7211, %v7212
        %v7214 = vrot.slane %v7101, 1
        %v7215 = vsel %vm1678, %v7212, %v7214
        %v7216 = vrot.slane %v7102, 1
        %v7217 = vrot.slane %v7103, 1
        %v7218 = vsel %vm1678, %v7216, %v7217
        %v7219 = vrot.slane %v7104, 1
        %v7220 = vsel %vm1678, %v7217, %v7219
        %v7221 = vrot.slane %v7105, 1
        %v7222 = vrot.slane %v7106, 1
        %v7223 = vsel %vm1678, %v7221, %v7222
        %v7224 = vrot.slane %v7107, 1
        %v7225 = vsel %vm1678, %v7222, %v7224
        %v7226 = vrot.slane %v7108, 1
        %v7227 = vrot.slane %v7109, 1
        %v7228 = vsel %vm1678, %v7226, %v7227
        %v7229 = vrot.slane %v7110, 1
        %v7230 = vsel %vm1678, %v7227, %v7229
        %v7231 = vrot.slane %v7111, 1
        %v7232 = vrot.slane %v7112, 1
        %v7233 = vsel %vm1678, %v7231, %v7232
        %v7234 = vrot.slane %v7113, 1
        %v7235 = vsel %vm1678, %v7232, %v7234
        %v7236 = vrot.slane %v7114, 1
        %v7237 = vrot.slane %v7115, 1
        %v7238 = vsel %vm1678, %v7236, %v7237
        %v7239 = vrot.slane %v7116, 1
        %v7240 = vsel %vm1678, %v7237, %v7239
        %v7241 = vrot.slane %v7117, 1
        %v7242 = vrot.slane %v7118, 1
        %v7243 = vsel %vm1678, %v7241, %v7242
        %v7244 = vrot.slane %v7119, 1
        %v7245 = vsel %vm1678, %v7242, %v7244
        %v7246 = vrot.slane %v7120, 1
        %v7247 = vrot.slane %v7121, 1
        %v7248 = vsel %vm1678, %v7246, %v7247
        %v7249 = vrot.slane %v7122, 1
        %v7250 = vsel %vm1678, %v7247, %v7249
        %v7283 = vadd.f32 %v6801, %v7173
        %v7284 = vadd.f32 %v6804, %v7175
        %v7285 = vadd.f32 %v6815, %v7178
        %v7286 = vadd.f32 %v6818, %v7180
        %v7287 = vadd.f32 %v6829, %v7183
        %v7288 = vadd.f32 %v6832, %v7185
        %v7289 = vadd.f32 %v6843, %v7188
        %v7290 = vadd.f32 %v6846, %v7190
        %v7291 = vadd.f32 %v6857, %v7193
        %v7292 = vadd.f32 %v6860, %v7195
        %v7293 = vadd.f32 %v6871, %v7198
        %v7294 = vadd.f32 %v6874, %v7200
        %v7295 = vadd.f32 %v6885, %v7203
        %v7296 = vadd.f32 %v6888, %v7205
        %v7297 = vadd.f32 %v6899, %v7208
        %v7298 = vadd.f32 %v6902, %v7210
        %v7299 = vadd.f32 %v6913, %v7213
        %v7300 = vadd.f32 %v6916, %v7215
        %v7301 = vadd.f32 %v6927, %v7218
        %v7302 = vadd.f32 %v6930, %v7220
        %v7303 = vadd.f32 %v6941, %v7223
        %v7304 = vadd.f32 %v6944, %v7225
        %v7305 = vadd.f32 %v6955, %v7228
        %v7306 = vadd.f32 %v6958, %v7230
        %v7307 = vadd.f32 %v6969, %v7233
        %v7308 = vadd.f32 %v6972, %v7235
        %v7309 = vadd.f32 %v6983, %v7238
        %v7310 = vadd.f32 %v6986, %v7240
        %v7311 = vadd.f32 %v6997, %v7243
        %v7312 = vadd.f32 %v7000, %v7245
        %v7313 = vadd.f32 %v7011, %v7248
        %v7314 = vadd.f32 %v7014, %v7250
        %v7315 = vmax.f32 %v7283, 0.0
        %v7316 = vmax.f32 %v7284, 0.0
        %v7317 = vmax.f32 %v7285, 0.0
        %v7318 = vmax.f32 %v7286, 0.0
        %v7319 = vmax.f32 %v7287, 0.0
        %v7320 = vmax.f32 %v7288, 0.0
        %v7321 = vmax.f32 %v7289, 0.0
        %v7322 = vmax.f32 %v7290, 0.0
        %v7323 = vmax.f32 %v7291, 0.0
        %v7324 = vmax.f32 %v7292, 0.0
        %v7325 = vmax.f32 %v7293, 0.0
        %v7326 = vmax.f32 %v7294, 0.0
        %v7327 = vmax.f32 %v7295, 0.0
        %v7328 = vmax.f32 %v7296, 0.0
        %v7329 = vmax.f32 %v7297, 0.0
        %v7330 = vmax.f32 %v7298, 0.0
        %v7331 = vmax.f32 %v7299, 0.0
        %v7332 = vmax.f32 %v7300, 0.0
        %v7333 = vmax.f32 %v7301, 0.0
        %v7334 = vmax.f32 %v7302, 0.0
        %v7335 = vmax.f32 %v7303, 0.0
        %v7336 = vmax.f32 %v7304, 0.0
        %v7337 = vmax.f32 %v7305, 0.0
        %v7338 = vmax.f32 %v7306, 0.0
        %v7339 = vmax.f32 %v7307, 0.0
        %v7340 = vmax.f32 %v7308, 0.0
        %v7341 = vmax.f32 %v7309, 0.0
        %v7342 = vmax.f32 %v7310, 0.0
        %v7343 = vmax.f32 %v7311, 0.0
        %v7344 = vmax.f32 %v7312, 0.0
        %v7345 = vmax.f32 %v7313, 0.0
        %v7346 = vmax.f32 %v7314, 0.0
        %7347 = vst [vmem:[%s354] sm:$0xff] %v7315
        %7348 = vst [vmem:[%s354 + $0x8] sm:$0xff] %v7316
        %7349 = vst [vmem:[%s354 + $0x10] sm:$0xff] %v7317
        %7350 = vst [vmem:[%s354 + $0x18] sm:$0xff] %v7318
        %7351 = vst [vmem:[%s354 + $0x20] sm:$0xff] %v7319
        %7352 = vst [vmem:[%s354 + $0x28] sm:$0xff] %v7320
        %7353 = vst [vmem:[%s354 + $0x30] sm:$0xff] %v7321
        %7354 = vst [vmem:[%s354 + $0x38] sm:$0xff] %v7322
        %7355 = vst [vmem:[%s354 + $0x40] sm:$0xff] %v7323
        %7356 = vst [vmem:[%s354 + $0x48] sm:$0xff] %v7324
        %7357 = vst [vmem:[%s354 + $0x50] sm:$0xff] %v7325
        %7358 = vst [vmem:[%s354 + $0x58] sm:$0xff] %v7326
        %7359 = vst [vmem:[%s354 + $0x60] sm:$0xff] %v7327
        %7360 = vst [vmem:[%s354 + $0x68] sm:$0xff] %v7328
        %7361 = vst [vmem:[%s354 + $0x70] sm:$0xff] %v7329
        %7362 = vst [vmem:[%s354 + $0x78] sm:$0xff] %v7330
        %7363 = vst [vmem:[%s354 + $0x80] sm:$0xff] %v7331
        %7364 = vst [vmem:[%s354 + $0x88] sm:$0xff] %v7332
        %7365 = vst [vmem:[%s354 + $0x90] sm:$0xff] %v7333
        %7366 = vst [vmem:[%s354 + $0x98] sm:$0xff] %v7334
        %7367 = vst [vmem:[%s354 + $0xa0] sm:$0xff] %v7335
        %7368 = vst [vmem:[%s354 + $0xa8] sm:$0xff] %v7336
        %7369 = vst [vmem:[%s354 + $0xb0] sm:$0xff] %v7337
        %7370 = vst [vmem:[%s354 + $0xb8] sm:$0xff] %v7338
        %7371 = vst [vmem:[%s354 + $0xc0] sm:$0xff] %v7339
        %7372 = vst [vmem:[%s354 + $0xc8] sm:$0xff] %v7340
        %7373 = vst [vmem:[%s354 + $0xd0] sm:$0xff] %v7341
        %7374 = vst [vmem:[%s354 + $0xd8] sm:$0xff] %v7342
        %7375 = vst [vmem:[%s354 + $0xe0] sm:$0xff] %v7343
        %7376 = vst [vmem:[%s354 + $0xe8] sm:$0xff] %v7344
        %7377 = vst [vmem:[%s354 + $0xf0] sm:$0xff] %v7345
        %7378 = vst [vmem:[%s354 + $0xf8] sm:$0xff] %v7346
        %s7379 = sand.u32 %s200, 1
        %s7380 = scalar_lea.sflag [#allocation5], %s7379
        %s7381 = sand.u32 %s200, 1
        %s7382 = smul.addr %s7381, 256
        %s7383 = scalar_lea.vmem [#allocation11], %s7382
        // Predicated region
        $region65: #{tpu_custom_call.1} parent=47 // pred_check
          %p7384 = pneg %p210
        $region66: #{tpu_custom_call.1} parent=47 // pred_check_branch
          %7386 = sbr.rel (%p7384) target = $region68
        $region67: #{tpu_custom_call.1} parent=47 // pred_region
          %s7387 = smul.u32 16, %s31
          %s7389 = ssub.s32 4096, 4096
          %7390 = vsyncadd %s7380, %s7389
          %s7391 = smul.addr %s7387, 2
          %s7392 = smul.addr %s30, 32
          %s7393 = sadd.s32 %s7391, %s7392
          %s7394 = smul.addr %s7393, 128
          %s7395 = scalar_lea.hbm %s7, %s7394
          %s7396 = sshll.u32 %s7383, 4
          %s7397 = int_to_ptr.vmem [resolvable:$true] %s7396
          %7402 = dma.vmem_to_hbm [thread:$0]  %s7397, 4096, %s7395, %s7380, 128, 128, 8
        $region68: #{tpu_custom_call.1} parent=47 // pred_fallthru
          _
      $region48: #{tpu_custom_call.1} parent=5 // pred_fallthru
        _
      %p7403 = scmp.le.s32.totalorder 2, %s21
      // Predicated region
      $region69: #{tpu_custom_call.1} parent=5 // pred_check
        %p7404 = pneg %p7403
      $region70: #{tpu_custom_call.1} parent=5 // pred_check_branch
        %7406 = sbr.rel (%p7404) target = $region72
      $region71: #{tpu_custom_call.1} parent=5 // pred_region
        %s7407 = ssub.s32 %s21, 2
        // Predicated region
        $region73: #{tpu_custom_call.1} parent=71 // pred_check
          %p7408 = pneg %p216
        $region74: #{tpu_custom_call.1} parent=71 // pred_check_branch
          %7410 = sbr.rel (%p7408) target = $region76
        $region75: #{tpu_custom_call.1} parent=71 // pred_region
          %s7411 = sand.u32 %s201, 1
          %s7412 = scalar_lea.sflag [#allocation5], %s7411
          %s7413 = sand.u32 %s201, 1
          %s7414 = smul.addr %s7413, 256
          %s7415 = scalar_lea.vmem [#allocation11], %s7414
          %7416 = dma.done %s7412, 4096
        $region76: #{tpu_custom_call.1} parent=71 // pred_fallthru
          _
      $region72: #{tpu_custom_call.1} parent=5 // pred_fallthru
        _
    $region6: #{tpu_custom_call.1} parent=1 // loop_footer
      %s25 = sadd.s32 1, %s21
    $region7: #{tpu_custom_call.1} parent=1 // loop_footer_branch
      %20 = sbr.rel target = $region3
    $region8: #{tpu_custom_call.1} parent=1 // loop_exit
      _
    %7417 = vsyncpa [#allocation4], 1
    %s7418 = scalar_lea.sflag [#allocation4], 1
    %7419 = vsyncpa %s7418, 1
    %7420 = vsyncpa [#allocation7], 1
    %7421 = vsyncpa [#allocation10], 1
    %7422 = vsyncpa [#allocation5], 1
    %s7423 = scalar_lea.sflag [#allocation5], 1
    %7424 = vsyncpa %s7423, 1

</llo_original>
